<compile_context>
chip_gen: v6e
topology: v6e:2x2x1
jax: 0.10.0
libtpu: 0.0.40
codegen_flags: <defaults>
</compile_context>

<pallas_src>
import numpy as np

import jax
import jax.numpy as jnp
from jax import lax
from jax.experimental import pallas as pl
from jax.experimental.pallas import tpu as pltpu

# ----------------------------- model configuration ---------------------------
LATENT_DIM = 32
OUT_DIM = 4            # spatial size right after the fc layer
NUM_FILTERS = 32
NUM_LAYERS = 4
KSIZE = 3
OBS_CHANNELS = 3       # observation_size[0]
BATCH = 2

# spatial sizes of the activations flowing through the decoder
_S = [OUT_DIM]                                    # 4
for _ in range(NUM_LAYERS - 1):
    _S.append(_S[-1] + KSIZE - 1)                 # 6, 8, 10 (stride-1 deconvs)
S_OUT = (_S[-1] - 1) * 2 + KSIZE + 1              # 22 (stride-2, output_padding 1)

# per-deconv geometry of the zero-padded (last layer: zero-dilated) input,
# held in VMEM as a flat (Hp*Wp + 8, C) slab (the +8 absorbs tap-offset overrun)
HP = [
    _S[0] + 2 * (KSIZE - 1),                                     # 8
    _S[1] + 2 * (KSIZE - 1),                                     # 10
    _S[2] + 2 * (KSIZE - 1),                                     # 12
    (_S[3] - 1) * 2 + 1 + (KSIZE - 1) + (KSIZE - 1 + 1),         # 24
]
HO = [hp - KSIZE + 1 for hp in HP]                               # 6, 8, 10, 22
FLAT_ROWS = [hp * hp + 8 for hp in HP]                           # 72, 108, 152, 584
DIL_W = 2 * _S[3]      # 20: dilated row width incl. the trailing output-padding zero


# ------------------------------- fused Pallas kernel -------------------------
def decoder_kernel(lat_ref, fcw_ref, fcb_ref,
                   w1_ref, b1_ref, w2_ref, b2_ref, w3_ref, b3_ref,
                   w4t_ref, b4_ref, spread_ref, o_ref,
                   f1, f2, f3, f4):
    C = NUM_FILTERS
    K = KSIZE

    # fresh zero background (padding + dilation zeros) for this batch element.
    # (Must be re-zeroed every grid step: with "parallel" megacore sharding each
    #  core owns its own scratch, so a program_id==0 gate would be unsafe.)
    f1[...] = jnp.zeros_like(f1)
    f2[...] = jnp.zeros_like(f2)
    f3[...] = jnp.zeros_like(f3)
    f4[...] = jnp.zeros_like(f4)

    # ---- fc + ReLU (fc columns pre-permuted to (y, x, c) order at init) -----
    h = jnp.dot(lat_ref[0], fcw_ref[...], preferred_element_type=jnp.float32)
    h = jnp.maximum(h + fcb_ref[...], 0.0)                      # (1, 16*C)

    hp0 = HP[0]
    for m in range(OUT_DIM * OUT_DIM):                          # scatter into F1
        yy, xx = divmod(m, OUT_DIM)
        row = (K - 1 + yy) * hp0 + (K - 1 + xx)
        f1[row:row + 1, :] = h[:, m * C:(m + 1) * C]

    def conv(f_ref, w_ref, b_ref, hp, relu):
        # one im2col matmul over the whole padded plane; output rows y*hp + x
        # with x >= Ho are junk and are simply never read back.
        ho = hp - K + 1
        L = ho * hp
        taps = [f_ref[ky * hp + kx: ky * hp + kx + L, :]
                for ky in range(K) for kx in range(K)]
        patches = jnp.concatenate(taps, axis=1)                 # (L, K*K*Cin)
        y = jnp.dot(patches, w_ref[...], preferred_element_type=jnp.float32)
        y = y + b_ref[...]
        return jnp.maximum(y, 0.0) if relu else y

    def store_valid(dst_ref, y, ho, wo, wp_src, hp_dst):
        # copy the valid (ho, wo) block into the interior of the next slab
        for r in range(ho):
            dst = (K - 1 + r) * hp_dst + (K - 1)
            dst_ref[dst:dst + wo, :] = y[r * wp_src: r * wp_src + wo, :]

    # ---- three stride-1 ConvTranspose2d(32->32) + ReLU -----------------------
    y1 = conv(f1, w1_ref, b1_ref, HP[0], relu=True)
    store_valid(f2, y1, HO[0], HO[0], HP[0], HP[1])
    y2 = conv(f2, w2_ref, b2_ref, HP[1], relu=True)
    store_valid(f3, y2, HO[1], HO[1], HP[1], HP[2])
    y3 = conv(f3, w3_ref, b3_ref, HP[2], relu=True)             # (HO2*HP2, C)

    # ---- stride-2 zero-dilation of y3 into F4 (tiny 0/1 spread matmul) -------
    # spread_ref is the constant (DIL_W, S3) matrix with spread[2j, j] == 1,
    # i.e. valid input column j lands at dilated column 2j, odd columns stay 0.
    s3 = _S[3]                                                   # 10
    hp3 = HP[3]
    for r in range(s3):
        rows = y3[r * HP[2]: r * HP[2] + s3, :]                  # (10, C) valid cols
        dst = (K - 1 + 2 * r) * hp3 + (K - 1)
        f4[dst:dst + DIL_W, :] = jnp.dot(spread_ref[...], rows,
                                         preferred_element_type=jnp.float32)

    # ---- last ConvTranspose2d(32->3), stride 2, output_padding 1 (no ReLU) ---
    # computed channel-major so the result is written straight out as NCHW
    L4 = HO[3] * hp3
    taps4 = [f4[ky * hp3 + kx: ky * hp3 + kx + L4, :]
             for ky in range(K) for kx in range(K)]
    p4 = jnp.concatenate(taps4, axis=1)                          # (L4, K*K*C)
    y4t = lax.dot_general(w4t_ref[...], p4,
                          (((1,), (1,)), ((), ())),
                          preferred_element_type=jnp.float32)    # (Cobs, L4)
    y4t = y4t + b4_ref[...]
    for r in range(HO[3]):
        o_ref[0, :, r:r + 1, :] = y4t[:, None, r * hp3: r * hp3 + HO[3]]


# ------------------------------- wrapper --------------------------------------
def _fixed_spec(arr):
    zeros = (0,) * arr.ndim
    return pl.BlockSpec(arr.shape, lambda b, _z=zeros: _z)


@jax.jit
def decoder_forward(latent, prepared):
    fcw, fcb, w1, b1, w2, b2, w3, b3, w4t, b4, spread = prepared
    B = latent.shape[0]
    lat3 = latent.reshape(B, 1, LATENT_DIM)
    weights = (fcw, fcb, w1, b1, w2, b2, w3, b3, w4t, b4, spread)
    return pl.pallas_call(
        decoder_kernel,
        out_shape=jax.ShapeDtypeStruct((B, OBS_CHANNELS, S_OUT, S_OUT),
                                       jnp.float32),
        grid=(B,),
        in_specs=[pl.BlockSpec((1, 1, LATENT_DIM), lambda b: (b, 0, 0))]
                 + [_fixed_spec(w) for w in weights],
        out_specs=pl.BlockSpec((1, OBS_CHANNELS, S_OUT, S_OUT),
                               lambda b: (b, 0, 0, 0)),
        scratch_shapes=[pltpu.VMEM((rows, NUM_FILTERS), jnp.float32)
                        for rows in FLAT_ROWS],
        compiler_params=pltpu.CompilerParams(
            dimension_semantics=("parallel",)),
    )(lat3, *weights)


# --------------------- one-time parameter repacking (hoisted) ------------------
def prepare_params(params):
    fc_w, fc_b = params["fc"]                     # (n_flatten, latent), (n_flatten,)
    # reorder fc outputs from (c, y, x) to (y, x, c): pure weight-column permute
    perm = np.arange(OUT_DIM * OUT_DIM * NUM_FILTERS).reshape(
        NUM_FILTERS, OUT_DIM, OUT_DIM).transpose(1, 2, 0).reshape(-1)
    fcw = jnp.transpose(fc_w)[:, perm]            # (latent, n_flatten)
    fcb = fc_b[perm].reshape(1, -1)

    flat = []
    for (w, b, _stride, _opad) in params["deconvs"]:
        cin, cout = w.shape[0], w.shape[1]
        wf = w[:, :, ::-1, ::-1]                  # flip spatial taps
        wf = jnp.transpose(wf, (2, 3, 0, 1)).reshape(KSIZE * KSIZE * cin, cout)
        flat.append((wf, b))
    (w1, b1), (w2, b2), (w3, b3), (w4, b4) = flat

    # constant 0/1 stride-2 dilation matrix, built once on the host
    spread = np.zeros((DIL_W, _S[3]), np.float32)
    spread[2 * np.arange(_S[3]), np.arange(_S[3])] = 1.0

    return (fcw, fcb,
            w1, b1.reshape(1, -1),
            w2, b2.reshape(1, -1),
            w3, b3.reshape(1, -1),
            jnp.transpose(w4),                    # (Cobs, K*K*C) channel-major
            b4.reshape(-1, 1),                    # (Cobs, 1)
            jnp.asarray(spread))


# --------------------------- deterministic parameters --------------------------
def init_params(key):
    n_flatten = OUT_DIM * OUT_DIM * NUM_FILTERS
    keys = jax.random.split(key, 2 + 2 * NUM_LAYERS)

    def u(k, shape, fan_in):
        bound = 1.0 / np.sqrt(fan_in)
        return jax.random.uniform(k, shape, jnp.float32, -bound, bound)

    fc_w = u(keys[0], (n_flatten, LATENT_DIM), LATENT_DIM)
    fc_b = u(keys[1], (n_flatten,), LATENT_DIM)
    deconvs = []
    fan = NUM_FILTERS * KSIZE * KSIZE
    for i in range(NUM_LAYERS - 1):
        w = u(keys[2 + 2 * i], (NUM_FILTERS, NUM_FILTERS, KSIZE, KSIZE), fan)
        b = u(keys[3 + 2 * i], (NUM_FILTERS,), fan)
        deconvs.append((w, b, 1, 0))                     # stride=1, out_pad=0
    w = u(keys[2 + 2 * (NUM_LAYERS - 1)],
          (NUM_FILTERS, OBS_CHANNELS, KSIZE, KSIZE), fan)
    b = u(keys[3 + 2 * (NUM_LAYERS - 1)], (OBS_CHANNELS,), fan)
    deconvs.append((w, b, 2, 1))                         # stride=2, out_pad=1
    return {"fc": (fc_w, fc_b), "deconvs": deconvs}


# ------------------------------- numpy reference -------------------------------
def ref_conv_transpose(x, w, b, stride, out_pad):
    # x: (N, Cin, H, W), w: (Cin, Cout, K, K)  -- PyTorch ConvTranspose2d semantics
    N, Cin, H, W = x.shape
    _, Cout, K, _ = w.shape
    Ho = (H - 1) * stride + K + out_pad
    Wo = (W - 1) * stride + K + out_pad
    y = np.zeros((N, Cout, Ho, Wo), x.dtype) + b.reshape(1, Cout, 1, 1)
    for iy in range(H):
        for ix in range(W):
            contrib = np.einsum("nc,cokl->nokl", x[:, :, iy, ix], w)
            y[:, :, iy * stride:iy * stride + K,
                    ix * stride:ix * stride + K] += contrib
    return y


def ref_forward(latent, params):
    x = np.asarray(latent, np.float64)
    fc_w, fc_b = [np.asarray(a, np.float64) for a in params["fc"]]
    h = np.maximum(x @ fc_w.T + fc_b, 0.0)
    h = h.reshape(-1, NUM_FILTERS, OUT_DIM, OUT_DIM)
    n = len(params["deconvs"])
    for i, (w, b, stride, opad) in enumerate(params["deconvs"]):
        h = ref_conv_transpose(h, np.asarray(w, np.float64),
                               np.asarray(b, np.float64), stride, opad)
        if i < n - 1:
            h = np.maximum(h, 0.0)
    return h


# ------------------------------------ main --------------------------------------
if __name__ == "__main__":
    key = jax.random.PRNGKey(0)
    pkey, xkey = jax.random.split(key)
    params = init_params(pkey)
    prepared = prepare_params(params)
    latent = jax.random.normal(xkey, (BATCH, LATENT_DIM), jnp.float32)

    out = decoder_forward(latent, prepared)
    out = jax.block_until_ready(out)

    ref = ref_forward(latent, params)
    assert out.shape == ref.shape, (out.shape, ref.shape)
    np.testing.assert_allclose(np.asarray(out), ref, rtol=1e-3, atol=3e-4)
    print("KERNEL_OK")
</pallas_src>

<mosaic_0001>
module attributes {stable_mosaic.version = 11 : i64} {
  func.func @decoder_kernel(%arg0: i32, %arg1: memref<1x1x32xf32, #tpu.memory_space<vmem>>, %arg2: memref<32x512xf32, #tpu.memory_space<vmem>>, %arg3: memref<1x512xf32, #tpu.memory_space<vmem>>, %arg4: memref<288x32xf32, #tpu.memory_space<vmem>>, %arg5: memref<1x32xf32, #tpu.memory_space<vmem>>, %arg6: memref<288x32xf32, #tpu.memory_space<vmem>>, %arg7: memref<1x32xf32, #tpu.memory_space<vmem>>, %arg8: memref<288x32xf32, #tpu.memory_space<vmem>>, %arg9: memref<1x32xf32, #tpu.memory_space<vmem>>, %arg10: memref<3x288xf32, #tpu.memory_space<vmem>>, %arg11: memref<3x1xf32, #tpu.memory_space<vmem>>, %arg12: memref<20x10xf32, #tpu.memory_space<vmem>>, %arg13: memref<1x3x22x22xf32, #tpu.memory_space<vmem>>, %arg14: memref<72x32xf32, #tpu.memory_space<vmem>>, %arg15: memref<108x32xf32, #tpu.memory_space<vmem>>, %arg16: memref<152x32xf32, #tpu.memory_space<vmem>>, %arg17: memref<584x32xf32, #tpu.memory_space<vmem>>) attributes {dimension_semantics = [#tpu.dimension_semantics<parallel>], iteration_bounds = array<i64: 2>, scalar_prefetch = 0 : i64, scratch_operands = 4 : i64, tpu.core_type = #tpu.core_type<tc>, window_params = [{transform_indices = @transform_0, window_bounds = array<i64: 1, 1, 32>}, {pipeline_mode = #tpu.pipeline_mode<synchronous>, transform_indices = @transform_1, window_bounds = array<i64: 32, 512>}, {pipeline_mode = #tpu.pipeline_mode<synchronous>, transform_indices = @transform_2, window_bounds = array<i64: 1, 512>}, {pipeline_mode = #tpu.pipeline_mode<synchronous>, transform_indices = @transform_3, window_bounds = array<i64: 288, 32>}, {pipeline_mode = #tpu.pipeline_mode<synchronous>, transform_indices = @transform_4, window_bounds = array<i64: 1, 32>}, {pipeline_mode = #tpu.pipeline_mode<synchronous>, transform_indices = @transform_5, window_bounds = array<i64: 288, 32>}, {pipeline_mode = #tpu.pipeline_mode<synchronous>, transform_indices = @transform_6, window_bounds = array<i64: 1, 32>}, {pipeline_mode = #tpu.pipeline_mode<synchronous>, transform_indices = @transform_7, window_bounds = array<i64: 288, 32>}, {pipeline_mode = #tpu.pipeline_mode<synchronous>, transform_indices = @transform_8, window_bounds = array<i64: 1, 32>}, {pipeline_mode = #tpu.pipeline_mode<synchronous>, transform_indices = @transform_9, window_bounds = array<i64: 3, 288>}, {pipeline_mode = #tpu.pipeline_mode<synchronous>, transform_indices = @transform_10, window_bounds = array<i64: 3, 1>}, {pipeline_mode = #tpu.pipeline_mode<synchronous>, transform_indices = @transform_11, window_bounds = array<i64: 20, 10>}, {transform_indices = @transform_12, window_bounds = array<i64: 1, 3, 22, 22>}]} {
    %cst = arith.constant 0.000000e+00 : f32
    %0 = vector.broadcast %cst : f32 to vector<72x32xf32>
    %c0 = arith.constant 0 : index
    %c0_0 = arith.constant 0 : index
    %1 = vector.load %arg14[%c0, %c0_0] : memref<72x32xf32, #tpu.memory_space<vmem>>, vector<72x32xf32>
    tpu.vector_store %arg14[%c0, %c0_0], %0 {strides = array<i32>} : memref<72x32xf32, #tpu.memory_space<vmem>>, vector<72x32xf32>,
    %cst_1 = arith.constant 0.000000e+00 : f32
    %2 = vector.broadcast %cst_1 : f32 to vector<108x32xf32>
    %c0_2 = arith.constant 0 : index
    %c0_3 = arith.constant 0 : index
    %3 = vector.load %arg15[%c0_2, %c0_3] : memref<108x32xf32, #tpu.memory_space<vmem>>, vector<108x32xf32>
    tpu.vector_store %arg15[%c0_2, %c0_3], %2 {strides = array<i32>} : memref<108x32xf32, #tpu.memory_space<vmem>>, vector<108x32xf32>,
    %cst_4 = arith.constant 0.000000e+00 : f32
    %4 = vector.broadcast %cst_4 : f32 to vector<152x32xf32>
    %c0_5 = arith.constant 0 : index
    %c0_6 = arith.constant 0 : index
    %5 = vector.load %arg16[%c0_5, %c0_6] : memref<152x32xf32, #tpu.memory_space<vmem>>, vector<152x32xf32>
    tpu.vector_store %arg16[%c0_5, %c0_6], %4 {strides = array<i32>} : memref<152x32xf32, #tpu.memory_space<vmem>>, vector<152x32xf32>,
    %cst_7 = arith.constant 0.000000e+00 : f32
    %6 = vector.broadcast %cst_7 : f32 to vector<584x32xf32>
    %c0_8 = arith.constant 0 : index
    %c0_9 = arith.constant 0 : index
    %7 = vector.load %arg17[%c0_8, %c0_9] : memref<584x32xf32, #tpu.memory_space<vmem>>, vector<584x32xf32>
    tpu.vector_store %arg17[%c0_8, %c0_9], %6 {strides = array<i32>} : memref<584x32xf32, #tpu.memory_space<vmem>>, vector<584x32xf32>,
    %c0_10 = arith.constant 0 : index
    %c0_11 = arith.constant 0 : index
    %c0_12 = arith.constant 0 : index
    %8 = vector.load %arg1[%c0_10, %c0_11, %c0_12] : memref<1x1x32xf32, #tpu.memory_space<vmem>>, vector<1x1x32xf32>
    %9 = vector.shape_cast %8 : vector<1x1x32xf32> to vector<1x32xf32>
    %c0_13 = arith.constant 0 : index
    %c0_14 = arith.constant 0 : index
    %10 = vector.load %arg2[%c0_13, %c0_14] : memref<32x512xf32, #tpu.memory_space<vmem>>, vector<32x512xf32>
    %cst_15 = arith.constant dense<0.000000e+00> : vector<1x512xf32>
    %11 = tpu.matmul %9, %10, %cst_15 {dimension_numbers = #tpu.dot_dimension_numbers<[1], [0], [0], [1], [0, 0, 1, 1], [], []>} : vector<1x32xf32>, vector<32x512xf32>, vector<1x512xf32> -> vector<1x512xf32>
    %c0_16 = arith.constant 0 : index
    %c0_17 = arith.constant 0 : index
    %12 = vector.load %arg3[%c0_16, %c0_17] : memref<1x512xf32, #tpu.memory_space<vmem>>, vector<1x512xf32>
    %13 = arith.addf %11, %12 : vector<1x512xf32>
    %cst_18 = arith.constant 0.000000e+00 : f32
    %14 = vector.broadcast %cst_18 : f32 to vector<1x512xf32>
    %15 = arith.maximumf %13, %14 : vector<1x512xf32>
    %16 = vector.extract_strided_slice %15 {offsets = [0, 0], sizes = [1, 32], strides = [1, 1]} : vector<1x512xf32> to vector<1x32xf32>
    %c18 = arith.constant 18 : index
    %c0_19 = arith.constant 0 : index
    %17 = vector.load %arg14[%c18, %c0_19] : memref<72x32xf32, #tpu.memory_space<vmem>>, vector<1x32xf32>
    tpu.vector_store %arg14[%c18, %c0_19], %16 {strides = array<i32>} : memref<72x32xf32, #tpu.memory_space<vmem>>, vector<1x32xf32>,
    %18 = vector.extract_strided_slice %15 {offsets = [0, 32], sizes = [1, 32], strides = [1, 1]} : vector<1x512xf32> to vector<1x32xf32>
    %c19 = arith.constant 19 : index
    %c0_20 = arith.constant 0 : index
    %19 = vector.load %arg14[%c19, %c0_20] : memref<72x32xf32, #tpu.memory_space<vmem>>, vector<1x32xf32>
    tpu.vector_store %arg14[%c19, %c0_20], %18 {strides = array<i32>} : memref<72x32xf32, #tpu.memory_space<vmem>>, vector<1x32xf32>,
    %20 = vector.extract_strided_slice %15 {offsets = [0, 64], sizes = [1, 32], strides = [1, 1]} : vector<1x512xf32> to vector<1x32xf32>
    %c20 = arith.constant 20 : index
    %c0_21 = arith.constant 0 : index
    %21 = vector.load %arg14[%c20, %c0_21] : memref<72x32xf32, #tpu.memory_space<vmem>>, vector<1x32xf32>
    tpu.vector_store %arg14[%c20, %c0_21], %20 {strides = array<i32>} : memref<72x32xf32, #tpu.memory_space<vmem>>, vector<1x32xf32>,
    %22 = vector.extract_strided_slice %15 {offsets = [0, 96], sizes = [1, 32], strides = [1, 1]} : vector<1x512xf32> to vector<1x32xf32>
    %c21 = arith.constant 21 : index
    %c0_22 = arith.constant 0 : index
    %23 = vector.load %arg14[%c21, %c0_22] : memref<72x32xf32, #tpu.memory_space<vmem>>, vector<1x32xf32>
    tpu.vector_store %arg14[%c21, %c0_22], %22 {strides = array<i32>} : memref<72x32xf32, #tpu.memory_space<vmem>>, vector<1x32xf32>,
    %24 = vector.extract_strided_slice %15 {offsets = [0, 128], sizes = [1, 32], strides = [1, 1]} : vector<1x512xf32> to vector<1x32xf32>
    %c26 = arith.constant 26 : index
    %c0_23 = arith.constant 0 : index
    %25 = vector.load %arg14[%c26, %c0_23] : memref<72x32xf32, #tpu.memory_space<vmem>>, vector<1x32xf32>
    tpu.vector_store %arg14[%c26, %c0_23], %24 {strides = array<i32>} : memref<72x32xf32, #tpu.memory_space<vmem>>, vector<1x32xf32>,
    %26 = vector.extract_strided_slice %15 {offsets = [0, 160], sizes = [1, 32], strides = [1, 1]} : vector<1x512xf32> to vector<1x32xf32>
    %c27 = arith.constant 27 : index
    %c0_24 = arith.constant 0 : index
    %27 = vector.load %arg14[%c27, %c0_24] : memref<72x32xf32, #tpu.memory_space<vmem>>, vector<1x32xf32>
    tpu.vector_store %arg14[%c27, %c0_24], %26 {strides = array<i32>} : memref<72x32xf32, #tpu.memory_space<vmem>>, vector<1x32xf32>,
    %28 = vector.extract_strided_slice %15 {offsets = [0, 192], sizes = [1, 32], strides = [1, 1]} : vector<1x512xf32> to vector<1x32xf32>
    %c28 = arith.constant 28 : index
    %c0_25 = arith.constant 0 : index
    %29 = vector.load %arg14[%c28, %c0_25] : memref<72x32xf32, #tpu.memory_space<vmem>>, vector<1x32xf32>
    tpu.vector_store %arg14[%c28, %c0_25], %28 {strides = array<i32>} : memref<72x32xf32, #tpu.memory_space<vmem>>, vector<1x32xf32>,
    %30 = vector.extract_strided_slice %15 {offsets = [0, 224], sizes = [1, 32], strides = [1, 1]} : vector<1x512xf32> to vector<1x32xf32>
    %c29 = arith.constant 29 : index
    %c0_26 = arith.constant 0 : index
    %31 = vector.load %arg14[%c29, %c0_26] : memref<72x32xf32, #tpu.memory_space<vmem>>, vector<1x32xf32>
    tpu.vector_store %arg14[%c29, %c0_26], %30 {strides = array<i32>} : memref<72x32xf32, #tpu.memory_space<vmem>>, vector<1x32xf32>,
    %32 = vector.extract_strided_slice %15 {offsets = [0, 256], sizes = [1, 32], strides = [1, 1]} : vector<1x512xf32> to vector<1x32xf32>
    %c34 = arith.constant 34 : index
    %c0_27 = arith.constant 0 : index
    %33 = vector.load %arg14[%c34, %c0_27] : memref<72x32xf32, #tpu.memory_space<vmem>>, vector<1x32xf32>
    tpu.vector_store %arg14[%c34, %c0_27], %32 {strides = array<i32>} : memref<72x32xf32, #tpu.memory_space<vmem>>, vector<1x32xf32>,
    %34 = vector.extract_strided_slice %15 {offsets = [0, 288], sizes = [1, 32], strides = [1, 1]} : vector<1x512xf32> to vector<1x32xf32>
    %c35 = arith.constant 35 : index
    %c0_28 = arith.constant 0 : index
    %35 = vector.load %arg14[%c35, %c0_28] : memref<72x32xf32, #tpu.memory_space<vmem>>, vector<1x32xf32>
    tpu.vector_store %arg14[%c35, %c0_28], %34 {strides = array<i32>} : memref<72x32xf32, #tpu.memory_space<vmem>>, vector<1x32xf32>,
    %36 = vector.extract_strided_slice %15 {offsets = [0, 320], sizes = [1, 32], strides = [1, 1]} : vector<1x512xf32> to vector<1x32xf32>
    %c36 = arith.constant 36 : index
    %c0_29 = arith.constant 0 : index
    %37 = vector.load %arg14[%c36, %c0_29] : memref<72x32xf32, #tpu.memory_space<vmem>>, vector<1x32xf32>
    tpu.vector_store %arg14[%c36, %c0_29], %36 {strides = array<i32>} : memref<72x32xf32, #tpu.memory_space<vmem>>, vector<1x32xf32>,
    %38 = vector.extract_strided_slice %15 {offsets = [0, 352], sizes = [1, 32], strides = [1, 1]} : vector<1x512xf32> to vector<1x32xf32>
    %c37 = arith.constant 37 : index
    %c0_30 = arith.constant 0 : index
    %39 = vector.load %arg14[%c37, %c0_30] : memref<72x32xf32, #tpu.memory_space<vmem>>, vector<1x32xf32>
    tpu.vector_store %arg14[%c37, %c0_30], %38 {strides = array<i32>} : memref<72x32xf32, #tpu.memory_space<vmem>>, vector<1x32xf32>,
    %40 = vector.extract_strided_slice %15 {offsets = [0, 384], sizes = [1, 32], strides = [1, 1]} : vector<1x512xf32> to vector<1x32xf32>
    %c42 = arith.constant 42 : index
    %c0_31 = arith.constant 0 : index
    %41 = vector.load %arg14[%c42, %c0_31] : memref<72x32xf32, #tpu.memory_space<vmem>>, vector<1x32xf32>
    tpu.vector_store %arg14[%c42, %c0_31], %40 {strides = array<i32>} : memref<72x32xf32, #tpu.memory_space<vmem>>, vector<1x32xf32>,
    %42 = vector.extract_strided_slice %15 {offsets = [0, 416], sizes = [1, 32], strides = [1, 1]} : vector<1x512xf32> to vector<1x32xf32>
    %c43 = arith.constant 43 : index
    %c0_32 = arith.constant 0 : index
    %43 = vector.load %arg14[%c43, %c0_32] : memref<72x32xf32, #tpu.memory_space<vmem>>, vector<1x32xf32>
    tpu.vector_store %arg14[%c43, %c0_32], %42 {strides = array<i32>} : memref<72x32xf32, #tpu.memory_space<vmem>>, vector<1x32xf32>,
    %44 = vector.extract_strided_slice %15 {offsets = [0, 448], sizes = [1, 32], strides = [1, 1]} : vector<1x512xf32> to vector<1x32xf32>
    %c44 = arith.constant 44 : index
    %c0_33 = arith.constant 0 : index
    %45 = vector.load %arg14[%c44, %c0_33] : memref<72x32xf32, #tpu.memory_space<vmem>>, vector<1x32xf32>
    tpu.vector_store %arg14[%c44, %c0_33], %44 {strides = array<i32>} : memref<72x32xf32, #tpu.memory_space<vmem>>, vector<1x32xf32>,
    %46 = vector.extract_strided_slice %15 {offsets = [0, 480], sizes = [1, 32], strides = [1, 1]} : vector<1x512xf32> to vector<1x32xf32>
    %c45 = arith.constant 45 : index
    %c0_34 = arith.constant 0 : index
    %47 = vector.load %arg14[%c45, %c0_34] : memref<72x32xf32, #tpu.memory_space<vmem>>, vector<1x32xf32>
    tpu.vector_store %arg14[%c45, %c0_34], %46 {strides = array<i32>} : memref<72x32xf32, #tpu.memory_space<vmem>>, vector<1x32xf32>,
    %c0_35 = arith.constant 0 : index
    %c0_36 = arith.constant 0 : index
    %48 = vector.load %arg14[%c0_35, %c0_36] : memref<72x32xf32, #tpu.memory_space<vmem>>, vector<48x32xf32>
    %c1 = arith.constant 1 : index
    %c0_37 = arith.constant 0 : index
    %49 = vector.load %arg14[%c1, %c0_37] : memref<72x32xf32, #tpu.memory_space<vmem>>, vector<48x32xf32>
    %c2 = arith.constant 2 : index
    %c0_38 = arith.constant 0 : index
    %50 = vector.load %arg14[%c2, %c0_38] : memref<72x32xf32, #tpu.memory_space<vmem>>, vector<48x32xf32>
    %c8 = arith.constant 8 : index
    %c0_39 = arith.constant 0 : index
    %51 = vector.load %arg14[%c8, %c0_39] : memref<72x32xf32, #tpu.memory_space<vmem>>, vector<48x32xf32>
    %c9 = arith.constant 9 : index
    %c0_40 = arith.constant 0 : index
    %52 = vector.load %arg14[%c9, %c0_40] : memref<72x32xf32, #tpu.memory_space<vmem>>, vector<48x32xf32>
    %c10 = arith.constant 10 : index
    %c0_41 = arith.constant 0 : index
    %53 = vector.load %arg14[%c10, %c0_41] : memref<72x32xf32, #tpu.memory_space<vmem>>, vector<48x32xf32>
    %c16 = arith.constant 16 : index
    %c0_42 = arith.constant 0 : index
    %54 = vector.load %arg14[%c16, %c0_42] : memref<72x32xf32, #tpu.memory_space<vmem>>, vector<48x32xf32>
    %c17 = arith.constant 17 : index
    %c0_43 = arith.constant 0 : index
    %55 = vector.load %arg14[%c17, %c0_43] : memref<72x32xf32, #tpu.memory_space<vmem>>, vector<48x32xf32>
    %c18_44 = arith.constant 18 : index
    %c0_45 = arith.constant 0 : index
    %56 = vector.load %arg14[%c18_44, %c0_45] : memref<72x32xf32, #tpu.memory_space<vmem>>, vector<48x32xf32>
    %57 = tpu.concatenate %48, %49, %50, %51, %52, %53, %54, %55, %56 in 1 : vector<48x32xf32>, vector<48x32xf32>, vector<48x32xf32>, vector<48x32xf32>, vector<48x32xf32>, vector<48x32xf32>, vector<48x32xf32>, vector<48x32xf32>, vector<48x32xf32> -> vector<48x288xf32>
    %c0_46 = arith.constant 0 : index
    %c0_47 = arith.constant 0 : index
    %58 = vector.load %arg4[%c0_46, %c0_47] : memref<288x32xf32, #tpu.memory_space<vmem>>, vector<288x32xf32>
    %cst_48 = arith.constant dense<0.000000e+00> : vector<48x32xf32>
    %59 = tpu.matmul %57, %58, %cst_48 {dimension_numbers = #tpu.dot_dimension_numbers<[1], [0], [0], [1], [0, 0, 1, 1], [], []>} : vector<48x288xf32>, vector<288x32xf32>, vector<48x32xf32> -> vector<48x32xf32>
    %c0_49 = arith.constant 0 : index
    %c0_50 = arith.constant 0 : index
    %60 = vector.load %arg5[%c0_49, %c0_50] : memref<1x32xf32, #tpu.memory_space<vmem>>, vector<1x32xf32>
    %61 = vector.broadcast %60 : vector<1x32xf32> to vector<48x32xf32>
    %62 = arith.addf %59, %61 : vector<48x32xf32>
    %cst_51 = arith.constant 0.000000e+00 : f32
    %63 = vector.broadcast %cst_51 : f32 to vector<48x32xf32>
    %64 = arith.maximumf %62, %63 : vector<48x32xf32>
    %65 = vector.extract_strided_slice %64 {offsets = [0, 0], sizes = [6, 32], strides = [1, 1]} : vector<48x32xf32> to vector<6x32xf32>
    %c22 = arith.constant 22 : index
    %c0_52 = arith.constant 0 : index
    %66 = vector.load %arg15[%c22, %c0_52] : memref<108x32xf32, #tpu.memory_space<vmem>>, vector<6x32xf32>
    tpu.vector_store %arg15[%c22, %c0_52], %65 {strides = array<i32>} : memref<108x32xf32, #tpu.memory_space<vmem>>, vector<6x32xf32>,
    %67 = vector.extract_strided_slice %64 {offsets = [8, 0], sizes = [6, 32], strides = [1, 1]} : vector<48x32xf32> to vector<6x32xf32>
    %c32 = arith.constant 32 : index
    %c0_53 = arith.constant 0 : index
    %68 = vector.load %arg15[%c32, %c0_53] : memref<108x32xf32, #tpu.memory_space<vmem>>, vector<6x32xf32>
    tpu.vector_store %arg15[%c32, %c0_53], %67 {strides = array<i32>} : memref<108x32xf32, #tpu.memory_space<vmem>>, vector<6x32xf32>,
    %69 = vector.extract_strided_slice %64 {offsets = [16, 0], sizes = [6, 32], strides = [1, 1]} : vector<48x32xf32> to vector<6x32xf32>
    %c42_54 = arith.constant 42 : index
    %c0_55 = arith.constant 0 : index
    %70 = vector.load %arg15[%c42_54, %c0_55] : memref<108x32xf32, #tpu.memory_space<vmem>>, vector<6x32xf32>
    tpu.vector_store %arg15[%c42_54, %c0_55], %69 {strides = array<i32>} : memref<108x32xf32, #tpu.memory_space<vmem>>, vector<6x32xf32>,
    %71 = vector.extract_strided_slice %64 {offsets = [24, 0], sizes = [6, 32], strides = [1, 1]} : vector<48x32xf32> to vector<6x32xf32>
    %c52 = arith.constant 52 : index
    %c0_56 = arith.constant 0 : index
    %72 = vector.load %arg15[%c52, %c0_56] : memref<108x32xf32, #tpu.memory_space<vmem>>, vector<6x32xf32>
    tpu.vector_store %arg15[%c52, %c0_56], %71 {strides = array<i32>} : memref<108x32xf32, #tpu.memory_space<vmem>>, vector<6x32xf32>,
    %73 = vector.extract_strided_slice %64 {offsets = [32, 0], sizes = [6, 32], strides = [1, 1]} : vector<48x32xf32> to vector<6x32xf32>
    %c62 = arith.constant 62 : index
    %c0_57 = arith.constant 0 : index
    %74 = vector.load %arg15[%c62, %c0_57] : memref<108x32xf32, #tpu.memory_space<vmem>>, vector<6x32xf32>
    tpu.vector_store %arg15[%c62, %c0_57], %73 {strides = array<i32>} : memref<108x32xf32, #tpu.memory_space<vmem>>, vector<6x32xf32>,
    %75 = vector.extract_strided_slice %64 {offsets = [40, 0], sizes = [6, 32], strides = [1, 1]} : vector<48x32xf32> to vector<6x32xf32>
    %c72 = arith.constant 72 : index
    %c0_58 = arith.constant 0 : index
    %76 = vector.load %arg15[%c72, %c0_58] : memref<108x32xf32, #tpu.memory_space<vmem>>, vector<6x32xf32>
    tpu.vector_store %arg15[%c72, %c0_58], %75 {strides = array<i32>} : memref<108x32xf32, #tpu.memory_space<vmem>>, vector<6x32xf32>,
    %c0_59 = arith.constant 0 : index
    %c0_60 = arith.constant 0 : index
    %77 = vector.load %arg15[%c0_59, %c0_60] : memref<108x32xf32, #tpu.memory_space<vmem>>, vector<80x32xf32>
    %c1_61 = arith.constant 1 : index
    %c0_62 = arith.constant 0 : index
    %78 = vector.load %arg15[%c1_61, %c0_62] : memref<108x32xf32, #tpu.memory_space<vmem>>, vector<80x32xf32>
    %c2_63 = arith.constant 2 : index
    %c0_64 = arith.constant 0 : index
    %79 = vector.load %arg15[%c2_63, %c0_64] : memref<108x32xf32, #tpu.memory_space<vmem>>, vector<80x32xf32>
    %c10_65 = arith.constant 10 : index
    %c0_66 = arith.constant 0 : index
    %80 = vector.load %arg15[%c10_65, %c0_66] : memref<108x32xf32, #tpu.memory_space<vmem>>, vector<80x32xf32>
    %c11 = arith.constant 11 : index
    %c0_67 = arith.constant 0 : index
    %81 = vector.load %arg15[%c11, %c0_67] : memref<108x32xf32, #tpu.memory_space<vmem>>, vector<80x32xf32>
    %c12 = arith.constant 12 : index
    %c0_68 = arith.constant 0 : index
    %82 = vector.load %arg15[%c12, %c0_68] : memref<108x32xf32, #tpu.memory_space<vmem>>, vector<80x32xf32>
    %c20_69 = arith.constant 20 : index
    %c0_70 = arith.constant 0 : index
    %83 = vector.load %arg15[%c20_69, %c0_70] : memref<108x32xf32, #tpu.memory_space<vmem>>, vector<80x32xf32>
    %c21_71 = arith.constant 21 : index
    %c0_72 = arith.constant 0 : index
    %84 = vector.load %arg15[%c21_71, %c0_72] : memref<108x32xf32, #tpu.memory_space<vmem>>, vector<80x32xf32>
    %c22_73 = arith.constant 22 : index
    %c0_74 = arith.constant 0 : index
    %85 = vector.load %arg15[%c22_73, %c0_74] : memref<108x32xf32, #tpu.memory_space<vmem>>, vector<80x32xf32>
    %86 = tpu.concatenate %77, %78, %79, %80, %81, %82, %83, %84, %85 in 1 : vector<80x32xf32>, vector<80x32xf32>, vector<80x32xf32>, vector<80x32xf32>, vector<80x32xf32>, vector<80x32xf32>, vector<80x32xf32>, vector<80x32xf32>, vector<80x32xf32> -> vector<80x288xf32>
    %c0_75 = arith.constant 0 : index
    %c0_76 = arith.constant 0 : index
    %87 = vector.load %arg6[%c0_75, %c0_76] : memref<288x32xf32, #tpu.memory_space<vmem>>, vector<288x32xf32>
    %cst_77 = arith.constant dense<0.000000e+00> : vector<80x32xf32>
    %88 = tpu.matmul %86, %87, %cst_77 {dimension_numbers = #tpu.dot_dimension_numbers<[1], [0], [0], [1], [0, 0, 1, 1], [], []>} : vector<80x288xf32>, vector<288x32xf32>, vector<80x32xf32> -> vector<80x32xf32>
    %c0_78 = arith.constant 0 : index
    %c0_79 = arith.constant 0 : index
    %89 = vector.load %arg7[%c0_78, %c0_79] : memref<1x32xf32, #tpu.memory_space<vmem>>, vector<1x32xf32>
    %90 = vector.broadcast %89 : vector<1x32xf32> to vector<80x32xf32>
    %91 = arith.addf %88, %90 : vector<80x32xf32>
    %cst_80 = arith.constant 0.000000e+00 : f32
    %92 = vector.broadcast %cst_80 : f32 to vector<80x32xf32>
    %93 = arith.maximumf %91, %92 : vector<80x32xf32>
    %94 = vector.extract_strided_slice %93 {offsets = [0, 0], sizes = [8, 32], strides = [1, 1]} : vector<80x32xf32> to vector<8x32xf32>
    %c26_81 = arith.constant 26 : index
    %c0_82 = arith.constant 0 : index
    %95 = vector.load %arg16[%c26_81, %c0_82] : memref<152x32xf32, #tpu.memory_space<vmem>>, vector<8x32xf32>
    tpu.vector_store %arg16[%c26_81, %c0_82], %94 {strides = array<i32>} : memref<152x32xf32, #tpu.memory_space<vmem>>, vector<8x32xf32>,
    %96 = vector.extract_strided_slice %93 {offsets = [10, 0], sizes = [8, 32], strides = [1, 1]} : vector<80x32xf32> to vector<8x32xf32>
    %c38 = arith.constant 38 : index
    %c0_83 = arith.constant 0 : index
    %97 = vector.load %arg16[%c38, %c0_83] : memref<152x32xf32, #tpu.memory_space<vmem>>, vector<8x32xf32>
    tpu.vector_store %arg16[%c38, %c0_83], %96 {strides = array<i32>} : memref<152x32xf32, #tpu.memory_space<vmem>>, vector<8x32xf32>,
    %98 = vector.extract_strided_slice %93 {offsets = [20, 0], sizes = [8, 32], strides = [1, 1]} : vector<80x32xf32> to vector<8x32xf32>
    %c50 = arith.constant 50 : index
    %c0_84 = arith.constant 0 : index
    %99 = vector.load %arg16[%c50, %c0_84] : memref<152x32xf32, #tpu.memory_space<vmem>>, vector<8x32xf32>
    tpu.vector_store %arg16[%c50, %c0_84], %98 {strides = array<i32>} : memref<152x32xf32, #tpu.memory_space<vmem>>, vector<8x32xf32>,
    %100 = vector.extract_strided_slice %93 {offsets = [30, 0], sizes = [8, 32], strides = [1, 1]} : vector<80x32xf32> to vector<8x32xf32>
    %c62_85 = arith.constant 62 : index
    %c0_86 = arith.constant 0 : index
    %101 = vector.load %arg16[%c62_85, %c0_86] : memref<152x32xf32, #tpu.memory_space<vmem>>, vector<8x32xf32>
    tpu.vector_store %arg16[%c62_85, %c0_86], %100 {strides = array<i32>} : memref<152x32xf32, #tpu.memory_space<vmem>>, vector<8x32xf32>,
    %102 = vector.extract_strided_slice %93 {offsets = [40, 0], sizes = [8, 32], strides = [1, 1]} : vector<80x32xf32> to vector<8x32xf32>
    %c74 = arith.constant 74 : index
    %c0_87 = arith.constant 0 : index
    %103 = vector.load %arg16[%c74, %c0_87] : memref<152x32xf32, #tpu.memory_space<vmem>>, vector<8x32xf32>
    tpu.vector_store %arg16[%c74, %c0_87], %102 {strides = array<i32>} : memref<152x32xf32, #tpu.memory_space<vmem>>, vector<8x32xf32>,
    %104 = vector.extract_strided_slice %93 {offsets = [50, 0], sizes = [8, 32], strides = [1, 1]} : vector<80x32xf32> to vector<8x32xf32>
    %c86 = arith.constant 86 : index
    %c0_88 = arith.constant 0 : index
    %105 = vector.load %arg16[%c86, %c0_88] : memref<152x32xf32, #tpu.memory_space<vmem>>, vector<8x32xf32>
    tpu.vector_store %arg16[%c86, %c0_88], %104 {strides = array<i32>} : memref<152x32xf32, #tpu.memory_space<vmem>>, vector<8x32xf32>,
    %106 = vector.extract_strided_slice %93 {offsets = [60, 0], sizes = [8, 32], strides = [1, 1]} : vector<80x32xf32> to vector<8x32xf32>
    %c98 = arith.constant 98 : index
    %c0_89 = arith.constant 0 : index
    %107 = vector.load %arg16[%c98, %c0_89] : memref<152x32xf32, #tpu.memory_space<vmem>>, vector<8x32xf32>
    tpu.vector_store %arg16[%c98, %c0_89], %106 {strides = array<i32>} : memref<152x32xf32, #tpu.memory_space<vmem>>, vector<8x32xf32>,
    %108 = vector.extract_strided_slice %93 {offsets = [70, 0], sizes = [8, 32], strides = [1, 1]} : vector<80x32xf32> to vector<8x32xf32>
    %c110 = arith.constant 110 : index
    %c0_90 = arith.constant 0 : index
    %109 = vector.load %arg16[%c110, %c0_90] : memref<152x32xf32, #tpu.memory_space<vmem>>, vector<8x32xf32>
    tpu.vector_store %arg16[%c110, %c0_90], %108 {strides = array<i32>} : memref<152x32xf32, #tpu.memory_space<vmem>>, vector<8x32xf32>,
    %c0_91 = arith.constant 0 : index
    %c0_92 = arith.constant 0 : index
    %110 = vector.load %arg16[%c0_91, %c0_92] : memref<152x32xf32, #tpu.memory_space<vmem>>, vector<120x32xf32>
    %c1_93 = arith.constant 1 : index
    %c0_94 = arith.constant 0 : index
    %111 = vector.load %arg16[%c1_93, %c0_94] : memref<152x32xf32, #tpu.memory_space<vmem>>, vector<120x32xf32>
    %c2_95 = arith.constant 2 : index
    %c0_96 = arith.constant 0 : index
    %112 = vector.load %arg16[%c2_95, %c0_96] : memref<152x32xf32, #tpu.memory_space<vmem>>, vector<120x32xf32>
    %c12_97 = arith.constant 12 : index
    %c0_98 = arith.constant 0 : index
    %113 = vector.load %arg16[%c12_97, %c0_98] : memref<152x32xf32, #tpu.memory_space<vmem>>, vector<120x32xf32>
    %c13 = arith.constant 13 : index
    %c0_99 = arith.constant 0 : index
    %114 = vector.load %arg16[%c13, %c0_99] : memref<152x32xf32, #tpu.memory_space<vmem>>, vector<120x32xf32>
    %c14 = arith.constant 14 : index
    %c0_100 = arith.constant 0 : index
    %115 = vector.load %arg16[%c14, %c0_100] : memref<152x32xf32, #tpu.memory_space<vmem>>, vector<120x32xf32>
    %c24 = arith.constant 24 : index
    %c0_101 = arith.constant 0 : index
    %116 = vector.load %arg16[%c24, %c0_101] : memref<152x32xf32, #tpu.memory_space<vmem>>, vector<120x32xf32>
    %c25 = arith.constant 25 : index
    %c0_102 = arith.constant 0 : index
    %117 = vector.load %arg16[%c25, %c0_102] : memref<152x32xf32, #tpu.memory_space<vmem>>, vector<120x32xf32>
    %c26_103 = arith.constant 26 : index
    %c0_104 = arith.constant 0 : index
    %118 = vector.load %arg16[%c26_103, %c0_104] : memref<152x32xf32, #tpu.memory_space<vmem>>, vector<120x32xf32>
    %119 = tpu.concatenate %110, %111, %112, %113, %114, %115, %116, %117, %118 in 1 : vector<120x32xf32>, vector<120x32xf32>, vector<120x32xf32>, vector<120x32xf32>, vector<120x32xf32>, vector<120x32xf32>, vector<120x32xf32>, vector<120x32xf32>, vector<120x32xf32> -> vector<120x288xf32>
    %c0_105 = arith.constant 0 : index
    %c0_106 = arith.constant 0 : index
    %120 = vector.load %arg8[%c0_105, %c0_106] : memref<288x32xf32, #tpu.memory_space<vmem>>, vector<288x32xf32>
    %cst_107 = arith.constant dense<0.000000e+00> : vector<120x32xf32>
    %121 = tpu.matmul %119, %120, %cst_107 {dimension_numbers = #tpu.dot_dimension_numbers<[1], [0], [0], [1], [0, 0, 1, 1], [], []>} : vector<120x288xf32>, vector<288x32xf32>, vector<120x32xf32> -> vector<120x32xf32>
    %c0_108 = arith.constant 0 : index
    %c0_109 = arith.constant 0 : index
    %122 = vector.load %arg9[%c0_108, %c0_109] : memref<1x32xf32, #tpu.memory_space<vmem>>, vector<1x32xf32>
    %123 = vector.broadcast %122 : vector<1x32xf32> to vector<120x32xf32>
    %124 = arith.addf %121, %123 : vector<120x32xf32>
    %cst_110 = arith.constant 0.000000e+00 : f32
    %125 = vector.broadcast %cst_110 : f32 to vector<120x32xf32>
    %126 = arith.maximumf %124, %125 : vector<120x32xf32>
    %127 = vector.extract_strided_slice %126 {offsets = [0, 0], sizes = [10, 32], strides = [1, 1]} : vector<120x32xf32> to vector<10x32xf32>
    %c0_111 = arith.constant 0 : index
    %c0_112 = arith.constant 0 : index
    %128 = vector.load %arg12[%c0_111, %c0_112] : memref<20x10xf32, #tpu.memory_space<vmem>>, vector<20x10xf32>
    %cst_113 = arith.constant dense<0.000000e+00> : vector<20x32xf32>
    %129 = tpu.matmul %128, %127, %cst_113 {dimension_numbers = #tpu.dot_dimension_numbers<[1], [0], [0], [1], [0, 0, 1, 1], [], []>} : vector<20x10xf32>, vector<10x32xf32>, vector<20x32xf32> -> vector<20x32xf32>
    %c50_114 = arith.constant 50 : index
    %c0_115 = arith.constant 0 : index
    %130 = vector.load %arg17[%c50_114, %c0_115] : memref<584x32xf32, #tpu.memory_space<vmem>>, vector<20x32xf32>
    tpu.vector_store %arg17[%c50_114, %c0_115], %129 {strides = array<i32>} : memref<584x32xf32, #tpu.memory_space<vmem>>, vector<20x32xf32>,
    %131 = vector.extract_strided_slice %126 {offsets = [12, 0], sizes = [10, 32], strides = [1, 1]} : vector<120x32xf32> to vector<10x32xf32>
    %c0_116 = arith.constant 0 : index
    %c0_117 = arith.constant 0 : index
    %132 = vector.load %arg12[%c0_116, %c0_117] : memref<20x10xf32, #tpu.memory_space<vmem>>, vector<20x10xf32>
    %cst_118 = arith.constant dense<0.000000e+00> : vector<20x32xf32>
    %133 = tpu.matmul %132, %131, %cst_118 {dimension_numbers = #tpu.dot_dimension_numbers<[1], [0], [0], [1], [0, 0, 1, 1], [], []>} : vector<20x10xf32>, vector<10x32xf32>, vector<20x32xf32> -> vector<20x32xf32>
    %c98_119 = arith.constant 98 : index
    %c0_120 = arith.constant 0 : index
    %134 = vector.load %arg17[%c98_119, %c0_120] : memref<584x32xf32, #tpu.memory_space<vmem>>, vector<20x32xf32>
    tpu.vector_store %arg17[%c98_119, %c0_120], %133 {strides = array<i32>} : memref<584x32xf32, #tpu.memory_space<vmem>>, vector<20x32xf32>,
    %135 = vector.extract_strided_slice %126 {offsets = [24, 0], sizes = [10, 32], strides = [1, 1]} : vector<120x32xf32> to vector<10x32xf32>
    %c0_121 = arith.constant 0 : index
    %c0_122 = arith.constant 0 : index
    %136 = vector.load %arg12[%c0_121, %c0_122] : memref<20x10xf32, #tpu.memory_space<vmem>>, vector<20x10xf32>
    %cst_123 = arith.constant dense<0.000000e+00> : vector<20x32xf32>
    %137 = tpu.matmul %136, %135, %cst_123 {dimension_numbers = #tpu.dot_dimension_numbers<[1], [0], [0], [1], [0, 0, 1, 1], [], []>} : vector<20x10xf32>, vector<10x32xf32>, vector<20x32xf32> -> vector<20x32xf32>
    %c146 = arith.constant 146 : index
    %c0_124 = arith.constant 0 : index
    %138 = vector.load %arg17[%c146, %c0_124] : memref<584x32xf32, #tpu.memory_space<vmem>>, vector<20x32xf32>
    tpu.vector_store %arg17[%c146, %c0_124], %137 {strides = array<i32>} : memref<584x32xf32, #tpu.memory_space<vmem>>, vector<20x32xf32>,
    %139 = vector.extract_strided_slice %126 {offsets = [36, 0], sizes = [10, 32], strides = [1, 1]} : vector<120x32xf32> to vector<10x32xf32>
    %c0_125 = arith.constant 0 : index
    %c0_126 = arith.constant 0 : index
    %140 = vector.load %arg12[%c0_125, %c0_126] : memref<20x10xf32, #tpu.memory_space<vmem>>, vector<20x10xf32>
    %cst_127 = arith.constant dense<0.000000e+00> : vector<20x32xf32>
    %141 = tpu.matmul %140, %139, %cst_127 {dimension_numbers = #tpu.dot_dimension_numbers<[1], [0], [0], [1], [0, 0, 1, 1], [], []>} : vector<20x10xf32>, vector<10x32xf32>, vector<20x32xf32> -> vector<20x32xf32>
    %c194 = arith.constant 194 : index
    %c0_128 = arith.constant 0 : index
    %142 = vector.load %arg17[%c194, %c0_128] : memref<584x32xf32, #tpu.memory_space<vmem>>, vector<20x32xf32>
    tpu.vector_store %arg17[%c194, %c0_128], %141 {strides = array<i32>} : memref<584x32xf32, #tpu.memory_space<vmem>>, vector<20x32xf32>,
    %143 = vector.extract_strided_slice %126 {offsets = [48, 0], sizes = [10, 32], strides = [1, 1]} : vector<120x32xf32> to vector<10x32xf32>
    %c0_129 = arith.constant 0 : index
    %c0_130 = arith.constant 0 : index
    %144 = vector.load %arg12[%c0_129, %c0_130] : memref<20x10xf32, #tpu.memory_space<vmem>>, vector<20x10xf32>
    %cst_131 = arith.constant dense<0.000000e+00> : vector<20x32xf32>
    %145 = tpu.matmul %144, %143, %cst_131 {dimension_numbers = #tpu.dot_dimension_numbers<[1], [0], [0], [1], [0, 0, 1, 1], [], []>} : vector<20x10xf32>, vector<10x32xf32>, vector<20x32xf32> -> vector<20x32xf32>
    %c242 = arith.constant 242 : index
    %c0_132 = arith.constant 0 : index
    %146 = vector.load %arg17[%c242, %c0_132] : memref<584x32xf32, #tpu.memory_space<vmem>>, vector<20x32xf32>
    tpu.vector_store %arg17[%c242, %c0_132], %145 {strides = array<i32>} : memref<584x32xf32, #tpu.memory_space<vmem>>, vector<20x32xf32>,
    %147 = vector.extract_strided_slice %126 {offsets = [60, 0], sizes = [10, 32], strides = [1, 1]} : vector<120x32xf32> to vector<10x32xf32>
    %c0_133 = arith.constant 0 : index
    %c0_134 = arith.constant 0 : index
    %148 = vector.load %arg12[%c0_133, %c0_134] : memref<20x10xf32, #tpu.memory_space<vmem>>, vector<20x10xf32>
    %cst_135 = arith.constant dense<0.000000e+00> : vector<20x32xf32>
    %149 = tpu.matmul %148, %147, %cst_135 {dimension_numbers = #tpu.dot_dimension_numbers<[1], [0], [0], [1], [0, 0, 1, 1], [], []>} : vector<20x10xf32>, vector<10x32xf32>, vector<20x32xf32> -> vector<20x32xf32>
    %c290 = arith.constant 290 : index
    %c0_136 = arith.constant 0 : index
    %150 = vector.load %arg17[%c290, %c0_136] : memref<584x32xf32, #tpu.memory_space<vmem>>, vector<20x32xf32>
    tpu.vector_store %arg17[%c290, %c0_136], %149 {strides = array<i32>} : memref<584x32xf32, #tpu.memory_space<vmem>>, vector<20x32xf32>,
    %151 = vector.extract_strided_slice %126 {offsets = [72, 0], sizes = [10, 32], strides = [1, 1]} : vector<120x32xf32> to vector<10x32xf32>
    %c0_137 = arith.constant 0 : index
    %c0_138 = arith.constant 0 : index
    %152 = vector.load %arg12[%c0_137, %c0_138] : memref<20x10xf32, #tpu.memory_space<vmem>>, vector<20x10xf32>
    %cst_139 = arith.constant dense<0.000000e+00> : vector<20x32xf32>
    %153 = tpu.matmul %152, %151, %cst_139 {dimension_numbers = #tpu.dot_dimension_numbers<[1], [0], [0], [1], [0, 0, 1, 1], [], []>} : vector<20x10xf32>, vector<10x32xf32>, vector<20x32xf32> -> vector<20x32xf32>
    %c338 = arith.constant 338 : index
    %c0_140 = arith.constant 0 : index
    %154 = vector.load %arg17[%c338, %c0_140] : memref<584x32xf32, #tpu.memory_space<vmem>>, vector<20x32xf32>
    tpu.vector_store %arg17[%c338, %c0_140], %153 {strides = array<i32>} : memref<584x32xf32, #tpu.memory_space<vmem>>, vector<20x32xf32>,
    %155 = vector.extract_strided_slice %126 {offsets = [84, 0], sizes = [10, 32], strides = [1, 1]} : vector<120x32xf32> to vector<10x32xf32>
    %c0_141 = arith.constant 0 : index
    %c0_142 = arith.constant 0 : index
    %156 = vector.load %arg12[%c0_141, %c0_142] : memref<20x10xf32, #tpu.memory_space<vmem>>, vector<20x10xf32>
    %cst_143 = arith.constant dense<0.000000e+00> : vector<20x32xf32>
    %157 = tpu.matmul %156, %155, %cst_143 {dimension_numbers = #tpu.dot_dimension_numbers<[1], [0], [0], [1], [0, 0, 1, 1], [], []>} : vector<20x10xf32>, vector<10x32xf32>, vector<20x32xf32> -> vector<20x32xf32>
    %c386 = arith.constant 386 : index
    %c0_144 = arith.constant 0 : index
    %158 = vector.load %arg17[%c386, %c0_144] : memref<584x32xf32, #tpu.memory_space<vmem>>, vector<20x32xf32>
    tpu.vector_store %arg17[%c386, %c0_144], %157 {strides = array<i32>} : memref<584x32xf32, #tpu.memory_space<vmem>>, vector<20x32xf32>,
    %159 = vector.extract_strided_slice %126 {offsets = [96, 0], sizes = [10, 32], strides = [1, 1]} : vector<120x32xf32> to vector<10x32xf32>
    %c0_145 = arith.constant 0 : index
    %c0_146 = arith.constant 0 : index
    %160 = vector.load %arg12[%c0_145, %c0_146] : memref<20x10xf32, #tpu.memory_space<vmem>>, vector<20x10xf32>
    %cst_147 = arith.constant dense<0.000000e+00> : vector<20x32xf32>
    %161 = tpu.matmul %160, %159, %cst_147 {dimension_numbers = #tpu.dot_dimension_numbers<[1], [0], [0], [1], [0, 0, 1, 1], [], []>} : vector<20x10xf32>, vector<10x32xf32>, vector<20x32xf32> -> vector<20x32xf32>
    %c434 = arith.constant 434 : index
    %c0_148 = arith.constant 0 : index
    %162 = vector.load %arg17[%c434, %c0_148] : memref<584x32xf32, #tpu.memory_space<vmem>>, vector<20x32xf32>
    tpu.vector_store %arg17[%c434, %c0_148], %161 {strides = array<i32>} : memref<584x32xf32, #tpu.memory_space<vmem>>, vector<20x32xf32>,
    %163 = vector.extract_strided_slice %126 {offsets = [108, 0], sizes = [10, 32], strides = [1, 1]} : vector<120x32xf32> to vector<10x32xf32>
    %c0_149 = arith.constant 0 : index
    %c0_150 = arith.constant 0 : index
    %164 = vector.load %arg12[%c0_149, %c0_150] : memref<20x10xf32, #tpu.memory_space<vmem>>, vector<20x10xf32>
    %cst_151 = arith.constant dense<0.000000e+00> : vector<20x32xf32>
    %165 = tpu.matmul %164, %163, %cst_151 {dimension_numbers = #tpu.dot_dimension_numbers<[1], [0], [0], [1], [0, 0, 1, 1], [], []>} : vector<20x10xf32>, vector<10x32xf32>, vector<20x32xf32> -> vector<20x32xf32>
    %c482 = arith.constant 482 : index
    %c0_152 = arith.constant 0 : index
    %166 = vector.load %arg17[%c482, %c0_152] : memref<584x32xf32, #tpu.memory_space<vmem>>, vector<20x32xf32>
    tpu.vector_store %arg17[%c482, %c0_152], %165 {strides = array<i32>} : memref<584x32xf32, #tpu.memory_space<vmem>>, vector<20x32xf32>,
    %c0_153 = arith.constant 0 : index
    %c0_154 = arith.constant 0 : index
    %167 = vector.load %arg17[%c0_153, %c0_154] : memref<584x32xf32, #tpu.memory_space<vmem>>, vector<528x32xf32>
    %c1_155 = arith.constant 1 : index
    %c0_156 = arith.constant 0 : index
    %168 = vector.load %arg17[%c1_155, %c0_156] : memref<584x32xf32, #tpu.memory_space<vmem>>, vector<528x32xf32>
    %c2_157 = arith.constant 2 : index
    %c0_158 = arith.constant 0 : index
    %169 = vector.load %arg17[%c2_157, %c0_158] : memref<584x32xf32, #tpu.memory_space<vmem>>, vector<528x32xf32>
    %c24_159 = arith.constant 24 : index
    %c0_160 = arith.constant 0 : index
    %170 = vector.load %arg17[%c24_159, %c0_160] : memref<584x32xf32, #tpu.memory_space<vmem>>, vector<528x32xf32>
    %c25_161 = arith.constant 25 : index
    %c0_162 = arith.constant 0 : index
    %171 = vector.load %arg17[%c25_161, %c0_162] : memref<584x32xf32, #tpu.memory_space<vmem>>, vector<528x32xf32>
    %c26_163 = arith.constant 26 : index
    %c0_164 = arith.constant 0 : index
    %172 = vector.load %arg17[%c26_163, %c0_164] : memref<584x32xf32, #tpu.memory_space<vmem>>, vector<528x32xf32>
    %c48 = arith.constant 48 : index
    %c0_165 = arith.constant 0 : index
    %173 = vector.load %arg17[%c48, %c0_165] : memref<584x32xf32, #tpu.memory_space<vmem>>, vector<528x32xf32>
    %c49 = arith.constant 49 : index
    %c0_166 = arith.constant 0 : index
    %174 = vector.load %arg17[%c49, %c0_166] : memref<584x32xf32, #tpu.memory_space<vmem>>, vector<528x32xf32>
    %c50_167 = arith.constant 50 : index
    %c0_168 = arith.constant 0 : index
    %175 = vector.load %arg17[%c50_167, %c0_168] : memref<584x32xf32, #tpu.memory_space<vmem>>, vector<528x32xf32>
    %176 = tpu.concatenate %167, %168, %169, %170, %171, %172, %173, %174, %175 in 1 : vector<528x32xf32>, vector<528x32xf32>, vector<528x32xf32>, vector<528x32xf32>, vector<528x32xf32>, vector<528x32xf32>, vector<528x32xf32>, vector<528x32xf32>, vector<528x32xf32> -> vector<528x288xf32>
    %c0_169 = arith.constant 0 : index
    %c0_170 = arith.constant 0 : index
    %177 = vector.load %arg10[%c0_169, %c0_170] : memref<3x288xf32, #tpu.memory_space<vmem>>, vector<3x288xf32>
    %cst_171 = arith.constant dense<0.000000e+00> : vector<3x528xf32>
    %178 = tpu.matmul %177, %176, %cst_171 {dimension_numbers = #tpu.dot_dimension_numbers<[1], [1], [0], [0], [0, 0, 1, 0], [], []>} : vector<3x288xf32>, vector<528x288xf32>, vector<3x528xf32> -> vector<3x528xf32>
    %c0_172 = arith.constant 0 : index
    %c0_173 = arith.constant 0 : index
    %179 = vector.load %arg11[%c0_172, %c0_173] : memref<3x1xf32, #tpu.memory_space<vmem>>, vector<3x1xf32>
    %180 = vector.broadcast %179 : vector<3x1xf32> to vector<3x528xf32>
    %181 = arith.addf %178, %180 : vector<3x528xf32>
    %182 = vector.extract_strided_slice %181 {offsets = [0, 0], sizes = [3, 22], strides = [1, 1]} : vector<3x528xf32> to vector<3x22xf32>
    %183 = vector.shape_cast %182 : vector<3x22xf32> to vector<3x1x22xf32>
    %c0_174 = arith.constant 0 : index
    %c0_175 = arith.constant 0 : index
    %c0_176 = arith.constant 0 : index
    %c0_177 = arith.constant 0 : index
    %184 = vector.load %arg13[%c0_174, %c0_175, %c0_176, %c0_177] : memref<1x3x22x22xf32, #tpu.memory_space<vmem>>, vector<1x3x1x22xf32>
    %185 = vector.shape_cast %184 : vector<1x3x1x22xf32> to vector<3x1x22xf32>
    %186 = vector.shape_cast %183 : vector<3x1x22xf32> to vector<1x3x1x22xf32>
    tpu.vector_store %arg13[%c0_174, %c0_175, %c0_176, %c0_177], %186 {strides = array<i32>} : memref<1x3x22x22xf32, #tpu.memory_space<vmem>>, vector<1x3x1x22xf32>,
    %187 = vector.extract_strided_slice %181 {offsets = [0, 24], sizes = [3, 22], strides = [1, 1]} : vector<3x528xf32> to vector<3x22xf32>
    %188 = vector.shape_cast %187 : vector<3x22xf32> to vector<3x1x22xf32>
    %c0_178 = arith.constant 0 : index
    %c0_179 = arith.constant 0 : index
    %c1_180 = arith.constant 1 : index
    %c0_181 = arith.constant 0 : index
    %189 = vector.load %arg13[%c0_178, %c0_179, %c1_180, %c0_181] : memref<1x3x22x22xf32, #tpu.memory_space<vmem>>, vector<1x3x1x22xf32>
    %190 = vector.shape_cast %189 : vector<1x3x1x22xf32> to vector<3x1x22xf32>
    %191 = vector.shape_cast %188 : vector<3x1x22xf32> to vector<1x3x1x22xf32>
    tpu.vector_store %arg13[%c0_178, %c0_179, %c1_180, %c0_181], %191 {strides = array<i32>} : memref<1x3x22x22xf32, #tpu.memory_space<vmem>>, vector<1x3x1x22xf32>,
    %192 = vector.extract_strided_slice %181 {offsets = [0, 48], sizes = [3, 22], strides = [1, 1]} : vector<3x528xf32> to vector<3x22xf32>
    %193 = vector.shape_cast %192 : vector<3x22xf32> to vector<3x1x22xf32>
    %c0_182 = arith.constant 0 : index
    %c0_183 = arith.constant 0 : index
    %c2_184 = arith.constant 2 : index
    %c0_185 = arith.constant 0 : index
    %194 = vector.load %arg13[%c0_182, %c0_183, %c2_184, %c0_185] : memref<1x3x22x22xf32, #tpu.memory_space<vmem>>, vector<1x3x1x22xf32>
    %195 = vector.shape_cast %194 : vector<1x3x1x22xf32> to vector<3x1x22xf32>
    %196 = vector.shape_cast %193 : vector<3x1x22xf32> to vector<1x3x1x22xf32>
    tpu.vector_store %arg13[%c0_182, %c0_183, %c2_184, %c0_185], %196 {strides = array<i32>} : memref<1x3x22x22xf32, #tpu.memory_space<vmem>>, vector<1x3x1x22xf32>,
    %197 = vector.extract_strided_slice %181 {offsets = [0, 72], sizes = [3, 22], strides = [1, 1]} : vector<3x528xf32> to vector<3x22xf32>
    %198 = vector.shape_cast %197 : vector<3x22xf32> to vector<3x1x22xf32>
    %c0_186 = arith.constant 0 : index
    %c0_187 = arith.constant 0 : index
    %c3 = arith.constant 3 : index
    %c0_188 = arith.constant 0 : index
    %199 = vector.load %arg13[%c0_186, %c0_187, %c3, %c0_188] : memref<1x3x22x22xf32, #tpu.memory_space<vmem>>, vector<1x3x1x22xf32>
    %200 = vector.shape_cast %199 : vector<1x3x1x22xf32> to vector<3x1x22xf32>
    %201 = vector.shape_cast %198 : vector<3x1x22xf32> to vector<1x3x1x22xf32>
    tpu.vector_store %arg13[%c0_186, %c0_187, %c3, %c0_188], %201 {strides = array<i32>} : memref<1x3x22x22xf32, #tpu.memory_space<vmem>>, vector<1x3x1x22xf32>,
    %202 = vector.extract_strided_slice %181 {offsets = [0, 96], sizes = [3, 22], strides = [1, 1]} : vector<3x528xf32> to vector<3x22xf32>
    %203 = vector.shape_cast %202 : vector<3x22xf32> to vector<3x1x22xf32>
    %c0_189 = arith.constant 0 : index
    %c0_190 = arith.constant 0 : index
    %c4 = arith.constant 4 : index
    %c0_191 = arith.constant 0 : index
    %204 = vector.load %arg13[%c0_189, %c0_190, %c4, %c0_191] : memref<1x3x22x22xf32, #tpu.memory_space<vmem>>, vector<1x3x1x22xf32>
    %205 = vector.shape_cast %204 : vector<1x3x1x22xf32> to vector<3x1x22xf32>
    %206 = vector.shape_cast %203 : vector<3x1x22xf32> to vector<1x3x1x22xf32>
    tpu.vector_store %arg13[%c0_189, %c0_190, %c4, %c0_191], %206 {strides = array<i32>} : memref<1x3x22x22xf32, #tpu.memory_space<vmem>>, vector<1x3x1x22xf32>,
    %207 = vector.extract_strided_slice %181 {offsets = [0, 120], sizes = [3, 22], strides = [1, 1]} : vector<3x528xf32> to vector<3x22xf32>
    %208 = vector.shape_cast %207 : vector<3x22xf32> to vector<3x1x22xf32>
    %c0_192 = arith.constant 0 : index
    %c0_193 = arith.constant 0 : index
    %c5 = arith.constant 5 : index
    %c0_194 = arith.constant 0 : index
    %209 = vector.load %arg13[%c0_192, %c0_193, %c5, %c0_194] : memref<1x3x22x22xf32, #tpu.memory_space<vmem>>, vector<1x3x1x22xf32>
    %210 = vector.shape_cast %209 : vector<1x3x1x22xf32> to vector<3x1x22xf32>
    %211 = vector.shape_cast %208 : vector<3x1x22xf32> to vector<1x3x1x22xf32>
    tpu.vector_store %arg13[%c0_192, %c0_193, %c5, %c0_194], %211 {strides = array<i32>} : memref<1x3x22x22xf32, #tpu.memory_space<vmem>>, vector<1x3x1x22xf32>,
    %212 = vector.extract_strided_slice %181 {offsets = [0, 144], sizes = [3, 22], strides = [1, 1]} : vector<3x528xf32> to vector<3x22xf32>
    %213 = vector.shape_cast %212 : vector<3x22xf32> to vector<3x1x22xf32>
    %c0_195 = arith.constant 0 : index
    %c0_196 = arith.constant 0 : index
    %c6 = arith.constant 6 : index
    %c0_197 = arith.constant 0 : index
    %214 = vector.load %arg13[%c0_195, %c0_196, %c6, %c0_197] : memref<1x3x22x22xf32, #tpu.memory_space<vmem>>, vector<1x3x1x22xf32>
    %215 = vector.shape_cast %214 : vector<1x3x1x22xf32> to vector<3x1x22xf32>
    %216 = vector.shape_cast %213 : vector<3x1x22xf32> to vector<1x3x1x22xf32>
    tpu.vector_store %arg13[%c0_195, %c0_196, %c6, %c0_197], %216 {strides = array<i32>} : memref<1x3x22x22xf32, #tpu.memory_space<vmem>>, vector<1x3x1x22xf32>,
    %217 = vector.extract_strided_slice %181 {offsets = [0, 168], sizes = [3, 22], strides = [1, 1]} : vector<3x528xf32> to vector<3x22xf32>
    %218 = vector.shape_cast %217 : vector<3x22xf32> to vector<3x1x22xf32>
    %c0_198 = arith.constant 0 : index
    %c0_199 = arith.constant 0 : index
    %c7 = arith.constant 7 : index
    %c0_200 = arith.constant 0 : index
    %219 = vector.load %arg13[%c0_198, %c0_199, %c7, %c0_200] : memref<1x3x22x22xf32, #tpu.memory_space<vmem>>, vector<1x3x1x22xf32>
    %220 = vector.shape_cast %219 : vector<1x3x1x22xf32> to vector<3x1x22xf32>
    %221 = vector.shape_cast %218 : vector<3x1x22xf32> to vector<1x3x1x22xf32>
    tpu.vector_store %arg13[%c0_198, %c0_199, %c7, %c0_200], %221 {strides = array<i32>} : memref<1x3x22x22xf32, #tpu.memory_space<vmem>>, vector<1x3x1x22xf32>,
    %222 = vector.extract_strided_slice %181 {offsets = [0, 192], sizes = [3, 22], strides = [1, 1]} : vector<3x528xf32> to vector<3x22xf32>
    %223 = vector.shape_cast %222 : vector<3x22xf32> to vector<3x1x22xf32>
    %c0_201 = arith.constant 0 : index
    %c0_202 = arith.constant 0 : index
    %c8_203 = arith.constant 8 : index
    %c0_204 = arith.constant 0 : index
    %224 = vector.load %arg13[%c0_201, %c0_202, %c8_203, %c0_204] : memref<1x3x22x22xf32, #tpu.memory_space<vmem>>, vector<1x3x1x22xf32>
    %225 = vector.shape_cast %224 : vector<1x3x1x22xf32> to vector<3x1x22xf32>
    %226 = vector.shape_cast %223 : vector<3x1x22xf32> to vector<1x3x1x22xf32>
    tpu.vector_store %arg13[%c0_201, %c0_202, %c8_203, %c0_204], %226 {strides = array<i32>} : memref<1x3x22x22xf32, #tpu.memory_space<vmem>>, vector<1x3x1x22xf32>,
    %227 = vector.extract_strided_slice %181 {offsets = [0, 216], sizes = [3, 22], strides = [1, 1]} : vector<3x528xf32> to vector<3x22xf32>
    %228 = vector.shape_cast %227 : vector<3x22xf32> to vector<3x1x22xf32>
    %c0_205 = arith.constant 0 : index
    %c0_206 = arith.constant 0 : index
    %c9_207 = arith.constant 9 : index
    %c0_208 = arith.constant 0 : index
    %229 = vector.load %arg13[%c0_205, %c0_206, %c9_207, %c0_208] : memref<1x3x22x22xf32, #tpu.memory_space<vmem>>, vector<1x3x1x22xf32>
    %230 = vector.shape_cast %229 : vector<1x3x1x22xf32> to vector<3x1x22xf32>
    %231 = vector.shape_cast %228 : vector<3x1x22xf32> to vector<1x3x1x22xf32>
    tpu.vector_store %arg13[%c0_205, %c0_206, %c9_207, %c0_208], %231 {strides = array<i32>} : memref<1x3x22x22xf32, #tpu.memory_space<vmem>>, vector<1x3x1x22xf32>,
    %232 = vector.extract_strided_slice %181 {offsets = [0, 240], sizes = [3, 22], strides = [1, 1]} : vector<3x528xf32> to vector<3x22xf32>
    %233 = vector.shape_cast %232 : vector<3x22xf32> to vector<3x1x22xf32>
    %c0_209 = arith.constant 0 : index
    %c0_210 = arith.constant 0 : index
    %c10_211 = arith.constant 10 : index
    %c0_212 = arith.constant 0 : index
    %234 = vector.load %arg13[%c0_209, %c0_210, %c10_211, %c0_212] : memref<1x3x22x22xf32, #tpu.memory_space<vmem>>, vector<1x3x1x22xf32>
    %235 = vector.shape_cast %234 : vector<1x3x1x22xf32> to vector<3x1x22xf32>
    %236 = vector.shape_cast %233 : vector<3x1x22xf32> to vector<1x3x1x22xf32>
    tpu.vector_store %arg13[%c0_209, %c0_210, %c10_211, %c0_212], %236 {strides = array<i32>} : memref<1x3x22x22xf32, #tpu.memory_space<vmem>>, vector<1x3x1x22xf32>,
    %237 = vector.extract_strided_slice %181 {offsets = [0, 264], sizes = [3, 22], strides = [1, 1]} : vector<3x528xf32> to vector<3x22xf32>
    %238 = vector.shape_cast %237 : vector<3x22xf32> to vector<3x1x22xf32>
    %c0_213 = arith.constant 0 : index
    %c0_214 = arith.constant 0 : index
    %c11_215 = arith.constant 11 : index
    %c0_216 = arith.constant 0 : index
    %239 = vector.load %arg13[%c0_213, %c0_214, %c11_215, %c0_216] : memref<1x3x22x22xf32, #tpu.memory_space<vmem>>, vector<1x3x1x22xf32>
    %240 = vector.shape_cast %239 : vector<1x3x1x22xf32> to vector<3x1x22xf32>
    %241 = vector.shape_cast %238 : vector<3x1x22xf32> to vector<1x3x1x22xf32>
    tpu.vector_store %arg13[%c0_213, %c0_214, %c11_215, %c0_216], %241 {strides = array<i32>} : memref<1x3x22x22xf32, #tpu.memory_space<vmem>>, vector<1x3x1x22xf32>,
    %242 = vector.extract_strided_slice %181 {offsets = [0, 288], sizes = [3, 22], strides = [1, 1]} : vector<3x528xf32> to vector<3x22xf32>
    %243 = vector.shape_cast %242 : vector<3x22xf32> to vector<3x1x22xf32>
    %c0_217 = arith.constant 0 : index
    %c0_218 = arith.constant 0 : index
    %c12_219 = arith.constant 12 : index
    %c0_220 = arith.constant 0 : index
    %244 = vector.load %arg13[%c0_217, %c0_218, %c12_219, %c0_220] : memref<1x3x22x22xf32, #tpu.memory_space<vmem>>, vector<1x3x1x22xf32>
    %245 = vector.shape_cast %244 : vector<1x3x1x22xf32> to vector<3x1x22xf32>
    %246 = vector.shape_cast %243 : vector<3x1x22xf32> to vector<1x3x1x22xf32>
    tpu.vector_store %arg13[%c0_217, %c0_218, %c12_219, %c0_220], %246 {strides = array<i32>} : memref<1x3x22x22xf32, #tpu.memory_space<vmem>>, vector<1x3x1x22xf32>,
    %247 = vector.extract_strided_slice %181 {offsets = [0, 312], sizes = [3, 22], strides = [1, 1]} : vector<3x528xf32> to vector<3x22xf32>
    %248 = vector.shape_cast %247 : vector<3x22xf32> to vector<3x1x22xf32>
    %c0_221 = arith.constant 0 : index
    %c0_222 = arith.constant 0 : index
    %c13_223 = arith.constant 13 : index
    %c0_224 = arith.constant 0 : index
    %249 = vector.load %arg13[%c0_221, %c0_222, %c13_223, %c0_224] : memref<1x3x22x22xf32, #tpu.memory_space<vmem>>, vector<1x3x1x22xf32>
    %250 = vector.shape_cast %249 : vector<1x3x1x22xf32> to vector<3x1x22xf32>
    %251 = vector.shape_cast %248 : vector<3x1x22xf32> to vector<1x3x1x22xf32>
    tpu.vector_store %arg13[%c0_221, %c0_222, %c13_223, %c0_224], %251 {strides = array<i32>} : memref<1x3x22x22xf32, #tpu.memory_space<vmem>>, vector<1x3x1x22xf32>,
    %252 = vector.extract_strided_slice %181 {offsets = [0, 336], sizes = [3, 22], strides = [1, 1]} : vector<3x528xf32> to vector<3x22xf32>
    %253 = vector.shape_cast %252 : vector<3x22xf32> to vector<3x1x22xf32>
    %c0_225 = arith.constant 0 : index
    %c0_226 = arith.constant 0 : index
    %c14_227 = arith.constant 14 : index
    %c0_228 = arith.constant 0 : index
    %254 = vector.load %arg13[%c0_225, %c0_226, %c14_227, %c0_228] : memref<1x3x22x22xf32, #tpu.memory_space<vmem>>, vector<1x3x1x22xf32>
    %255 = vector.shape_cast %254 : vector<1x3x1x22xf32> to vector<3x1x22xf32>
    %256 = vector.shape_cast %253 : vector<3x1x22xf32> to vector<1x3x1x22xf32>
    tpu.vector_store %arg13[%c0_225, %c0_226, %c14_227, %c0_228], %256 {strides = array<i32>} : memref<1x3x22x22xf32, #tpu.memory_space<vmem>>, vector<1x3x1x22xf32>,
    %257 = vector.extract_strided_slice %181 {offsets = [0, 360], sizes = [3, 22], strides = [1, 1]} : vector<3x528xf32> to vector<3x22xf32>
    %258 = vector.shape_cast %257 : vector<3x22xf32> to vector<3x1x22xf32>
    %c0_229 = arith.constant 0 : index
    %c0_230 = arith.constant 0 : index
    %c15 = arith.constant 15 : index
    %c0_231 = arith.constant 0 : index
    %259 = vector.load %arg13[%c0_229, %c0_230, %c15, %c0_231] : memref<1x3x22x22xf32, #tpu.memory_space<vmem>>, vector<1x3x1x22xf32>
    %260 = vector.shape_cast %259 : vector<1x3x1x22xf32> to vector<3x1x22xf32>
    %261 = vector.shape_cast %258 : vector<3x1x22xf32> to vector<1x3x1x22xf32>
    tpu.vector_store %arg13[%c0_229, %c0_230, %c15, %c0_231], %261 {strides = array<i32>} : memref<1x3x22x22xf32, #tpu.memory_space<vmem>>, vector<1x3x1x22xf32>,
    %262 = vector.extract_strided_slice %181 {offsets = [0, 384], sizes = [3, 22], strides = [1, 1]} : vector<3x528xf32> to vector<3x22xf32>
    %263 = vector.shape_cast %262 : vector<3x22xf32> to vector<3x1x22xf32>
    %c0_232 = arith.constant 0 : index
    %c0_233 = arith.constant 0 : index
    %c16_234 = arith.constant 16 : index
    %c0_235 = arith.constant 0 : index
    %264 = vector.load %arg13[%c0_232, %c0_233, %c16_234, %c0_235] : memref<1x3x22x22xf32, #tpu.memory_space<vmem>>, vector<1x3x1x22xf32>
    %265 = vector.shape_cast %264 : vector<1x3x1x22xf32> to vector<3x1x22xf32>
    %266 = vector.shape_cast %263 : vector<3x1x22xf32> to vector<1x3x1x22xf32>
    tpu.vector_store %arg13[%c0_232, %c0_233, %c16_234, %c0_235], %266 {strides = array<i32>} : memref<1x3x22x22xf32, #tpu.memory_space<vmem>>, vector<1x3x1x22xf32>,
    %267 = vector.extract_strided_slice %181 {offsets = [0, 408], sizes = [3, 22], strides = [1, 1]} : vector<3x528xf32> to vector<3x22xf32>
    %268 = vector.shape_cast %267 : vector<3x22xf32> to vector<3x1x22xf32>
    %c0_236 = arith.constant 0 : index
    %c0_237 = arith.constant 0 : index
    %c17_238 = arith.constant 17 : index
    %c0_239 = arith.constant 0 : index
    %269 = vector.load %arg13[%c0_236, %c0_237, %c17_238, %c0_239] : memref<1x3x22x22xf32, #tpu.memory_space<vmem>>, vector<1x3x1x22xf32>
    %270 = vector.shape_cast %269 : vector<1x3x1x22xf32> to vector<3x1x22xf32>
    %271 = vector.shape_cast %268 : vector<3x1x22xf32> to vector<1x3x1x22xf32>
    tpu.vector_store %arg13[%c0_236, %c0_237, %c17_238, %c0_239], %271 {strides = array<i32>} : memref<1x3x22x22xf32, #tpu.memory_space<vmem>>, vector<1x3x1x22xf32>,
    %272 = vector.extract_strided_slice %181 {offsets = [0, 432], sizes = [3, 22], strides = [1, 1]} : vector<3x528xf32> to vector<3x22xf32>
    %273 = vector.shape_cast %272 : vector<3x22xf32> to vector<3x1x22xf32>
    %c0_240 = arith.constant 0 : index
    %c0_241 = arith.constant 0 : index
    %c18_242 = arith.constant 18 : index
    %c0_243 = arith.constant 0 : index
    %274 = vector.load %arg13[%c0_240, %c0_241, %c18_242, %c0_243] : memref<1x3x22x22xf32, #tpu.memory_space<vmem>>, vector<1x3x1x22xf32>
    %275 = vector.shape_cast %274 : vector<1x3x1x22xf32> to vector<3x1x22xf32>
    %276 = vector.shape_cast %273 : vector<3x1x22xf32> to vector<1x3x1x22xf32>
    tpu.vector_store %arg13[%c0_240, %c0_241, %c18_242, %c0_243], %276 {strides = array<i32>} : memref<1x3x22x22xf32, #tpu.memory_space<vmem>>, vector<1x3x1x22xf32>,
    %277 = vector.extract_strided_slice %181 {offsets = [0, 456], sizes = [3, 22], strides = [1, 1]} : vector<3x528xf32> to vector<3x22xf32>
    %278 = vector.shape_cast %277 : vector<3x22xf32> to vector<3x1x22xf32>
    %c0_244 = arith.constant 0 : index
    %c0_245 = arith.constant 0 : index
    %c19_246 = arith.constant 19 : index
    %c0_247 = arith.constant 0 : index
    %279 = vector.load %arg13[%c0_244, %c0_245, %c19_246, %c0_247] : memref<1x3x22x22xf32, #tpu.memory_space<vmem>>, vector<1x3x1x22xf32>
    %280 = vector.shape_cast %279 : vector<1x3x1x22xf32> to vector<3x1x22xf32>
    %281 = vector.shape_cast %278 : vector<3x1x22xf32> to vector<1x3x1x22xf32>
    tpu.vector_store %arg13[%c0_244, %c0_245, %c19_246, %c0_247], %281 {strides = array<i32>} : memref<1x3x22x22xf32, #tpu.memory_space<vmem>>, vector<1x3x1x22xf32>,
    %282 = vector.extract_strided_slice %181 {offsets = [0, 480], sizes = [3, 22], strides = [1, 1]} : vector<3x528xf32> to vector<3x22xf32>
    %283 = vector.shape_cast %282 : vector<3x22xf32> to vector<3x1x22xf32>
    %c0_248 = arith.constant 0 : index
    %c0_249 = arith.constant 0 : index
    %c20_250 = arith.constant 20 : index
    %c0_251 = arith.constant 0 : index
    %284 = vector.load %arg13[%c0_248, %c0_249, %c20_250, %c0_251] : memref<1x3x22x22xf32, #tpu.memory_space<vmem>>, vector<1x3x1x22xf32>
    %285 = vector.shape_cast %284 : vector<1x3x1x22xf32> to vector<3x1x22xf32>
    %286 = vector.shape_cast %283 : vector<3x1x22xf32> to vector<1x3x1x22xf32>
    tpu.vector_store %arg13[%c0_248, %c0_249, %c20_250, %c0_251], %286 {strides = array<i32>} : memref<1x3x22x22xf32, #tpu.memory_space<vmem>>, vector<1x3x1x22xf32>,
    %287 = vector.extract_strided_slice %181 {offsets = [0, 504], sizes = [3, 22], strides = [1, 1]} : vector<3x528xf32> to vector<3x22xf32>
    %288 = vector.shape_cast %287 : vector<3x22xf32> to vector<3x1x22xf32>
    %c0_252 = arith.constant 0 : index
    %c0_253 = arith.constant 0 : index
    %c21_254 = arith.constant 21 : index
    %c0_255 = arith.constant 0 : index
    %289 = vector.load %arg13[%c0_252, %c0_253, %c21_254, %c0_255] : memref<1x3x22x22xf32, #tpu.memory_space<vmem>>, vector<1x3x1x22xf32>
    %290 = vector.shape_cast %289 : vector<1x3x1x22xf32> to vector<3x1x22xf32>
    %291 = vector.shape_cast %288 : vector<3x1x22xf32> to vector<1x3x1x22xf32>
    tpu.vector_store %arg13[%c0_252, %c0_253, %c21_254, %c0_255], %291 {strides = array<i32>} : memref<1x3x22x22xf32, #tpu.memory_space<vmem>>, vector<1x3x1x22xf32>,
    return
  }
  func.func @transform_0(%arg0: i32) -> (i32, i32, i32) {
    %c0_i32 = arith.constant 0 : i32
    %c0_i32_0 = arith.constant 0 : i32
    %c0_i32_1 = arith.constant 0 : i32
    return %arg0, %c0_i32, %c0_i32_0 : i32, i32, i32
  }
  func.func @transform_1(%arg0: i32) -> (i32, i32) {
    %c0_i32 = arith.constant 0 : i32
    %c0_i32_0 = arith.constant 0 : i32
    %c0_i32_1 = arith.constant 0 : i32
    return %c0_i32, %c0_i32_0 : i32, i32
  }
  func.func @transform_2(%arg0: i32) -> (i32, i32) {
    %c0_i32 = arith.constant 0 : i32
    %c0_i32_0 = arith.constant 0 : i32
    %c0_i32_1 = arith.constant 0 : i32
    return %c0_i32, %c0_i32_0 : i32, i32
  }
  func.func @transform_3(%arg0: i32) -> (i32, i32) {
    %c0_i32 = arith.constant 0 : i32
    %c0_i32_0 = arith.constant 0 : i32
    %c0_i32_1 = arith.constant 0 : i32
    return %c0_i32, %c0_i32_0 : i32, i32
  }
  func.func @transform_4(%arg0: i32) -> (i32, i32) {
    %c0_i32 = arith.constant 0 : i32
    %c0_i32_0 = arith.constant 0 : i32
    %c0_i32_1 = arith.constant 0 : i32
    return %c0_i32, %c0_i32_0 : i32, i32
  }
  func.func @transform_5(%arg0: i32) -> (i32, i32) {
    %c0_i32 = arith.constant 0 : i32
    %c0_i32_0 = arith.constant 0 : i32
    %c0_i32_1 = arith.constant 0 : i32
    return %c0_i32, %c0_i32_0 : i32, i32
  }
  func.func @transform_6(%arg0: i32) -> (i32, i32) {
    %c0_i32 = arith.constant 0 : i32
    %c0_i32_0 = arith.constant 0 : i32
    %c0_i32_1 = arith.constant 0 : i32
    return %c0_i32, %c0_i32_0 : i32, i32
  }
  func.func @transform_7(%arg0: i32) -> (i32, i32) {
    %c0_i32 = arith.constant 0 : i32
    %c0_i32_0 = arith.constant 0 : i32
    %c0_i32_1 = arith.constant 0 : i32
    return %c0_i32, %c0_i32_0 : i32, i32
  }
  func.func @transform_8(%arg0: i32) -> (i32, i32) {
    %c0_i32 = arith.constant 0 : i32
    %c0_i32_0 = arith.constant 0 : i32
    %c0_i32_1 = arith.constant 0 : i32
    return %c0_i32, %c0_i32_0 : i32, i32
  }
  func.func @transform_9(%arg0: i32) -> (i32, i32) {
    %c0_i32 = arith.constant 0 : i32
    %c0_i32_0 = arith.constant 0 : i32
    %c0_i32_1 = arith.constant 0 : i32
    return %c0_i32, %c0_i32_0 : i32, i32
  }
  func.func @transform_10(%arg0: i32) -> (i32, i32) {
    %c0_i32 = arith.constant 0 : i32
    %c0_i32_0 = arith.constant 0 : i32
    %c0_i32_1 = arith.constant 0 : i32
    return %c0_i32, %c0_i32_0 : i32, i32
  }
  func.func @transform_11(%arg0: i32) -> (i32, i32) {
    %c0_i32 = arith.constant 0 : i32
    %c0_i32_0 = arith.constant 0 : i32
    %c0_i32_1 = arith.constant 0 : i32
    return %c0_i32, %c0_i32_0 : i32, i32
  }
  func.func @transform_12(%arg0: i32) -> (i32, i32, i32, i32) {
    %c0_i32 = arith.constant 0 : i32
    %c0_i32_0 = arith.constant 0 : i32
    %c0_i32_1 = arith.constant 0 : i32
    %c0_i32_2 = arith.constant 0 : i32
    return %arg0, %c0_i32, %c0_i32_0, %c0_i32_1 : i32, i32, i32, i32
  }
}

</mosaic_0001>

<llo_original>
// kernel: decoder_forward.1
$region0: #{decoder_forward.1}
  #allocation0 [shape = 'u32[]', space=smem, size = 0x4, offset = 0x4, fixed_abs, tag = 'smem constant byte address 0x4 - core index']
  #allocation1 [shape = 'u32[144,128]{1,0:T(1,128)}', space=vmem, size = 0x12000, scoped, tag = 'internal scratch']
  #allocation2 [shape = 'f32[72,32]{1,0:T(8,128)}', space=vmem, size = 0x9000, scoped, tag = 'scratch operand']
  #allocation3 [shape = 'f32[108,32]{1,0:T(8,128)}', space=vmem, size = 0xe000, scoped, tag = 'scratch operand']
  #allocation4 [shape = 'f32[152,32]{1,0:T(8,128)}', space=vmem, size = 0x13000, scoped, tag = 'scratch operand']
  #allocation5 [shape = 'f32[584,32]{1,0:T(8,128)}', space=vmem, size = 0x49000, scoped, tag = 'scratch operand']
  %s0 = inlined_call_operand.vmem [shape: f32[2,1,32], index: 0, kind: input, shape index: {}]
  %s1 = inlined_call_operand.vmem [shape: f32[32,512], index: 1, kind: input, shape index: {}]
  %s2 = inlined_call_operand.vmem [shape: f32[1,512], index: 2, kind: input, shape index: {}]
  %s3 = inlined_call_operand.vmem [shape: f32[288,32], index: 3, kind: input, shape index: {}]
  %s4 = inlined_call_operand.vmem [shape: f32[1,32], index: 4, kind: input, shape index: {}]
  %s5 = inlined_call_operand.vmem [shape: f32[288,32], index: 5, kind: input, shape index: {}]
  %s6 = inlined_call_operand.vmem [shape: f32[1,32], index: 6, kind: input, shape index: {}]
  %s7 = inlined_call_operand.vmem [shape: f32[288,32], index: 7, kind: input, shape index: {}]
  %s8 = inlined_call_operand.vmem [shape: f32[1,32], index: 8, kind: input, shape index: {}]
  %s9 = inlined_call_operand.vmem [shape: f32[3,288], index: 9, kind: input, shape index: {}]
  %s10 = inlined_call_operand.vmem [shape: f32[3,1], index: 10, kind: input, shape index: {}]
  %s11 = inlined_call_operand.vmem [shape: f32[20,10], index: 11, kind: input, shape index: {}]
  %s12 = inlined_call_operand.vmem [shape: f32[2,3,22,22], index: 12, kind: output, shape index: {}]
  %s13 = sld [smem:[#allocation0]]
  $region81: #{decoder_forward.1} parent=0
    _
  %s15 = ssub.s32 1, %s13
  %s16 = scalar_select 0, %s15, %s13
  loop: start=0, step=1, limit=4
  $region2: #{decoder_forward.1} parent=0 // loop_pre_header
    _
  $region3: #{decoder_forward.1} parent=0 // loop_header
    %s18 = sphi 0, %s22
    %p19 = scmp.ge.s32.totalorder %s18, 4
    %s28 = sphi 0, %s30
    %s31 = sphi 0, %s28
    %s32 = sphi 0, %s31
    %s48 = sphi 0, %s32
    %s52 = sphi 0, %s52
    %s54 = sphi 0, %s52
    %s55 = sphi 0, %s54
    %s69 = sphi 0, %s55
    %s73 = sphi 0, %s73
    %s75 = sphi 0, %s73
    %s76 = sphi 0, %s75
    %s90 = sphi 0, %s76
    %s94 = sphi 0, %s94
    %s96 = sphi 0, %s94
    %s97 = sphi 0, %s96
    %s111 = sphi 0, %s97
    %s115 = sphi 0, %s115
    %s117 = sphi 0, %s115
    %s118 = sphi 0, %s117
    %s132 = sphi 0, %s118
    %s136 = sphi 0, %s136
    %s138 = sphi 0, %s136
    %s139 = sphi 0, %s138
    %s153 = sphi 0, %s139
    %s157 = sphi 0, %s157
    %s159 = sphi 0, %s157
    %s160 = sphi 0, %s159
    %s174 = sphi 0, %s160
    %s178 = sphi 0, %s178
    %s180 = sphi 0, %s178
    %s181 = sphi 0, %s180
    %s195 = sphi 0, %s181
    %s199 = sphi 0, %s199
    %s201 = sphi 0, %s199
    %s202 = sphi 0, %s201
    %s216 = sphi 0, %s202
    %s220 = sphi 0, %s220
    %s222 = sphi 0, %s220
    %s223 = sphi 0, %s222
    %s237 = sphi 0, %s223
    %s241 = sphi 0, %s241
    %s243 = sphi 0, %s241
    %s244 = sphi 0, %s243
    %s258 = sphi 0, %s244
    %s262 = sphi 0, %s262
    %s264 = sphi 0, %s262
    %s265 = sphi 0, %s264
    %s279 = sphi 0, %s265
    %s285 = sphi 0, %s287
    %s288 = sphi 0, %s285
    %s289 = sphi 0, %s288
    %s305 = sphi 0, %s289
  $region4: #{decoder_forward.1} parent=0 // loop_header_branch
    %21 = sbr.rel (%p19) target = $region8
  $region5: #{decoder_forward.1} parent=0 // loop_body
    %s23 = ssub.s32 %s18, 1
    %s24 = ssub.s32 %s18, 2
    %s25 = sadd.s32 %s18, 1
    %s26 = ssub.s32 %s18, %s25
    %p27 = scmp.eq.s32.totalorder %s26, 0
    %s29 = sadd.s32 %s28, 1
    %s30 = scalar_select %p27, %s28, %s29
    %p33 = pneg %p27
    %p34 = scmp.eq.s32.totalorder %s18, 1
    %p35 = por %p33, %p34
    %p36 = scmp.ne.s32.totalorder %s28, %s31
    %p37 = scmp.eq.s32.totalorder %s18, 0
    %p38 = por %p36, %p37
    %p39 = scmp.ne.s32.totalorder %s28, %s31
    %p40 = scmp.eq.s32.totalorder %s23, 1
    %p41 = por %p39, %p40
    %p42 = scmp.ne.s32.totalorder %s31, %s32
    %p43 = scmp.eq.s32.totalorder %s23, 0
    %p44 = por %p42, %p43
    %p45 = scmp.ne.s32.totalorder %s31, %s32
    %p46 = scmp.eq.s32.totalorder %s24, 1
    %p47 = por %p45, %p46
    %p49 = scmp.ne.s32.totalorder %s32, %s48
    %p50 = scmp.eq.s32.totalorder %s24, 0
    %p51 = por %p49, %p50
    %s53 = sadd.s32 %s52, 1
    %p56 = scmp.eq.s32.totalorder %s18, 1
    %p57 = scmp.ne.s32.totalorder %s52, %s54
    %p58 = scmp.eq.s32.totalorder %s18, 0
    %p59 = por %p57, %p58
    %p60 = scmp.ne.s32.totalorder %s52, %s54
    %p61 = scmp.eq.s32.totalorder %s23, 1
    %p62 = por %p60, %p61
    %p63 = scmp.ne.s32.totalorder %s54, %s55
    %p64 = scmp.eq.s32.totalorder %s23, 0
    %p65 = por %p63, %p64
    %p66 = scmp.ne.s32.totalorder %s54, %s55
    %p67 = scmp.eq.s32.totalorder %s24, 1
    %p68 = por %p66, %p67
    %p70 = scmp.ne.s32.totalorder %s55, %s69
    %p71 = scmp.eq.s32.totalorder %s24, 0
    %p72 = por %p70, %p71
    %s74 = sadd.s32 %s73, 1
    %p77 = scmp.eq.s32.totalorder %s18, 1
    %p78 = scmp.ne.s32.totalorder %s73, %s75
    %p79 = scmp.eq.s32.totalorder %s18, 0
    %p80 = por %p78, %p79
    %p81 = scmp.ne.s32.totalorder %s73, %s75
    %p82 = scmp.eq.s32.totalorder %s23, 1
    %p83 = por %p81, %p82
    %p84 = scmp.ne.s32.totalorder %s75, %s76
    %p85 = scmp.eq.s32.totalorder %s23, 0
    %p86 = por %p84, %p85
    %p87 = scmp.ne.s32.totalorder %s75, %s76
    %p88 = scmp.eq.s32.totalorder %s24, 1
    %p89 = por %p87, %p88
    %p91 = scmp.ne.s32.totalorder %s76, %s90
    %p92 = scmp.eq.s32.totalorder %s24, 0
    %p93 = por %p91, %p92
    %s95 = sadd.s32 %s94, 1
    %p98 = scmp.eq.s32.totalorder %s18, 1
    %p99 = scmp.ne.s32.totalorder %s94, %s96
    %p100 = scmp.eq.s32.totalorder %s18, 0
    %p101 = por %p99, %p100
    %p102 = scmp.ne.s32.totalorder %s94, %s96
    %p103 = scmp.eq.s32.totalorder %s23, 1
    %p104 = por %p102, %p103
    %p105 = scmp.ne.s32.totalorder %s96, %s97
    %p106 = scmp.eq.s32.totalorder %s23, 0
    %p107 = por %p105, %p106
    %p108 = scmp.ne.s32.totalorder %s96, %s97
    %p109 = scmp.eq.s32.totalorder %s24, 1
    %p110 = por %p108, %p109
    %p112 = scmp.ne.s32.totalorder %s97, %s111
    %p113 = scmp.eq.s32.totalorder %s24, 0
    %p114 = por %p112, %p113
    %s116 = sadd.s32 %s115, 1
    %p119 = scmp.eq.s32.totalorder %s18, 1
    %p120 = scmp.ne.s32.totalorder %s115, %s117
    %p121 = scmp.eq.s32.totalorder %s18, 0
    %p122 = por %p120, %p121
    %p123 = scmp.ne.s32.totalorder %s115, %s117
    %p124 = scmp.eq.s32.totalorder %s23, 1
    %p125 = por %p123, %p124
    %p126 = scmp.ne.s32.totalorder %s117, %s118
    %p127 = scmp.eq.s32.totalorder %s23, 0
    %p128 = por %p126, %p127
    %p129 = scmp.ne.s32.totalorder %s117, %s118
    %p130 = scmp.eq.s32.totalorder %s24, 1
    %p131 = por %p129, %p130
    %p133 = scmp.ne.s32.totalorder %s118, %s132
    %p134 = scmp.eq.s32.totalorder %s24, 0
    %p135 = por %p133, %p134
    %s137 = sadd.s32 %s136, 1
    %p140 = scmp.eq.s32.totalorder %s18, 1
    %p141 = scmp.ne.s32.totalorder %s136, %s138
    %p142 = scmp.eq.s32.totalorder %s18, 0
    %p143 = por %p141, %p142
    %p144 = scmp.ne.s32.totalorder %s136, %s138
    %p145 = scmp.eq.s32.totalorder %s23, 1
    %p146 = por %p144, %p145
    %p147 = scmp.ne.s32.totalorder %s138, %s139
    %p148 = scmp.eq.s32.totalorder %s23, 0
    %p149 = por %p147, %p148
    %p150 = scmp.ne.s32.totalorder %s138, %s139
    %p151 = scmp.eq.s32.totalorder %s24, 1
    %p152 = por %p150, %p151
    %p154 = scmp.ne.s32.totalorder %s139, %s153
    %p155 = scmp.eq.s32.totalorder %s24, 0
    %p156 = por %p154, %p155
    %s158 = sadd.s32 %s157, 1
    %p161 = scmp.eq.s32.totalorder %s18, 1
    %p162 = scmp.ne.s32.totalorder %s157, %s159
    %p163 = scmp.eq.s32.totalorder %s18, 0
    %p164 = por %p162, %p163
    %p165 = scmp.ne.s32.totalorder %s157, %s159
    %p166 = scmp.eq.s32.totalorder %s23, 1
    %p167 = por %p165, %p166
    %p168 = scmp.ne.s32.totalorder %s159, %s160
    %p169 = scmp.eq.s32.totalorder %s23, 0
    %p170 = por %p168, %p169
    %p171 = scmp.ne.s32.totalorder %s159, %s160
    %p172 = scmp.eq.s32.totalorder %s24, 1
    %p173 = por %p171, %p172
    %p175 = scmp.ne.s32.totalorder %s160, %s174
    %p176 = scmp.eq.s32.totalorder %s24, 0
    %p177 = por %p175, %p176
    %s179 = sadd.s32 %s178, 1
    %p182 = scmp.eq.s32.totalorder %s18, 1
    %p183 = scmp.ne.s32.totalorder %s178, %s180
    %p184 = scmp.eq.s32.totalorder %s18, 0
    %p185 = por %p183, %p184
    %p186 = scmp.ne.s32.totalorder %s178, %s180
    %p187 = scmp.eq.s32.totalorder %s23, 1
    %p188 = por %p186, %p187
    %p189 = scmp.ne.s32.totalorder %s180, %s181
    %p190 = scmp.eq.s32.totalorder %s23, 0
    %p191 = por %p189, %p190
    %p192 = scmp.ne.s32.totalorder %s180, %s181
    %p193 = scmp.eq.s32.totalorder %s24, 1
    %p194 = por %p192, %p193
    %p196 = scmp.ne.s32.totalorder %s181, %s195
    %p197 = scmp.eq.s32.totalorder %s24, 0
    %p198 = por %p196, %p197
    %s200 = sadd.s32 %s199, 1
    %p203 = scmp.eq.s32.totalorder %s18, 1
    %p204 = scmp.ne.s32.totalorder %s199, %s201
    %p205 = scmp.eq.s32.totalorder %s18, 0
    %p206 = por %p204, %p205
    %p207 = scmp.ne.s32.totalorder %s199, %s201
    %p208 = scmp.eq.s32.totalorder %s23, 1
    %p209 = por %p207, %p208
    %p210 = scmp.ne.s32.totalorder %s201, %s202
    %p211 = scmp.eq.s32.totalorder %s23, 0
    %p212 = por %p210, %p211
    %p213 = scmp.ne.s32.totalorder %s201, %s202
    %p214 = scmp.eq.s32.totalorder %s24, 1
    %p215 = por %p213, %p214
    %p217 = scmp.ne.s32.totalorder %s202, %s216
    %p218 = scmp.eq.s32.totalorder %s24, 0
    %p219 = por %p217, %p218
    %s221 = sadd.s32 %s220, 1
    %p224 = scmp.eq.s32.totalorder %s18, 1
    %p225 = scmp.ne.s32.totalorder %s220, %s222
    %p226 = scmp.eq.s32.totalorder %s18, 0
    %p227 = por %p225, %p226
    %p228 = scmp.ne.s32.totalorder %s220, %s222
    %p229 = scmp.eq.s32.totalorder %s23, 1
    %p230 = por %p228, %p229
    %p231 = scmp.ne.s32.totalorder %s222, %s223
    %p232 = scmp.eq.s32.totalorder %s23, 0
    %p233 = por %p231, %p232
    %p234 = scmp.ne.s32.totalorder %s222, %s223
    %p235 = scmp.eq.s32.totalorder %s24, 1
    %p236 = por %p234, %p235
    %p238 = scmp.ne.s32.totalorder %s223, %s237
    %p239 = scmp.eq.s32.totalorder %s24, 0
    %p240 = por %p238, %p239
    %s242 = sadd.s32 %s241, 1
    %p245 = scmp.eq.s32.totalorder %s18, 1
    %p246 = scmp.ne.s32.totalorder %s241, %s243
    %p247 = scmp.eq.s32.totalorder %s18, 0
    %p248 = por %p246, %p247
    %p249 = scmp.ne.s32.totalorder %s241, %s243
    %p250 = scmp.eq.s32.totalorder %s23, 1
    %p251 = por %p249, %p250
    %p252 = scmp.ne.s32.totalorder %s243, %s244
    %p253 = scmp.eq.s32.totalorder %s23, 0
    %p254 = por %p252, %p253
    %p255 = scmp.ne.s32.totalorder %s243, %s244
    %p256 = scmp.eq.s32.totalorder %s24, 1
    %p257 = por %p255, %p256
    %p259 = scmp.ne.s32.totalorder %s244, %s258
    %p260 = scmp.eq.s32.totalorder %s24, 0
    %p261 = por %p259, %p260
    %s263 = sadd.s32 %s262, 1
    %p266 = scmp.eq.s32.totalorder %s18, 1
    %p267 = scmp.ne.s32.totalorder %s262, %s264
    %p268 = scmp.eq.s32.totalorder %s18, 0
    %p269 = por %p267, %p268
    %p270 = scmp.ne.s32.totalorder %s262, %s264
    %p271 = scmp.eq.s32.totalorder %s23, 1
    %p272 = por %p270, %p271
    %p273 = scmp.ne.s32.totalorder %s264, %s265
    %p274 = scmp.eq.s32.totalorder %s23, 0
    %p275 = por %p273, %p274
    %p276 = scmp.ne.s32.totalorder %s264, %s265
    %p277 = scmp.eq.s32.totalorder %s24, 1
    %p278 = por %p276, %p277
    %p280 = scmp.ne.s32.totalorder %s265, %s279
    %p281 = scmp.eq.s32.totalorder %s24, 0
    %p282 = por %p280, %p281
    %s283 = ssub.s32 %s18, %s25
    %p284 = scmp.eq.s32.totalorder %s283, 0
    %s286 = sadd.s32 %s285, 1
    %s287 = scalar_select %p284, %s285, %s286
    %p290 = pneg %p284
    %p291 = scmp.eq.s32.totalorder %s18, 1
    %p292 = por %p290, %p291
    %p293 = scmp.ne.s32.totalorder %s285, %s288
    %p294 = scmp.eq.s32.totalorder %s18, 0
    %p295 = por %p293, %p294
    %p296 = scmp.ne.s32.totalorder %s285, %s288
    %p297 = scmp.eq.s32.totalorder %s23, 1
    %p298 = por %p296, %p297
    %p299 = scmp.ne.s32.totalorder %s288, %s289
    %p300 = scmp.eq.s32.totalorder %s23, 0
    %p301 = por %p299, %p300
    %p302 = scmp.ne.s32.totalorder %s288, %s289
    %p303 = scmp.eq.s32.totalorder %s24, 1
    %p304 = por %p302, %p303
    %p306 = scmp.ne.s32.totalorder %s289, %s305
    %p307 = scmp.eq.s32.totalorder %s24, 0
    %p308 = por %p306, %p307
    %p309 = scmp.le.s32.totalorder 1, %s18
    %p310 = scmp.lt.s32.totalorder %s18, 3
    %p311 = pnand %p309, %p310
    %p312 = pneg %p311
    // Predicated region
    $region9: #{decoder_forward.1} parent=5 // pred_check
      _
    $region10: #{decoder_forward.1} parent=5 // pred_check_branch
      %314 = sbr.rel (%p311) target = $region12
    $region11: #{decoder_forward.1} parent=5 // pred_region
      %s315 = ssub.s32 %s18, 1
      // Predicated region
      $region13: #{decoder_forward.1} parent=11 // pred_check
        %p316 = pneg %p65
      $region14: #{decoder_forward.1} parent=11 // pred_check_branch
        %318 = sbr.rel (%p316) target = $region16
      $region15: #{decoder_forward.1} parent=11 // pred_region
        _
      $region16: #{decoder_forward.1} parent=11 // pred_fallthru
        _
      // Predicated region
      $region17: #{decoder_forward.1} parent=11 // pred_check
        %p319 = pneg %p86
      $region18: #{decoder_forward.1} parent=11 // pred_check_branch
        %321 = sbr.rel (%p319) target = $region20
      $region19: #{decoder_forward.1} parent=11 // pred_region
        _
      $region20: #{decoder_forward.1} parent=11 // pred_fallthru
        _
      // Predicated region
      $region21: #{decoder_forward.1} parent=11 // pred_check
        %p322 = pneg %p107
      $region22: #{decoder_forward.1} parent=11 // pred_check_branch
        %324 = sbr.rel (%p322) target = $region24
      $region23: #{decoder_forward.1} parent=11 // pred_region
        _
      $region24: #{decoder_forward.1} parent=11 // pred_fallthru
        _
      // Predicated region
      $region25: #{decoder_forward.1} parent=11 // pred_check
        %p325 = pneg %p128
      $region26: #{decoder_forward.1} parent=11 // pred_check_branch
        %327 = sbr.rel (%p325) target = $region28
      $region27: #{decoder_forward.1} parent=11 // pred_region
        _
      $region28: #{decoder_forward.1} parent=11 // pred_fallthru
        _
      // Predicated region
      $region29: #{decoder_forward.1} parent=11 // pred_check
        %p328 = pneg %p149
      $region30: #{decoder_forward.1} parent=11 // pred_check_branch
        %330 = sbr.rel (%p328) target = $region32
      $region31: #{decoder_forward.1} parent=11 // pred_region
        _
      $region32: #{decoder_forward.1} parent=11 // pred_fallthru
        _
      // Predicated region
      $region33: #{decoder_forward.1} parent=11 // pred_check
        %p331 = pneg %p170
      $region34: #{decoder_forward.1} parent=11 // pred_check_branch
        %333 = sbr.rel (%p331) target = $region36
      $region35: #{decoder_forward.1} parent=11 // pred_region
        _
      $region36: #{decoder_forward.1} parent=11 // pred_fallthru
        _
      // Predicated region
      $region37: #{decoder_forward.1} parent=11 // pred_check
        %p334 = pneg %p191
      $region38: #{decoder_forward.1} parent=11 // pred_check_branch
        %336 = sbr.rel (%p334) target = $region40
      $region39: #{decoder_forward.1} parent=11 // pred_region
        _
      $region40: #{decoder_forward.1} parent=11 // pred_fallthru
        _
      // Predicated region
      $region41: #{decoder_forward.1} parent=11 // pred_check
        %p337 = pneg %p212
      $region42: #{decoder_forward.1} parent=11 // pred_check_branch
        %339 = sbr.rel (%p337) target = $region44
      $region43: #{decoder_forward.1} parent=11 // pred_region
        _
      $region44: #{decoder_forward.1} parent=11 // pred_fallthru
        _
      // Predicated region
      $region45: #{decoder_forward.1} parent=11 // pred_check
        %p340 = pneg %p233
      $region46: #{decoder_forward.1} parent=11 // pred_check_branch
        %342 = sbr.rel (%p340) target = $region48
      $region47: #{decoder_forward.1} parent=11 // pred_region
        _
      $region48: #{decoder_forward.1} parent=11 // pred_fallthru
        _
      // Predicated region
      $region49: #{decoder_forward.1} parent=11 // pred_check
        %p343 = pneg %p254
      $region50: #{decoder_forward.1} parent=11 // pred_check_branch
        %345 = sbr.rel (%p343) target = $region52
      $region51: #{decoder_forward.1} parent=11 // pred_region
        _
      $region52: #{decoder_forward.1} parent=11 // pred_fallthru
        _
      // Predicated region
      $region53: #{decoder_forward.1} parent=11 // pred_check
        %p346 = pneg %p275
      $region54: #{decoder_forward.1} parent=11 // pred_check_branch
        %348 = sbr.rel (%p346) target = $region56
      $region55: #{decoder_forward.1} parent=11 // pred_region
        _
      $region56: #{decoder_forward.1} parent=11 // pred_fallthru
        _
    $region12: #{decoder_forward.1} parent=5 // pred_fallthru
      _
    %p349 = scmp.lt.s32.totalorder %s18, 2
    // Predicated region
    $region57: #{decoder_forward.1} parent=5 // pred_check
      %p350 = pneg %p349
    $region58: #{decoder_forward.1} parent=5 // pred_check_branch
      %352 = sbr.rel (%p350) target = $region60
    $region59: #{decoder_forward.1} parent=5 // pred_region
      // Predicated region
      $region61: #{decoder_forward.1} parent=59 // pred_check
        %p353 = pneg %p38
      $region62: #{decoder_forward.1} parent=59 // pred_check_branch
        %355 = sbr.rel (%p353) target = $region64
      $region63: #{decoder_forward.1} parent=59 // pred_region
        %p356 = scmp.lt.s32.totalorder %s18, 1
        %s357 = scalar_select %p356, %s18, 1
        %s358 = scalar_lea.vmem %s0, %s357
      $region64: #{decoder_forward.1} parent=59 // pred_fallthru
        _
    $region60: #{decoder_forward.1} parent=5 // pred_fallthru
      _
    %p359 = scmp.le.s32.totalorder 1, %s18
    %p360 = scmp.lt.s32.totalorder %s18, 3
    %p361 = pnand %p359, %p360
    %p362 = pneg %p361
    // Predicated region
    $region65: #{decoder_forward.1} parent=5 // pred_check
      _
    $region66: #{decoder_forward.1} parent=5 // pred_check_branch
      %364 = sbr.rel (%p361) target = $region68
    $region67: #{decoder_forward.1} parent=5 // pred_region
      %s365 = ssub.s32 %s18, 1
      %p366 = scmp.lt.s32.totalorder %s23, 1
      %s367 = scalar_select %p366, %s23, 1
      %s368 = scalar_lea.vmem %s0, %s367
      %p369 = pneg %p44
      %p370 = pneg %p41
      %p371 = pneg %p65
      %p372 = pneg %p62
      %p373 = pneg %p86
      %p374 = pneg %p83
      %p375 = pneg %p107
      %p376 = pneg %p104
      %p377 = pneg %p128
      %p378 = pneg %p125
      %p379 = pneg %p149
      %p380 = pneg %p146
      %p381 = pneg %p170
      %p382 = pneg %p167
      %p383 = pneg %p191
      %p384 = pneg %p188
      %p385 = pneg %p212
      %p386 = pneg %p209
      %p387 = pneg %p233
      %p388 = pneg %p230
      %p389 = pneg %p254
      %p390 = pneg %p251
      %p391 = pneg %p275
      %p392 = pneg %p272
      %p393 = pneg %p301
      %p394 = pneg %p298
      %p395 = scmp.lt.s32.totalorder %s23, 1
      %s396 = scalar_select %p395, %s23, 1
      %s397 = smul.addr %s396, 9
      %s398 = smul.addr %s397, 8
      %s399 = scalar_lea.vmem %s12, %s398
      %p400 = scmp.lt.s32.totalorder %s23, 1
      %s401 = scalar_select %p400, %s23, 1
      %s402 = scalar_lea.vmem %s0, %s401
      %p403 = scmp.lt.s32.totalorder %s23, 1
      %s404 = scalar_select %p403, %s23, 1
      %s405 = smul.addr %s404, 9
      %s406 = smul.addr %s405, 8
      %s407 = scalar_lea.vmem %s12, %s406
      %vm408 = vcmask 261120
      %409 = vst.msk [vmem:[#allocation2] sm:$0xff] %vm408, 0.0
      %410 = vst.msk [vmem:[#allocation2 + $0x8] sm:$0xff] %vm408, 0.0
      %411 = vst.msk [vmem:[#allocation2 + $0x10] sm:$0xff] %vm408, 0.0
      %412 = vst.msk [vmem:[#allocation2 + $0x18] sm:$0xff] %vm408, 0.0
      %413 = vst.msk [vmem:[#allocation2 + $0x20] sm:$0xff] %vm408, 0.0
      %414 = vst.msk [vmem:[#allocation2 + $0x28] sm:$0xff] %vm408, 0.0
      %415 = vst.msk [vmem:[#allocation2 + $0x30] sm:$0xff] %vm408, 0.0
      %416 = vst.msk [vmem:[#allocation2 + $0x38] sm:$0xff] %vm408, 0.0
      %417 = vst.msk [vmem:[#allocation2 + $0x40] sm:$0xff] %vm408, 0.0
      %418 = vst.msk [vmem:[#allocation3] sm:$0xff] %vm408, 0.0
      %419 = vst.msk [vmem:[#allocation3 + $0x8] sm:$0xff] %vm408, 0.0
      %420 = vst.msk [vmem:[#allocation3 + $0x10] sm:$0xff] %vm408, 0.0
      %421 = vst.msk [vmem:[#allocation3 + $0x18] sm:$0xff] %vm408, 0.0
      %422 = vst.msk [vmem:[#allocation3 + $0x20] sm:$0xff] %vm408, 0.0
      %423 = vst.msk [vmem:[#allocation3 + $0x28] sm:$0xff] %vm408, 0.0
      %424 = vst.msk [vmem:[#allocation3 + $0x30] sm:$0xff] %vm408, 0.0
      %425 = vst.msk [vmem:[#allocation3 + $0x38] sm:$0xff] %vm408, 0.0
      %426 = vst.msk [vmem:[#allocation3 + $0x40] sm:$0xff] %vm408, 0.0
      %427 = vst.msk [vmem:[#allocation3 + $0x48] sm:$0xff] %vm408, 0.0
      %428 = vst.msk [vmem:[#allocation3 + $0x50] sm:$0xff] %vm408, 0.0
      %429 = vst.msk [vmem:[#allocation3 + $0x58] sm:$0xff] %vm408, 0.0
      %430 = vst.msk [vmem:[#allocation3 + $0x60] sm:$0xff] %vm408, 0.0
      %vm431 = vcmask 257024
      %432 = vst.msk [vmem:[#allocation3 + $0x68] sm:$0xf] %vm431, 0.0
      %433 = vst.msk [vmem:[#allocation4] sm:$0xff] %vm408, 0.0
      %434 = vst.msk [vmem:[#allocation4 + $0x8] sm:$0xff] %vm408, 0.0
      %435 = vst.msk [vmem:[#allocation4 + $0x10] sm:$0xff] %vm408, 0.0
      %436 = vst.msk [vmem:[#allocation4 + $0x18] sm:$0xff] %vm408, 0.0
      %437 = vst.msk [vmem:[#allocation4 + $0x20] sm:$0xff] %vm408, 0.0
      %438 = vst.msk [vmem:[#allocation4 + $0x28] sm:$0xff] %vm408, 0.0
      %439 = vst.msk [vmem:[#allocation4 + $0x30] sm:$0xff] %vm408, 0.0
      %440 = vst.msk [vmem:[#allocation4 + $0x38] sm:$0xff] %vm408, 0.0
      %441 = vst.msk [vmem:[#allocation4 + $0x40] sm:$0xff] %vm408, 0.0
      %442 = vst.msk [vmem:[#allocation4 + $0x48] sm:$0xff] %vm408, 0.0
      %443 = vst.msk [vmem:[#allocation4 + $0x50] sm:$0xff] %vm408, 0.0
      %444 = vst.msk [vmem:[#allocation4 + $0x58] sm:$0xff] %vm408, 0.0
      %445 = vst.msk [vmem:[#allocation4 + $0x60] sm:$0xff] %vm408, 0.0
      %446 = vst.msk [vmem:[#allocation4 + $0x68] sm:$0xff] %vm408, 0.0
      %447 = vst.msk [vmem:[#allocation4 + $0x70] sm:$0xff] %vm408, 0.0
      %448 = vst.msk [vmem:[#allocation4 + $0x78] sm:$0xff] %vm408, 0.0
      %449 = vst.msk [vmem:[#allocation4 + $0x80] sm:$0xff] %vm408, 0.0
      %450 = vst.msk [vmem:[#allocation4 + $0x88] sm:$0xff] %vm408, 0.0
      %451 = vst.msk [vmem:[#allocation4 + $0x90] sm:$0xff] %vm408, 0.0
      %452 = vst.msk [vmem:[#allocation5] sm:$0xff] %vm408, 0.0
      %453 = vst.msk [vmem:[#allocation5 + $0x8] sm:$0xff] %vm408, 0.0
      %454 = vst.msk [vmem:[#allocation5 + $0x10] sm:$0xff] %vm408, 0.0
      %455 = vst.msk [vmem:[#allocation5 + $0x18] sm:$0xff] %vm408, 0.0
      %456 = vst.msk [vmem:[#allocation5 + $0x20] sm:$0xff] %vm408, 0.0
      %457 = vst.msk [vmem:[#allocation5 + $0x28] sm:$0xff] %vm408, 0.0
      %458 = vst.msk [vmem:[#allocation5 + $0x30] sm:$0xff] %vm408, 0.0
      %459 = vst.msk [vmem:[#allocation5 + $0x38] sm:$0xff] %vm408, 0.0
      %460 = vst.msk [vmem:[#allocation5 + $0x40] sm:$0xff] %vm408, 0.0
      %461 = vst.msk [vmem:[#allocation5 + $0x48] sm:$0xff] %vm408, 0.0
      %462 = vst.msk [vmem:[#allocation5 + $0x50] sm:$0xff] %vm408, 0.0
      %463 = vst.msk [vmem:[#allocation5 + $0x58] sm:$0xff] %vm408, 0.0
      %464 = vst.msk [vmem:[#allocation5 + $0x60] sm:$0xff] %vm408, 0.0
      %465 = vst.msk [vmem:[#allocation5 + $0x68] sm:$0xff] %vm408, 0.0
      %466 = vst.msk [vmem:[#allocation5 + $0x70] sm:$0xff] %vm408, 0.0
      %467 = vst.msk [vmem:[#allocation5 + $0x78] sm:$0xff] %vm408, 0.0
      %468 = vst.msk [vmem:[#allocation5 + $0x80] sm:$0xff] %vm408, 0.0
      %469 = vst.msk [vmem:[#allocation5 + $0x88] sm:$0xff] %vm408, 0.0
      %470 = vst.msk [vmem:[#allocation5 + $0x90] sm:$0xff] %vm408, 0.0
      %471 = vst.msk [vmem:[#allocation5 + $0x98] sm:$0xff] %vm408, 0.0
      %472 = vst.msk [vmem:[#allocation5 + $0xa0] sm:$0xff] %vm408, 0.0
      %473 = vst.msk [vmem:[#allocation5 + $0xa8] sm:$0xff] %vm408, 0.0
      %474 = vst.msk [vmem:[#allocation5 + $0xb0] sm:$0xff] %vm408, 0.0
      %475 = vst.msk [vmem:[#allocation5 + $0xb8] sm:$0xff] %vm408, 0.0
      %476 = vst.msk [vmem:[#allocation5 + $0xc0] sm:$0xff] %vm408, 0.0
      %477 = vst.msk [vmem:[#allocation5 + $0xc8] sm:$0xff] %vm408, 0.0
      %478 = vst.msk [vmem:[#allocation5 + $0xd0] sm:$0xff] %vm408, 0.0
      %479 = vst.msk [vmem:[#allocation5 + $0xd8] sm:$0xff] %vm408, 0.0
      %480 = vst.msk [vmem:[#allocation5 + $0xe0] sm:$0xff] %vm408, 0.0
      %481 = vst.msk [vmem:[#allocation5 + $0xe8] sm:$0xff] %vm408, 0.0
      %482 = vst.msk [vmem:[#allocation5 + $0xf0] sm:$0xff] %vm408, 0.0
      %483 = vst.msk [vmem:[#allocation5 + $0xf8] sm:$0xff] %vm408, 0.0
      %484 = vst.msk [vmem:[#allocation5 + $0x100] sm:$0xff] %vm408, 0.0
      %485 = vst.msk [vmem:[#allocation5 + $0x108] sm:$0xff] %vm408, 0.0
      %486 = vst.msk [vmem:[#allocation5 + $0x110] sm:$0xff] %vm408, 0.0
      %487 = vst.msk [vmem:[#allocation5 + $0x118] sm:$0xff] %vm408, 0.0
      %488 = vst.msk [vmem:[#allocation5 + $0x120] sm:$0xff] %vm408, 0.0
      %489 = vst.msk [vmem:[#allocation5 + $0x128] sm:$0xff] %vm408, 0.0
      %490 = vst.msk [vmem:[#allocation5 + $0x130] sm:$0xff] %vm408, 0.0
      %491 = vst.msk [vmem:[#allocation5 + $0x138] sm:$0xff] %vm408, 0.0
      %492 = vst.msk [vmem:[#allocation5 + $0x140] sm:$0xff] %vm408, 0.0
      %493 = vst.msk [vmem:[#allocation5 + $0x148] sm:$0xff] %vm408, 0.0
      %494 = vst.msk [vmem:[#allocation5 + $0x150] sm:$0xff] %vm408, 0.0
      %495 = vst.msk [vmem:[#allocation5 + $0x158] sm:$0xff] %vm408, 0.0
      %496 = vst.msk [vmem:[#allocation5 + $0x160] sm:$0xff] %vm408, 0.0
      %497 = vst.msk [vmem:[#allocation5 + $0x168] sm:$0xff] %vm408, 0.0
      %498 = vst.msk [vmem:[#allocation5 + $0x170] sm:$0xff] %vm408, 0.0
      %499 = vst.msk [vmem:[#allocation5 + $0x178] sm:$0xff] %vm408, 0.0
      %500 = vst.msk [vmem:[#allocation5 + $0x180] sm:$0xff] %vm408, 0.0
      %501 = vst.msk [vmem:[#allocation5 + $0x188] sm:$0xff] %vm408, 0.0
      %502 = vst.msk [vmem:[#allocation5 + $0x190] sm:$0xff] %vm408, 0.0
      %503 = vst.msk [vmem:[#allocation5 + $0x198] sm:$0xff] %vm408, 0.0
      %504 = vst.msk [vmem:[#allocation5 + $0x1a0] sm:$0xff] %vm408, 0.0
      %505 = vst.msk [vmem:[#allocation5 + $0x1a8] sm:$0xff] %vm408, 0.0
      %506 = vst.msk [vmem:[#allocation5 + $0x1b0] sm:$0xff] %vm408, 0.0
      %507 = vst.msk [vmem:[#allocation5 + $0x1b8] sm:$0xff] %vm408, 0.0
      %508 = vst.msk [vmem:[#allocation5 + $0x1c0] sm:$0xff] %vm408, 0.0
      %509 = vst.msk [vmem:[#allocation5 + $0x1c8] sm:$0xff] %vm408, 0.0
      %510 = vst.msk [vmem:[#allocation5 + $0x1d0] sm:$0xff] %vm408, 0.0
      %511 = vst.msk [vmem:[#allocation5 + $0x1d8] sm:$0xff] %vm408, 0.0
      %512 = vst.msk [vmem:[#allocation5 + $0x1e0] sm:$0xff] %vm408, 0.0
      %513 = vst.msk [vmem:[#allocation5 + $0x1e8] sm:$0xff] %vm408, 0.0
      %514 = vst.msk [vmem:[#allocation5 + $0x1f0] sm:$0xff] %vm408, 0.0
      %515 = vst.msk [vmem:[#allocation5 + $0x1f8] sm:$0xff] %vm408, 0.0
      %516 = vst.msk [vmem:[#allocation5 + $0x200] sm:$0xff] %vm408, 0.0
      %517 = vst.msk [vmem:[#allocation5 + $0x208] sm:$0xff] %vm408, 0.0
      %518 = vst.msk [vmem:[#allocation5 + $0x210] sm:$0xff] %vm408, 0.0
      %519 = vst.msk [vmem:[#allocation5 + $0x218] sm:$0xff] %vm408, 0.0
      %520 = vst.msk [vmem:[#allocation5 + $0x220] sm:$0xff] %vm408, 0.0
      %521 = vst.msk [vmem:[#allocation5 + $0x228] sm:$0xff] %vm408, 0.0
      %522 = vst.msk [vmem:[#allocation5 + $0x230] sm:$0xff] %vm408, 0.0
      %523 = vst.msk [vmem:[#allocation5 + $0x238] sm:$0xff] %vm408, 0.0
      %524 = vst.msk [vmem:[#allocation5 + $0x240] sm:$0xff] %vm408, 0.0
      %v525 = vld [vmem:[%s402] sm:$0x1]
      %v526 = vld [vmem:[%s1] sm:$0xff]
      %v527 = vld [vmem:[%s1 + $0x8] sm:$0xff]
      %v528 = vld [vmem:[%s1 + $0x10] sm:$0xff]
      %v529 = vld [vmem:[%s1 + $0x18] sm:$0xff]
      %v530 = vld [vmem:[%s1 + $0x20] sm:$0xff]
      %v531 = vld [vmem:[%s1 + $0x28] sm:$0xff]
      %v532 = vld [vmem:[%s1 + $0x30] sm:$0xff]
      %v533 = vld [vmem:[%s1 + $0x38] sm:$0xff]
      %v534 = vld [vmem:[%s1 + $0x40] sm:$0xff]
      %v535 = vld [vmem:[%s1 + $0x48] sm:$0xff]
      %v536 = vld [vmem:[%s1 + $0x50] sm:$0xff]
      %v537 = vld [vmem:[%s1 + $0x58] sm:$0xff]
      %v538 = vld [vmem:[%s1 + $0x60] sm:$0xff]
      %v539 = vld [vmem:[%s1 + $0x68] sm:$0xff]
      %v540 = vld [vmem:[%s1 + $0x70] sm:$0xff]
      %v541 = vld [vmem:[%s1 + $0x78] sm:$0xff]
      %v542 = vld [vmem:[%s2] sm:$0xf]
      %v544 = vlaneseq
      %v545 = vshrl.u32 %v544, 7
      %v546 = vsub.s32 0, %v545
      %v547 = vrot.slane %v542, %v546
      %v548 = vlaneseq
      %v549 = vshrl.u32 %v548, 7
      %v550 = vsub.s32 1, %v549
      %v551 = vrot.slane %v542, %v550
      %v552 = vlaneseq
      %v553 = vshrl.u32 %v552, 7
      %v554 = vsub.s32 2, %v553
      %v555 = vrot.slane %v542, %v554
      %v556 = vlaneseq
      %v557 = vshrl.u32 %v556, 7
      %v558 = vsub.s32 3, %v557
      %v559 = vrot.slane %v542, %v558
      %v565 = vsel %vm408, %v525, 0
      %567 = vmatprep.subr.mxu0 0.0
      %568 = vmatpush1.msra.mxu0 0.0
      %569 = vmatprep.subr.mxu0 0.0
      %570 = vmatpush1.msra.mxu0 0.0
      %571 = vmatprep.subr.mxu0 0.0
      %572 = vmatpush1.msra.mxu0 0.0
      %573 = vmatprep.subr.mxu0 0.0
      %574 = vmatpush1.msra.mxu0 0.0
      %575 = vmatprep.subr.mxu0 0.0
      %576 = vmatpush1.msra.mxu0 0.0
      %577 = vmatprep.subr.mxu0 0.0
      %578 = vmatpush1.msra.mxu0 0.0
      %579 = vmatprep.subr.mxu0 0.0
      %580 = vmatpush1.msra.mxu0 0.0
      %581 = vmatprep.subr.mxu0 0.0
      %582 = vmatpush1.msra.mxu0 0.0
      %583 = vmatprep.subr.mxu0 0.0
      %584 = vmatpush1.msra.mxu0 0.0
      %585 = vmatprep.subr.mxu0 0.0
      %586 = vmatpush1.msra.mxu0 0.0
      %587 = vmatprep.subr.mxu0 0.0
      %588 = vmatpush1.msra.mxu0 0.0
      %589 = vmatprep.subr.mxu0 0.0
      %590 = vmatpush1.msra.mxu0 0.0
      %591 = vmatprep.subr.mxu0 %v539
      %592 = vmatpush1.msra.mxu0 %v538
      %593 = vmatprep.subr.mxu0 %v535
      %594 = vmatpush1.msra.mxu0 %v534
      %595 = vmatprep.subr.mxu0 %v531
      %596 = vmatpush1.msra.mxu0 %v530
      %597 = vmatprep.subr.mxu0 %v527
      %598 = vmatpush1.msra.mxu0 %v526
      %599 = vmatprep.subr.mxu0 0.0
      %600 = vmatpush2.msra.mxu0 0.0
      %601 = vmatprep.subr.mxu0 0.0
      %602 = vmatpush2.msra.mxu0 0.0
      %603 = vmatprep.subr.mxu0 0.0
      %604 = vmatpush2.msra.mxu0 0.0
      %605 = vmatprep.subr.mxu0 0.0
      %606 = vmatpush2.msra.mxu0 0.0
      %607 = vmatprep.subr.mxu0 0.0
      %608 = vmatpush2.msra.mxu0 0.0
      %609 = vmatprep.subr.mxu0 0.0
      %610 = vmatpush2.msra.mxu0 0.0
      %611 = vmatprep.subr.mxu0 0.0
      %612 = vmatpush2.msra.mxu0 0.0
      %613 = vmatprep.subr.mxu0 0.0
      %614 = vmatpush2.msra.mxu0 0.0
      %615 = vmatprep.subr.mxu0 0.0
      %616 = vmatpush2.msra.mxu0 0.0
      %617 = vmatprep.subr.mxu0 0.0
      %618 = vmatpush2.msra.mxu0 0.0
      %619 = vmatprep.subr.mxu0 0.0
      %620 = vmatpush2.msra.mxu0 0.0
      %621 = vmatprep.subr.mxu0 0.0
      %622 = vmatpush2.msra.mxu0 0.0
      %623 = vmatprep.subr.mxu0 0.0
      %624 = vmatpush2.msra.mxu0 0.0
      %625 = vmatprep.subr.mxu0 0.0
      %626 = vmatpush2.msra.mxu0 0.0
      %627 = vmatprep.subr.mxu0 0.0
      %628 = vmatpush2.msra.mxu0 0.0
      %629 = vmatprep.subr.mxu0 0.0
      %630 = vmatpush2.msra.mxu0 0.0
      %631 = vmatprep.mubr.f32.mxu0 0.0
      %632 = vmatmul.mubr.f32.gmra.mxu0 %v565
      %v633 = vpop.f32.mrf.mxu0
      %v634 = vadd.f32 %v547, %v633
      %v635 = vpop.f32.mrf.mxu0
      %v636 = vadd.f32 %v551, %v635
      %637 = vdwg.mxu0
      %638 = vmatprep.subr.mxu0 0.0
      %639 = vmatpush1.msra.mxu0 0.0
      %640 = vmatprep.subr.mxu0 0.0
      %641 = vmatpush1.msra.mxu0 0.0
      %642 = vmatprep.subr.mxu0 0.0
      %643 = vmatpush1.msra.mxu0 0.0
      %644 = vmatprep.subr.mxu0 0.0
      %645 = vmatpush1.msra.mxu0 0.0
      %646 = vmatprep.subr.mxu0 0.0
      %647 = vmatpush1.msra.mxu0 0.0
      %648 = vmatprep.subr.mxu0 0.0
      %649 = vmatpush1.msra.mxu0 0.0
      %650 = vmatprep.subr.mxu0 0.0
      %651 = vmatpush1.msra.mxu0 0.0
      %652 = vmatprep.subr.mxu0 0.0
      %653 = vmatpush1.msra.mxu0 0.0
      %654 = vmatprep.subr.mxu0 0.0
      %655 = vmatpush1.msra.mxu0 0.0
      %656 = vmatprep.subr.mxu0 0.0
      %657 = vmatpush1.msra.mxu0 0.0
      %658 = vmatprep.subr.mxu0 0.0
      %659 = vmatpush1.msra.mxu0 0.0
      %660 = vmatprep.subr.mxu0 0.0
      %661 = vmatpush1.msra.mxu0 0.0
      %662 = vmatprep.subr.mxu0 %v541
      %663 = vmatpush1.msra.mxu0 %v540
      %664 = vmatprep.subr.mxu0 %v537
      %665 = vmatpush1.msra.mxu0 %v536
      %666 = vmatprep.subr.mxu0 %v533
      %667 = vmatpush1.msra.mxu0 %v532
      %668 = vmatprep.subr.mxu0 %v529
      %669 = vmatpush1.msra.mxu0 %v528
      %670 = vmatprep.subr.mxu0 0.0
      %671 = vmatpush2.msra.mxu0 0.0
      %672 = vmatprep.subr.mxu0 0.0
      %673 = vmatpush2.msra.mxu0 0.0
      %674 = vmatprep.subr.mxu0 0.0
      %675 = vmatpush2.msra.mxu0 0.0
      %676 = vmatprep.subr.mxu0 0.0
      %677 = vmatpush2.msra.mxu0 0.0
      %678 = vmatprep.subr.mxu0 0.0
      %679 = vmatpush2.msra.mxu0 0.0
      %680 = vmatprep.subr.mxu0 0.0
      %681 = vmatpush2.msra.mxu0 0.0
      %682 = vmatprep.subr.mxu0 0.0
      %683 = vmatpush2.msra.mxu0 0.0
      %684 = vmatprep.subr.mxu0 0.0
      %685 = vmatpush2.msra.mxu0 0.0
      %686 = vmatprep.subr.mxu0 0.0
      %687 = vmatpush2.msra.mxu0 0.0
      %688 = vmatprep.subr.mxu0 0.0
      %689 = vmatpush2.msra.mxu0 0.0
      %690 = vmatprep.subr.mxu0 0.0
      %691 = vmatpush2.msra.mxu0 0.0
      %692 = vmatprep.subr.mxu0 0.0
      %693 = vmatpush2.msra.mxu0 0.0
      %694 = vmatprep.subr.mxu0 0.0
      %695 = vmatpush2.msra.mxu0 0.0
      %696 = vmatprep.subr.mxu0 0.0
      %697 = vmatpush2.msra.mxu0 0.0
      %698 = vmatprep.subr.mxu0 0.0
      %699 = vmatpush2.msra.mxu0 0.0
      %700 = vmatprep.subr.mxu0 0.0
      %701 = vmatpush2.msra.mxu0 0.0
      %702 = vmatprep.mubr.f32.mxu0 0.0
      %703 = vmatmul.mubr.f32.gmra.mxu0 %v565
      %v704 = vpop.f32.mrf.mxu0
      %v705 = vadd.f32 %v555, %v704
      %v706 = vpop.f32.mrf.mxu0
      %v707 = vadd.f32 %v559, %v706
      %708 = vdwg.mxu0
      %v709 = vmax.f32 %v634, 0.0
      %v710 = vmax.f32 %v636, 0.0
      %v711 = vmax.f32 %v705, 0.0
      %v712 = vmax.f32 %v707, 0.0
      %vm713 = vcmask 253952
      %714 = vst.msk [vmem:[#allocation2 + $0x12] sm:$0x1] %vm713, %v709
      %716 = vrot.lane.b32.xlu0 %v709, 96
      %v717 = vpop.permute.xlu0 %716
      %719 = vst.msk [vmem:[#allocation2 + $0x13] sm:$0x1] %vm713, %v717
      %720 = vrot.lane.b32.xlu0 %v709, 64
      %v721 = vpop.permute.xlu0 %720
      %723 = vst.msk [vmem:[#allocation2 + $0x14] sm:$0x1] %vm713, %v721
      %724 = vrot.lane.b32.xlu0 %v709, 32
      %v725 = vpop.permute.xlu0 %724
      %727 = vst.msk [vmem:[#allocation2 + $0x15] sm:$0x1] %vm713, %v725
      %728 = vst.msk [vmem:[#allocation2 + $0x1a] sm:$0x1] %vm713, %v710
      %730 = vrot.lane.b32.xlu0 %v710, 96
      %v731 = vpop.permute.xlu0 %730
      %733 = vst.msk [vmem:[#allocation2 + $0x1b] sm:$0x1] %vm713, %v731
      %734 = vrot.lane.b32.xlu0 %v710, 64
      %v735 = vpop.permute.xlu0 %734
      %737 = vst.msk [vmem:[#allocation2 + $0x1c] sm:$0x1] %vm713, %v735
      %738 = vrot.lane.b32.xlu0 %v710, 32
      %v739 = vpop.permute.xlu0 %738
      %741 = vst.msk [vmem:[#allocation2 + $0x1d] sm:$0x1] %vm713, %v739
      %742 = vst.msk [vmem:[#allocation2 + $0x22] sm:$0x1] %vm713, %v711
      %744 = vrot.lane.b32.xlu0 %v711, 96
      %v745 = vpop.permute.xlu0 %744
      %747 = vst.msk [vmem:[#allocation2 + $0x23] sm:$0x1] %vm713, %v745
      %748 = vrot.lane.b32.xlu0 %v711, 64
      %v749 = vpop.permute.xlu0 %748
      %751 = vst.msk [vmem:[#allocation2 + $0x24] sm:$0x1] %vm713, %v749
      %752 = vrot.lane.b32.xlu0 %v711, 32
      %v753 = vpop.permute.xlu0 %752
      %755 = vst.msk [vmem:[#allocation2 + $0x25] sm:$0x1] %vm713, %v753
      %756 = vst.msk [vmem:[#allocation2 + $0x2a] sm:$0x1] %vm713, %v712
      %758 = vrot.lane.b32.xlu0 %v712, 96
      %v759 = vpop.permute.xlu0 %758
      %761 = vst.msk [vmem:[#allocation2 + $0x2b] sm:$0x1] %vm713, %v759
      %762 = vrot.lane.b32.xlu0 %v712, 64
      %v763 = vpop.permute.xlu0 %762
      %765 = vst.msk [vmem:[#allocation2 + $0x2c] sm:$0x1] %vm713, %v763
      %766 = vrot.lane.b32.xlu0 %v712, 32
      %v767 = vpop.permute.xlu0 %766
      %769 = vst.msk [vmem:[#allocation2 + $0x2d] sm:$0x1] %vm713, %v767
      %v770 = vld [vmem:[#allocation2] sm:$0xff]
      %v771 = vld [vmem:[#allocation2 + $0x8] sm:$0xff]
      %v772 = vld [vmem:[#allocation2 + $0x10] sm:$0xff]
      %v773 = vld [vmem:[#allocation2 + $0x18] sm:$0xff]
      %v774 = vld [vmem:[#allocation2 + $0x20] sm:$0xff]
      %v775 = vld [vmem:[#allocation2 + $0x28] sm:$0xff]
      %v776 = vld [vmem:[#allocation2 + $0x1] sm:$0xff]
      %v777 = vld [vmem:[#allocation2 + $0x9] sm:$0xff]
      %v778 = vld [vmem:[#allocation2 + $0x11] sm:$0xff]
      %v779 = vld [vmem:[#allocation2 + $0x19] sm:$0xff]
      %v780 = vld [vmem:[#allocation2 + $0x21] sm:$0xff]
      %v781 = vld [vmem:[#allocation2 + $0x29] sm:$0xff]
      %v782 = vld [vmem:[#allocation2 + $0x2] sm:$0xff]
      %v783 = vld [vmem:[#allocation2 + $0xa] sm:$0xff]
      %v784 = vld [vmem:[#allocation2 + $0x12] sm:$0xff]
      %v785 = vld [vmem:[#allocation2 + $0x1a] sm:$0xff]
      %v786 = vld [vmem:[#allocation2 + $0x22] sm:$0xff]
      %v787 = vld [vmem:[#allocation2 + $0x2a] sm:$0xff]
      %v788 = vld [vmem:[#allocation2 + $0x30] sm:$0xff]
      %v789 = vld [vmem:[#allocation2 + $0x31] sm:$0xff]
      %v790 = vld [vmem:[#allocation2 + $0x32] sm:$0xff]
      %v791 = vld [vmem:[#allocation2 + $0x38] sm:$0xff]
      %v792 = vld [vmem:[#allocation2 + $0x39] sm:$0xff]
      %v793 = vld [vmem:[#allocation2 + $0x3a] sm:$0xff]
      %800 = vrot.lane.b32.xlu0 %v776, 32
      %v801 = vpop.permute.xlu0 %800
      %802 = vrot.lane.b32.xlu0 %v777, 32
      %v803 = vpop.permute.xlu0 %802
      %804 = vrot.lane.b32.xlu0 %v778, 32
      %v805 = vpop.permute.xlu0 %804
      %806 = vrot.lane.b32.xlu0 %v779, 32
      %v807 = vpop.permute.xlu0 %806
      %808 = vrot.lane.b32.xlu0 %v780, 32
      %v809 = vpop.permute.xlu0 %808
      %810 = vrot.lane.b32.xlu0 %v781, 32
      %v811 = vpop.permute.xlu0 %810
      %824 = vrot.lane.b32.xlu0 %v782, 64
      %v825 = vpop.permute.xlu0 %824
      %826 = vrot.lane.b32.xlu0 %v783, 64
      %v827 = vpop.permute.xlu0 %826
      %828 = vrot.lane.b32.xlu0 %v784, 64
      %v829 = vpop.permute.xlu0 %828
      %830 = vrot.lane.b32.xlu0 %v785, 64
      %v831 = vpop.permute.xlu0 %830
      %832 = vrot.lane.b32.xlu0 %v786, 64
      %v833 = vpop.permute.xlu0 %832
      %834 = vrot.lane.b32.xlu0 %v787, 64
      %v835 = vpop.permute.xlu0 %834
      %848 = vrot.lane.b32.xlu0 %v771, 96
      %v849 = vpop.permute.xlu0 %848
      %850 = vrot.lane.b32.xlu0 %v772, 96
      %v851 = vpop.permute.xlu0 %850
      %852 = vrot.lane.b32.xlu0 %v773, 96
      %v853 = vpop.permute.xlu0 %852
      %854 = vrot.lane.b32.xlu0 %v774, 96
      %v855 = vpop.permute.xlu0 %854
      %856 = vrot.lane.b32.xlu0 %v775, 96
      %v857 = vpop.permute.xlu0 %856
      %858 = vrot.lane.b32.xlu0 %v788, 96
      %v859 = vpop.permute.xlu0 %858
      %867 = vrot.lane.b32.xlu0 %v783, 32
      %v868 = vpop.permute.xlu0 %867
      %869 = vrot.lane.b32.xlu0 %v784, 32
      %v870 = vpop.permute.xlu0 %869
      %871 = vrot.lane.b32.xlu0 %v785, 32
      %v872 = vpop.permute.xlu0 %871
      %873 = vrot.lane.b32.xlu0 %v786, 32
      %v874 = vpop.permute.xlu0 %873
      %875 = vrot.lane.b32.xlu0 %v787, 32
      %v876 = vpop.permute.xlu0 %875
      %877 = vrot.lane.b32.xlu0 %v790, 32
      %v878 = vpop.permute.xlu0 %877
      %886 = vrot.lane.b32.xlu0 %v772, 64
      %v887 = vpop.permute.xlu0 %886
      %888 = vrot.lane.b32.xlu0 %v773, 64
      %v889 = vpop.permute.xlu0 %888
      %890 = vrot.lane.b32.xlu0 %v774, 64
      %v891 = vpop.permute.xlu0 %890
      %892 = vrot.lane.b32.xlu0 %v775, 64
      %v893 = vpop.permute.xlu0 %892
      %894 = vrot.lane.b32.xlu0 %v788, 64
      %v895 = vpop.permute.xlu0 %894
      %896 = vrot.lane.b32.xlu0 %v791, 64
      %v897 = vpop.permute.xlu0 %896
      %906 = vrot.lane.b32.xlu0 %v778, 96
      %v907 = vpop.permute.xlu0 %906
      %908 = vrot.lane.b32.xlu0 %v779, 96
      %v909 = vpop.permute.xlu0 %908
      %910 = vrot.lane.b32.xlu0 %v780, 96
      %v911 = vpop.permute.xlu0 %910
      %912 = vrot.lane.b32.xlu0 %v781, 96
      %v913 = vpop.permute.xlu0 %912
      %914 = vrot.lane.b32.xlu0 %v789, 96
      %v915 = vpop.permute.xlu0 %914
      %916 = vrot.lane.b32.xlu0 %v792, 96
      %v917 = vpop.permute.xlu0 %916
      %v924 = vsel %vm408, %v770, %v801
      %v925 = vsel %vm408, %v771, %v803
      %v926 = vsel %vm408, %v772, %v805
      %v927 = vsel %vm408, %v773, %v807
      %v928 = vsel %vm408, %v774, %v809
      %v929 = vsel %vm408, %v775, %v811
      %vm930 = vcmask 523264
      %v931 = vsel %vm930, %v924, %v825
      %v932 = vsel %vm930, %v925, %v827
      %v933 = vsel %vm930, %v926, %v829
      %v934 = vsel %vm930, %v927, %v831
      %v935 = vsel %vm930, %v928, %v833
      %v936 = vsel %vm930, %v929, %v835
      %vm937 = vcmask 785408
      %v938 = vsel %vm937, %v931, %v849
      %v939 = vsel %vm937, %v932, %v851
      %v940 = vsel %vm937, %v933, %v853
      %v941 = vsel %vm937, %v934, %v855
      %v942 = vsel %vm937, %v935, %v857
      %v943 = vsel %vm937, %v936, %v859
      %v944 = vsel %vm408, %v777, %v868
      %v945 = vsel %vm408, %v778, %v870
      %v946 = vsel %vm408, %v779, %v872
      %v947 = vsel %vm408, %v780, %v874
      %v948 = vsel %vm408, %v781, %v876
      %v949 = vsel %vm408, %v789, %v878
      %v950 = vsel %vm930, %v944, %v887
      %v951 = vsel %vm930, %v945, %v889
      %v952 = vsel %vm930, %v946, %v891
      %v953 = vsel %vm930, %v947, %v893
      %v954 = vsel %vm930, %v948, %v895
      %v955 = vsel %vm930, %v949, %v897
      %v956 = vsel %vm937, %v950, %v907
      %v957 = vsel %vm937, %v951, %v909
      %v958 = vsel %vm937, %v952, %v911
      %v959 = vsel %vm937, %v953, %v913
      %v960 = vsel %vm937, %v954, %v915
      %v961 = vsel %vm937, %v955, %v917
      %v962 = vld [vmem:[%s3] sm:$0xff]
      %v963 = vld [vmem:[%s3 + $0x8] sm:$0xff]
      %v964 = vld [vmem:[%s3 + $0x10] sm:$0xff]
      %v965 = vld [vmem:[%s3 + $0x18] sm:$0xff]
      %v966 = vld [vmem:[%s3 + $0x20] sm:$0xff]
      %v967 = vld [vmem:[%s3 + $0x28] sm:$0xff]
      %v968 = vld [vmem:[%s3 + $0x30] sm:$0xff]
      %v969 = vld [vmem:[%s3 + $0x38] sm:$0xff]
      %v970 = vld [vmem:[%s3 + $0x40] sm:$0xff]
      %v971 = vld [vmem:[%s3 + $0x48] sm:$0xff]
      %v972 = vld [vmem:[%s3 + $0x50] sm:$0xff]
      %v973 = vld [vmem:[%s3 + $0x58] sm:$0xff]
      %v974 = vld [vmem:[%s3 + $0x60] sm:$0xff]
      %v975 = vld [vmem:[%s3 + $0x68] sm:$0xff]
      %v976 = vld [vmem:[%s3 + $0x70] sm:$0xff]
      %v977 = vld [vmem:[%s3 + $0x78] sm:$0xff]
      %v978 = vld [vmem:[%s3 + $0x80] sm:$0xff]
      %v979 = vld [vmem:[%s3 + $0x88] sm:$0xff]
      %v980 = vld [vmem:[%s3 + $0x90] sm:$0xff]
      %v981 = vld [vmem:[%s3 + $0x98] sm:$0xff]
      %v982 = vld [vmem:[%s3 + $0xa0] sm:$0xff]
      %v983 = vld [vmem:[%s3 + $0xa8] sm:$0xff]
      %v984 = vld [vmem:[%s3 + $0xb0] sm:$0xff]
      %v985 = vld [vmem:[%s3 + $0xb8] sm:$0xff]
      %v986 = vld [vmem:[%s3 + $0xc0] sm:$0xff]
      %v987 = vld [vmem:[%s3 + $0xc8] sm:$0xff]
      %v988 = vld [vmem:[%s3 + $0xd0] sm:$0xff]
      %v989 = vld [vmem:[%s3 + $0xd8] sm:$0xff]
      %v990 = vld [vmem:[%s3 + $0xe0] sm:$0xff]
      %v991 = vld [vmem:[%s3 + $0xe8] sm:$0xff]
      %v992 = vld [vmem:[%s3 + $0xf0] sm:$0xff]
      %v993 = vld [vmem:[%s3 + $0xf8] sm:$0xff]
      %v994 = vld [vmem:[%s3 + $0x100] sm:$0xff]
      %v995 = vld [vmem:[%s3 + $0x108] sm:$0xff]
      %v996 = vld [vmem:[%s3 + $0x110] sm:$0xff]
      %v997 = vld [vmem:[%s3 + $0x118] sm:$0xff]
      %v998 = vld [vmem:[%s4] sm:$0x1]
      %v1000 = vlaneseq
      %v1001 = vshrl.u32 %v1000, 7
      %v1002 = vsub.s32 0, %v1001
      %v1003 = vrot.slane %v998, %v1002
      %v1005 = vsel %vm408, %v784, 0
      %v1007 = vsel %vm408, %v785, 0
      %v1009 = vsel %vm408, %v786, 0
      %v1011 = vsel %vm408, %v787, 0
      %v1013 = vsel %vm408, %v790, 0
      %v1016 = vsel %vm408, %v793, 0
      %1018 = vmatprep.subr.mxu0 0.0
      %1019 = vmatpush1.msra.mxu0 %v977
      %1020 = vmatprep.subr.mxu0 0.0
      %1021 = vmatpush1.msra.mxu0 %v976
      %1022 = vmatprep.subr.mxu0 0.0
      %1023 = vmatpush1.msra.mxu0 %v975
      %1024 = vmatprep.subr.mxu0 0.0
      %1025 = vmatpush1.msra.mxu0 %v974
      %1026 = vmatprep.subr.mxu0 0.0
      %1027 = vmatpush1.msra.mxu0 %v973
      %1028 = vmatprep.subr.mxu0 0.0
      %1029 = vmatpush1.msra.mxu0 %v972
      %1030 = vmatprep.subr.mxu0 0.0
      %1031 = vmatpush1.msra.mxu0 %v971
      %1032 = vmatprep.subr.mxu0 0.0
      %1033 = vmatpush1.msra.mxu0 %v970
      %1034 = vmatprep.subr.mxu0 0.0
      %1035 = vmatpush1.msra.mxu0 %v969
      %1036 = vmatprep.subr.mxu0 0.0
      %1037 = vmatpush1.msra.mxu0 %v968
      %1038 = vmatprep.subr.mxu0 0.0
      %1039 = vmatpush1.msra.mxu0 %v967
      %1040 = vmatprep.subr.mxu0 0.0
      %1041 = vmatpush1.msra.mxu0 %v966
      %1042 = vmatprep.subr.mxu0 0.0
      %1043 = vmatpush1.msra.mxu0 %v965
      %1044 = vmatprep.subr.mxu0 0.0
      %1045 = vmatpush1.msra.mxu0 %v964
      %1046 = vmatprep.subr.mxu0 0.0
      %1047 = vmatpush1.msra.mxu0 %v963
      %1048 = vmatprep.subr.mxu0 0.0
      %1049 = vmatpush1.msra.mxu0 %v962
      %1050 = vmatprep.subr.mxu0 0.0
      %1051 = vmatpush2.msra.mxu0 %v993
      %1052 = vmatprep.subr.mxu0 0.0
      %1053 = vmatpush2.msra.mxu0 %v992
      %1054 = vmatprep.subr.mxu0 0.0
      %1055 = vmatpush2.msra.mxu0 %v991
      %1056 = vmatprep.subr.mxu0 0.0
      %1057 = vmatpush2.msra.mxu0 %v990
      %1058 = vmatprep.subr.mxu0 0.0
      %1059 = vmatpush2.msra.mxu0 %v989
      %1060 = vmatprep.subr.mxu0 0.0
      %1061 = vmatpush2.msra.mxu0 %v988
      %1062 = vmatprep.subr.mxu0 0.0
      %1063 = vmatpush2.msra.mxu0 %v987
      %1064 = vmatprep.subr.mxu0 0.0
      %1065 = vmatpush2.msra.mxu0 %v986
      %1066 = vmatprep.subr.mxu0 0.0
      %1067 = vmatpush2.msra.mxu0 %v985
      %1068 = vmatprep.subr.mxu0 0.0
      %1069 = vmatpush2.msra.mxu0 %v984
      %1070 = vmatprep.subr.mxu0 0.0
      %1071 = vmatpush2.msra.mxu0 %v983
      %1072 = vmatprep.subr.mxu0 0.0
      %1073 = vmatpush2.msra.mxu0 %v982
      %1074 = vmatprep.subr.mxu0 0.0
      %1075 = vmatpush2.msra.mxu0 %v981
      %1076 = vmatprep.subr.mxu0 0.0
      %1077 = vmatpush2.msra.mxu0 %v980
      %1078 = vmatprep.subr.mxu0 0.0
      %1079 = vmatpush2.msra.mxu0 %v979
      %1080 = vmatprep.subr.mxu0 0.0
      %1081 = vmatpush2.msra.mxu0 %v978
      %1082 = vmatprep.mubr.f32.mxu0 %v956
      %1083 = vmatmul.mubr.f32.gmra.mxu0 %v938
      %v1084 = vpop.f32.mrf.mxu0
      %v1085 = vadd.f32 %v1003, %v1084
      %v1086 = vpop.f32.mrf.mxu0
      %1087 = vmatprep.mubr.f32.mxu0 %v957
      %1088 = vmatmul.mubr.f32.gmra.mxu0 %v939
      %v1089 = vpop.f32.mrf.mxu0
      %v1090 = vadd.f32 %v1003, %v1089
      %v1091 = vpop.f32.mrf.mxu0
      %1092 = vmatprep.mubr.f32.mxu0 %v958
      %1093 = vmatmul.mubr.f32.gmra.mxu0 %v940
      %v1094 = vpop.f32.mrf.mxu0
      %v1095 = vadd.f32 %v1003, %v1094
      %v1096 = vpop.f32.mrf.mxu0
      %1097 = vmatprep.mubr.f32.mxu0 %v959
      %1098 = vmatmul.mubr.f32.gmra.mxu0 %v941
      %v1099 = vpop.f32.mrf.mxu0
      %v1100 = vadd.f32 %v1003, %v1099
      %v1101 = vpop.f32.mrf.mxu0
      %1102 = vmatprep.mubr.f32.mxu0 %v960
      %1103 = vmatmul.mubr.f32.gmra.mxu0 %v942
      %v1104 = vpop.f32.mrf.mxu0
      %v1105 = vadd.f32 %v1003, %v1104
      %v1106 = vpop.f32.mrf.mxu0
      %1107 = vmatprep.mubr.f32.mxu0 %v961
      %1108 = vmatmul.mubr.f32.gmra.mxu0 %v943
      %v1109 = vpop.f32.mrf.mxu0
      %v1110 = vadd.f32 %v1003, %v1109
      %v1111 = vpop.f32.mrf.mxu0
      %1112 = vdwg.mxu0
      %1113 = vmatprep.subr.mxu0 0.0
      %1114 = vmatpush1.msra.mxu0 0.0
      %1115 = vmatprep.subr.mxu0 0.0
      %1116 = vmatpush1.msra.mxu0 0.0
      %1117 = vmatprep.subr.mxu0 0.0
      %1118 = vmatpush1.msra.mxu0 0.0
      %1119 = vmatprep.subr.mxu0 0.0
      %1120 = vmatpush1.msra.mxu0 0.0
      %1121 = vmatprep.subr.mxu0 0.0
      %1122 = vmatpush1.msra.mxu0 0.0
      %1123 = vmatprep.subr.mxu0 0.0
      %1124 = vmatpush1.msra.mxu0 0.0
      %1125 = vmatprep.subr.mxu0 0.0
      %1126 = vmatpush1.msra.mxu0 0.0
      %1127 = vmatprep.subr.mxu0 0.0
      %1128 = vmatpush1.msra.mxu0 0.0
      %1129 = vmatprep.subr.mxu0 0.0
      %1130 = vmatpush1.msra.mxu0 0.0
      %1131 = vmatprep.subr.mxu0 0.0
      %1132 = vmatpush1.msra.mxu0 0.0
      %1133 = vmatprep.subr.mxu0 0.0
      %1134 = vmatpush1.msra.mxu0 0.0
      %1135 = vmatprep.subr.mxu0 0.0
      %1136 = vmatpush1.msra.mxu0 0.0
      %1137 = vmatprep.subr.mxu0 0.0
      %1138 = vmatpush1.msra.mxu0 %v997
      %1139 = vmatprep.subr.mxu0 0.0
      %1140 = vmatpush1.msra.mxu0 %v996
      %1141 = vmatprep.subr.mxu0 0.0
      %1142 = vmatpush1.msra.mxu0 %v995
      %1143 = vmatprep.subr.mxu0 0.0
      %1144 = vmatpush1.msra.mxu0 %v994
      %1145 = vmatprep.subr.mxu0 0.0
      %1146 = vmatpush2.msra.mxu0 0.0
      %1147 = vmatprep.subr.mxu0 0.0
      %1148 = vmatpush2.msra.mxu0 0.0
      %1149 = vmatprep.subr.mxu0 0.0
      %1150 = vmatpush2.msra.mxu0 0.0
      %1151 = vmatprep.subr.mxu0 0.0
      %1152 = vmatpush2.msra.mxu0 0.0
      %1153 = vmatprep.subr.mxu0 0.0
      %1154 = vmatpush2.msra.mxu0 0.0
      %1155 = vmatprep.subr.mxu0 0.0
      %1156 = vmatpush2.msra.mxu0 0.0
      %1157 = vmatprep.subr.mxu0 0.0
      %1158 = vmatpush2.msra.mxu0 0.0
      %1159 = vmatprep.subr.mxu0 0.0
      %1160 = vmatpush2.msra.mxu0 0.0
      %1161 = vmatprep.subr.mxu0 0.0
      %1162 = vmatpush2.msra.mxu0 0.0
      %1163 = vmatprep.subr.mxu0 0.0
      %1164 = vmatpush2.msra.mxu0 0.0
      %1165 = vmatprep.subr.mxu0 0.0
      %1166 = vmatpush2.msra.mxu0 0.0
      %1167 = vmatprep.subr.mxu0 0.0
      %1168 = vmatpush2.msra.mxu0 0.0
      %1169 = vmatprep.subr.mxu0 0.0
      %1170 = vmatpush2.msra.mxu0 0.0
      %1171 = vmatprep.subr.mxu0 0.0
      %1172 = vmatpush2.msra.mxu0 0.0
      %1173 = vmatprep.subr.mxu0 0.0
      %1174 = vmatpush2.msra.mxu0 0.0
      %1175 = vmatprep.subr.mxu0 0.0
      %1176 = vmatpush2.msra.mxu0 0.0
      %1177 = vmatprep.mubr.f32.mxu0 0.0
      %1178 = vmatmul.mubr.f32.gmra.mxu0 %v1005
      %v1179 = vpop.f32.mrf.mxu0
      %v1180 = vadd.f32 %v1085, %v1179
      %v1181 = vpop.f32.mrf.mxu0
      %1182 = vmatprep.mubr.f32.mxu0 0.0
      %1183 = vmatmul.mubr.f32.gmra.mxu0 %v1007
      %v1184 = vpop.f32.mrf.mxu0
      %v1185 = vadd.f32 %v1090, %v1184
      %v1186 = vpop.f32.mrf.mxu0
      %1187 = vmatprep.mubr.f32.mxu0 0.0
      %1188 = vmatmul.mubr.f32.gmra.mxu0 %v1009
      %v1189 = vpop.f32.mrf.mxu0
      %v1190 = vadd.f32 %v1095, %v1189
      %v1191 = vpop.f32.mrf.mxu0
      %1192 = vmatprep.mubr.f32.mxu0 0.0
      %1193 = vmatmul.mubr.f32.gmra.mxu0 %v1011
      %v1194 = vpop.f32.mrf.mxu0
      %v1195 = vadd.f32 %v1100, %v1194
      %v1196 = vpop.f32.mrf.mxu0
      %1197 = vmatprep.mubr.f32.mxu0 0.0
      %1198 = vmatmul.mubr.f32.gmra.mxu0 %v1013
      %v1199 = vpop.f32.mrf.mxu0
      %v1200 = vadd.f32 %v1105, %v1199
      %v1201 = vpop.f32.mrf.mxu0
      %1202 = vmatprep.mubr.f32.mxu0 0.0
      %1203 = vmatmul.mubr.f32.gmra.mxu0 %v1016
      %v1204 = vpop.f32.mrf.mxu0
      %v1205 = vadd.f32 %v1110, %v1204
      %v1206 = vpop.f32.mrf.mxu0
      %1207 = vdwg.mxu0
      %v1208 = vmax.f32 %v1180, 0.0
      %v1209 = vmax.f32 %v1185, 0.0
      %v1210 = vmax.f32 %v1190, 0.0
      %v1211 = vmax.f32 %v1195, 0.0
      %v1212 = vmax.f32 %v1200, 0.0
      %v1213 = vmax.f32 %v1205, 0.0
      %vm1214 = vcmask 259072
      %1215 = vst.msk [vmem:[#allocation3 + $0x16] sm:$0x3f] %vm1214, %v1208
      %1216 = vst.msk [vmem:[#allocation3 + $0x20] sm:$0x3f] %vm1214, %v1209
      %1217 = vst.msk [vmem:[#allocation3 + $0x2a] sm:$0x3f] %vm1214, %v1210
      %1218 = vst.msk [vmem:[#allocation3 + $0x34] sm:$0x3f] %vm1214, %v1211
      %1219 = vst.msk [vmem:[#allocation3 + $0x3e] sm:$0x3f] %vm1214, %v1212
      %1220 = vst.msk [vmem:[#allocation3 + $0x48] sm:$0x3f] %vm1214, %v1213
      %v1221 = vld [vmem:[#allocation3] sm:$0xff]
      %v1222 = vld [vmem:[#allocation3 + $0x8] sm:$0xff]
      %v1223 = vld [vmem:[#allocation3 + $0x10] sm:$0xff]
      %v1224 = vld [vmem:[#allocation3 + $0x18] sm:$0xff]
      %v1225 = vld [vmem:[#allocation3 + $0x20] sm:$0xff]
      %v1226 = vld [vmem:[#allocation3 + $0x28] sm:$0xff]
      %v1227 = vld [vmem:[#allocation3 + $0x30] sm:$0xff]
      %v1228 = vld [vmem:[#allocation3 + $0x38] sm:$0xff]
      %v1229 = vld [vmem:[#allocation3 + $0x40] sm:$0xff]
      %v1230 = vld [vmem:[#allocation3 + $0x48] sm:$0xff]
      %v1231 = vld [vmem:[#allocation3 + $0x1] sm:$0xff]
      %v1232 = vld [vmem:[#allocation3 + $0x9] sm:$0xff]
      %v1233 = vld [vmem:[#allocation3 + $0x11] sm:$0xff]
      %v1234 = vld [vmem:[#allocation3 + $0x19] sm:$0xff]
      %v1235 = vld [vmem:[#allocation3 + $0x21] sm:$0xff]
      %v1236 = vld [vmem:[#allocation3 + $0x29] sm:$0xff]
      %v1237 = vld [vmem:[#allocation3 + $0x31] sm:$0xff]
      %v1238 = vld [vmem:[#allocation3 + $0x39] sm:$0xff]
      %v1239 = vld [vmem:[#allocation3 + $0x41] sm:$0xff]
      %v1240 = vld [vmem:[#allocation3 + $0x49] sm:$0xff]
      %v1241 = vld [vmem:[#allocation3 + $0x2] sm:$0xff]
      %v1242 = vld [vmem:[#allocation3 + $0xa] sm:$0xff]
      %v1243 = vld [vmem:[#allocation3 + $0x12] sm:$0xff]
      %v1244 = vld [vmem:[#allocation3 + $0x1a] sm:$0xff]
      %v1245 = vld [vmem:[#allocation3 + $0x22] sm:$0xff]
      %v1246 = vld [vmem:[#allocation3 + $0x2a] sm:$0xff]
      %v1247 = vld [vmem:[#allocation3 + $0x32] sm:$0xff]
      %v1248 = vld [vmem:[#allocation3 + $0x3a] sm:$0xff]
      %v1249 = vld [vmem:[#allocation3 + $0x42] sm:$0xff]
      %v1250 = vld [vmem:[#allocation3 + $0x4a] sm:$0xff]
      %v1251 = vld [vmem:[#allocation3 + $0x52] sm:$0xff]
      %v1252 = vld [vmem:[#allocation3 + $0xb] sm:$0xff]
      %v1253 = vld [vmem:[#allocation3 + $0x13] sm:$0xff]
      %v1254 = vld [vmem:[#allocation3 + $0x1b] sm:$0xff]
      %v1255 = vld [vmem:[#allocation3 + $0x23] sm:$0xff]
      %v1256 = vld [vmem:[#allocation3 + $0x2b] sm:$0xff]
      %v1257 = vld [vmem:[#allocation3 + $0x33] sm:$0xff]
      %v1258 = vld [vmem:[#allocation3 + $0x3b] sm:$0xff]
      %v1259 = vld [vmem:[#allocation3 + $0x43] sm:$0xff]
      %v1260 = vld [vmem:[#allocation3 + $0x4b] sm:$0xff]
      %v1261 = vld [vmem:[#allocation3 + $0x53] sm:$0xff]
      %v1262 = vld [vmem:[#allocation3 + $0xc] sm:$0xff]
      %v1263 = vld [vmem:[#allocation3 + $0x14] sm:$0xff]
      %v1264 = vld [vmem:[#allocation3 + $0x1c] sm:$0xff]
      %v1265 = vld [vmem:[#allocation3 + $0x24] sm:$0xff]
      %v1266 = vld [vmem:[#allocation3 + $0x2c] sm:$0xff]
      %v1267 = vld [vmem:[#allocation3 + $0x34] sm:$0xff]
      %v1268 = vld [vmem:[#allocation3 + $0x3c] sm:$0xff]
      %v1269 = vld [vmem:[#allocation3 + $0x44] sm:$0xff]
      %v1270 = vld [vmem:[#allocation3 + $0x4c] sm:$0xff]
      %v1271 = vld [vmem:[#allocation3 + $0x54] sm:$0xff]
      %v1272 = vld [vmem:[#allocation3 + $0x5c] sm:$0xff]
      %v1273 = vld [vmem:[#allocation3 + $0x15] sm:$0xff]
      %v1274 = vld [vmem:[#allocation3 + $0x1d] sm:$0xff]
      %v1275 = vld [vmem:[#allocation3 + $0x25] sm:$0xff]
      %v1276 = vld [vmem:[#allocation3 + $0x2d] sm:$0xff]
      %v1277 = vld [vmem:[#allocation3 + $0x35] sm:$0xff]
      %v1278 = vld [vmem:[#allocation3 + $0x3d] sm:$0xff]
      %v1279 = vld [vmem:[#allocation3 + $0x45] sm:$0xff]
      %v1280 = vld [vmem:[#allocation3 + $0x4d] sm:$0xff]
      %v1281 = vld [vmem:[#allocation3 + $0x55] sm:$0xff]
      %v1282 = vld [vmem:[#allocation3 + $0x5d] sm:$0xff]
      %v1283 = vld [vmem:[#allocation3 + $0x16] sm:$0xff]
      %v1284 = vld [vmem:[#allocation3 + $0x1e] sm:$0xff]
      %v1285 = vld [vmem:[#allocation3 + $0x26] sm:$0xff]
      %v1286 = vld [vmem:[#allocation3 + $0x2e] sm:$0xff]
      %v1287 = vld [vmem:[#allocation3 + $0x36] sm:$0xff]
      %v1288 = vld [vmem:[#allocation3 + $0x3e] sm:$0xff]
      %v1289 = vld [vmem:[#allocation3 + $0x46] sm:$0xff]
      %v1290 = vld [vmem:[#allocation3 + $0x4e] sm:$0xff]
      %v1291 = vld [vmem:[#allocation3 + $0x56] sm:$0xff]
      %v1292 = vld [vmem:[#allocation3 + $0x5e] sm:$0xff]
      %1303 = vrot.lane.b32.xlu0 %v1231, 32
      %v1304 = vpop.permute.xlu0 %1303
      %1305 = vrot.lane.b32.xlu0 %v1232, 32
      %v1306 = vpop.permute.xlu0 %1305
      %1307 = vrot.lane.b32.xlu0 %v1233, 32
      %v1308 = vpop.permute.xlu0 %1307
      %1309 = vrot.lane.b32.xlu0 %v1234, 32
      %v1310 = vpop.permute.xlu0 %1309
      %1311 = vrot.lane.b32.xlu0 %v1235, 32
      %v1312 = vpop.permute.xlu0 %1311
      %1313 = vrot.lane.b32.xlu0 %v1236, 32
      %v1314 = vpop.permute.xlu0 %1313
      %1315 = vrot.lane.b32.xlu0 %v1237, 32
      %v1316 = vpop.permute.xlu0 %1315
      %1317 = vrot.lane.b32.xlu0 %v1238, 32
      %v1318 = vpop.permute.xlu0 %1317
      %1319 = vrot.lane.b32.xlu0 %v1239, 32
      %v1320 = vpop.permute.xlu0 %1319
      %1321 = vrot.lane.b32.xlu0 %v1240, 32
      %v1322 = vpop.permute.xlu0 %1321
      %1343 = vrot.lane.b32.xlu0 %v1241, 64
      %v1344 = vpop.permute.xlu0 %1343
      %1345 = vrot.lane.b32.xlu0 %v1242, 64
      %v1346 = vpop.permute.xlu0 %1345
      %1347 = vrot.lane.b32.xlu0 %v1243, 64
      %v1348 = vpop.permute.xlu0 %1347
      %1349 = vrot.lane.b32.xlu0 %v1244, 64
      %v1350 = vpop.permute.xlu0 %1349
      %1351 = vrot.lane.b32.xlu0 %v1245, 64
      %v1352 = vpop.permute.xlu0 %1351
      %1353 = vrot.lane.b32.xlu0 %v1246, 64
      %v1354 = vpop.permute.xlu0 %1353
      %1355 = vrot.lane.b32.xlu0 %v1247, 64
      %v1356 = vpop.permute.xlu0 %1355
      %1357 = vrot.lane.b32.xlu0 %v1248, 64
      %v1358 = vpop.permute.xlu0 %1357
      %1359 = vrot.lane.b32.xlu0 %v1249, 64
      %v1360 = vpop.permute.xlu0 %1359
      %1361 = vrot.lane.b32.xlu0 %v1250, 64
      %v1362 = vpop.permute.xlu0 %1361
      %1374 = vrot.lane.b32.xlu0 %v1242, 96
      %v1375 = vpop.permute.xlu0 %1374
      %1376 = vrot.lane.b32.xlu0 %v1243, 96
      %v1377 = vpop.permute.xlu0 %1376
      %1378 = vrot.lane.b32.xlu0 %v1244, 96
      %v1379 = vpop.permute.xlu0 %1378
      %1380 = vrot.lane.b32.xlu0 %v1245, 96
      %v1381 = vpop.permute.xlu0 %1380
      %1382 = vrot.lane.b32.xlu0 %v1246, 96
      %v1383 = vpop.permute.xlu0 %1382
      %1384 = vrot.lane.b32.xlu0 %v1247, 96
      %v1385 = vpop.permute.xlu0 %1384
      %1386 = vrot.lane.b32.xlu0 %v1248, 96
      %v1387 = vpop.permute.xlu0 %1386
      %1388 = vrot.lane.b32.xlu0 %v1249, 96
      %v1389 = vpop.permute.xlu0 %1388
      %1390 = vrot.lane.b32.xlu0 %v1250, 96
      %v1391 = vpop.permute.xlu0 %1390
      %1392 = vrot.lane.b32.xlu0 %v1251, 96
      %v1393 = vpop.permute.xlu0 %1392
      %1414 = vrot.lane.b32.xlu0 %v1262, 32
      %v1415 = vpop.permute.xlu0 %1414
      %1416 = vrot.lane.b32.xlu0 %v1263, 32
      %v1417 = vpop.permute.xlu0 %1416
      %1418 = vrot.lane.b32.xlu0 %v1264, 32
      %v1419 = vpop.permute.xlu0 %1418
      %1420 = vrot.lane.b32.xlu0 %v1265, 32
      %v1421 = vpop.permute.xlu0 %1420
      %1422 = vrot.lane.b32.xlu0 %v1266, 32
      %v1423 = vpop.permute.xlu0 %1422
      %1424 = vrot.lane.b32.xlu0 %v1267, 32
      %v1425 = vpop.permute.xlu0 %1424
      %1426 = vrot.lane.b32.xlu0 %v1268, 32
      %v1427 = vpop.permute.xlu0 %1426
      %1428 = vrot.lane.b32.xlu0 %v1269, 32
      %v1429 = vpop.permute.xlu0 %1428
      %1430 = vrot.lane.b32.xlu0 %v1270, 32
      %v1431 = vpop.permute.xlu0 %1430
      %1432 = vrot.lane.b32.xlu0 %v1271, 32
      %v1433 = vpop.permute.xlu0 %1432
      %1445 = vrot.lane.b32.xlu0 %v1263, 64
      %v1446 = vpop.permute.xlu0 %1445
      %1447 = vrot.lane.b32.xlu0 %v1264, 64
      %v1448 = vpop.permute.xlu0 %1447
      %1449 = vrot.lane.b32.xlu0 %v1265, 64
      %v1450 = vpop.permute.xlu0 %1449
      %1451 = vrot.lane.b32.xlu0 %v1266, 64
      %v1452 = vpop.permute.xlu0 %1451
      %1453 = vrot.lane.b32.xlu0 %v1267, 64
      %v1454 = vpop.permute.xlu0 %1453
      %1455 = vrot.lane.b32.xlu0 %v1268, 64
      %v1456 = vpop.permute.xlu0 %1455
      %1457 = vrot.lane.b32.xlu0 %v1269, 64
      %v1458 = vpop.permute.xlu0 %1457
      %1459 = vrot.lane.b32.xlu0 %v1270, 64
      %v1460 = vpop.permute.xlu0 %1459
      %1461 = vrot.lane.b32.xlu0 %v1271, 64
      %v1462 = vpop.permute.xlu0 %1461
      %1463 = vrot.lane.b32.xlu0 %v1272, 64
      %v1464 = vpop.permute.xlu0 %1463
      %1485 = vrot.lane.b32.xlu0 %v1273, 96
      %v1486 = vpop.permute.xlu0 %1485
      %1487 = vrot.lane.b32.xlu0 %v1274, 96
      %v1488 = vpop.permute.xlu0 %1487
      %1489 = vrot.lane.b32.xlu0 %v1275, 96
      %v1490 = vpop.permute.xlu0 %1489
      %1491 = vrot.lane.b32.xlu0 %v1276, 96
      %v1492 = vpop.permute.xlu0 %1491
      %1493 = vrot.lane.b32.xlu0 %v1277, 96
      %v1494 = vpop.permute.xlu0 %1493
      %1495 = vrot.lane.b32.xlu0 %v1278, 96
      %v1496 = vpop.permute.xlu0 %1495
      %1497 = vrot.lane.b32.xlu0 %v1279, 96
      %v1498 = vpop.permute.xlu0 %1497
      %1499 = vrot.lane.b32.xlu0 %v1280, 96
      %v1500 = vpop.permute.xlu0 %1499
      %1501 = vrot.lane.b32.xlu0 %v1281, 96
      %v1502 = vpop.permute.xlu0 %1501
      %1503 = vrot.lane.b32.xlu0 %v1282, 96
      %v1504 = vpop.permute.xlu0 %1503
      %v1515 = vsel %vm408, %v1221, %v1304
      %v1516 = vsel %vm408, %v1222, %v1306
      %v1517 = vsel %vm408, %v1223, %v1308
      %v1518 = vsel %vm408, %v1224, %v1310
      %v1519 = vsel %vm408, %v1225, %v1312
      %v1520 = vsel %vm408, %v1226, %v1314
      %v1521 = vsel %vm408, %v1227, %v1316
      %v1522 = vsel %vm408, %v1228, %v1318
      %v1523 = vsel %vm408, %v1229, %v1320
      %v1524 = vsel %vm408, %v1230, %v1322
      %v1525 = vsel %vm930, %v1515, %v1344
      %v1526 = vsel %vm930, %v1516, %v1346
      %v1527 = vsel %vm930, %v1517, %v1348
      %v1528 = vsel %vm930, %v1518, %v1350
      %v1529 = vsel %vm930, %v1519, %v1352
      %v1530 = vsel %vm930, %v1520, %v1354
      %v1531 = vsel %vm930, %v1521, %v1356
      %v1532 = vsel %vm930, %v1522, %v1358
      %v1533 = vsel %vm930, %v1523, %v1360
      %v1534 = vsel %vm930, %v1524, %v1362
      %v1535 = vsel %vm937, %v1525, %v1375
      %v1536 = vsel %vm937, %v1526, %v1377
      %v1537 = vsel %vm937, %v1527, %v1379
      %v1538 = vsel %vm937, %v1528, %v1381
      %v1539 = vsel %vm937, %v1529, %v1383
      %v1540 = vsel %vm937, %v1530, %v1385
      %v1541 = vsel %vm937, %v1531, %v1387
      %v1542 = vsel %vm937, %v1532, %v1389
      %v1543 = vsel %vm937, %v1533, %v1391
      %v1544 = vsel %vm937, %v1534, %v1393
      %v1545 = vsel %vm408, %v1252, %v1415
      %v1546 = vsel %vm408, %v1253, %v1417
      %v1547 = vsel %vm408, %v1254, %v1419
      %v1548 = vsel %vm408, %v1255, %v1421
      %v1549 = vsel %vm408, %v1256, %v1423
      %v1550 = vsel %vm408, %v1257, %v1425
      %v1551 = vsel %vm408, %v1258, %v1427
      %v1552 = vsel %vm408, %v1259, %v1429
      %v1553 = vsel %vm408, %v1260, %v1431
      %v1554 = vsel %vm408, %v1261, %v1433
      %v1555 = vsel %vm930, %v1545, %v1446
      %v1556 = vsel %vm930, %v1546, %v1448
      %v1557 = vsel %vm930, %v1547, %v1450
      %v1558 = vsel %vm930, %v1548, %v1452
      %v1559 = vsel %vm930, %v1549, %v1454
      %v1560 = vsel %vm930, %v1550, %v1456
      %v1561 = vsel %vm930, %v1551, %v1458
      %v1562 = vsel %vm930, %v1552, %v1460
      %v1563 = vsel %vm930, %v1553, %v1462
      %v1564 = vsel %vm930, %v1554, %v1464
      %v1565 = vsel %vm937, %v1555, %v1486
      %v1566 = vsel %vm937, %v1556, %v1488
      %v1567 = vsel %vm937, %v1557, %v1490
      %v1568 = vsel %vm937, %v1558, %v1492
      %v1569 = vsel %vm937, %v1559, %v1494
      %v1570 = vsel %vm937, %v1560, %v1496
      %v1571 = vsel %vm937, %v1561, %v1498
      %v1572 = vsel %vm937, %v1562, %v1500
      %v1573 = vsel %vm937, %v1563, %v1502
      %v1574 = vsel %vm937, %v1564, %v1504
      %v1575 = vld [vmem:[%s5] sm:$0xff]
      %v1576 = vld [vmem:[%s5 + $0x8] sm:$0xff]
      %v1577 = vld [vmem:[%s5 + $0x10] sm:$0xff]
      %v1578 = vld [vmem:[%s5 + $0x18] sm:$0xff]
      %v1579 = vld [vmem:[%s5 + $0x20] sm:$0xff]
      %v1580 = vld [vmem:[%s5 + $0x28] sm:$0xff]
      %v1581 = vld [vmem:[%s5 + $0x30] sm:$0xff]
      %v1582 = vld [vmem:[%s5 + $0x38] sm:$0xff]
      %v1583 = vld [vmem:[%s5 + $0x40] sm:$0xff]
      %v1584 = vld [vmem:[%s5 + $0x48] sm:$0xff]
      %v1585 = vld [vmem:[%s5 + $0x50] sm:$0xff]
      %v1586 = vld [vmem:[%s5 + $0x58] sm:$0xff]
      %v1587 = vld [vmem:[%s5 + $0x60] sm:$0xff]
      %v1588 = vld [vmem:[%s5 + $0x68] sm:$0xff]
      %v1589 = vld [vmem:[%s5 + $0x70] sm:$0xff]
      %v1590 = vld [vmem:[%s5 + $0x78] sm:$0xff]
      %v1591 = vld [vmem:[%s5 + $0x80] sm:$0xff]
      %v1592 = vld [vmem:[%s5 + $0x88] sm:$0xff]
      %v1593 = vld [vmem:[%s5 + $0x90] sm:$0xff]
      %v1594 = vld [vmem:[%s5 + $0x98] sm:$0xff]
      %v1595 = vld [vmem:[%s5 + $0xa0] sm:$0xff]
      %v1596 = vld [vmem:[%s5 + $0xa8] sm:$0xff]
      %v1597 = vld [vmem:[%s5 + $0xb0] sm:$0xff]
      %v1598 = vld [vmem:[%s5 + $0xb8] sm:$0xff]
      %v1599 = vld [vmem:[%s5 + $0xc0] sm:$0xff]
      %v1600 = vld [vmem:[%s5 + $0xc8] sm:$0xff]
      %v1601 = vld [vmem:[%s5 + $0xd0] sm:$0xff]
      %v1602 = vld [vmem:[%s5 + $0xd8] sm:$0xff]
      %v1603 = vld [vmem:[%s5 + $0xe0] sm:$0xff]
      %v1604 = vld [vmem:[%s5 + $0xe8] sm:$0xff]
      %v1605 = vld [vmem:[%s5 + $0xf0] sm:$0xff]
      %v1606 = vld [vmem:[%s5 + $0xf8] sm:$0xff]
      %v1607 = vld [vmem:[%s5 + $0x100] sm:$0xff]
      %v1608 = vld [vmem:[%s5 + $0x108] sm:$0xff]
      %v1609 = vld [vmem:[%s5 + $0x110] sm:$0xff]
      %v1610 = vld [vmem:[%s5 + $0x118] sm:$0xff]
      %v1611 = vld [vmem:[%s6] sm:$0x1]
      %v1613 = vlaneseq
      %v1614 = vshrl.u32 %v1613, 7
      %v1615 = vsub.s32 0, %v1614
      %v1616 = vrot.slane %v1611, %v1615
      %v1619 = vsel %vm408, %v1283, 0
      %v1622 = vsel %vm408, %v1284, 0
      %v1625 = vsel %vm408, %v1285, 0
      %v1628 = vsel %vm408, %v1286, 0
      %v1631 = vsel %vm408, %v1287, 0
      %v1634 = vsel %vm408, %v1288, 0
      %v1637 = vsel %vm408, %v1289, 0
      %v1640 = vsel %vm408, %v1290, 0
      %v1643 = vsel %vm408, %v1291, 0
      %v1646 = vsel %vm408, %v1292, 0
      %1648 = vmatprep.subr.mxu0 0.0
      %1649 = vmatpush1.msra.mxu0 %v1590
      %1650 = vmatprep.subr.mxu0 0.0
      %1651 = vmatpush1.msra.mxu0 %v1589
      %1652 = vmatprep.subr.mxu0 0.0
      %1653 = vmatpush1.msra.mxu0 %v1588
      %1654 = vmatprep.subr.mxu0 0.0
      %1655 = vmatpush1.msra.mxu0 %v1587
      %1656 = vmatprep.subr.mxu0 0.0
      %1657 = vmatpush1.msra.mxu0 %v1586
      %1658 = vmatprep.subr.mxu0 0.0
      %1659 = vmatpush1.msra.mxu0 %v1585
      %1660 = vmatprep.subr.mxu0 0.0
      %1661 = vmatpush1.msra.mxu0 %v1584
      %1662 = vmatprep.subr.mxu0 0.0
      %1663 = vmatpush1.msra.mxu0 %v1583
      %1664 = vmatprep.subr.mxu0 0.0
      %1665 = vmatpush1.msra.mxu0 %v1582
      %1666 = vmatprep.subr.mxu0 0.0
      %1667 = vmatpush1.msra.mxu0 %v1581
      %1668 = vmatprep.subr.mxu0 0.0
      %1669 = vmatpush1.msra.mxu0 %v1580
      %1670 = vmatprep.subr.mxu0 0.0
      %1671 = vmatpush1.msra.mxu0 %v1579
      %1672 = vmatprep.subr.mxu0 0.0
      %1673 = vmatpush1.msra.mxu0 %v1578
      %1674 = vmatprep.subr.mxu0 0.0
      %1675 = vmatpush1.msra.mxu0 %v1577
      %1676 = vmatprep.subr.mxu0 0.0
      %1677 = vmatpush1.msra.mxu0 %v1576
      %1678 = vmatprep.subr.mxu0 0.0
      %1679 = vmatpush1.msra.mxu0 %v1575
      %1680 = vmatprep.subr.mxu0 0.0
      %1681 = vmatpush2.msra.mxu0 %v1606
      %1682 = vmatprep.subr.mxu0 0.0
      %1683 = vmatpush2.msra.mxu0 %v1605
      %1684 = vmatprep.subr.mxu0 0.0
      %1685 = vmatpush2.msra.mxu0 %v1604
      %1686 = vmatprep.subr.mxu0 0.0
      %1687 = vmatpush2.msra.mxu0 %v1603
      %1688 = vmatprep.subr.mxu0 0.0
      %1689 = vmatpush2.msra.mxu0 %v1602
      %1690 = vmatprep.subr.mxu0 0.0
      %1691 = vmatpush2.msra.mxu0 %v1601
      %1692 = vmatprep.subr.mxu0 0.0
      %1693 = vmatpush2.msra.mxu0 %v1600
      %1694 = vmatprep.subr.mxu0 0.0
      %1695 = vmatpush2.msra.mxu0 %v1599
      %1696 = vmatprep.subr.mxu0 0.0
      %1697 = vmatpush2.msra.mxu0 %v1598
      %1698 = vmatprep.subr.mxu0 0.0
      %1699 = vmatpush2.msra.mxu0 %v1597
      %1700 = vmatprep.subr.mxu0 0.0
      %1701 = vmatpush2.msra.mxu0 %v1596
      %1702 = vmatprep.subr.mxu0 0.0
      %1703 = vmatpush2.msra.mxu0 %v1595
      %1704 = vmatprep.subr.mxu0 0.0
      %1705 = vmatpush2.msra.mxu0 %v1594
      %1706 = vmatprep.subr.mxu0 0.0
      %1707 = vmatpush2.msra.mxu0 %v1593
      %1708 = vmatprep.subr.mxu0 0.0
      %1709 = vmatpush2.msra.mxu0 %v1592
      %1710 = vmatprep.subr.mxu0 0.0
      %1711 = vmatpush2.msra.mxu0 %v1591
      %1712 = vmatprep.mubr.f32.mxu0 %v1565
      %1713 = vmatmul.mubr.f32.gmra.mxu0 %v1535
      %v1714 = vpop.f32.mrf.mxu0
      %v1715 = vadd.f32 %v1616, %v1714
      %v1716 = vpop.f32.mrf.mxu0
      %1717 = vmatprep.mubr.f32.mxu0 %v1566
      %1718 = vmatmul.mubr.f32.gmra.mxu0 %v1536
      %v1719 = vpop.f32.mrf.mxu0
      %v1720 = vadd.f32 %v1616, %v1719
      %v1721 = vpop.f32.mrf.mxu0
      %1722 = vmatprep.mubr.f32.mxu0 %v1567
      %1723 = vmatmul.mubr.f32.gmra.mxu0 %v1537
      %v1724 = vpop.f32.mrf.mxu0
      %v1725 = vadd.f32 %v1616, %v1724
      %v1726 = vpop.f32.mrf.mxu0
      %1727 = vmatprep.mubr.f32.mxu0 %v1568
      %1728 = vmatmul.mubr.f32.gmra.mxu0 %v1538
      %v1729 = vpop.f32.mrf.mxu0
      %v1730 = vadd.f32 %v1616, %v1729
      %v1731 = vpop.f32.mrf.mxu0
      %1732 = vmatprep.mubr.f32.mxu0 %v1569
      %1733 = vmatmul.mubr.f32.gmra.mxu0 %v1539
      %v1734 = vpop.f32.mrf.mxu0
      %v1735 = vadd.f32 %v1616, %v1734
      %v1736 = vpop.f32.mrf.mxu0
      %1737 = vmatprep.mubr.f32.mxu0 %v1570
      %1738 = vmatmul.mubr.f32.gmra.mxu0 %v1540
      %v1739 = vpop.f32.mrf.mxu0
      %v1740 = vadd.f32 %v1616, %v1739
      %v1741 = vpop.f32.mrf.mxu0
      %1742 = vmatprep.mubr.f32.mxu0 %v1571
      %1743 = vmatmul.mubr.f32.gmra.mxu0 %v1541
      %v1744 = vpop.f32.mrf.mxu0
      %v1745 = vadd.f32 %v1616, %v1744
      %v1746 = vpop.f32.mrf.mxu0
      %1747 = vmatprep.mubr.f32.mxu0 %v1572
      %1748 = vmatmul.mubr.f32.gmra.mxu0 %v1542
      %v1749 = vpop.f32.mrf.mxu0
      %v1750 = vadd.f32 %v1616, %v1749
      %v1751 = vpop.f32.mrf.mxu0
      %1752 = vmatprep.mubr.f32.mxu0 %v1573
      %1753 = vmatmul.mubr.f32.gmra.mxu0 %v1543
      %v1754 = vpop.f32.mrf.mxu0
      %v1755 = vadd.f32 %v1616, %v1754
      %v1756 = vpop.f32.mrf.mxu0
      %1757 = vmatprep.mubr.f32.mxu0 %v1574
      %1758 = vmatmul.mubr.f32.gmra.mxu0 %v1544
      %v1759 = vpop.f32.mrf.mxu0
      %v1760 = vadd.f32 %v1616, %v1759
      %v1761 = vpop.f32.mrf.mxu0
      %1762 = vdwg.mxu0
      %1763 = vmatprep.subr.mxu0 0.0
      %1764 = vmatpush1.msra.mxu0 0.0
      %1765 = vmatprep.subr.mxu0 0.0
      %1766 = vmatpush1.msra.mxu0 0.0
      %1767 = vmatprep.subr.mxu0 0.0
      %1768 = vmatpush1.msra.mxu0 0.0
      %1769 = vmatprep.subr.mxu0 0.0
      %1770 = vmatpush1.msra.mxu0 0.0
      %1771 = vmatprep.subr.mxu0 0.0
      %1772 = vmatpush1.msra.mxu0 0.0
      %1773 = vmatprep.subr.mxu0 0.0
      %1774 = vmatpush1.msra.mxu0 0.0
      %1775 = vmatprep.subr.mxu0 0.0
      %1776 = vmatpush1.msra.mxu0 0.0
      %1777 = vmatprep.subr.mxu0 0.0
      %1778 = vmatpush1.msra.mxu0 0.0
      %1779 = vmatprep.subr.mxu0 0.0
      %1780 = vmatpush1.msra.mxu0 0.0
      %1781 = vmatprep.subr.mxu0 0.0
      %1782 = vmatpush1.msra.mxu0 0.0
      %1783 = vmatprep.subr.mxu0 0.0
      %1784 = vmatpush1.msra.mxu0 0.0
      %1785 = vmatprep.subr.mxu0 0.0
      %1786 = vmatpush1.msra.mxu0 0.0
      %1787 = vmatprep.subr.mxu0 0.0
      %1788 = vmatpush1.msra.mxu0 %v1610
      %1789 = vmatprep.subr.mxu0 0.0
      %1790 = vmatpush1.msra.mxu0 %v1609
      %1791 = vmatprep.subr.mxu0 0.0
      %1792 = vmatpush1.msra.mxu0 %v1608
      %1793 = vmatprep.subr.mxu0 0.0
      %1794 = vmatpush1.msra.mxu0 %v1607
      %1795 = vmatprep.subr.mxu0 0.0
      %1796 = vmatpush2.msra.mxu0 0.0
      %1797 = vmatprep.subr.mxu0 0.0
      %1798 = vmatpush2.msra.mxu0 0.0
      %1799 = vmatprep.subr.mxu0 0.0
      %1800 = vmatpush2.msra.mxu0 0.0
      %1801 = vmatprep.subr.mxu0 0.0
      %1802 = vmatpush2.msra.mxu0 0.0
      %1803 = vmatprep.subr.mxu0 0.0
      %1804 = vmatpush2.msra.mxu0 0.0
      %1805 = vmatprep.subr.mxu0 0.0
      %1806 = vmatpush2.msra.mxu0 0.0
      %1807 = vmatprep.subr.mxu0 0.0
      %1808 = vmatpush2.msra.mxu0 0.0
      %1809 = vmatprep.subr.mxu0 0.0
      %1810 = vmatpush2.msra.mxu0 0.0
      %1811 = vmatprep.subr.mxu0 0.0
      %1812 = vmatpush2.msra.mxu0 0.0
      %1813 = vmatprep.subr.mxu0 0.0
      %1814 = vmatpush2.msra.mxu0 0.0
      %1815 = vmatprep.subr.mxu0 0.0
      %1816 = vmatpush2.msra.mxu0 0.0
      %1817 = vmatprep.subr.mxu0 0.0
      %1818 = vmatpush2.msra.mxu0 0.0
      %1819 = vmatprep.subr.mxu0 0.0
      %1820 = vmatpush2.msra.mxu0 0.0
      %1821 = vmatprep.subr.mxu0 0.0
      %1822 = vmatpush2.msra.mxu0 0.0
      %1823 = vmatprep.subr.mxu0 0.0
      %1824 = vmatpush2.msra.mxu0 0.0
      %1825 = vmatprep.subr.mxu0 0.0
      %1826 = vmatpush2.msra.mxu0 0.0
      %1827 = vmatprep.mubr.f32.mxu0 0.0
      %1828 = vmatmul.mubr.f32.gmra.mxu0 %v1619
      %v1829 = vpop.f32.mrf.mxu0
      %v1830 = vadd.f32 %v1715, %v1829
      %v1831 = vpop.f32.mrf.mxu0
      %1832 = vmatprep.mubr.f32.mxu0 0.0
      %1833 = vmatmul.mubr.f32.gmra.mxu0 %v1622
      %v1834 = vpop.f32.mrf.mxu0
      %v1835 = vadd.f32 %v1720, %v1834
      %v1836 = vpop.f32.mrf.mxu0
      %1837 = vmatprep.mubr.f32.mxu0 0.0
      %1838 = vmatmul.mubr.f32.gmra.mxu0 %v1625
      %v1839 = vpop.f32.mrf.mxu0
      %v1840 = vadd.f32 %v1725, %v1839
      %v1841 = vpop.f32.mrf.mxu0
      %1842 = vmatprep.mubr.f32.mxu0 0.0
      %1843 = vmatmul.mubr.f32.gmra.mxu0 %v1628
      %v1844 = vpop.f32.mrf.mxu0
      %v1845 = vadd.f32 %v1730, %v1844
      %v1846 = vpop.f32.mrf.mxu0
      %1847 = vmatprep.mubr.f32.mxu0 0.0
      %1848 = vmatmul.mubr.f32.gmra.mxu0 %v1631
      %v1849 = vpop.f32.mrf.mxu0
      %v1850 = vadd.f32 %v1735, %v1849
      %v1851 = vpop.f32.mrf.mxu0
      %1852 = vmatprep.mubr.f32.mxu0 0.0
      %1853 = vmatmul.mubr.f32.gmra.mxu0 %v1634
      %v1854 = vpop.f32.mrf.mxu0
      %v1855 = vadd.f32 %v1740, %v1854
      %v1856 = vpop.f32.mrf.mxu0
      %1857 = vmatprep.mubr.f32.mxu0 0.0
      %1858 = vmatmul.mubr.f32.gmra.mxu0 %v1637
      %v1859 = vpop.f32.mrf.mxu0
      %v1860 = vadd.f32 %v1745, %v1859
      %v1861 = vpop.f32.mrf.mxu0
      %1862 = vmatprep.mubr.f32.mxu0 0.0
      %1863 = vmatmul.mubr.f32.gmra.mxu0 %v1640
      %v1864 = vpop.f32.mrf.mxu0
      %v1865 = vadd.f32 %v1750, %v1864
      %v1866 = vpop.f32.mrf.mxu0
      %1867 = vmatprep.mubr.f32.mxu0 0.0
      %1868 = vmatmul.mubr.f32.gmra.mxu0 %v1643
      %v1869 = vpop.f32.mrf.mxu0
      %v1870 = vadd.f32 %v1755, %v1869
      %v1871 = vpop.f32.mrf.mxu0
      %1872 = vmatprep.mubr.f32.mxu0 0.0
      %1873 = vmatmul.mubr.f32.gmra.mxu0 %v1646
      %v1874 = vpop.f32.mrf.mxu0
      %v1875 = vadd.f32 %v1760, %v1874
      %v1876 = vpop.f32.mrf.mxu0
      %1877 = vdwg.mxu0
      %v1878 = vmax.f32 %v1830, 0.0
      %v1879 = vmax.f32 %v1835, 0.0
      %v1880 = vmax.f32 %v1840, 0.0
      %v1881 = vmax.f32 %v1845, 0.0
      %v1882 = vmax.f32 %v1850, 0.0
      %v1883 = vmax.f32 %v1855, 0.0
      %v1884 = vmax.f32 %v1860, 0.0
      %v1885 = vmax.f32 %v1865, 0.0
      %v1886 = vmax.f32 %v1870, 0.0
      %v1887 = vmax.f32 %v1875, 0.0
      %1888 = vst.msk [vmem:[#allocation4 + $0x1a] sm:$0xff] %vm408, %v1878
      %vm1889 = vcmask 261122
      %1890 = vst.msk [vmem:[#allocation4 + $0x24] sm:$0xfc] %vm1889, %v1879
      %vm1891 = vcmask 254976
      %1892 = vst.msk [vmem:[#allocation4 + $0x2c] sm:$0x3] %vm1891, %v1880
      %vm1893 = vcmask 261124
      %1894 = vst.msk [vmem:[#allocation4 + $0x2e] sm:$0xf0] %vm1893, %v1880
      %1895 = vst.msk [vmem:[#allocation4 + $0x36] sm:$0xf] %vm431, %v1881
      %vm1896 = vcmask 261126
      %1897 = vst.msk [vmem:[#allocation4 + $0x38] sm:$0xc0] %vm1896, %v1881
      %1898 = vst.msk [vmem:[#allocation4 + $0x40] sm:$0x3f] %vm1214, %v1882
      %1899 = vst.msk [vmem:[#allocation4 + $0x4a] sm:$0xff] %vm408, %v1883
      %1900 = vst.msk [vmem:[#allocation4 + $0x54] sm:$0xfc] %vm1889, %v1884
      %1901 = vst.msk [vmem:[#allocation4 + $0x5c] sm:$0x3] %vm1891, %v1885
      %1902 = vst.msk [vmem:[#allocation4 + $0x5e] sm:$0xf0] %vm1893, %v1885
      %1903 = vst.msk [vmem:[#allocation4 + $0x66] sm:$0xf] %vm431, %v1886
      %1904 = vst.msk [vmem:[#allocation4 + $0x68] sm:$0xc0] %vm1896, %v1886
      %1905 = vst.msk [vmem:[#allocation4 + $0x70] sm:$0x3f] %vm1214, %v1887
      %v1906 = vld [vmem:[#allocation4] sm:$0xff]
      %v1907 = vld [vmem:[#allocation4 + $0x8] sm:$0xff]
      %v1908 = vld [vmem:[#allocation4 + $0x10] sm:$0xff]
      %v1909 = vld [vmem:[#allocation4 + $0x18] sm:$0xff]
      %v1910 = vld [vmem:[#allocation4 + $0x20] sm:$0xff]
      %v1911 = vld [vmem:[#allocation4 + $0x28] sm:$0xff]
      %v1912 = vld [vmem:[#allocation4 + $0x30] sm:$0xff]
      %v1913 = vld [vmem:[#allocation4 + $0x38] sm:$0xff]
      %v1914 = vld [vmem:[#allocation4 + $0x40] sm:$0xff]
      %v1915 = vld [vmem:[#allocation4 + $0x48] sm:$0xff]
      %v1916 = vld [vmem:[#allocation4 + $0x50] sm:$0xff]
      %v1917 = vld [vmem:[#allocation4 + $0x58] sm:$0xff]
      %v1918 = vld [vmem:[#allocation4 + $0x60] sm:$0xff]
      %v1919 = vld [vmem:[#allocation4 + $0x68] sm:$0xff]
      %v1920 = vld [vmem:[#allocation4 + $0x70] sm:$0xff]
      %v1921 = vld [vmem:[#allocation4 + $0x1] sm:$0xff]
      %v1922 = vld [vmem:[#allocation4 + $0x9] sm:$0xff]
      %v1923 = vld [vmem:[#allocation4 + $0x11] sm:$0xff]
      %v1924 = vld [vmem:[#allocation4 + $0x19] sm:$0xff]
      %v1925 = vld [vmem:[#allocation4 + $0x21] sm:$0xff]
      %v1926 = vld [vmem:[#allocation4 + $0x29] sm:$0xff]
      %v1927 = vld [vmem:[#allocation4 + $0x31] sm:$0xff]
      %v1928 = vld [vmem:[#allocation4 + $0x39] sm:$0xff]
      %v1929 = vld [vmem:[#allocation4 + $0x41] sm:$0xff]
      %v1930 = vld [vmem:[#allocation4 + $0x49] sm:$0xff]
      %v1931 = vld [vmem:[#allocation4 + $0x51] sm:$0xff]
      %v1932 = vld [vmem:[#allocation4 + $0x59] sm:$0xff]
      %v1933 = vld [vmem:[#allocation4 + $0x61] sm:$0xff]
      %v1934 = vld [vmem:[#allocation4 + $0x69] sm:$0xff]
      %v1935 = vld [vmem:[#allocation4 + $0x71] sm:$0xff]
      %v1936 = vld [vmem:[#allocation4 + $0x2] sm:$0xff]
      %v1937 = vld [vmem:[#allocation4 + $0xa] sm:$0xff]
      %v1938 = vld [vmem:[#allocation4 + $0x12] sm:$0xff]
      %v1939 = vld [vmem:[#allocation4 + $0x1a] sm:$0xff]
      %v1940 = vld [vmem:[#allocation4 + $0x22] sm:$0xff]
      %v1941 = vld [vmem:[#allocation4 + $0x2a] sm:$0xff]
      %v1942 = vld [vmem:[#allocation4 + $0x32] sm:$0xff]
      %v1943 = vld [vmem:[#allocation4 + $0x3a] sm:$0xff]
      %v1944 = vld [vmem:[#allocation4 + $0x42] sm:$0xff]
      %v1945 = vld [vmem:[#allocation4 + $0x4a] sm:$0xff]
      %v1946 = vld [vmem:[#allocation4 + $0x52] sm:$0xff]
      %v1947 = vld [vmem:[#allocation4 + $0x5a] sm:$0xff]
      %v1948 = vld [vmem:[#allocation4 + $0x62] sm:$0xff]
      %v1949 = vld [vmem:[#allocation4 + $0x6a] sm:$0xff]
      %v1950 = vld [vmem:[#allocation4 + $0x72] sm:$0xff]
      %v1951 = vld [vmem:[#allocation4 + $0xc] sm:$0xff]
      %v1952 = vld [vmem:[#allocation4 + $0x14] sm:$0xff]
      %v1953 = vld [vmem:[#allocation4 + $0x1c] sm:$0xff]
      %v1954 = vld [vmem:[#allocation4 + $0x24] sm:$0xff]
      %v1955 = vld [vmem:[#allocation4 + $0x2c] sm:$0xff]
      %v1956 = vld [vmem:[#allocation4 + $0x34] sm:$0xff]
      %v1957 = vld [vmem:[#allocation4 + $0x3c] sm:$0xff]
      %v1958 = vld [vmem:[#allocation4 + $0x44] sm:$0xff]
      %v1959 = vld [vmem:[#allocation4 + $0x4c] sm:$0xff]
      %v1960 = vld [vmem:[#allocation4 + $0x54] sm:$0xff]
      %v1961 = vld [vmem:[#allocation4 + $0x5c] sm:$0xff]
      %v1962 = vld [vmem:[#allocation4 + $0x64] sm:$0xff]
      %v1963 = vld [vmem:[#allocation4 + $0x6c] sm:$0xff]
      %v1964 = vld [vmem:[#allocation4 + $0x74] sm:$0xff]
      %v1965 = vld [vmem:[#allocation4 + $0x7c] sm:$0xff]
      %v1966 = vld [vmem:[#allocation4 + $0xd] sm:$0xff]
      %v1967 = vld [vmem:[#allocation4 + $0x15] sm:$0xff]
      %v1968 = vld [vmem:[#allocation4 + $0x1d] sm:$0xff]
      %v1969 = vld [vmem:[#allocation4 + $0x25] sm:$0xff]
      %v1970 = vld [vmem:[#allocation4 + $0x2d] sm:$0xff]
      %v1971 = vld [vmem:[#allocation4 + $0x35] sm:$0xff]
      %v1972 = vld [vmem:[#allocation4 + $0x3d] sm:$0xff]
      %v1973 = vld [vmem:[#allocation4 + $0x45] sm:$0xff]
      %v1974 = vld [vmem:[#allocation4 + $0x4d] sm:$0xff]
      %v1975 = vld [vmem:[#allocation4 + $0x55] sm:$0xff]
      %v1976 = vld [vmem:[#allocation4 + $0x5d] sm:$0xff]
      %v1977 = vld [vmem:[#allocation4 + $0x65] sm:$0xff]
      %v1978 = vld [vmem:[#allocation4 + $0x6d] sm:$0xff]
      %v1979 = vld [vmem:[#allocation4 + $0x75] sm:$0xff]
      %v1980 = vld [vmem:[#allocation4 + $0x7d] sm:$0xff]
      %v1981 = vld [vmem:[#allocation4 + $0xe] sm:$0xff]
      %v1982 = vld [vmem:[#allocation4 + $0x16] sm:$0xff]
      %v1983 = vld [vmem:[#allocation4 + $0x1e] sm:$0xff]
      %v1984 = vld [vmem:[#allocation4 + $0x26] sm:$0xff]
      %v1985 = vld [vmem:[#allocation4 + $0x2e] sm:$0xff]
      %v1986 = vld [vmem:[#allocation4 + $0x36] sm:$0xff]
      %v1987 = vld [vmem:[#allocation4 + $0x3e] sm:$0xff]
      %v1988 = vld [vmem:[#allocation4 + $0x46] sm:$0xff]
      %v1989 = vld [vmem:[#allocation4 + $0x4e] sm:$0xff]
      %v1990 = vld [vmem:[#allocation4 + $0x56] sm:$0xff]
      %v1991 = vld [vmem:[#allocation4 + $0x5e] sm:$0xff]
      %v1992 = vld [vmem:[#allocation4 + $0x66] sm:$0xff]
      %v1993 = vld [vmem:[#allocation4 + $0x6e] sm:$0xff]
      %v1994 = vld [vmem:[#allocation4 + $0x76] sm:$0xff]
      %v1995 = vld [vmem:[#allocation4 + $0x7e] sm:$0xff]
      %v1996 = vld [vmem:[#allocation4 + $0x78] sm:$0xff]
      %v1997 = vld [vmem:[#allocation4 + $0x80] sm:$0xff]
      %v1998 = vld [vmem:[#allocation4 + $0x88] sm:$0xff]
      %v1999 = vld [vmem:[#allocation4 + $0x79] sm:$0xff]
      %v2000 = vld [vmem:[#allocation4 + $0x81] sm:$0xff]
      %v2001 = vld [vmem:[#allocation4 + $0x89] sm:$0xff]
      %v2002 = vld [vmem:[#allocation4 + $0x7a] sm:$0xff]
      %v2003 = vld [vmem:[#allocation4 + $0x82] sm:$0xff]
      %v2004 = vld [vmem:[#allocation4 + $0x8a] sm:$0xff]
      %2020 = vrot.lane.b32.xlu0 %v1921, 32
      %v2021 = vpop.permute.xlu0 %2020
      %2022 = vrot.lane.b32.xlu0 %v1922, 32
      %v2023 = vpop.permute.xlu0 %2022
      %2024 = vrot.lane.b32.xlu0 %v1923, 32
      %v2025 = vpop.permute.xlu0 %2024
      %2026 = vrot.lane.b32.xlu0 %v1924, 32
      %v2027 = vpop.permute.xlu0 %2026
      %2028 = vrot.lane.b32.xlu0 %v1925, 32
      %v2029 = vpop.permute.xlu0 %2028
      %2030 = vrot.lane.b32.xlu0 %v1926, 32
      %v2031 = vpop.permute.xlu0 %2030
      %2032 = vrot.lane.b32.xlu0 %v1927, 32
      %v2033 = vpop.permute.xlu0 %2032
      %2034 = vrot.lane.b32.xlu0 %v1928, 32
      %v2035 = vpop.permute.xlu0 %2034
      %2036 = vrot.lane.b32.xlu0 %v1929, 32
      %v2037 = vpop.permute.xlu0 %2036
      %2038 = vrot.lane.b32.xlu0 %v1930, 32
      %v2039 = vpop.permute.xlu0 %2038
      %2040 = vrot.lane.b32.xlu0 %v1931, 32
      %v2041 = vpop.permute.xlu0 %2040
      %2042 = vrot.lane.b32.xlu0 %v1932, 32
      %v2043 = vpop.permute.xlu0 %2042
      %2044 = vrot.lane.b32.xlu0 %v1933, 32
      %v2045 = vpop.permute.xlu0 %2044
      %2046 = vrot.lane.b32.xlu0 %v1934, 32
      %v2047 = vpop.permute.xlu0 %2046
      %2048 = vrot.lane.b32.xlu0 %v1935, 32
      %v2049 = vpop.permute.xlu0 %2048
      %2080 = vrot.lane.b32.xlu0 %v1936, 64
      %v2081 = vpop.permute.xlu0 %2080
      %2082 = vrot.lane.b32.xlu0 %v1937, 64
      %v2083 = vpop.permute.xlu0 %2082
      %2084 = vrot.lane.b32.xlu0 %v1938, 64
      %v2085 = vpop.permute.xlu0 %2084
      %2086 = vrot.lane.b32.xlu0 %v1939, 64
      %v2087 = vpop.permute.xlu0 %2086
      %2088 = vrot.lane.b32.xlu0 %v1940, 64
      %v2089 = vpop.permute.xlu0 %2088
      %2090 = vrot.lane.b32.xlu0 %v1941, 64
      %v2091 = vpop.permute.xlu0 %2090
      %2092 = vrot.lane.b32.xlu0 %v1942, 64
      %v2093 = vpop.permute.xlu0 %2092
      %2094 = vrot.lane.b32.xlu0 %v1943, 64
      %v2095 = vpop.permute.xlu0 %2094
      %2096 = vrot.lane.b32.xlu0 %v1944, 64
      %v2097 = vpop.permute.xlu0 %2096
      %2098 = vrot.lane.b32.xlu0 %v1945, 64
      %v2099 = vpop.permute.xlu0 %2098
      %2100 = vrot.lane.b32.xlu0 %v1946, 64
      %v2101 = vpop.permute.xlu0 %2100
      %2102 = vrot.lane.b32.xlu0 %v1947, 64
      %v2103 = vpop.permute.xlu0 %2102
      %2104 = vrot.lane.b32.xlu0 %v1948, 64
      %v2105 = vpop.permute.xlu0 %2104
      %2106 = vrot.lane.b32.xlu0 %v1949, 64
      %v2107 = vpop.permute.xlu0 %2106
      %2108 = vrot.lane.b32.xlu0 %v1950, 64
      %v2109 = vpop.permute.xlu0 %2108
      %2140 = vrot.lane.b32.xlu0 %v1951, 96
      %v2141 = vpop.permute.xlu0 %2140
      %2142 = vrot.lane.b32.xlu0 %v1952, 96
      %v2143 = vpop.permute.xlu0 %2142
      %2144 = vrot.lane.b32.xlu0 %v1953, 96
      %v2145 = vpop.permute.xlu0 %2144
      %2146 = vrot.lane.b32.xlu0 %v1954, 96
      %v2147 = vpop.permute.xlu0 %2146
      %2148 = vrot.lane.b32.xlu0 %v1955, 96
      %v2149 = vpop.permute.xlu0 %2148
      %2150 = vrot.lane.b32.xlu0 %v1956, 96
      %v2151 = vpop.permute.xlu0 %2150
      %2152 = vrot.lane.b32.xlu0 %v1957, 96
      %v2153 = vpop.permute.xlu0 %2152
      %2154 = vrot.lane.b32.xlu0 %v1958, 96
      %v2155 = vpop.permute.xlu0 %2154
      %2156 = vrot.lane.b32.xlu0 %v1959, 96
      %v2157 = vpop.permute.xlu0 %2156
      %2158 = vrot.lane.b32.xlu0 %v1960, 96
      %v2159 = vpop.permute.xlu0 %2158
      %2160 = vrot.lane.b32.xlu0 %v1961, 96
      %v2161 = vpop.permute.xlu0 %2160
      %2162 = vrot.lane.b32.xlu0 %v1962, 96
      %v2163 = vpop.permute.xlu0 %2162
      %2164 = vrot.lane.b32.xlu0 %v1963, 96
      %v2165 = vpop.permute.xlu0 %2164
      %2166 = vrot.lane.b32.xlu0 %v1964, 96
      %v2167 = vpop.permute.xlu0 %2166
      %2168 = vrot.lane.b32.xlu0 %v1965, 96
      %v2169 = vpop.permute.xlu0 %2168
      %2200 = vrot.lane.b32.xlu0 %v1981, 32
      %v2201 = vpop.permute.xlu0 %2200
      %2202 = vrot.lane.b32.xlu0 %v1982, 32
      %v2203 = vpop.permute.xlu0 %2202
      %2204 = vrot.lane.b32.xlu0 %v1983, 32
      %v2205 = vpop.permute.xlu0 %2204
      %2206 = vrot.lane.b32.xlu0 %v1984, 32
      %v2207 = vpop.permute.xlu0 %2206
      %2208 = vrot.lane.b32.xlu0 %v1985, 32
      %v2209 = vpop.permute.xlu0 %2208
      %2210 = vrot.lane.b32.xlu0 %v1986, 32
      %v2211 = vpop.permute.xlu0 %2210
      %2212 = vrot.lane.b32.xlu0 %v1987, 32
      %v2213 = vpop.permute.xlu0 %2212
      %2214 = vrot.lane.b32.xlu0 %v1988, 32
      %v2215 = vpop.permute.xlu0 %2214
      %2216 = vrot.lane.b32.xlu0 %v1989, 32
      %v2217 = vpop.permute.xlu0 %2216
      %2218 = vrot.lane.b32.xlu0 %v1990, 32
      %v2219 = vpop.permute.xlu0 %2218
      %2220 = vrot.lane.b32.xlu0 %v1991, 32
      %v2221 = vpop.permute.xlu0 %2220
      %2222 = vrot.lane.b32.xlu0 %v1992, 32
      %v2223 = vpop.permute.xlu0 %2222
      %2224 = vrot.lane.b32.xlu0 %v1993, 32
      %v2225 = vpop.permute.xlu0 %2224
      %2226 = vrot.lane.b32.xlu0 %v1994, 32
      %v2227 = vpop.permute.xlu0 %2226
      %2228 = vrot.lane.b32.xlu0 %v1995, 32
      %v2229 = vpop.permute.xlu0 %2228
      %2260 = vrot.lane.b32.xlu0 %v1909, 64
      %v2261 = vpop.permute.xlu0 %2260
      %2262 = vrot.lane.b32.xlu0 %v1910, 64
      %v2263 = vpop.permute.xlu0 %2262
      %2264 = vrot.lane.b32.xlu0 %v1911, 64
      %v2265 = vpop.permute.xlu0 %2264
      %2266 = vrot.lane.b32.xlu0 %v1912, 64
      %v2267 = vpop.permute.xlu0 %2266
      %2268 = vrot.lane.b32.xlu0 %v1913, 64
      %v2269 = vpop.permute.xlu0 %2268
      %2270 = vrot.lane.b32.xlu0 %v1914, 64
      %v2271 = vpop.permute.xlu0 %2270
      %2272 = vrot.lane.b32.xlu0 %v1915, 64
      %v2273 = vpop.permute.xlu0 %2272
      %2274 = vrot.lane.b32.xlu0 %v1916, 64
      %v2275 = vpop.permute.xlu0 %2274
      %2276 = vrot.lane.b32.xlu0 %v1917, 64
      %v2277 = vpop.permute.xlu0 %2276
      %2278 = vrot.lane.b32.xlu0 %v1918, 64
      %v2279 = vpop.permute.xlu0 %2278
      %2280 = vrot.lane.b32.xlu0 %v1919, 64
      %v2281 = vpop.permute.xlu0 %2280
      %2282 = vrot.lane.b32.xlu0 %v1920, 64
      %v2283 = vpop.permute.xlu0 %2282
      %2284 = vrot.lane.b32.xlu0 %v1996, 64
      %v2285 = vpop.permute.xlu0 %2284
      %2286 = vrot.lane.b32.xlu0 %v1997, 64
      %v2287 = vpop.permute.xlu0 %2286
      %2288 = vrot.lane.b32.xlu0 %v1998, 64
      %v2289 = vpop.permute.xlu0 %2288
      %2308 = vrot.lane.b32.xlu0 %v1924, 96
      %v2309 = vpop.permute.xlu0 %2308
      %2310 = vrot.lane.b32.xlu0 %v1925, 96
      %v2311 = vpop.permute.xlu0 %2310
      %2312 = vrot.lane.b32.xlu0 %v1926, 96
      %v2313 = vpop.permute.xlu0 %2312
      %2314 = vrot.lane.b32.xlu0 %v1927, 96
      %v2315 = vpop.permute.xlu0 %2314
      %2316 = vrot.lane.b32.xlu0 %v1928, 96
      %v2317 = vpop.permute.xlu0 %2316
      %2318 = vrot.lane.b32.xlu0 %v1929, 96
      %v2319 = vpop.permute.xlu0 %2318
      %2320 = vrot.lane.b32.xlu0 %v1930, 96
      %v2321 = vpop.permute.xlu0 %2320
      %2322 = vrot.lane.b32.xlu0 %v1931, 96
      %v2323 = vpop.permute.xlu0 %2322
      %2324 = vrot.lane.b32.xlu0 %v1932, 96
      %v2325 = vpop.permute.xlu0 %2324
      %2326 = vrot.lane.b32.xlu0 %v1933, 96
      %v2327 = vpop.permute.xlu0 %2326
      %2328 = vrot.lane.b32.xlu0 %v1934, 96
      %v2329 = vpop.permute.xlu0 %2328
      %2330 = vrot.lane.b32.xlu0 %v1935, 96
      %v2331 = vpop.permute.xlu0 %2330
      %2332 = vrot.lane.b32.xlu0 %v1999, 96
      %v2333 = vpop.permute.xlu0 %2332
      %2334 = vrot.lane.b32.xlu0 %v2000, 96
      %v2335 = vpop.permute.xlu0 %2334
      %2336 = vrot.lane.b32.xlu0 %v2001, 96
      %v2337 = vpop.permute.xlu0 %2336
      %v2353 = vsel %vm408, %v1906, %v2021
      %v2354 = vsel %vm408, %v1907, %v2023
      %v2355 = vsel %vm408, %v1908, %v2025
      %v2356 = vsel %vm408, %v1909, %v2027
      %v2357 = vsel %vm408, %v1910, %v2029
      %v2358 = vsel %vm408, %v1911, %v2031
      %v2359 = vsel %vm408, %v1912, %v2033
      %v2360 = vsel %vm408, %v1913, %v2035
      %v2361 = vsel %vm408, %v1914, %v2037
      %v2362 = vsel %vm408, %v1915, %v2039
      %v2363 = vsel %vm408, %v1916, %v2041
      %v2364 = vsel %vm408, %v1917, %v2043
      %v2365 = vsel %vm408, %v1918, %v2045
      %v2366 = vsel %vm408, %v1919, %v2047
      %v2367 = vsel %vm408, %v1920, %v2049
      %v2368 = vsel %vm930, %v2353, %v2081
      %v2369 = vsel %vm930, %v2354, %v2083
      %v2370 = vsel %vm930, %v2355, %v2085
      %v2371 = vsel %vm930, %v2356, %v2087
      %v2372 = vsel %vm930, %v2357, %v2089
      %v2373 = vsel %vm930, %v2358, %v2091
      %v2374 = vsel %vm930, %v2359, %v2093
      %v2375 = vsel %vm930, %v2360, %v2095
      %v2376 = vsel %vm930, %v2361, %v2097
      %v2377 = vsel %vm930, %v2362, %v2099
      %v2378 = vsel %vm930, %v2363, %v2101
      %v2379 = vsel %vm930, %v2364, %v2103
      %v2380 = vsel %vm930, %v2365, %v2105
      %v2381 = vsel %vm930, %v2366, %v2107
      %v2382 = vsel %vm930, %v2367, %v2109
      %v2383 = vsel %vm937, %v2368, %v2141
      %v2384 = vsel %vm937, %v2369, %v2143
      %v2385 = vsel %vm937, %v2370, %v2145
      %v2386 = vsel %vm937, %v2371, %v2147
      %v2387 = vsel %vm937, %v2372, %v2149
      %v2388 = vsel %vm937, %v2373, %v2151
      %v2389 = vsel %vm937, %v2374, %v2153
      %v2390 = vsel %vm937, %v2375, %v2155
      %v2391 = vsel %vm937, %v2376, %v2157
      %v2392 = vsel %vm937, %v2377, %v2159
      %v2393 = vsel %vm937, %v2378, %v2161
      %v2394 = vsel %vm937, %v2379, %v2163
      %v2395 = vsel %vm937, %v2380, %v2165
      %v2396 = vsel %vm937, %v2381, %v2167
      %v2397 = vsel %vm937, %v2382, %v2169
      %v2398 = vsel %vm408, %v1966, %v2201
      %v2399 = vsel %vm408, %v1967, %v2203
      %v2400 = vsel %vm408, %v1968, %v2205
      %v2401 = vsel %vm408, %v1969, %v2207
      %v2402 = vsel %vm408, %v1970, %v2209
      %v2403 = vsel %vm408, %v1971, %v2211
      %v2404 = vsel %vm408, %v1972, %v2213
      %v2405 = vsel %vm408, %v1973, %v2215
      %v2406 = vsel %vm408, %v1974, %v2217
      %v2407 = vsel %vm408, %v1975, %v2219
      %v2408 = vsel %vm408, %v1976, %v2221
      %v2409 = vsel %vm408, %v1977, %v2223
      %v2410 = vsel %vm408, %v1978, %v2225
      %v2411 = vsel %vm408, %v1979, %v2227
      %v2412 = vsel %vm408, %v1980, %v2229
      %v2413 = vsel %vm930, %v2398, %v2261
      %v2414 = vsel %vm930, %v2399, %v2263
      %v2415 = vsel %vm930, %v2400, %v2265
      %v2416 = vsel %vm930, %v2401, %v2267
      %v2417 = vsel %vm930, %v2402, %v2269
      %v2418 = vsel %vm930, %v2403, %v2271
      %v2419 = vsel %vm930, %v2404, %v2273
      %v2420 = vsel %vm930, %v2405, %v2275
      %v2421 = vsel %vm930, %v2406, %v2277
      %v2422 = vsel %vm930, %v2407, %v2279
      %v2423 = vsel %vm930, %v2408, %v2281
      %v2424 = vsel %vm930, %v2409, %v2283
      %v2425 = vsel %vm930, %v2410, %v2285
      %v2426 = vsel %vm930, %v2411, %v2287
      %v2427 = vsel %vm930, %v2412, %v2289
      %v2428 = vsel %vm937, %v2413, %v2309
      %v2429 = vsel %vm937, %v2414, %v2311
      %v2430 = vsel %vm937, %v2415, %v2313
      %v2431 = vsel %vm937, %v2416, %v2315
      %v2432 = vsel %vm937, %v2417, %v2317
      %v2433 = vsel %vm937, %v2418, %v2319
      %v2434 = vsel %vm937, %v2419, %v2321
      %v2435 = vsel %vm937, %v2420, %v2323
      %v2436 = vsel %vm937, %v2421, %v2325
      %v2437 = vsel %vm937, %v2422, %v2327
      %v2438 = vsel %vm937, %v2423, %v2329
      %v2439 = vsel %vm937, %v2424, %v2331
      %v2440 = vsel %vm937, %v2425, %v2333
      %v2441 = vsel %vm937, %v2426, %v2335
      %v2442 = vsel %vm937, %v2427, %v2337
      %v2443 = vld [vmem:[%s7] sm:$0xff]
      %v2444 = vld [vmem:[%s7 + $0x8] sm:$0xff]
      %v2445 = vld [vmem:[%s7 + $0x10] sm:$0xff]
      %v2446 = vld [vmem:[%s7 + $0x18] sm:$0xff]
      %v2447 = vld [vmem:[%s7 + $0x20] sm:$0xff]
      %v2448 = vld [vmem:[%s7 + $0x28] sm:$0xff]
      %v2449 = vld [vmem:[%s7 + $0x30] sm:$0xff]
      %v2450 = vld [vmem:[%s7 + $0x38] sm:$0xff]
      %v2451 = vld [vmem:[%s7 + $0x40] sm:$0xff]
      %v2452 = vld [vmem:[%s7 + $0x48] sm:$0xff]
      %v2453 = vld [vmem:[%s7 + $0x50] sm:$0xff]
      %v2454 = vld [vmem:[%s7 + $0x58] sm:$0xff]
      %v2455 = vld [vmem:[%s7 + $0x60] sm:$0xff]
      %v2456 = vld [vmem:[%s7 + $0x68] sm:$0xff]
      %v2457 = vld [vmem:[%s7 + $0x70] sm:$0xff]
      %v2458 = vld [vmem:[%s7 + $0x78] sm:$0xff]
      %v2459 = vld [vmem:[%s7 + $0x80] sm:$0xff]
      %v2460 = vld [vmem:[%s7 + $0x88] sm:$0xff]
      %v2461 = vld [vmem:[%s7 + $0x90] sm:$0xff]
      %v2462 = vld [vmem:[%s7 + $0x98] sm:$0xff]
      %v2463 = vld [vmem:[%s7 + $0xa0] sm:$0xff]
      %v2464 = vld [vmem:[%s7 + $0xa8] sm:$0xff]
      %v2465 = vld [vmem:[%s7 + $0xb0] sm:$0xff]
      %v2466 = vld [vmem:[%s7 + $0xb8] sm:$0xff]
      %v2467 = vld [vmem:[%s7 + $0xc0] sm:$0xff]
      %v2468 = vld [vmem:[%s7 + $0xc8] sm:$0xff]
      %v2469 = vld [vmem:[%s7 + $0xd0] sm:$0xff]
      %v2470 = vld [vmem:[%s7 + $0xd8] sm:$0xff]
      %v2471 = vld [vmem:[%s7 + $0xe0] sm:$0xff]
      %v2472 = vld [vmem:[%s7 + $0xe8] sm:$0xff]
      %v2473 = vld [vmem:[%s7 + $0xf0] sm:$0xff]
      %v2474 = vld [vmem:[%s7 + $0xf8] sm:$0xff]
      %v2475 = vld [vmem:[%s7 + $0x100] sm:$0xff]
      %v2476 = vld [vmem:[%s7 + $0x108] sm:$0xff]
      %v2477 = vld [vmem:[%s7 + $0x110] sm:$0xff]
      %v2478 = vld [vmem:[%s7 + $0x118] sm:$0xff]
      %v2479 = vld [vmem:[%s8] sm:$0x1]
      %v2481 = vlaneseq
      %v2482 = vshrl.u32 %v2481, 7
      %v2483 = vsub.s32 0, %v2482
      %v2484 = vrot.slane %v2479, %v2483
      %v2486 = vsel %vm408, %v1939, 0
      %v2488 = vsel %vm408, %v1940, 0
      %v2490 = vsel %vm408, %v1941, 0
      %v2492 = vsel %vm408, %v1942, 0
      %v2494 = vsel %vm408, %v1943, 0
      %v2496 = vsel %vm408, %v1944, 0
      %v2498 = vsel %vm408, %v1945, 0
      %v2500 = vsel %vm408, %v1946, 0
      %v2502 = vsel %vm408, %v1947, 0
      %v2504 = vsel %vm408, %v1948, 0
      %v2506 = vsel %vm408, %v1949, 0
      %v2508 = vsel %vm408, %v1950, 0
      %v2511 = vsel %vm408, %v2002, 0
      %v2514 = vsel %vm408, %v2003, 0
      %v2517 = vsel %vm408, %v2004, 0
      %2519 = vmatprep.subr.mxu0 0.0
      %2520 = vmatpush1.msra.mxu0 %v2458
      %2521 = vmatprep.subr.mxu0 0.0
      %2522 = vmatpush1.msra.mxu0 %v2457
      %2523 = vmatprep.subr.mxu0 0.0
      %2524 = vmatpush1.msra.mxu0 %v2456
      %2525 = vmatprep.subr.mxu0 0.0
      %2526 = vmatpush1.msra.mxu0 %v2455
      %2527 = vmatprep.subr.mxu0 0.0
      %2528 = vmatpush1.msra.mxu0 %v2454
      %2529 = vmatprep.subr.mxu0 0.0
      %2530 = vmatpush1.msra.mxu0 %v2453
      %2531 = vmatprep.subr.mxu0 0.0
      %2532 = vmatpush1.msra.mxu0 %v2452
      %2533 = vmatprep.subr.mxu0 0.0
      %2534 = vmatpush1.msra.mxu0 %v2451
      %2535 = vmatprep.subr.mxu0 0.0
      %2536 = vmatpush1.msra.mxu0 %v2450
      %2537 = vmatprep.subr.mxu0 0.0
      %2538 = vmatpush1.msra.mxu0 %v2449
      %2539 = vmatprep.subr.mxu0 0.0
      %2540 = vmatpush1.msra.mxu0 %v2448
      %2541 = vmatprep.subr.mxu0 0.0
      %2542 = vmatpush1.msra.mxu0 %v2447
      %2543 = vmatprep.subr.mxu0 0.0
      %2544 = vmatpush1.msra.mxu0 %v2446
      %2545 = vmatprep.subr.mxu0 0.0
      %2546 = vmatpush1.msra.mxu0 %v2445
      %2547 = vmatprep.subr.mxu0 0.0
      %2548 = vmatpush1.msra.mxu0 %v2444
      %2549 = vmatprep.subr.mxu0 0.0
      %2550 = vmatpush1.msra.mxu0 %v2443
      %2551 = vmatprep.subr.mxu0 0.0
      %2552 = vmatpush2.msra.mxu0 %v2474
      %2553 = vmatprep.subr.mxu0 0.0
      %2554 = vmatpush2.msra.mxu0 %v2473
      %2555 = vmatprep.subr.mxu0 0.0
      %2556 = vmatpush2.msra.mxu0 %v2472
      %2557 = vmatprep.subr.mxu0 0.0
      %2558 = vmatpush2.msra.mxu0 %v2471
      %2559 = vmatprep.subr.mxu0 0.0
      %2560 = vmatpush2.msra.mxu0 %v2470
      %2561 = vmatprep.subr.mxu0 0.0
      %2562 = vmatpush2.msra.mxu0 %v2469
      %2563 = vmatprep.subr.mxu0 0.0
      %2564 = vmatpush2.msra.mxu0 %v2468
      %2565 = vmatprep.subr.mxu0 0.0
      %2566 = vmatpush2.msra.mxu0 %v2467
      %2567 = vmatprep.subr.mxu0 0.0
      %2568 = vmatpush2.msra.mxu0 %v2466
      %2569 = vmatprep.subr.mxu0 0.0
      %2570 = vmatpush2.msra.mxu0 %v2465
      %2571 = vmatprep.subr.mxu0 0.0
      %2572 = vmatpush2.msra.mxu0 %v2464
      %2573 = vmatprep.subr.mxu0 0.0
      %2574 = vmatpush2.msra.mxu0 %v2463
      %2575 = vmatprep.subr.mxu0 0.0
      %2576 = vmatpush2.msra.mxu0 %v2462
      %2577 = vmatprep.subr.mxu0 0.0
      %2578 = vmatpush2.msra.mxu0 %v2461
      %2579 = vmatprep.subr.mxu0 0.0
      %2580 = vmatpush2.msra.mxu0 %v2460
      %2581 = vmatprep.subr.mxu0 0.0
      %2582 = vmatpush2.msra.mxu0 %v2459
      %2583 = vmatprep.mubr.f32.mxu0 %v2428
      %2584 = vmatmul.mubr.f32.gmra.mxu0 %v2383
      %v2585 = vpop.f32.mrf.mxu0
      %v2586 = vadd.f32 %v2484, %v2585
      %v2587 = vpop.f32.mrf.mxu0
      %2588 = vmatprep.mubr.f32.mxu0 %v2429
      %2589 = vmatmul.mubr.f32.gmra.mxu0 %v2384
      %v2590 = vpop.f32.mrf.mxu0
      %v2591 = vadd.f32 %v2484, %v2590
      %v2592 = vpop.f32.mrf.mxu0
      %2593 = vmatprep.mubr.f32.mxu0 %v2430
      %2594 = vmatmul.mubr.f32.gmra.mxu0 %v2385
      %v2595 = vpop.f32.mrf.mxu0
      %v2596 = vadd.f32 %v2484, %v2595
      %v2597 = vpop.f32.mrf.mxu0
      %2598 = vmatprep.mubr.f32.mxu0 %v2431
      %2599 = vmatmul.mubr.f32.gmra.mxu0 %v2386
      %v2600 = vpop.f32.mrf.mxu0
      %v2601 = vadd.f32 %v2484, %v2600
      %v2602 = vpop.f32.mrf.mxu0
      %2603 = vmatprep.mubr.f32.mxu0 %v2432
      %2604 = vmatmul.mubr.f32.gmra.mxu0 %v2387
      %v2605 = vpop.f32.mrf.mxu0
      %v2606 = vadd.f32 %v2484, %v2605
      %v2607 = vpop.f32.mrf.mxu0
      %2608 = vmatprep.mubr.f32.mxu0 %v2433
      %2609 = vmatmul.mubr.f32.gmra.mxu0 %v2388
      %v2610 = vpop.f32.mrf.mxu0
      %v2611 = vadd.f32 %v2484, %v2610
      %v2612 = vpop.f32.mrf.mxu0
      %2613 = vmatprep.mubr.f32.mxu0 %v2434
      %2614 = vmatmul.mubr.f32.gmra.mxu0 %v2389
      %v2615 = vpop.f32.mrf.mxu0
      %v2616 = vadd.f32 %v2484, %v2615
      %v2617 = vpop.f32.mrf.mxu0
      %2618 = vmatprep.mubr.f32.mxu0 %v2435
      %2619 = vmatmul.mubr.f32.gmra.mxu0 %v2390
      %v2620 = vpop.f32.mrf.mxu0
      %v2621 = vadd.f32 %v2484, %v2620
      %v2622 = vpop.f32.mrf.mxu0
      %2623 = vmatprep.mubr.f32.mxu0 %v2436
      %2624 = vmatmul.mubr.f32.gmra.mxu0 %v2391
      %v2625 = vpop.f32.mrf.mxu0
      %v2626 = vadd.f32 %v2484, %v2625
      %v2627 = vpop.f32.mrf.mxu0
      %2628 = vmatprep.mubr.f32.mxu0 %v2437
      %2629 = vmatmul.mubr.f32.gmra.mxu0 %v2392
      %v2630 = vpop.f32.mrf.mxu0
      %v2631 = vadd.f32 %v2484, %v2630
      %v2632 = vpop.f32.mrf.mxu0
      %2633 = vmatprep.mubr.f32.mxu0 %v2438
      %2634 = vmatmul.mubr.f32.gmra.mxu0 %v2393
      %v2635 = vpop.f32.mrf.mxu0
      %v2636 = vadd.f32 %v2484, %v2635
      %v2637 = vpop.f32.mrf.mxu0
      %2638 = vmatprep.mubr.f32.mxu0 %v2439
      %2639 = vmatmul.mubr.f32.gmra.mxu0 %v2394
      %v2640 = vpop.f32.mrf.mxu0
      %v2641 = vadd.f32 %v2484, %v2640
      %v2642 = vpop.f32.mrf.mxu0
      %2643 = vmatprep.mubr.f32.mxu0 %v2440
      %2644 = vmatmul.mubr.f32.gmra.mxu0 %v2395
      %v2645 = vpop.f32.mrf.mxu0
      %v2646 = vadd.f32 %v2484, %v2645
      %v2647 = vpop.f32.mrf.mxu0
      %2648 = vmatprep.mubr.f32.mxu0 %v2441
      %2649 = vmatmul.mubr.f32.gmra.mxu0 %v2396
      %v2650 = vpop.f32.mrf.mxu0
      %v2651 = vadd.f32 %v2484, %v2650
      %v2652 = vpop.f32.mrf.mxu0
      %2653 = vmatprep.mubr.f32.mxu0 %v2442
      %2654 = vmatmul.mubr.f32.gmra.mxu0 %v2397
      %v2655 = vpop.f32.mrf.mxu0
      %v2656 = vadd.f32 %v2484, %v2655
      %v2657 = vpop.f32.mrf.mxu0
      %2658 = vdwg.mxu0
      %2659 = vmatprep.subr.mxu0 0.0
      %2660 = vmatpush1.msra.mxu0 0.0
      %2661 = vmatprep.subr.mxu0 0.0
      %2662 = vmatpush1.msra.mxu0 0.0
      %2663 = vmatprep.subr.mxu0 0.0
      %2664 = vmatpush1.msra.mxu0 0.0
      %2665 = vmatprep.subr.mxu0 0.0
      %2666 = vmatpush1.msra.mxu0 0.0
      %2667 = vmatprep.subr.mxu0 0.0
      %2668 = vmatpush1.msra.mxu0 0.0
      %2669 = vmatprep.subr.mxu0 0.0
      %2670 = vmatpush1.msra.mxu0 0.0
      %2671 = vmatprep.subr.mxu0 0.0
      %2672 = vmatpush1.msra.mxu0 0.0
      %2673 = vmatprep.subr.mxu0 0.0
      %2674 = vmatpush1.msra.mxu0 0.0
      %2675 = vmatprep.subr.mxu0 0.0
      %2676 = vmatpush1.msra.mxu0 0.0
      %2677 = vmatprep.subr.mxu0 0.0
      %2678 = vmatpush1.msra.mxu0 0.0
      %2679 = vmatprep.subr.mxu0 0.0
      %2680 = vmatpush1.msra.mxu0 0.0
      %2681 = vmatprep.subr.mxu0 0.0
      %2682 = vmatpush1.msra.mxu0 0.0
      %2683 = vmatprep.subr.mxu0 0.0
      %2684 = vmatpush1.msra.mxu0 %v2478
      %2685 = vmatprep.subr.mxu0 0.0
      %2686 = vmatpush1.msra.mxu0 %v2477
      %2687 = vmatprep.subr.mxu0 0.0
      %2688 = vmatpush1.msra.mxu0 %v2476
      %2689 = vmatprep.subr.mxu0 0.0
      %2690 = vmatpush1.msra.mxu0 %v2475
      %2691 = vmatprep.subr.mxu0 0.0
      %2692 = vmatpush2.msra.mxu0 0.0
      %2693 = vmatprep.subr.mxu0 0.0
      %2694 = vmatpush2.msra.mxu0 0.0
      %2695 = vmatprep.subr.mxu0 0.0
      %2696 = vmatpush2.msra.mxu0 0.0
      %2697 = vmatprep.subr.mxu0 0.0
      %2698 = vmatpush2.msra.mxu0 0.0
      %2699 = vmatprep.subr.mxu0 0.0
      %2700 = vmatpush2.msra.mxu0 0.0
      %2701 = vmatprep.subr.mxu0 0.0
      %2702 = vmatpush2.msra.mxu0 0.0
      %2703 = vmatprep.subr.mxu0 0.0
      %2704 = vmatpush2.msra.mxu0 0.0
      %2705 = vmatprep.subr.mxu0 0.0
      %2706 = vmatpush2.msra.mxu0 0.0
      %2707 = vmatprep.subr.mxu0 0.0
      %2708 = vmatpush2.msra.mxu0 0.0
      %2709 = vmatprep.subr.mxu0 0.0
      %2710 = vmatpush2.msra.mxu0 0.0
      %2711 = vmatprep.subr.mxu0 0.0
      %2712 = vmatpush2.msra.mxu0 0.0
      %2713 = vmatprep.subr.mxu0 0.0
      %2714 = vmatpush2.msra.mxu0 0.0
      %2715 = vmatprep.subr.mxu0 0.0
      %2716 = vmatpush2.msra.mxu0 0.0
      %2717 = vmatprep.subr.mxu0 0.0
      %2718 = vmatpush2.msra.mxu0 0.0
      %2719 = vmatprep.subr.mxu0 0.0
      %2720 = vmatpush2.msra.mxu0 0.0
      %2721 = vmatprep.subr.mxu0 0.0
      %2722 = vmatpush2.msra.mxu0 0.0
      %2723 = vmatprep.mubr.f32.mxu0 0.0
      %2724 = vmatmul.mubr.f32.gmra.mxu0 %v2486
      %v2725 = vpop.f32.mrf.mxu0
      %v2726 = vadd.f32 %v2586, %v2725
      %v2727 = vpop.f32.mrf.mxu0
      %2728 = vmatprep.mubr.f32.mxu0 0.0
      %2729 = vmatmul.mubr.f32.gmra.mxu0 %v2488
      %v2730 = vpop.f32.mrf.mxu0
      %v2731 = vadd.f32 %v2591, %v2730
      %v2732 = vpop.f32.mrf.mxu0
      %2733 = vmatprep.mubr.f32.mxu0 0.0
      %2734 = vmatmul.mubr.f32.gmra.mxu0 %v2490
      %v2735 = vpop.f32.mrf.mxu0
      %v2736 = vadd.f32 %v2596, %v2735
      %v2737 = vpop.f32.mrf.mxu0
      %2738 = vmatprep.mubr.f32.mxu0 0.0
      %2739 = vmatmul.mubr.f32.gmra.mxu0 %v2492
      %v2740 = vpop.f32.mrf.mxu0
      %v2741 = vadd.f32 %v2601, %v2740
      %v2742 = vpop.f32.mrf.mxu0
      %2743 = vmatprep.mubr.f32.mxu0 0.0
      %2744 = vmatmul.mubr.f32.gmra.mxu0 %v2494
      %v2745 = vpop.f32.mrf.mxu0
      %v2746 = vadd.f32 %v2606, %v2745
      %v2747 = vpop.f32.mrf.mxu0
      %2748 = vmatprep.mubr.f32.mxu0 0.0
      %2749 = vmatmul.mubr.f32.gmra.mxu0 %v2496
      %v2750 = vpop.f32.mrf.mxu0
      %v2751 = vadd.f32 %v2611, %v2750
      %v2752 = vpop.f32.mrf.mxu0
      %2753 = vmatprep.mubr.f32.mxu0 0.0
      %2754 = vmatmul.mubr.f32.gmra.mxu0 %v2498
      %v2755 = vpop.f32.mrf.mxu0
      %v2756 = vadd.f32 %v2616, %v2755
      %v2757 = vpop.f32.mrf.mxu0
      %2758 = vmatprep.mubr.f32.mxu0 0.0
      %2759 = vmatmul.mubr.f32.gmra.mxu0 %v2500
      %v2760 = vpop.f32.mrf.mxu0
      %v2761 = vadd.f32 %v2621, %v2760
      %v2762 = vpop.f32.mrf.mxu0
      %2763 = vmatprep.mubr.f32.mxu0 0.0
      %2764 = vmatmul.mubr.f32.gmra.mxu0 %v2502
      %v2765 = vpop.f32.mrf.mxu0
      %v2766 = vadd.f32 %v2626, %v2765
      %v2767 = vpop.f32.mrf.mxu0
      %2768 = vmatprep.mubr.f32.mxu0 0.0
      %2769 = vmatmul.mubr.f32.gmra.mxu0 %v2504
      %v2770 = vpop.f32.mrf.mxu0
      %v2771 = vadd.f32 %v2631, %v2770
      %v2772 = vpop.f32.mrf.mxu0
      %2773 = vmatprep.mubr.f32.mxu0 0.0
      %2774 = vmatmul.mubr.f32.gmra.mxu0 %v2506
      %v2775 = vpop.f32.mrf.mxu0
      %v2776 = vadd.f32 %v2636, %v2775
      %v2777 = vpop.f32.mrf.mxu0
      %2778 = vmatprep.mubr.f32.mxu0 0.0
      %2779 = vmatmul.mubr.f32.gmra.mxu0 %v2508
      %v2780 = vpop.f32.mrf.mxu0
      %v2781 = vadd.f32 %v2641, %v2780
      %v2782 = vpop.f32.mrf.mxu0
      %2783 = vmatprep.mubr.f32.mxu0 0.0
      %2784 = vmatmul.mubr.f32.gmra.mxu0 %v2511
      %v2785 = vpop.f32.mrf.mxu0
      %v2786 = vadd.f32 %v2646, %v2785
      %v2787 = vpop.f32.mrf.mxu0
      %2788 = vmatprep.mubr.f32.mxu0 0.0
      %2789 = vmatmul.mubr.f32.gmra.mxu0 %v2514
      %v2790 = vpop.f32.mrf.mxu0
      %v2791 = vadd.f32 %v2651, %v2790
      %v2792 = vpop.f32.mrf.mxu0
      %2793 = vmatprep.mubr.f32.mxu0 0.0
      %2794 = vmatmul.mubr.f32.gmra.mxu0 %v2517
      %v2795 = vpop.f32.mrf.mxu0
      %v2796 = vadd.f32 %v2656, %v2795
      %v2797 = vpop.f32.mrf.mxu0
      %2798 = vdwg.mxu0
      %v2799 = vmax.f32 %v2726, 0.0
      %v2800 = vmax.f32 %v2731, 0.0
      %v2801 = vmax.f32 %v2736, 0.0
      %v2802 = vmax.f32 %v2741, 0.0
      %v2803 = vmax.f32 %v2746, 0.0
      %v2804 = vmax.f32 %v2751, 0.0
      %v2805 = vmax.f32 %v2756, 0.0
      %v2806 = vmax.f32 %v2761, 0.0
      %v2807 = vmax.f32 %v2766, 0.0
      %v2808 = vmax.f32 %v2771, 0.0
      %v2809 = vmax.f32 %v2776, 0.0
      %v2810 = vmax.f32 %v2781, 0.0
      %v2811 = vmax.f32 %v2786, 0.0
      %v2812 = vmax.f32 %v2791, 0.0
      %v2813 = vmax.f32 %v2796, 0.0
      %v2814 = vld [vmem:[%s11] sm:$0xff]
      %v2815 = vld [vmem:[%s11 + $0x8] sm:$0xff]
      %v2816 = vld [vmem:[%s11 + $0x10] sm:$0xf]
      %vm2817 = vcmask 80896
      %v2819 = vsel %vm2817, %v2814, 0
      %v2822 = vsel %vm2817, %v2815, 0
      %v2825 = vsel %vm2817, %v2816, 0
      %vm2827 = vcmask 1041408
      %v2829 = vsel %vm2827, %v2800, 0
      %2831 = vmatprep.subr.mxu0 0.0
      %2832 = vmatpush1.msra.mxu0 0.0
      %2833 = vmatprep.subr.mxu0 0.0
      %2834 = vmatpush1.msra.mxu0 0.0
      %2835 = vmatprep.subr.mxu0 0.0
      %2836 = vmatpush1.msra.mxu0 0.0
      %2837 = vmatprep.subr.mxu0 0.0
      %2838 = vmatpush1.msra.mxu0 0.0
      %2839 = vmatprep.subr.mxu0 0.0
      %2840 = vmatpush1.msra.mxu0 0.0
      %2841 = vmatprep.subr.mxu0 0.0
      %2842 = vmatpush1.msra.mxu0 0.0
      %2843 = vmatprep.subr.mxu0 0.0
      %2844 = vmatpush1.msra.mxu0 0.0
      %2845 = vmatprep.subr.mxu0 0.0
      %2846 = vmatpush1.msra.mxu0 0.0
      %2847 = vmatprep.subr.mxu0 0.0
      %2848 = vmatpush1.msra.mxu0 0.0
      %2849 = vmatprep.subr.mxu0 0.0
      %2850 = vmatpush1.msra.mxu0 0.0
      %2851 = vmatprep.subr.mxu0 0.0
      %2852 = vmatpush1.msra.mxu0 0.0
      %2853 = vmatprep.subr.mxu0 0.0
      %2854 = vmatpush1.msra.mxu0 0.0
      %2855 = vmatprep.subr.mxu0 0.0
      %2856 = vmatpush1.msra.mxu0 0.0
      %2857 = vmatprep.subr.mxu0 0.0
      %2858 = vmatpush1.msra.mxu0 0.0
      %2859 = vmatprep.subr.mxu0 0.0
      %2860 = vmatpush1.msra.mxu0 %v2829
      %2861 = vmatprep.subr.mxu0 0.0
      %2862 = vmatpush1.msra.mxu0 %v2799
      %2863 = vmatprep.subr.mxu0 0.0
      %2864 = vmatpush2.msra.mxu0 0.0
      %2865 = vmatprep.subr.mxu0 0.0
      %2866 = vmatpush2.msra.mxu0 0.0
      %2867 = vmatprep.subr.mxu0 0.0
      %2868 = vmatpush2.msra.mxu0 0.0
      %2869 = vmatprep.subr.mxu0 0.0
      %2870 = vmatpush2.msra.mxu0 0.0
      %2871 = vmatprep.subr.mxu0 0.0
      %2872 = vmatpush2.msra.mxu0 0.0
      %2873 = vmatprep.subr.mxu0 0.0
      %2874 = vmatpush2.msra.mxu0 0.0
      %2875 = vmatprep.subr.mxu0 0.0
      %2876 = vmatpush2.msra.mxu0 0.0
      %2877 = vmatprep.subr.mxu0 0.0
      %2878 = vmatpush2.msra.mxu0 0.0
      %2879 = vmatprep.subr.mxu0 0.0
      %2880 = vmatpush2.msra.mxu0 0.0
      %2881 = vmatprep.subr.mxu0 0.0
      %2882 = vmatpush2.msra.mxu0 0.0
      %2883 = vmatprep.subr.mxu0 0.0
      %2884 = vmatpush2.msra.mxu0 0.0
      %2885 = vmatprep.subr.mxu0 0.0
      %2886 = vmatpush2.msra.mxu0 0.0
      %2887 = vmatprep.subr.mxu0 0.0
      %2888 = vmatpush2.msra.mxu0 0.0
      %2889 = vmatprep.subr.mxu0 0.0
      %2890 = vmatpush2.msra.mxu0 0.0
      %2891 = vmatprep.subr.mxu0 0.0
      %2892 = vmatpush2.msra.mxu0 0.0
      %2893 = vmatprep.subr.mxu0 0.0
      %2894 = vmatpush2.msra.mxu0 0.0
      %2895 = vmatprep.mubr.f32.mxu0 0.0
      %2896 = vmatmul.mubr.f32.gmra.mxu0 %v2819
      %v2897 = vpop.f32.mrf.mxu0
      %v2898 = vadd.f32 0.0, %v2897
      %v2899 = vpop.f32.mrf.mxu0
      %2900 = vmatprep.mubr.f32.mxu0 0.0
      %2901 = vmatmul.mubr.f32.gmra.mxu0 %v2822
      %v2902 = vpop.f32.mrf.mxu0
      %v2903 = vadd.f32 0.0, %v2902
      %v2904 = vpop.f32.mrf.mxu0
      %2905 = vmatprep.mubr.f32.mxu0 0.0
      %2906 = vmatmul.mubr.f32.gmra.mxu0 %v2825
      %v2907 = vpop.f32.mrf.mxu0
      %v2908 = vadd.f32 0.0, %v2907
      %v2909 = vpop.f32.mrf.mxu0
      %2910 = vdwg.mxu0
      %2911 = vst.msk [vmem:[#allocation5 + $0x32] sm:$0xff] %vm408, %v2898
      %2912 = vst.msk [vmem:[#allocation5 + $0x3a] sm:$0xff] %vm408, %v2903
      %2913 = vst.msk [vmem:[#allocation5 + $0x42] sm:$0xf] %vm431, %v2908
      %v2914 = vld [vmem:[%s11] sm:$0xff]
      %v2915 = vld [vmem:[%s11 + $0x8] sm:$0xff]
      %v2916 = vld [vmem:[%s11 + $0x10] sm:$0xf]
      %vm2918 = vcmask 1043456
      %v2919 = vrot.slane %v2800, 4
      %v2920 = vrot.slane %v2801, 4
      %v2921 = vsel %vm2918, %v2919, %v2920
      %v2924 = vsel %vm2817, %v2914, 0
      %v2927 = vsel %vm2817, %v2915, 0
      %v2930 = vsel %vm2817, %v2916, 0
      %v2932 = vsel %vm2827, %v2920, 0
      %2934 = vmatprep.subr.mxu0 0.0
      %2935 = vmatpush1.msra.mxu0 0.0
      %2936 = vmatprep.subr.mxu0 0.0
      %2937 = vmatpush1.msra.mxu0 0.0
      %2938 = vmatprep.subr.mxu0 0.0
      %2939 = vmatpush1.msra.mxu0 0.0
      %2940 = vmatprep.subr.mxu0 0.0
      %2941 = vmatpush1.msra.mxu0 0.0
      %2942 = vmatprep.subr.mxu0 0.0
      %2943 = vmatpush1.msra.mxu0 0.0
      %2944 = vmatprep.subr.mxu0 0.0
      %2945 = vmatpush1.msra.mxu0 0.0
      %2946 = vmatprep.subr.mxu0 0.0
      %2947 = vmatpush1.msra.mxu0 0.0
      %2948 = vmatprep.subr.mxu0 0.0
      %2949 = vmatpush1.msra.mxu0 0.0
      %2950 = vmatprep.subr.mxu0 0.0
      %2951 = vmatpush1.msra.mxu0 0.0
      %2952 = vmatprep.subr.mxu0 0.0
      %2953 = vmatpush1.msra.mxu0 0.0
      %2954 = vmatprep.subr.mxu0 0.0
      %2955 = vmatpush1.msra.mxu0 0.0
      %2956 = vmatprep.subr.mxu0 0.0
      %2957 = vmatpush1.msra.mxu0 0.0
      %2958 = vmatprep.subr.mxu0 0.0
      %2959 = vmatpush1.msra.mxu0 0.0
      %2960 = vmatprep.subr.mxu0 0.0
      %2961 = vmatpush1.msra.mxu0 0.0
      %2962 = vmatprep.subr.mxu0 0.0
      %2963 = vmatpush1.msra.mxu0 %v2932
      %2964 = vmatprep.subr.mxu0 0.0
      %2965 = vmatpush1.msra.mxu0 %v2921
      %2966 = vmatprep.subr.mxu0 0.0
      %2967 = vmatpush2.msra.mxu0 0.0
      %2968 = vmatprep.subr.mxu0 0.0
      %2969 = vmatpush2.msra.mxu0 0.0
      %2970 = vmatprep.subr.mxu0 0.0
      %2971 = vmatpush2.msra.mxu0 0.0
      %2972 = vmatprep.subr.mxu0 0.0
      %2973 = vmatpush2.msra.mxu0 0.0
      %2974 = vmatprep.subr.mxu0 0.0
      %2975 = vmatpush2.msra.mxu0 0.0
      %2976 = vmatprep.subr.mxu0 0.0
      %2977 = vmatpush2.msra.mxu0 0.0
      %2978 = vmatprep.subr.mxu0 0.0
      %2979 = vmatpush2.msra.mxu0 0.0
      %2980 = vmatprep.subr.mxu0 0.0
      %2981 = vmatpush2.msra.mxu0 0.0
      %2982 = vmatprep.subr.mxu0 0.0
      %2983 = vmatpush2.msra.mxu0 0.0
      %2984 = vmatprep.subr.mxu0 0.0
      %2985 = vmatpush2.msra.mxu0 0.0
      %2986 = vmatprep.subr.mxu0 0.0
      %2987 = vmatpush2.msra.mxu0 0.0
      %2988 = vmatprep.subr.mxu0 0.0
      %2989 = vmatpush2.msra.mxu0 0.0
      %2990 = vmatprep.subr.mxu0 0.0
      %2991 = vmatpush2.msra.mxu0 0.0
      %2992 = vmatprep.subr.mxu0 0.0
      %2993 = vmatpush2.msra.mxu0 0.0
      %2994 = vmatprep.subr.mxu0 0.0
      %2995 = vmatpush2.msra.mxu0 0.0
      %2996 = vmatprep.subr.mxu0 0.0
      %2997 = vmatpush2.msra.mxu0 0.0
      %2998 = vmatprep.mubr.f32.mxu0 0.0
      %2999 = vmatmul.mubr.f32.gmra.mxu0 %v2924
      %v3000 = vpop.f32.mrf.mxu0
      %v3001 = vadd.f32 0.0, %v3000
      %v3002 = vpop.f32.mrf.mxu0
      %3003 = vmatprep.mubr.f32.mxu0 0.0
      %3004 = vmatmul.mubr.f32.gmra.mxu0 %v2927
      %v3005 = vpop.f32.mrf.mxu0
      %v3006 = vadd.f32 0.0, %v3005
      %v3007 = vpop.f32.mrf.mxu0
      %3008 = vmatprep.mubr.f32.mxu0 0.0
      %3009 = vmatmul.mubr.f32.gmra.mxu0 %v2930
      %v3010 = vpop.f32.mrf.mxu0
      %v3011 = vadd.f32 0.0, %v3010
      %v3012 = vpop.f32.mrf.mxu0
      %3013 = vdwg.mxu0
      %3014 = vst.msk [vmem:[#allocation5 + $0x62] sm:$0xff] %vm408, %v3001
      %3015 = vst.msk [vmem:[#allocation5 + $0x6a] sm:$0xff] %vm408, %v3006
      %3016 = vst.msk [vmem:[#allocation5 + $0x72] sm:$0xf] %vm431, %v3011
      %v3017 = vld [vmem:[%s11] sm:$0xff]
      %v3018 = vld [vmem:[%s11 + $0x8] sm:$0xff]
      %v3019 = vld [vmem:[%s11 + $0x10] sm:$0xf]
      %v3021 = vsel %vm2817, %v3017, 0
      %v3024 = vsel %vm2817, %v3018, 0
      %v3027 = vsel %vm2817, %v3019, 0
      %v3030 = vsel %vm2827, %v2803, 0
      %3032 = vmatprep.subr.mxu0 0.0
      %3033 = vmatpush1.msra.mxu0 0.0
      %3034 = vmatprep.subr.mxu0 0.0
      %3035 = vmatpush1.msra.mxu0 0.0
      %3036 = vmatprep.subr.mxu0 0.0
      %3037 = vmatpush1.msra.mxu0 0.0
      %3038 = vmatprep.subr.mxu0 0.0
      %3039 = vmatpush1.msra.mxu0 0.0
      %3040 = vmatprep.subr.mxu0 0.0
      %3041 = vmatpush1.msra.mxu0 0.0
      %3042 = vmatprep.subr.mxu0 0.0
      %3043 = vmatpush1.msra.mxu0 0.0
      %3044 = vmatprep.subr.mxu0 0.0
      %3045 = vmatpush1.msra.mxu0 0.0
      %3046 = vmatprep.subr.mxu0 0.0
      %3047 = vmatpush1.msra.mxu0 0.0
      %3048 = vmatprep.subr.mxu0 0.0
      %3049 = vmatpush1.msra.mxu0 0.0
      %3050 = vmatprep.subr.mxu0 0.0
      %3051 = vmatpush1.msra.mxu0 0.0
      %3052 = vmatprep.subr.mxu0 0.0
      %3053 = vmatpush1.msra.mxu0 0.0
      %3054 = vmatprep.subr.mxu0 0.0
      %3055 = vmatpush1.msra.mxu0 0.0
      %3056 = vmatprep.subr.mxu0 0.0
      %3057 = vmatpush1.msra.mxu0 0.0
      %3058 = vmatprep.subr.mxu0 0.0
      %3059 = vmatpush1.msra.mxu0 0.0
      %3060 = vmatprep.subr.mxu0 0.0
      %3061 = vmatpush1.msra.mxu0 %v3030
      %3062 = vmatprep.subr.mxu0 0.0
      %3063 = vmatpush1.msra.mxu0 %v2802
      %3064 = vmatprep.subr.mxu0 0.0
      %3065 = vmatpush2.msra.mxu0 0.0
      %3066 = vmatprep.subr.mxu0 0.0
      %3067 = vmatpush2.msra.mxu0 0.0
      %3068 = vmatprep.subr.mxu0 0.0
      %3069 = vmatpush2.msra.mxu0 0.0
      %3070 = vmatprep.subr.mxu0 0.0
      %3071 = vmatpush2.msra.mxu0 0.0
      %3072 = vmatprep.subr.mxu0 0.0
      %3073 = vmatpush2.msra.mxu0 0.0
      %3074 = vmatprep.subr.mxu0 0.0
      %3075 = vmatpush2.msra.mxu0 0.0
      %3076 = vmatprep.subr.mxu0 0.0
      %3077 = vmatpush2.msra.mxu0 0.0
      %3078 = vmatprep.subr.mxu0 0.0
      %3079 = vmatpush2.msra.mxu0 0.0
      %3080 = vmatprep.subr.mxu0 0.0
      %3081 = vmatpush2.msra.mxu0 0.0
      %3082 = vmatprep.subr.mxu0 0.0
      %3083 = vmatpush2.msra.mxu0 0.0
      %3084 = vmatprep.subr.mxu0 0.0
      %3085 = vmatpush2.msra.mxu0 0.0
      %3086 = vmatprep.subr.mxu0 0.0
      %3087 = vmatpush2.msra.mxu0 0.0
      %3088 = vmatprep.subr.mxu0 0.0
      %3089 = vmatpush2.msra.mxu0 0.0
      %3090 = vmatprep.subr.mxu0 0.0
      %3091 = vmatpush2.msra.mxu0 0.0
      %3092 = vmatprep.subr.mxu0 0.0
      %3093 = vmatpush2.msra.mxu0 0.0
      %3094 = vmatprep.subr.mxu0 0.0
      %3095 = vmatpush2.msra.mxu0 0.0
      %3096 = vmatprep.mubr.f32.mxu0 0.0
      %3097 = vmatmul.mubr.f32.gmra.mxu0 %v3021
      %v3098 = vpop.f32.mrf.mxu0
      %v3099 = vadd.f32 0.0, %v3098
      %v3100 = vpop.f32.mrf.mxu0
      %3101 = vmatprep.mubr.f32.mxu0 0.0
      %3102 = vmatmul.mubr.f32.gmra.mxu0 %v3024
      %v3103 = vpop.f32.mrf.mxu0
      %v3104 = vadd.f32 0.0, %v3103
      %v3105 = vpop.f32.mrf.mxu0
      %3106 = vmatprep.mubr.f32.mxu0 0.0
      %3107 = vmatmul.mubr.f32.gmra.mxu0 %v3027
      %v3108 = vpop.f32.mrf.mxu0
      %v3109 = vadd.f32 0.0, %v3108
      %v3110 = vpop.f32.mrf.mxu0
      %3111 = vdwg.mxu0
      %3112 = vst.msk [vmem:[#allocation5 + $0x92] sm:$0xff] %vm408, %v3099
      %3113 = vst.msk [vmem:[#allocation5 + $0x9a] sm:$0xff] %vm408, %v3104
      %3114 = vst.msk [vmem:[#allocation5 + $0xa2] sm:$0xf] %vm431, %v3109
      %v3115 = vld [vmem:[%s11] sm:$0xff]
      %v3116 = vld [vmem:[%s11 + $0x8] sm:$0xff]
      %v3117 = vld [vmem:[%s11 + $0x10] sm:$0xf]
      %v3119 = vrot.slane %v2803, 4
      %v3120 = vrot.slane %v2804, 4
      %v3121 = vsel %vm2918, %v3119, %v3120
      %v3124 = vsel %vm2817, %v3115, 0
      %v3127 = vsel %vm2817, %v3116, 0
      %v3130 = vsel %vm2817, %v3117, 0
      %v3132 = vsel %vm2827, %v3120, 0
      %3134 = vmatprep.subr.mxu0 0.0
      %3135 = vmatpush1.msra.mxu0 0.0
      %3136 = vmatprep.subr.mxu0 0.0
      %3137 = vmatpush1.msra.mxu0 0.0
      %3138 = vmatprep.subr.mxu0 0.0
      %3139 = vmatpush1.msra.mxu0 0.0
      %3140 = vmatprep.subr.mxu0 0.0
      %3141 = vmatpush1.msra.mxu0 0.0
      %3142 = vmatprep.subr.mxu0 0.0
      %3143 = vmatpush1.msra.mxu0 0.0
      %3144 = vmatprep.subr.mxu0 0.0
      %3145 = vmatpush1.msra.mxu0 0.0
      %3146 = vmatprep.subr.mxu0 0.0
      %3147 = vmatpush1.msra.mxu0 0.0
      %3148 = vmatprep.subr.mxu0 0.0
      %3149 = vmatpush1.msra.mxu0 0.0
      %3150 = vmatprep.subr.mxu0 0.0
      %3151 = vmatpush1.msra.mxu0 0.0
      %3152 = vmatprep.subr.mxu0 0.0
      %3153 = vmatpush1.msra.mxu0 0.0
      %3154 = vmatprep.subr.mxu0 0.0
      %3155 = vmatpush1.msra.mxu0 0.0
      %3156 = vmatprep.subr.mxu0 0.0
      %3157 = vmatpush1.msra.mxu0 0.0
      %3158 = vmatprep.subr.mxu0 0.0
      %3159 = vmatpush1.msra.mxu0 0.0
      %3160 = vmatprep.subr.mxu0 0.0
      %3161 = vmatpush1.msra.mxu0 0.0
      %3162 = vmatprep.subr.mxu0 0.0
      %3163 = vmatpush1.msra.mxu0 %v3132
      %3164 = vmatprep.subr.mxu0 0.0
      %3165 = vmatpush1.msra.mxu0 %v3121
      %3166 = vmatprep.subr.mxu0 0.0
      %3167 = vmatpush2.msra.mxu0 0.0
      %3168 = vmatprep.subr.mxu0 0.0
      %3169 = vmatpush2.msra.mxu0 0.0
      %3170 = vmatprep.subr.mxu0 0.0
      %3171 = vmatpush2.msra.mxu0 0.0
      %3172 = vmatprep.subr.mxu0 0.0
      %3173 = vmatpush2.msra.mxu0 0.0
      %3174 = vmatprep.subr.mxu0 0.0
      %3175 = vmatpush2.msra.mxu0 0.0
      %3176 = vmatprep.subr.mxu0 0.0
      %3177 = vmatpush2.msra.mxu0 0.0
      %3178 = vmatprep.subr.mxu0 0.0
      %3179 = vmatpush2.msra.mxu0 0.0
      %3180 = vmatprep.subr.mxu0 0.0
      %3181 = vmatpush2.msra.mxu0 0.0
      %3182 = vmatprep.subr.mxu0 0.0
      %3183 = vmatpush2.msra.mxu0 0.0
      %3184 = vmatprep.subr.mxu0 0.0
      %3185 = vmatpush2.msra.mxu0 0.0
      %3186 = vmatprep.subr.mxu0 0.0
      %3187 = vmatpush2.msra.mxu0 0.0
      %3188 = vmatprep.subr.mxu0 0.0
      %3189 = vmatpush2.msra.mxu0 0.0
      %3190 = vmatprep.subr.mxu0 0.0
      %3191 = vmatpush2.msra.mxu0 0.0
      %3192 = vmatprep.subr.mxu0 0.0
      %3193 = vmatpush2.msra.mxu0 0.0
      %3194 = vmatprep.subr.mxu0 0.0
      %3195 = vmatpush2.msra.mxu0 0.0
      %3196 = vmatprep.subr.mxu0 0.0
      %3197 = vmatpush2.msra.mxu0 0.0
      %3198 = vmatprep.mubr.f32.mxu0 0.0
      %3199 = vmatmul.mubr.f32.gmra.mxu0 %v3124
      %v3200 = vpop.f32.mrf.mxu0
      %v3201 = vadd.f32 0.0, %v3200
      %v3202 = vpop.f32.mrf.mxu0
      %3203 = vmatprep.mubr.f32.mxu0 0.0
      %3204 = vmatmul.mubr.f32.gmra.mxu0 %v3127
      %v3205 = vpop.f32.mrf.mxu0
      %v3206 = vadd.f32 0.0, %v3205
      %v3207 = vpop.f32.mrf.mxu0
      %3208 = vmatprep.mubr.f32.mxu0 0.0
      %3209 = vmatmul.mubr.f32.gmra.mxu0 %v3130
      %v3210 = vpop.f32.mrf.mxu0
      %v3211 = vadd.f32 0.0, %v3210
      %v3212 = vpop.f32.mrf.mxu0
      %3213 = vdwg.mxu0
      %3214 = vst.msk [vmem:[#allocation5 + $0xc2] sm:$0xff] %vm408, %v3201
      %3215 = vst.msk [vmem:[#allocation5 + $0xca] sm:$0xff] %vm408, %v3206
      %3216 = vst.msk [vmem:[#allocation5 + $0xd2] sm:$0xf] %vm431, %v3211
      %v3217 = vld [vmem:[%s11] sm:$0xff]
      %v3218 = vld [vmem:[%s11 + $0x8] sm:$0xff]
      %v3219 = vld [vmem:[%s11 + $0x10] sm:$0xf]
      %v3221 = vsel %vm2817, %v3217, 0
      %v3224 = vsel %vm2817, %v3218, 0
      %v3227 = vsel %vm2817, %v3219, 0
      %v3230 = vsel %vm2827, %v2806, 0
      %3232 = vmatprep.subr.mxu0 0.0
      %3233 = vmatpush1.msra.mxu0 0.0
      %3234 = vmatprep.subr.mxu0 0.0
      %3235 = vmatpush1.msra.mxu0 0.0
      %3236 = vmatprep.subr.mxu0 0.0
      %3237 = vmatpush1.msra.mxu0 0.0
      %3238 = vmatprep.subr.mxu0 0.0
      %3239 = vmatpush1.msra.mxu0 0.0
      %3240 = vmatprep.subr.mxu0 0.0
      %3241 = vmatpush1.msra.mxu0 0.0
      %3242 = vmatprep.subr.mxu0 0.0
      %3243 = vmatpush1.msra.mxu0 0.0
      %3244 = vmatprep.subr.mxu0 0.0
      %3245 = vmatpush1.msra.mxu0 0.0
      %3246 = vmatprep.subr.mxu0 0.0
      %3247 = vmatpush1.msra.mxu0 0.0
      %3248 = vmatprep.subr.mxu0 0.0
      %3249 = vmatpush1.msra.mxu0 0.0
      %3250 = vmatprep.subr.mxu0 0.0
      %3251 = vmatpush1.msra.mxu0 0.0
      %3252 = vmatprep.subr.mxu0 0.0
      %3253 = vmatpush1.msra.mxu0 0.0
      %3254 = vmatprep.subr.mxu0 0.0
      %3255 = vmatpush1.msra.mxu0 0.0
      %3256 = vmatprep.subr.mxu0 0.0
      %3257 = vmatpush1.msra.mxu0 0.0
      %3258 = vmatprep.subr.mxu0 0.0
      %3259 = vmatpush1.msra.mxu0 0.0
      %3260 = vmatprep.subr.mxu0 0.0
      %3261 = vmatpush1.msra.mxu0 %v3230
      %3262 = vmatprep.subr.mxu0 0.0
      %3263 = vmatpush1.msra.mxu0 %v2805
      %3264 = vmatprep.subr.mxu0 0.0
      %3265 = vmatpush2.msra.mxu0 0.0
      %3266 = vmatprep.subr.mxu0 0.0
      %3267 = vmatpush2.msra.mxu0 0.0
      %3268 = vmatprep.subr.mxu0 0.0
      %3269 = vmatpush2.msra.mxu0 0.0
      %3270 = vmatprep.subr.mxu0 0.0
      %3271 = vmatpush2.msra.mxu0 0.0
      %3272 = vmatprep.subr.mxu0 0.0
      %3273 = vmatpush2.msra.mxu0 0.0
      %3274 = vmatprep.subr.mxu0 0.0
      %3275 = vmatpush2.msra.mxu0 0.0
      %3276 = vmatprep.subr.mxu0 0.0
      %3277 = vmatpush2.msra.mxu0 0.0
      %3278 = vmatprep.subr.mxu0 0.0
      %3279 = vmatpush2.msra.mxu0 0.0
      %3280 = vmatprep.subr.mxu0 0.0
      %3281 = vmatpush2.msra.mxu0 0.0
      %3282 = vmatprep.subr.mxu0 0.0
      %3283 = vmatpush2.msra.mxu0 0.0
      %3284 = vmatprep.subr.mxu0 0.0
      %3285 = vmatpush2.msra.mxu0 0.0
      %3286 = vmatprep.subr.mxu0 0.0
      %3287 = vmatpush2.msra.mxu0 0.0
      %3288 = vmatprep.subr.mxu0 0.0
      %3289 = vmatpush2.msra.mxu0 0.0
      %3290 = vmatprep.subr.mxu0 0.0
      %3291 = vmatpush2.msra.mxu0 0.0
      %3292 = vmatprep.subr.mxu0 0.0
      %3293 = vmatpush2.msra.mxu0 0.0
      %3294 = vmatprep.subr.mxu0 0.0
      %3295 = vmatpush2.msra.mxu0 0.0
      %3296 = vmatprep.mubr.f32.mxu0 0.0
      %3297 = vmatmul.mubr.f32.gmra.mxu0 %v3221
      %v3298 = vpop.f32.mrf.mxu0
      %v3299 = vadd.f32 0.0, %v3298
      %v3300 = vpop.f32.mrf.mxu0
      %3301 = vmatprep.mubr.f32.mxu0 0.0
      %3302 = vmatmul.mubr.f32.gmra.mxu0 %v3224
      %v3303 = vpop.f32.mrf.mxu0
      %v3304 = vadd.f32 0.0, %v3303
      %v3305 = vpop.f32.mrf.mxu0
      %3306 = vmatprep.mubr.f32.mxu0 0.0
      %3307 = vmatmul.mubr.f32.gmra.mxu0 %v3227
      %v3308 = vpop.f32.mrf.mxu0
      %v3309 = vadd.f32 0.0, %v3308
      %v3310 = vpop.f32.mrf.mxu0
      %3311 = vdwg.mxu0
      %3312 = vst.msk [vmem:[#allocation5 + $0xf2] sm:$0xff] %vm408, %v3299
      %3313 = vst.msk [vmem:[#allocation5 + $0xfa] sm:$0xff] %vm408, %v3304
      %3314 = vst.msk [vmem:[#allocation5 + $0x102] sm:$0xf] %vm431, %v3309
      %v3315 = vld [vmem:[%s11] sm:$0xff]
      %v3316 = vld [vmem:[%s11 + $0x8] sm:$0xff]
      %v3317 = vld [vmem:[%s11 + $0x10] sm:$0xf]
      %v3319 = vrot.slane %v2806, 4
      %v3320 = vrot.slane %v2807, 4
      %v3321 = vsel %vm2918, %v3319, %v3320
      %v3324 = vsel %vm2817, %v3315, 0
      %v3327 = vsel %vm2817, %v3316, 0
      %v3330 = vsel %vm2817, %v3317, 0
      %v3332 = vsel %vm2827, %v3320, 0
      %3334 = vmatprep.subr.mxu0 0.0
      %3335 = vmatpush1.msra.mxu0 0.0
      %3336 = vmatprep.subr.mxu0 0.0
      %3337 = vmatpush1.msra.mxu0 0.0
      %3338 = vmatprep.subr.mxu0 0.0
      %3339 = vmatpush1.msra.mxu0 0.0
      %3340 = vmatprep.subr.mxu0 0.0
      %3341 = vmatpush1.msra.mxu0 0.0
      %3342 = vmatprep.subr.mxu0 0.0
      %3343 = vmatpush1.msra.mxu0 0.0
      %3344 = vmatprep.subr.mxu0 0.0
      %3345 = vmatpush1.msra.mxu0 0.0
      %3346 = vmatprep.subr.mxu0 0.0
      %3347 = vmatpush1.msra.mxu0 0.0
      %3348 = vmatprep.subr.mxu0 0.0
      %3349 = vmatpush1.msra.mxu0 0.0
      %3350 = vmatprep.subr.mxu0 0.0
      %3351 = vmatpush1.msra.mxu0 0.0
      %3352 = vmatprep.subr.mxu0 0.0
      %3353 = vmatpush1.msra.mxu0 0.0
      %3354 = vmatprep.subr.mxu0 0.0
      %3355 = vmatpush1.msra.mxu0 0.0
      %3356 = vmatprep.subr.mxu0 0.0
      %3357 = vmatpush1.msra.mxu0 0.0
      %3358 = vmatprep.subr.mxu0 0.0
      %3359 = vmatpush1.msra.mxu0 0.0
      %3360 = vmatprep.subr.mxu0 0.0
      %3361 = vmatpush1.msra.mxu0 0.0
      %3362 = vmatprep.subr.mxu0 0.0
      %3363 = vmatpush1.msra.mxu0 %v3332
      %3364 = vmatprep.subr.mxu0 0.0
      %3365 = vmatpush1.msra.mxu0 %v3321
      %3366 = vmatprep.subr.mxu0 0.0
      %3367 = vmatpush2.msra.mxu0 0.0
      %3368 = vmatprep.subr.mxu0 0.0
      %3369 = vmatpush2.msra.mxu0 0.0
      %3370 = vmatprep.subr.mxu0 0.0
      %3371 = vmatpush2.msra.mxu0 0.0
      %3372 = vmatprep.subr.mxu0 0.0
      %3373 = vmatpush2.msra.mxu0 0.0
      %3374 = vmatprep.subr.mxu0 0.0
      %3375 = vmatpush2.msra.mxu0 0.0
      %3376 = vmatprep.subr.mxu0 0.0
      %3377 = vmatpush2.msra.mxu0 0.0
      %3378 = vmatprep.subr.mxu0 0.0
      %3379 = vmatpush2.msra.mxu0 0.0
      %3380 = vmatprep.subr.mxu0 0.0
      %3381 = vmatpush2.msra.mxu0 0.0
      %3382 = vmatprep.subr.mxu0 0.0
      %3383 = vmatpush2.msra.mxu0 0.0
      %3384 = vmatprep.subr.mxu0 0.0
      %3385 = vmatpush2.msra.mxu0 0.0
      %3386 = vmatprep.subr.mxu0 0.0
      %3387 = vmatpush2.msra.mxu0 0.0
      %3388 = vmatprep.subr.mxu0 0.0
      %3389 = vmatpush2.msra.mxu0 0.0
      %3390 = vmatprep.subr.mxu0 0.0
      %3391 = vmatpush2.msra.mxu0 0.0
      %3392 = vmatprep.subr.mxu0 0.0
      %3393 = vmatpush2.msra.mxu0 0.0
      %3394 = vmatprep.subr.mxu0 0.0
      %3395 = vmatpush2.msra.mxu0 0.0
      %3396 = vmatprep.subr.mxu0 0.0
      %3397 = vmatpush2.msra.mxu0 0.0
      %3398 = vmatprep.mubr.f32.mxu0 0.0
      %3399 = vmatmul.mubr.f32.gmra.mxu0 %v3324
      %v3400 = vpop.f32.mrf.mxu0
      %v3401 = vadd.f32 0.0, %v3400
      %v3402 = vpop.f32.mrf.mxu0
      %3403 = vmatprep.mubr.f32.mxu0 0.0
      %3404 = vmatmul.mubr.f32.gmra.mxu0 %v3327
      %v3405 = vpop.f32.mrf.mxu0
      %v3406 = vadd.f32 0.0, %v3405
      %v3407 = vpop.f32.mrf.mxu0
      %3408 = vmatprep.mubr.f32.mxu0 0.0
      %3409 = vmatmul.mubr.f32.gmra.mxu0 %v3330
      %v3410 = vpop.f32.mrf.mxu0
      %v3411 = vadd.f32 0.0, %v3410
      %v3412 = vpop.f32.mrf.mxu0
      %3413 = vdwg.mxu0
      %3414 = vst.msk [vmem:[#allocation5 + $0x122] sm:$0xff] %vm408, %v3401
      %3415 = vst.msk [vmem:[#allocation5 + $0x12a] sm:$0xff] %vm408, %v3406
      %3416 = vst.msk [vmem:[#allocation5 + $0x132] sm:$0xf] %vm431, %v3411
      %v3417 = vld [vmem:[%s11] sm:$0xff]
      %v3418 = vld [vmem:[%s11 + $0x8] sm:$0xff]
      %v3419 = vld [vmem:[%s11 + $0x10] sm:$0xf]
      %v3421 = vsel %vm2817, %v3417, 0
      %v3424 = vsel %vm2817, %v3418, 0
      %v3427 = vsel %vm2817, %v3419, 0
      %v3430 = vsel %vm2827, %v2809, 0
      %3432 = vmatprep.subr.mxu0 0.0
      %3433 = vmatpush1.msra.mxu0 0.0
      %3434 = vmatprep.subr.mxu0 0.0
      %3435 = vmatpush1.msra.mxu0 0.0
      %3436 = vmatprep.subr.mxu0 0.0
      %3437 = vmatpush1.msra.mxu0 0.0
      %3438 = vmatprep.subr.mxu0 0.0
      %3439 = vmatpush1.msra.mxu0 0.0
      %3440 = vmatprep.subr.mxu0 0.0
      %3441 = vmatpush1.msra.mxu0 0.0
      %3442 = vmatprep.subr.mxu0 0.0
      %3443 = vmatpush1.msra.mxu0 0.0
      %3444 = vmatprep.subr.mxu0 0.0
      %3445 = vmatpush1.msra.mxu0 0.0
      %3446 = vmatprep.subr.mxu0 0.0
      %3447 = vmatpush1.msra.mxu0 0.0
      %3448 = vmatprep.subr.mxu0 0.0
      %3449 = vmatpush1.msra.mxu0 0.0
      %3450 = vmatprep.subr.mxu0 0.0
      %3451 = vmatpush1.msra.mxu0 0.0
      %3452 = vmatprep.subr.mxu0 0.0
      %3453 = vmatpush1.msra.mxu0 0.0
      %3454 = vmatprep.subr.mxu0 0.0
      %3455 = vmatpush1.msra.mxu0 0.0
      %3456 = vmatprep.subr.mxu0 0.0
      %3457 = vmatpush1.msra.mxu0 0.0
      %3458 = vmatprep.subr.mxu0 0.0
      %3459 = vmatpush1.msra.mxu0 0.0
      %3460 = vmatprep.subr.mxu0 0.0
      %3461 = vmatpush1.msra.mxu0 %v3430
      %3462 = vmatprep.subr.mxu0 0.0
      %3463 = vmatpush1.msra.mxu0 %v2808
      %3464 = vmatprep.subr.mxu0 0.0
      %3465 = vmatpush2.msra.mxu0 0.0
      %3466 = vmatprep.subr.mxu0 0.0
      %3467 = vmatpush2.msra.mxu0 0.0
      %3468 = vmatprep.subr.mxu0 0.0
      %3469 = vmatpush2.msra.mxu0 0.0
      %3470 = vmatprep.subr.mxu0 0.0
      %3471 = vmatpush2.msra.mxu0 0.0
      %3472 = vmatprep.subr.mxu0 0.0
      %3473 = vmatpush2.msra.mxu0 0.0
      %3474 = vmatprep.subr.mxu0 0.0
      %3475 = vmatpush2.msra.mxu0 0.0
      %3476 = vmatprep.subr.mxu0 0.0
      %3477 = vmatpush2.msra.mxu0 0.0
      %3478 = vmatprep.subr.mxu0 0.0
      %3479 = vmatpush2.msra.mxu0 0.0
      %3480 = vmatprep.subr.mxu0 0.0
      %3481 = vmatpush2.msra.mxu0 0.0
      %3482 = vmatprep.subr.mxu0 0.0
      %3483 = vmatpush2.msra.mxu0 0.0
      %3484 = vmatprep.subr.mxu0 0.0
      %3485 = vmatpush2.msra.mxu0 0.0
      %3486 = vmatprep.subr.mxu0 0.0
      %3487 = vmatpush2.msra.mxu0 0.0
      %3488 = vmatprep.subr.mxu0 0.0
      %3489 = vmatpush2.msra.mxu0 0.0
      %3490 = vmatprep.subr.mxu0 0.0
      %3491 = vmatpush2.msra.mxu0 0.0
      %3492 = vmatprep.subr.mxu0 0.0
      %3493 = vmatpush2.msra.mxu0 0.0
      %3494 = vmatprep.subr.mxu0 0.0
      %3495 = vmatpush2.msra.mxu0 0.0
      %3496 = vmatprep.mubr.f32.mxu0 0.0
      %3497 = vmatmul.mubr.f32.gmra.mxu0 %v3421
      %v3498 = vpop.f32.mrf.mxu0
      %v3499 = vadd.f32 0.0, %v3498
      %v3500 = vpop.f32.mrf.mxu0
      %3501 = vmatprep.mubr.f32.mxu0 0.0
      %3502 = vmatmul.mubr.f32.gmra.mxu0 %v3424
      %v3503 = vpop.f32.mrf.mxu0
      %v3504 = vadd.f32 0.0, %v3503
      %v3505 = vpop.f32.mrf.mxu0
      %3506 = vmatprep.mubr.f32.mxu0 0.0
      %3507 = vmatmul.mubr.f32.gmra.mxu0 %v3427
      %v3508 = vpop.f32.mrf.mxu0
      %v3509 = vadd.f32 0.0, %v3508
      %v3510 = vpop.f32.mrf.mxu0
      %3511 = vdwg.mxu0
      %3512 = vst.msk [vmem:[#allocation5 + $0x152] sm:$0xff] %vm408, %v3499
      %3513 = vst.msk [vmem:[#allocation5 + $0x15a] sm:$0xff] %vm408, %v3504
      %3514 = vst.msk [vmem:[#allocation5 + $0x162] sm:$0xf] %vm431, %v3509
      %v3515 = vld [vmem:[%s11] sm:$0xff]
      %v3516 = vld [vmem:[%s11 + $0x8] sm:$0xff]
      %v3517 = vld [vmem:[%s11 + $0x10] sm:$0xf]
      %v3519 = vrot.slane %v2809, 4
      %v3520 = vrot.slane %v2810, 4
      %v3521 = vsel %vm2918, %v3519, %v3520
      %v3524 = vsel %vm2817, %v3515, 0
      %v3527 = vsel %vm2817, %v3516, 0
      %v3530 = vsel %vm2817, %v3517, 0
      %v3532 = vsel %vm2827, %v3520, 0
      %3534 = vmatprep.subr.mxu0 0.0
      %3535 = vmatpush1.msra.mxu0 0.0
      %3536 = vmatprep.subr.mxu0 0.0
      %3537 = vmatpush1.msra.mxu0 0.0
      %3538 = vmatprep.subr.mxu0 0.0
      %3539 = vmatpush1.msra.mxu0 0.0
      %3540 = vmatprep.subr.mxu0 0.0
      %3541 = vmatpush1.msra.mxu0 0.0
      %3542 = vmatprep.subr.mxu0 0.0
      %3543 = vmatpush1.msra.mxu0 0.0
      %3544 = vmatprep.subr.mxu0 0.0
      %3545 = vmatpush1.msra.mxu0 0.0
      %3546 = vmatprep.subr.mxu0 0.0
      %3547 = vmatpush1.msra.mxu0 0.0
      %3548 = vmatprep.subr.mxu0 0.0
      %3549 = vmatpush1.msra.mxu0 0.0
      %3550 = vmatprep.subr.mxu0 0.0
      %3551 = vmatpush1.msra.mxu0 0.0
      %3552 = vmatprep.subr.mxu0 0.0
      %3553 = vmatpush1.msra.mxu0 0.0
      %3554 = vmatprep.subr.mxu0 0.0
      %3555 = vmatpush1.msra.mxu0 0.0
      %3556 = vmatprep.subr.mxu0 0.0
      %3557 = vmatpush1.msra.mxu0 0.0
      %3558 = vmatprep.subr.mxu0 0.0
      %3559 = vmatpush1.msra.mxu0 0.0
      %3560 = vmatprep.subr.mxu0 0.0
      %3561 = vmatpush1.msra.mxu0 0.0
      %3562 = vmatprep.subr.mxu0 0.0
      %3563 = vmatpush1.msra.mxu0 %v3532
      %3564 = vmatprep.subr.mxu0 0.0
      %3565 = vmatpush1.msra.mxu0 %v3521
      %3566 = vmatprep.subr.mxu0 0.0
      %3567 = vmatpush2.msra.mxu0 0.0
      %3568 = vmatprep.subr.mxu0 0.0
      %3569 = vmatpush2.msra.mxu0 0.0
      %3570 = vmatprep.subr.mxu0 0.0
      %3571 = vmatpush2.msra.mxu0 0.0
      %3572 = vmatprep.subr.mxu0 0.0
      %3573 = vmatpush2.msra.mxu0 0.0
      %3574 = vmatprep.subr.mxu0 0.0
      %3575 = vmatpush2.msra.mxu0 0.0
      %3576 = vmatprep.subr.mxu0 0.0
      %3577 = vmatpush2.msra.mxu0 0.0
      %3578 = vmatprep.subr.mxu0 0.0
      %3579 = vmatpush2.msra.mxu0 0.0
      %3580 = vmatprep.subr.mxu0 0.0
      %3581 = vmatpush2.msra.mxu0 0.0
      %3582 = vmatprep.subr.mxu0 0.0
      %3583 = vmatpush2.msra.mxu0 0.0
      %3584 = vmatprep.subr.mxu0 0.0
      %3585 = vmatpush2.msra.mxu0 0.0
      %3586 = vmatprep.subr.mxu0 0.0
      %3587 = vmatpush2.msra.mxu0 0.0
      %3588 = vmatprep.subr.mxu0 0.0
      %3589 = vmatpush2.msra.mxu0 0.0
      %3590 = vmatprep.subr.mxu0 0.0
      %3591 = vmatpush2.msra.mxu0 0.0
      %3592 = vmatprep.subr.mxu0 0.0
      %3593 = vmatpush2.msra.mxu0 0.0
      %3594 = vmatprep.subr.mxu0 0.0
      %3595 = vmatpush2.msra.mxu0 0.0
      %3596 = vmatprep.subr.mxu0 0.0
      %3597 = vmatpush2.msra.mxu0 0.0
      %3598 = vmatprep.mubr.f32.mxu0 0.0
      %3599 = vmatmul.mubr.f32.gmra.mxu0 %v3524
      %v3600 = vpop.f32.mrf.mxu0
      %v3601 = vadd.f32 0.0, %v3600
      %v3602 = vpop.f32.mrf.mxu0
      %3603 = vmatprep.mubr.f32.mxu0 0.0
      %3604 = vmatmul.mubr.f32.gmra.mxu0 %v3527
      %v3605 = vpop.f32.mrf.mxu0
      %v3606 = vadd.f32 0.0, %v3605
      %v3607 = vpop.f32.mrf.mxu0
      %3608 = vmatprep.mubr.f32.mxu0 0.0
      %3609 = vmatmul.mubr.f32.gmra.mxu0 %v3530
      %v3610 = vpop.f32.mrf.mxu0
      %v3611 = vadd.f32 0.0, %v3610
      %v3612 = vpop.f32.mrf.mxu0
      %3613 = vdwg.mxu0
      %3614 = vst.msk [vmem:[#allocation5 + $0x182] sm:$0xff] %vm408, %v3601
      %3615 = vst.msk [vmem:[#allocation5 + $0x18a] sm:$0xff] %vm408, %v3606
      %3616 = vst.msk [vmem:[#allocation5 + $0x192] sm:$0xf] %vm431, %v3611
      %v3617 = vld [vmem:[%s11] sm:$0xff]
      %v3618 = vld [vmem:[%s11 + $0x8] sm:$0xff]
      %v3619 = vld [vmem:[%s11 + $0x10] sm:$0xf]
      %v3621 = vsel %vm2817, %v3617, 0
      %v3624 = vsel %vm2817, %v3618, 0
      %v3627 = vsel %vm2817, %v3619, 0
      %v3630 = vsel %vm2827, %v2812, 0
      %3632 = vmatprep.subr.mxu0 0.0
      %3633 = vmatpush1.msra.mxu0 0.0
      %3634 = vmatprep.subr.mxu0 0.0
      %3635 = vmatpush1.msra.mxu0 0.0
      %3636 = vmatprep.subr.mxu0 0.0
      %3637 = vmatpush1.msra.mxu0 0.0
      %3638 = vmatprep.subr.mxu0 0.0
      %3639 = vmatpush1.msra.mxu0 0.0
      %3640 = vmatprep.subr.mxu0 0.0
      %3641 = vmatpush1.msra.mxu0 0.0
      %3642 = vmatprep.subr.mxu0 0.0
      %3643 = vmatpush1.msra.mxu0 0.0
      %3644 = vmatprep.subr.mxu0 0.0
      %3645 = vmatpush1.msra.mxu0 0.0
      %3646 = vmatprep.subr.mxu0 0.0
      %3647 = vmatpush1.msra.mxu0 0.0
      %3648 = vmatprep.subr.mxu0 0.0
      %3649 = vmatpush1.msra.mxu0 0.0
      %3650 = vmatprep.subr.mxu0 0.0
      %3651 = vmatpush1.msra.mxu0 0.0
      %3652 = vmatprep.subr.mxu0 0.0
      %3653 = vmatpush1.msra.mxu0 0.0
      %3654 = vmatprep.subr.mxu0 0.0
      %3655 = vmatpush1.msra.mxu0 0.0
      %3656 = vmatprep.subr.mxu0 0.0
      %3657 = vmatpush1.msra.mxu0 0.0
      %3658 = vmatprep.subr.mxu0 0.0
      %3659 = vmatpush1.msra.mxu0 0.0
      %3660 = vmatprep.subr.mxu0 0.0
      %3661 = vmatpush1.msra.mxu0 %v3630
      %3662 = vmatprep.subr.mxu0 0.0
      %3663 = vmatpush1.msra.mxu0 %v2811
      %3664 = vmatprep.subr.mxu0 0.0
      %3665 = vmatpush2.msra.mxu0 0.0
      %3666 = vmatprep.subr.mxu0 0.0
      %3667 = vmatpush2.msra.mxu0 0.0
      %3668 = vmatprep.subr.mxu0 0.0
      %3669 = vmatpush2.msra.mxu0 0.0
      %3670 = vmatprep.subr.mxu0 0.0
      %3671 = vmatpush2.msra.mxu0 0.0
      %3672 = vmatprep.subr.mxu0 0.0
      %3673 = vmatpush2.msra.mxu0 0.0
      %3674 = vmatprep.subr.mxu0 0.0
      %3675 = vmatpush2.msra.mxu0 0.0
      %3676 = vmatprep.subr.mxu0 0.0
      %3677 = vmatpush2.msra.mxu0 0.0
      %3678 = vmatprep.subr.mxu0 0.0
      %3679 = vmatpush2.msra.mxu0 0.0
      %3680 = vmatprep.subr.mxu0 0.0
      %3681 = vmatpush2.msra.mxu0 0.0
      %3682 = vmatprep.subr.mxu0 0.0
      %3683 = vmatpush2.msra.mxu0 0.0
      %3684 = vmatprep.subr.mxu0 0.0
      %3685 = vmatpush2.msra.mxu0 0.0
      %3686 = vmatprep.subr.mxu0 0.0
      %3687 = vmatpush2.msra.mxu0 0.0
      %3688 = vmatprep.subr.mxu0 0.0
      %3689 = vmatpush2.msra.mxu0 0.0
      %3690 = vmatprep.subr.mxu0 0.0
      %3691 = vmatpush2.msra.mxu0 0.0
      %3692 = vmatprep.subr.mxu0 0.0
      %3693 = vmatpush2.msra.mxu0 0.0
      %3694 = vmatprep.subr.mxu0 0.0
      %3695 = vmatpush2.msra.mxu0 0.0
      %3696 = vmatprep.mubr.f32.mxu0 0.0
      %3697 = vmatmul.mubr.f32.gmra.mxu0 %v3621
      %v3698 = vpop.f32.mrf.mxu0
      %v3699 = vadd.f32 0.0, %v3698
      %v3700 = vpop.f32.mrf.mxu0
      %3701 = vmatprep.mubr.f32.mxu0 0.0
      %3702 = vmatmul.mubr.f32.gmra.mxu0 %v3624
      %v3703 = vpop.f32.mrf.mxu0
      %v3704 = vadd.f32 0.0, %v3703
      %v3705 = vpop.f32.mrf.mxu0
      %3706 = vmatprep.mubr.f32.mxu0 0.0
      %3707 = vmatmul.mubr.f32.gmra.mxu0 %v3627
      %v3708 = vpop.f32.mrf.mxu0
      %v3709 = vadd.f32 0.0, %v3708
      %v3710 = vpop.f32.mrf.mxu0
      %3711 = vdwg.mxu0
      %3712 = vst.msk [vmem:[#allocation5 + $0x1b2] sm:$0xff] %vm408, %v3699
      %3713 = vst.msk [vmem:[#allocation5 + $0x1ba] sm:$0xff] %vm408, %v3704
      %3714 = vst.msk [vmem:[#allocation5 + $0x1c2] sm:$0xf] %vm431, %v3709
      %v3715 = vld [vmem:[%s11] sm:$0xff]
      %v3716 = vld [vmem:[%s11 + $0x8] sm:$0xff]
      %v3717 = vld [vmem:[%s11 + $0x10] sm:$0xf]
      %v3719 = vrot.slane %v2812, 4
      %v3720 = vrot.slane %v2813, 4
      %v3721 = vsel %vm2918, %v3719, %v3720
      %v3724 = vsel %vm2817, %v3715, 0
      %v3727 = vsel %vm2817, %v3716, 0
      %v3730 = vsel %vm2817, %v3717, 0
      %v3732 = vsel %vm2827, %v3720, 0
      %3734 = vmatprep.subr.mxu0 0.0
      %3735 = vmatpush1.msra.mxu0 0.0
      %3736 = vmatprep.subr.mxu0 0.0
      %3737 = vmatpush1.msra.mxu0 0.0
      %3738 = vmatprep.subr.mxu0 0.0
      %3739 = vmatpush1.msra.mxu0 0.0
      %3740 = vmatprep.subr.mxu0 0.0
      %3741 = vmatpush1.msra.mxu0 0.0
      %3742 = vmatprep.subr.mxu0 0.0
      %3743 = vmatpush1.msra.mxu0 0.0
      %3744 = vmatprep.subr.mxu0 0.0
      %3745 = vmatpush1.msra.mxu0 0.0
      %3746 = vmatprep.subr.mxu0 0.0
      %3747 = vmatpush1.msra.mxu0 0.0
      %3748 = vmatprep.subr.mxu0 0.0
      %3749 = vmatpush1.msra.mxu0 0.0
      %3750 = vmatprep.subr.mxu0 0.0
      %3751 = vmatpush1.msra.mxu0 0.0
      %3752 = vmatprep.subr.mxu0 0.0
      %3753 = vmatpush1.msra.mxu0 0.0
      %3754 = vmatprep.subr.mxu0 0.0
      %3755 = vmatpush1.msra.mxu0 0.0
      %3756 = vmatprep.subr.mxu0 0.0
      %3757 = vmatpush1.msra.mxu0 0.0
      %3758 = vmatprep.subr.mxu0 0.0
      %3759 = vmatpush1.msra.mxu0 0.0
      %3760 = vmatprep.subr.mxu0 0.0
      %3761 = vmatpush1.msra.mxu0 0.0
      %3762 = vmatprep.subr.mxu0 0.0
      %3763 = vmatpush1.msra.mxu0 %v3732
      %3764 = vmatprep.subr.mxu0 0.0
      %3765 = vmatpush1.msra.mxu0 %v3721
      %3766 = vmatprep.subr.mxu0 0.0
      %3767 = vmatpush2.msra.mxu0 0.0
      %3768 = vmatprep.subr.mxu0 0.0
      %3769 = vmatpush2.msra.mxu0 0.0
      %3770 = vmatprep.subr.mxu0 0.0
      %3771 = vmatpush2.msra.mxu0 0.0
      %3772 = vmatprep.subr.mxu0 0.0
      %3773 = vmatpush2.msra.mxu0 0.0
      %3774 = vmatprep.subr.mxu0 0.0
      %3775 = vmatpush2.msra.mxu0 0.0
      %3776 = vmatprep.subr.mxu0 0.0
      %3777 = vmatpush2.msra.mxu0 0.0
      %3778 = vmatprep.subr.mxu0 0.0
      %3779 = vmatpush2.msra.mxu0 0.0
      %3780 = vmatprep.subr.mxu0 0.0
      %3781 = vmatpush2.msra.mxu0 0.0
      %3782 = vmatprep.subr.mxu0 0.0
      %3783 = vmatpush2.msra.mxu0 0.0
      %3784 = vmatprep.subr.mxu0 0.0
      %3785 = vmatpush2.msra.mxu0 0.0
      %3786 = vmatprep.subr.mxu0 0.0
      %3787 = vmatpush2.msra.mxu0 0.0
      %3788 = vmatprep.subr.mxu0 0.0
      %3789 = vmatpush2.msra.mxu0 0.0
      %3790 = vmatprep.subr.mxu0 0.0
      %3791 = vmatpush2.msra.mxu0 0.0
      %3792 = vmatprep.subr.mxu0 0.0
      %3793 = vmatpush2.msra.mxu0 0.0
      %3794 = vmatprep.subr.mxu0 0.0
      %3795 = vmatpush2.msra.mxu0 0.0
      %3796 = vmatprep.subr.mxu0 0.0
      %3797 = vmatpush2.msra.mxu0 0.0
      %3798 = vmatprep.mubr.f32.mxu0 0.0
      %3799 = vmatmul.mubr.f32.gmra.mxu0 %v3724
      %v3800 = vpop.f32.mrf.mxu0
      %v3801 = vadd.f32 0.0, %v3800
      %v3802 = vpop.f32.mrf.mxu0
      %3803 = vmatprep.mubr.f32.mxu0 0.0
      %3804 = vmatmul.mubr.f32.gmra.mxu0 %v3727
      %v3805 = vpop.f32.mrf.mxu0
      %v3806 = vadd.f32 0.0, %v3805
      %v3807 = vpop.f32.mrf.mxu0
      %3808 = vmatprep.mubr.f32.mxu0 0.0
      %3809 = vmatmul.mubr.f32.gmra.mxu0 %v3730
      %v3810 = vpop.f32.mrf.mxu0
      %v3811 = vadd.f32 0.0, %v3810
      %v3812 = vpop.f32.mrf.mxu0
      %3813 = vdwg.mxu0
      %3814 = vst.msk [vmem:[#allocation5 + $0x1e2] sm:$0xff] %vm408, %v3801
      %3815 = vst.msk [vmem:[#allocation5 + $0x1ea] sm:$0xff] %vm408, %v3806
      %3816 = vst.msk [vmem:[#allocation5 + $0x1f2] sm:$0xf] %vm431, %v3811
      %v3817 = vld [vmem:[#allocation5] sm:$0xff]
      %v3818 = vld [vmem:[#allocation5 + $0x8] sm:$0xff]
      %v3819 = vld [vmem:[#allocation5 + $0x10] sm:$0xff]
      %v3820 = vld [vmem:[#allocation5 + $0x18] sm:$0xff]
      %v3821 = vld [vmem:[#allocation5 + $0x20] sm:$0xff]
      %v3822 = vld [vmem:[#allocation5 + $0x28] sm:$0xff]
      %v3823 = vld [vmem:[#allocation5 + $0x30] sm:$0xff]
      %v3824 = vld [vmem:[#allocation5 + $0x38] sm:$0xff]
      %v3825 = vld [vmem:[#allocation5 + $0x40] sm:$0xff]
      %v3826 = vld [vmem:[#allocation5 + $0x48] sm:$0xff]
      %v3827 = vld [vmem:[#allocation5 + $0x50] sm:$0xff]
      %v3828 = vld [vmem:[#allocation5 + $0x58] sm:$0xff]
      %v3829 = vld [vmem:[#allocation5 + $0x60] sm:$0xff]
      %v3830 = vld [vmem:[#allocation5 + $0x68] sm:$0xff]
      %v3831 = vld [vmem:[#allocation5 + $0x70] sm:$0xff]
      %v3832 = vld [vmem:[#allocation5 + $0x78] sm:$0xff]
      %v3833 = vld [vmem:[#allocation5 + $0x80] sm:$0xff]
      %v3834 = vld [vmem:[#allocation5 + $0x88] sm:$0xff]
      %v3835 = vld [vmem:[#allocation5 + $0x90] sm:$0xff]
      %v3836 = vld [vmem:[#allocation5 + $0x98] sm:$0xff]
      %v3837 = vld [vmem:[#allocation5 + $0xa0] sm:$0xff]
      %v3838 = vld [vmem:[#allocation5 + $0xa8] sm:$0xff]
      %v3839 = vld [vmem:[#allocation5 + $0xb0] sm:$0xff]
      %v3840 = vld [vmem:[#allocation5 + $0xb8] sm:$0xff]
      %v3841 = vld [vmem:[#allocation5 + $0xc0] sm:$0xff]
      %v3842 = vld [vmem:[#allocation5 + $0xc8] sm:$0xff]
      %v3843 = vld [vmem:[#allocation5 + $0xd0] sm:$0xff]
      %v3844 = vld [vmem:[#allocation5 + $0xd8] sm:$0xff]
      %v3845 = vld [vmem:[#allocation5 + $0xe0] sm:$0xff]
      %v3846 = vld [vmem:[#allocation5 + $0xe8] sm:$0xff]
      %v3847 = vld [vmem:[#allocation5 + $0xf0] sm:$0xff]
      %v3848 = vld [vmem:[#allocation5 + $0xf8] sm:$0xff]
      %v3849 = vld [vmem:[#allocation5 + $0x100] sm:$0xff]
      %v3850 = vld [vmem:[#allocation5 + $0x108] sm:$0xff]
      %v3851 = vld [vmem:[#allocation5 + $0x110] sm:$0xff]
      %v3852 = vld [vmem:[#allocation5 + $0x118] sm:$0xff]
      %v3853 = vld [vmem:[#allocation5 + $0x120] sm:$0xff]
      %v3854 = vld [vmem:[#allocation5 + $0x128] sm:$0xff]
      %v3855 = vld [vmem:[#allocation5 + $0x130] sm:$0xff]
      %v3856 = vld [vmem:[#allocation5 + $0x138] sm:$0xff]
      %v3857 = vld [vmem:[#allocation5 + $0x140] sm:$0xff]
      %v3858 = vld [vmem:[#allocation5 + $0x148] sm:$0xff]
      %v3859 = vld [vmem:[#allocation5 + $0x150] sm:$0xff]
      %v3860 = vld [vmem:[#allocation5 + $0x158] sm:$0xff]
      %v3861 = vld [vmem:[#allocation5 + $0x160] sm:$0xff]
      %v3862 = vld [vmem:[#allocation5 + $0x168] sm:$0xff]
      %v3863 = vld [vmem:[#allocation5 + $0x170] sm:$0xff]
      %v3864 = vld [vmem:[#allocation5 + $0x178] sm:$0xff]
      %v3865 = vld [vmem:[#allocation5 + $0x180] sm:$0xff]
      %v3866 = vld [vmem:[#allocation5 + $0x188] sm:$0xff]
      %v3867 = vld [vmem:[#allocation5 + $0x190] sm:$0xff]
      %v3868 = vld [vmem:[#allocation5 + $0x198] sm:$0xff]
      %v3869 = vld [vmem:[#allocation5 + $0x1a0] sm:$0xff]
      %v3870 = vld [vmem:[#allocation5 + $0x1a8] sm:$0xff]
      %v3871 = vld [vmem:[#allocation5 + $0x1b0] sm:$0xff]
      %v3872 = vld [vmem:[#allocation5 + $0x1b8] sm:$0xff]
      %v3873 = vld [vmem:[#allocation5 + $0x1c0] sm:$0xff]
      %v3874 = vld [vmem:[#allocation5 + $0x1c8] sm:$0xff]
      %v3875 = vld [vmem:[#allocation5 + $0x1d0] sm:$0xff]
      %v3876 = vld [vmem:[#allocation5 + $0x1d8] sm:$0xff]
      %v3877 = vld [vmem:[#allocation5 + $0x1e0] sm:$0xff]
      %v3878 = vld [vmem:[#allocation5 + $0x1e8] sm:$0xff]
      %v3879 = vld [vmem:[#allocation5 + $0x1f0] sm:$0xff]
      %v3880 = vld [vmem:[#allocation5 + $0x1f8] sm:$0xff]
      %v3881 = vld [vmem:[#allocation5 + $0x200] sm:$0xff]
      %v3882 = vld [vmem:[#allocation5 + $0x208] sm:$0xff]
      %v3883 = vld [vmem:[#allocation5 + $0x1] sm:$0xff]
      %v3884 = vld [vmem:[#allocation5 + $0x9] sm:$0xff]
      %v3885 = vld [vmem:[#allocation5 + $0x11] sm:$0xff]
      %v3886 = vld [vmem:[#allocation5 + $0x19] sm:$0xff]
      %v3887 = vld [vmem:[#allocation5 + $0x21] sm:$0xff]
      %v3888 = vld [vmem:[#allocation5 + $0x29] sm:$0xff]
      %v3889 = vld [vmem:[#allocation5 + $0x31] sm:$0xff]
      %v3890 = vld [vmem:[#allocation5 + $0x39] sm:$0xff]
      %v3891 = vld [vmem:[#allocation5 + $0x41] sm:$0xff]
      %v3892 = vld [vmem:[#allocation5 + $0x49] sm:$0xff]
      %v3893 = vld [vmem:[#allocation5 + $0x51] sm:$0xff]
      %v3894 = vld [vmem:[#allocation5 + $0x59] sm:$0xff]
      %v3895 = vld [vmem:[#allocation5 + $0x61] sm:$0xff]
      %v3896 = vld [vmem:[#allocation5 + $0x69] sm:$0xff]
      %v3897 = vld [vmem:[#allocation5 + $0x71] sm:$0xff]
      %v3898 = vld [vmem:[#allocation5 + $0x79] sm:$0xff]
      %v3899 = vld [vmem:[#allocation5 + $0x81] sm:$0xff]
      %v3900 = vld [vmem:[#allocation5 + $0x89] sm:$0xff]
      %v3901 = vld [vmem:[#allocation5 + $0x91] sm:$0xff]
      %v3902 = vld [vmem:[#allocation5 + $0x99] sm:$0xff]
      %v3903 = vld [vmem:[#allocation5 + $0xa1] sm:$0xff]
      %v3904 = vld [vmem:[#allocation5 + $0xa9] sm:$0xff]
      %v3905 = vld [vmem:[#allocation5 + $0xb1] sm:$0xff]
      %v3906 = vld [vmem:[#allocation5 + $0xb9] sm:$0xff]
      %v3907 = vld [vmem:[#allocation5 + $0xc1] sm:$0xff]
      %v3908 = vld [vmem:[#allocation5 + $0xc9] sm:$0xff]
      %v3909 = vld [vmem:[#allocation5 + $0xd1] sm:$0xff]
      %v3910 = vld [vmem:[#allocation5 + $0xd9] sm:$0xff]
      %v3911 = vld [vmem:[#allocation5 + $0xe1] sm:$0xff]
      %v3912 = vld [vmem:[#allocation5 + $0xe9] sm:$0xff]
      %v3913 = vld [vmem:[#allocation5 + $0xf1] sm:$0xff]
      %v3914 = vld [vmem:[#allocation5 + $0xf9] sm:$0xff]
      %v3915 = vld [vmem:[#allocation5 + $0x101] sm:$0xff]
      %v3916 = vld [vmem:[#allocation5 + $0x109] sm:$0xff]
      %v3917 = vld [vmem:[#allocation5 + $0x111] sm:$0xff]
      %v3918 = vld [vmem:[#allocation5 + $0x119] sm:$0xff]
      %v3919 = vld [vmem:[#allocation5 + $0x121] sm:$0xff]
      %v3920 = vld [vmem:[#allocation5 + $0x129] sm:$0xff]
      %v3921 = vld [vmem:[#allocation5 + $0x131] sm:$0xff]
      %v3922 = vld [vmem:[#allocation5 + $0x139] sm:$0xff]
      %v3923 = vld [vmem:[#allocation5 + $0x141] sm:$0xff]
      %v3924 = vld [vmem:[#allocation5 + $0x149] sm:$0xff]
      %v3925 = vld [vmem:[#allocation5 + $0x151] sm:$0xff]
      %v3926 = vld [vmem:[#allocation5 + $0x159] sm:$0xff]
      %v3927 = vld [vmem:[#allocation5 + $0x161] sm:$0xff]
      %v3928 = vld [vmem:[#allocation5 + $0x169] sm:$0xff]
      %v3929 = vld [vmem:[#allocation5 + $0x171] sm:$0xff]
      %v3930 = vld [vmem:[#allocation5 + $0x179] sm:$0xff]
      %v3931 = vld [vmem:[#allocation5 + $0x181] sm:$0xff]
      %v3932 = vld [vmem:[#allocation5 + $0x189] sm:$0xff]
      %v3933 = vld [vmem:[#allocation5 + $0x191] sm:$0xff]
      %v3934 = vld [vmem:[#allocation5 + $0x199] sm:$0xff]
      %v3935 = vld [vmem:[#allocation5 + $0x1a1] sm:$0xff]
      %v3936 = vld [vmem:[#allocation5 + $0x1a9] sm:$0xff]
      %v3937 = vld [vmem:[#allocation5 + $0x1b1] sm:$0xff]
      %v3938 = vld [vmem:[#allocation5 + $0x1b9] sm:$0xff]
      %v3939 = vld [vmem:[#allocation5 + $0x1c1] sm:$0xff]
      %v3940 = vld [vmem:[#allocation5 + $0x1c9] sm:$0xff]
      %v3941 = vld [vmem:[#allocation5 + $0x1d1] sm:$0xff]
      %v3942 = vld [vmem:[#allocation5 + $0x1d9] sm:$0xff]
      %v3943 = vld [vmem:[#allocation5 + $0x1e1] sm:$0xff]
      %v3944 = vld [vmem:[#allocation5 + $0x1e9] sm:$0xff]
      %v3945 = vld [vmem:[#allocation5 + $0x1f1] sm:$0xff]
      %v3946 = vld [vmem:[#allocation5 + $0x1f9] sm:$0xff]
      %v3947 = vld [vmem:[#allocation5 + $0x201] sm:$0xff]
      %v3948 = vld [vmem:[#allocation5 + $0x209] sm:$0xff]
      %v3949 = vld [vmem:[#allocation5 + $0x2] sm:$0xff]
      %v3950 = vld [vmem:[#allocation5 + $0xa] sm:$0xff]
      %v3951 = vld [vmem:[#allocation5 + $0x12] sm:$0xff]
      %v3952 = vld [vmem:[#allocation5 + $0x1a] sm:$0xff]
      %v3953 = vld [vmem:[#allocation5 + $0x22] sm:$0xff]
      %v3954 = vld [vmem:[#allocation5 + $0x2a] sm:$0xff]
      %v3955 = vld [vmem:[#allocation5 + $0x32] sm:$0xff]
      %v3956 = vld [vmem:[#allocation5 + $0x3a] sm:$0xff]
      %v3957 = vld [vmem:[#allocation5 + $0x42] sm:$0xff]
      %v3958 = vld [vmem:[#allocation5 + $0x4a] sm:$0xff]
      %v3959 = vld [vmem:[#allocation5 + $0x52] sm:$0xff]
      %v3960 = vld [vmem:[#allocation5 + $0x5a] sm:$0xff]
      %v3961 = vld [vmem:[#allocation5 + $0x62] sm:$0xff]
      %v3962 = vld [vmem:[#allocation5 + $0x6a] sm:$0xff]
      %v3963 = vld [vmem:[#allocation5 + $0x72] sm:$0xff]
      %v3964 = vld [vmem:[#allocation5 + $0x7a] sm:$0xff]
      %v3965 = vld [vmem:[#allocation5 + $0x82] sm:$0xff]
      %v3966 = vld [vmem:[#allocation5 + $0x8a] sm:$0xff]
      %v3967 = vld [vmem:[#allocation5 + $0x92] sm:$0xff]
      %v3968 = vld [vmem:[#allocation5 + $0x9a] sm:$0xff]
      %v3969 = vld [vmem:[#allocation5 + $0xa2] sm:$0xff]
      %v3970 = vld [vmem:[#allocation5 + $0xaa] sm:$0xff]
      %v3971 = vld [vmem:[#allocation5 + $0xb2] sm:$0xff]
      %v3972 = vld [vmem:[#allocation5 + $0xba] sm:$0xff]
      %v3973 = vld [vmem:[#allocation5 + $0xc2] sm:$0xff]
      %v3974 = vld [vmem:[#allocation5 + $0xca] sm:$0xff]
      %v3975 = vld [vmem:[#allocation5 + $0xd2] sm:$0xff]
      %v3976 = vld [vmem:[#allocation5 + $0xda] sm:$0xff]
      %v3977 = vld [vmem:[#allocation5 + $0xe2] sm:$0xff]
      %v3978 = vld [vmem:[#allocation5 + $0xea] sm:$0xff]
      %v3979 = vld [vmem:[#allocation5 + $0xf2] sm:$0xff]
      %v3980 = vld [vmem:[#allocation5 + $0xfa] sm:$0xff]
      %v3981 = vld [vmem:[#allocation5 + $0x102] sm:$0xff]
      %v3982 = vld [vmem:[#allocation5 + $0x10a] sm:$0xff]
      %v3983 = vld [vmem:[#allocation5 + $0x112] sm:$0xff]
      %v3984 = vld [vmem:[#allocation5 + $0x11a] sm:$0xff]
      %v3985 = vld [vmem:[#allocation5 + $0x122] sm:$0xff]
      %v3986 = vld [vmem:[#allocation5 + $0x12a] sm:$0xff]
      %v3987 = vld [vmem:[#allocation5 + $0x132] sm:$0xff]
      %v3988 = vld [vmem:[#allocation5 + $0x13a] sm:$0xff]
      %v3989 = vld [vmem:[#allocation5 + $0x142] sm:$0xff]
      %v3990 = vld [vmem:[#allocation5 + $0x14a] sm:$0xff]
      %v3991 = vld [vmem:[#allocation5 + $0x152] sm:$0xff]
      %v3992 = vld [vmem:[#allocation5 + $0x15a] sm:$0xff]
      %v3993 = vld [vmem:[#allocation5 + $0x162] sm:$0xff]
      %v3994 = vld [vmem:[#allocation5 + $0x16a] sm:$0xff]
      %v3995 = vld [vmem:[#allocation5 + $0x172] sm:$0xff]
      %v3996 = vld [vmem:[#allocation5 + $0x17a] sm:$0xff]
      %v3997 = vld [vmem:[#allocation5 + $0x182] sm:$0xff]
      %v3998 = vld [vmem:[#allocation5 + $0x18a] sm:$0xff]
      %v3999 = vld [vmem:[#allocation5 + $0x192] sm:$0xff]
      %v4000 = vld [vmem:[#allocation5 + $0x19a] sm:$0xff]
      %v4001 = vld [vmem:[#allocation5 + $0x1a2] sm:$0xff]
      %v4002 = vld [vmem:[#allocation5 + $0x1aa] sm:$0xff]
      %v4003 = vld [vmem:[#allocation5 + $0x1b2] sm:$0xff]
      %v4004 = vld [vmem:[#allocation5 + $0x1ba] sm:$0xff]
      %v4005 = vld [vmem:[#allocation5 + $0x1c2] sm:$0xff]
      %v4006 = vld [vmem:[#allocation5 + $0x1ca] sm:$0xff]
      %v4007 = vld [vmem:[#allocation5 + $0x1d2] sm:$0xff]
      %v4008 = vld [vmem:[#allocation5 + $0x1da] sm:$0xff]
      %v4009 = vld [vmem:[#allocation5 + $0x1e2] sm:$0xff]
      %v4010 = vld [vmem:[#allocation5 + $0x1ea] sm:$0xff]
      %v4011 = vld [vmem:[#allocation5 + $0x1f2] sm:$0xff]
      %v4012 = vld [vmem:[#allocation5 + $0x1fa] sm:$0xff]
      %v4013 = vld [vmem:[#allocation5 + $0x202] sm:$0xff]
      %v4014 = vld [vmem:[#allocation5 + $0x20a] sm:$0xff]
      %v4015 = vld [vmem:[#allocation5 + $0x210] sm:$0xff]
      %v4016 = vld [vmem:[#allocation5 + $0x218] sm:$0xff]
      %v4017 = vld [vmem:[#allocation5 + $0x220] sm:$0xff]
      %v4018 = vld [vmem:[#allocation5 + $0x211] sm:$0xff]
      %v4019 = vld [vmem:[#allocation5 + $0x219] sm:$0xff]
      %v4020 = vld [vmem:[#allocation5 + $0x221] sm:$0xff]
      %v4021 = vld [vmem:[#allocation5 + $0x212] sm:$0xff]
      %v4022 = vld [vmem:[#allocation5 + $0x21a] sm:$0xff]
      %v4023 = vld [vmem:[#allocation5 + $0x222] sm:$0xff]
      %v4024 = vld [vmem:[#allocation5 + $0x228] sm:$0xff]
      %v4025 = vld [vmem:[#allocation5 + $0x230] sm:$0xff]
      %v4026 = vld [vmem:[#allocation5 + $0x238] sm:$0xff]
      %v4027 = vld [vmem:[#allocation5 + $0x229] sm:$0xff]
      %v4028 = vld [vmem:[#allocation5 + $0x231] sm:$0xff]
      %v4029 = vld [vmem:[#allocation5 + $0x239] sm:$0xff]
      %v4030 = vld [vmem:[#allocation5 + $0x22a] sm:$0xff]
      %v4031 = vld [vmem:[#allocation5 + $0x232] sm:$0xff]
      %v4032 = vld [vmem:[#allocation5 + $0x23a] sm:$0xff]
      %4099 = vrot.lane.b32.xlu0 %v3883, 32
      %v4100 = vpop.permute.xlu0 %4099
      %4101 = vrot.lane.b32.xlu0 %v3884, 32
      %v4102 = vpop.permute.xlu0 %4101
      %4103 = vrot.lane.b32.xlu0 %v3885, 32
      %v4104 = vpop.permute.xlu0 %4103
      %4105 = vrot.lane.b32.xlu0 %v3886, 32
      %v4106 = vpop.permute.xlu0 %4105
      %4107 = vrot.lane.b32.xlu0 %v3887, 32
      %v4108 = vpop.permute.xlu0 %4107
      %4109 = vrot.lane.b32.xlu0 %v3888, 32
      %v4110 = vpop.permute.xlu0 %4109
      %4111 = vrot.lane.b32.xlu0 %v3889, 32
      %v4112 = vpop.permute.xlu0 %4111
      %4113 = vrot.lane.b32.xlu0 %v3890, 32
      %v4114 = vpop.permute.xlu0 %4113
      %4115 = vrot.lane.b32.xlu0 %v3891, 32
      %v4116 = vpop.permute.xlu0 %4115
      %4117 = vrot.lane.b32.xlu0 %v3892, 32
      %v4118 = vpop.permute.xlu0 %4117
      %4119 = vrot.lane.b32.xlu0 %v3893, 32
      %v4120 = vpop.permute.xlu0 %4119
      %4121 = vrot.lane.b32.xlu0 %v3894, 32
      %v4122 = vpop.permute.xlu0 %4121
      %4123 = vrot.lane.b32.xlu0 %v3895, 32
      %v4124 = vpop.permute.xlu0 %4123
      %4125 = vrot.lane.b32.xlu0 %v3896, 32
      %v4126 = vpop.permute.xlu0 %4125
      %4127 = vrot.lane.b32.xlu0 %v3897, 32
      %v4128 = vpop.permute.xlu0 %4127
      %4129 = vrot.lane.b32.xlu0 %v3898, 32
      %v4130 = vpop.permute.xlu0 %4129
      %4131 = vrot.lane.b32.xlu0 %v3899, 32
      %v4132 = vpop.permute.xlu0 %4131
      %4133 = vrot.lane.b32.xlu0 %v3900, 32
      %v4134 = vpop.permute.xlu0 %4133
      %4135 = vrot.lane.b32.xlu0 %v3901, 32
      %v4136 = vpop.permute.xlu0 %4135
      %4137 = vrot.lane.b32.xlu0 %v3902, 32
      %v4138 = vpop.permute.xlu0 %4137
      %4139 = vrot.lane.b32.xlu0 %v3903, 32
      %v4140 = vpop.permute.xlu0 %4139
      %4141 = vrot.lane.b32.xlu0 %v3904, 32
      %v4142 = vpop.permute.xlu0 %4141
      %4143 = vrot.lane.b32.xlu0 %v3905, 32
      %v4144 = vpop.permute.xlu0 %4143
      %4145 = vrot.lane.b32.xlu0 %v3906, 32
      %v4146 = vpop.permute.xlu0 %4145
      %4147 = vrot.lane.b32.xlu0 %v3907, 32
      %v4148 = vpop.permute.xlu0 %4147
      %4149 = vrot.lane.b32.xlu0 %v3908, 32
      %v4150 = vpop.permute.xlu0 %4149
      %4151 = vrot.lane.b32.xlu0 %v3909, 32
      %v4152 = vpop.permute.xlu0 %4151
      %4153 = vrot.lane.b32.xlu0 %v3910, 32
      %v4154 = vpop.permute.xlu0 %4153
      %4155 = vrot.lane.b32.xlu0 %v3911, 32
      %v4156 = vpop.permute.xlu0 %4155
      %4157 = vrot.lane.b32.xlu0 %v3912, 32
      %v4158 = vpop.permute.xlu0 %4157
      %4159 = vrot.lane.b32.xlu0 %v3913, 32
      %v4160 = vpop.permute.xlu0 %4159
      %4161 = vrot.lane.b32.xlu0 %v3914, 32
      %v4162 = vpop.permute.xlu0 %4161
      %4163 = vrot.lane.b32.xlu0 %v3915, 32
      %v4164 = vpop.permute.xlu0 %4163
      %4165 = vrot.lane.b32.xlu0 %v3916, 32
      %v4166 = vpop.permute.xlu0 %4165
      %4167 = vrot.lane.b32.xlu0 %v3917, 32
      %v4168 = vpop.permute.xlu0 %4167
      %4169 = vrot.lane.b32.xlu0 %v3918, 32
      %v4170 = vpop.permute.xlu0 %4169
      %4171 = vrot.lane.b32.xlu0 %v3919, 32
      %v4172 = vpop.permute.xlu0 %4171
      %4173 = vrot.lane.b32.xlu0 %v3920, 32
      %v4174 = vpop.permute.xlu0 %4173
      %4175 = vrot.lane.b32.xlu0 %v3921, 32
      %v4176 = vpop.permute.xlu0 %4175
      %4177 = vrot.lane.b32.xlu0 %v3922, 32
      %v4178 = vpop.permute.xlu0 %4177
      %4179 = vrot.lane.b32.xlu0 %v3923, 32
      %v4180 = vpop.permute.xlu0 %4179
      %4181 = vrot.lane.b32.xlu0 %v3924, 32
      %v4182 = vpop.permute.xlu0 %4181
      %4183 = vrot.lane.b32.xlu0 %v3925, 32
      %v4184 = vpop.permute.xlu0 %4183
      %4185 = vrot.lane.b32.xlu0 %v3926, 32
      %v4186 = vpop.permute.xlu0 %4185
      %4187 = vrot.lane.b32.xlu0 %v3927, 32
      %v4188 = vpop.permute.xlu0 %4187
      %4189 = vrot.lane.b32.xlu0 %v3928, 32
      %v4190 = vpop.permute.xlu0 %4189
      %4191 = vrot.lane.b32.xlu0 %v3929, 32
      %v4192 = vpop.permute.xlu0 %4191
      %4193 = vrot.lane.b32.xlu0 %v3930, 32
      %v4194 = vpop.permute.xlu0 %4193
      %4195 = vrot.lane.b32.xlu0 %v3931, 32
      %v4196 = vpop.permute.xlu0 %4195
      %4197 = vrot.lane.b32.xlu0 %v3932, 32
      %v4198 = vpop.permute.xlu0 %4197
      %4199 = vrot.lane.b32.xlu0 %v3933, 32
      %v4200 = vpop.permute.xlu0 %4199
      %4201 = vrot.lane.b32.xlu0 %v3934, 32
      %v4202 = vpop.permute.xlu0 %4201
      %4203 = vrot.lane.b32.xlu0 %v3935, 32
      %v4204 = vpop.permute.xlu0 %4203
      %4205 = vrot.lane.b32.xlu0 %v3936, 32
      %v4206 = vpop.permute.xlu0 %4205
      %4207 = vrot.lane.b32.xlu0 %v3937, 32
      %v4208 = vpop.permute.xlu0 %4207
      %4209 = vrot.lane.b32.xlu0 %v3938, 32
      %v4210 = vpop.permute.xlu0 %4209
      %4211 = vrot.lane.b32.xlu0 %v3939, 32
      %v4212 = vpop.permute.xlu0 %4211
      %4213 = vrot.lane.b32.xlu0 %v3940, 32
      %v4214 = vpop.permute.xlu0 %4213
      %4215 = vrot.lane.b32.xlu0 %v3941, 32
      %v4216 = vpop.permute.xlu0 %4215
      %4217 = vrot.lane.b32.xlu0 %v3942, 32
      %v4218 = vpop.permute.xlu0 %4217
      %4219 = vrot.lane.b32.xlu0 %v3943, 32
      %v4220 = vpop.permute.xlu0 %4219
      %4221 = vrot.lane.b32.xlu0 %v3944, 32
      %v4222 = vpop.permute.xlu0 %4221
      %4223 = vrot.lane.b32.xlu0 %v3945, 32
      %v4224 = vpop.permute.xlu0 %4223
      %4225 = vrot.lane.b32.xlu0 %v3946, 32
      %v4226 = vpop.permute.xlu0 %4225
      %4227 = vrot.lane.b32.xlu0 %v3947, 32
      %v4228 = vpop.permute.xlu0 %4227
      %4229 = vrot.lane.b32.xlu0 %v3948, 32
      %v4230 = vpop.permute.xlu0 %4229
      %4363 = vrot.lane.b32.xlu0 %v3949, 64
      %v4364 = vpop.permute.xlu0 %4363
      %4365 = vrot.lane.b32.xlu0 %v3950, 64
      %v4366 = vpop.permute.xlu0 %4365
      %4367 = vrot.lane.b32.xlu0 %v3951, 64
      %v4368 = vpop.permute.xlu0 %4367
      %4369 = vrot.lane.b32.xlu0 %v3952, 64
      %v4370 = vpop.permute.xlu0 %4369
      %4371 = vrot.lane.b32.xlu0 %v3953, 64
      %v4372 = vpop.permute.xlu0 %4371
      %4373 = vrot.lane.b32.xlu0 %v3954, 64
      %v4374 = vpop.permute.xlu0 %4373
      %4375 = vrot.lane.b32.xlu0 %v3955, 64
      %v4376 = vpop.permute.xlu0 %4375
      %4377 = vrot.lane.b32.xlu0 %v3956, 64
      %v4378 = vpop.permute.xlu0 %4377
      %4379 = vrot.lane.b32.xlu0 %v3957, 64
      %v4380 = vpop.permute.xlu0 %4379
      %4381 = vrot.lane.b32.xlu0 %v3958, 64
      %v4382 = vpop.permute.xlu0 %4381
      %4383 = vrot.lane.b32.xlu0 %v3959, 64
      %v4384 = vpop.permute.xlu0 %4383
      %4385 = vrot.lane.b32.xlu0 %v3960, 64
      %v4386 = vpop.permute.xlu0 %4385
      %4387 = vrot.lane.b32.xlu0 %v3961, 64
      %v4388 = vpop.permute.xlu0 %4387
      %4389 = vrot.lane.b32.xlu0 %v3962, 64
      %v4390 = vpop.permute.xlu0 %4389
      %4391 = vrot.lane.b32.xlu0 %v3963, 64
      %v4392 = vpop.permute.xlu0 %4391
      %4393 = vrot.lane.b32.xlu0 %v3964, 64
      %v4394 = vpop.permute.xlu0 %4393
      %4395 = vrot.lane.b32.xlu0 %v3965, 64
      %v4396 = vpop.permute.xlu0 %4395
      %4397 = vrot.lane.b32.xlu0 %v3966, 64
      %v4398 = vpop.permute.xlu0 %4397
      %4399 = vrot.lane.b32.xlu0 %v3967, 64
      %v4400 = vpop.permute.xlu0 %4399
      %4401 = vrot.lane.b32.xlu0 %v3968, 64
      %v4402 = vpop.permute.xlu0 %4401
      %4403 = vrot.lane.b32.xlu0 %v3969, 64
      %v4404 = vpop.permute.xlu0 %4403
      %4405 = vrot.lane.b32.xlu0 %v3970, 64
      %v4406 = vpop.permute.xlu0 %4405
      %4407 = vrot.lane.b32.xlu0 %v3971, 64
      %v4408 = vpop.permute.xlu0 %4407
      %4409 = vrot.lane.b32.xlu0 %v3972, 64
      %v4410 = vpop.permute.xlu0 %4409
      %4411 = vrot.lane.b32.xlu0 %v3973, 64
      %v4412 = vpop.permute.xlu0 %4411
      %4413 = vrot.lane.b32.xlu0 %v3974, 64
      %v4414 = vpop.permute.xlu0 %4413
      %4415 = vrot.lane.b32.xlu0 %v3975, 64
      %v4416 = vpop.permute.xlu0 %4415
      %4417 = vrot.lane.b32.xlu0 %v3976, 64
      %v4418 = vpop.permute.xlu0 %4417
      %4419 = vrot.lane.b32.xlu0 %v3977, 64
      %v4420 = vpop.permute.xlu0 %4419
      %4421 = vrot.lane.b32.xlu0 %v3978, 64
      %v4422 = vpop.permute.xlu0 %4421
      %4423 = vrot.lane.b32.xlu0 %v3979, 64
      %v4424 = vpop.permute.xlu0 %4423
      %4425 = vrot.lane.b32.xlu0 %v3980, 64
      %v4426 = vpop.permute.xlu0 %4425
      %4427 = vrot.lane.b32.xlu0 %v3981, 64
      %v4428 = vpop.permute.xlu0 %4427
      %4429 = vrot.lane.b32.xlu0 %v3982, 64
      %v4430 = vpop.permute.xlu0 %4429
      %4431 = vrot.lane.b32.xlu0 %v3983, 64
      %v4432 = vpop.permute.xlu0 %4431
      %4433 = vrot.lane.b32.xlu0 %v3984, 64
      %v4434 = vpop.permute.xlu0 %4433
      %4435 = vrot.lane.b32.xlu0 %v3985, 64
      %v4436 = vpop.permute.xlu0 %4435
      %4437 = vrot.lane.b32.xlu0 %v3986, 64
      %v4438 = vpop.permute.xlu0 %4437
      %4439 = vrot.lane.b32.xlu0 %v3987, 64
      %v4440 = vpop.permute.xlu0 %4439
      %4441 = vrot.lane.b32.xlu0 %v3988, 64
      %v4442 = vpop.permute.xlu0 %4441
      %4443 = vrot.lane.b32.xlu0 %v3989, 64
      %v4444 = vpop.permute.xlu0 %4443
      %4445 = vrot.lane.b32.xlu0 %v3990, 64
      %v4446 = vpop.permute.xlu0 %4445
      %4447 = vrot.lane.b32.xlu0 %v3991, 64
      %v4448 = vpop.permute.xlu0 %4447
      %4449 = vrot.lane.b32.xlu0 %v3992, 64
      %v4450 = vpop.permute.xlu0 %4449
      %4451 = vrot.lane.b32.xlu0 %v3993, 64
      %v4452 = vpop.permute.xlu0 %4451
      %4453 = vrot.lane.b32.xlu0 %v3994, 64
      %v4454 = vpop.permute.xlu0 %4453
      %4455 = vrot.lane.b32.xlu0 %v3995, 64
      %v4456 = vpop.permute.xlu0 %4455
      %4457 = vrot.lane.b32.xlu0 %v3996, 64
      %v4458 = vpop.permute.xlu0 %4457
      %4459 = vrot.lane.b32.xlu0 %v3997, 64
      %v4460 = vpop.permute.xlu0 %4459
      %4461 = vrot.lane.b32.xlu0 %v3998, 64
      %v4462 = vpop.permute.xlu0 %4461
      %4463 = vrot.lane.b32.xlu0 %v3999, 64
      %v4464 = vpop.permute.xlu0 %4463
      %4465 = vrot.lane.b32.xlu0 %v4000, 64
      %v4466 = vpop.permute.xlu0 %4465
      %4467 = vrot.lane.b32.xlu0 %v4001, 64
      %v4468 = vpop.permute.xlu0 %4467
      %4469 = vrot.lane.b32.xlu0 %v4002, 64
      %v4470 = vpop.permute.xlu0 %4469
      %4471 = vrot.lane.b32.xlu0 %v4003, 64
      %v4472 = vpop.permute.xlu0 %4471
      %4473 = vrot.lane.b32.xlu0 %v4004, 64
      %v4474 = vpop.permute.xlu0 %4473
      %4475 = vrot.lane.b32.xlu0 %v4005, 64
      %v4476 = vpop.permute.xlu0 %4475
      %4477 = vrot.lane.b32.xlu0 %v4006, 64
      %v4478 = vpop.permute.xlu0 %4477
      %4479 = vrot.lane.b32.xlu0 %v4007, 64
      %v4480 = vpop.permute.xlu0 %4479
      %4481 = vrot.lane.b32.xlu0 %v4008, 64
      %v4482 = vpop.permute.xlu0 %4481
      %4483 = vrot.lane.b32.xlu0 %v4009, 64
      %v4484 = vpop.permute.xlu0 %4483
      %4485 = vrot.lane.b32.xlu0 %v4010, 64
      %v4486 = vpop.permute.xlu0 %4485
      %4487 = vrot.lane.b32.xlu0 %v4011, 64
      %v4488 = vpop.permute.xlu0 %4487
      %4489 = vrot.lane.b32.xlu0 %v4012, 64
      %v4490 = vpop.permute.xlu0 %4489
      %4491 = vrot.lane.b32.xlu0 %v4013, 64
      %v4492 = vpop.permute.xlu0 %4491
      %4493 = vrot.lane.b32.xlu0 %v4014, 64
      %v4494 = vpop.permute.xlu0 %4493
      %4627 = vrot.lane.b32.xlu0 %v3820, 96
      %v4628 = vpop.permute.xlu0 %4627
      %4629 = vrot.lane.b32.xlu0 %v3821, 96
      %v4630 = vpop.permute.xlu0 %4629
      %4631 = vrot.lane.b32.xlu0 %v3822, 96
      %v4632 = vpop.permute.xlu0 %4631
      %4633 = vrot.lane.b32.xlu0 %v3823, 96
      %v4634 = vpop.permute.xlu0 %4633
      %4635 = vrot.lane.b32.xlu0 %v3824, 96
      %v4636 = vpop.permute.xlu0 %4635
      %4637 = vrot.lane.b32.xlu0 %v3825, 96
      %v4638 = vpop.permute.xlu0 %4637
      %4639 = vrot.lane.b32.xlu0 %v3826, 96
      %v4640 = vpop.permute.xlu0 %4639
      %4641 = vrot.lane.b32.xlu0 %v3827, 96
      %v4642 = vpop.permute.xlu0 %4641
      %4643 = vrot.lane.b32.xlu0 %v3828, 96
      %v4644 = vpop.permute.xlu0 %4643
      %4645 = vrot.lane.b32.xlu0 %v3829, 96
      %v4646 = vpop.permute.xlu0 %4645
      %4647 = vrot.lane.b32.xlu0 %v3830, 96
      %v4648 = vpop.permute.xlu0 %4647
      %4649 = vrot.lane.b32.xlu0 %v3831, 96
      %v4650 = vpop.permute.xlu0 %4649
      %4651 = vrot.lane.b32.xlu0 %v3832, 96
      %v4652 = vpop.permute.xlu0 %4651
      %4653 = vrot.lane.b32.xlu0 %v3833, 96
      %v4654 = vpop.permute.xlu0 %4653
      %4655 = vrot.lane.b32.xlu0 %v3834, 96
      %v4656 = vpop.permute.xlu0 %4655
      %4657 = vrot.lane.b32.xlu0 %v3835, 96
      %v4658 = vpop.permute.xlu0 %4657
      %4659 = vrot.lane.b32.xlu0 %v3836, 96
      %v4660 = vpop.permute.xlu0 %4659
      %4661 = vrot.lane.b32.xlu0 %v3837, 96
      %v4662 = vpop.permute.xlu0 %4661
      %4663 = vrot.lane.b32.xlu0 %v3838, 96
      %v4664 = vpop.permute.xlu0 %4663
      %4665 = vrot.lane.b32.xlu0 %v3839, 96
      %v4666 = vpop.permute.xlu0 %4665
      %4667 = vrot.lane.b32.xlu0 %v3840, 96
      %v4668 = vpop.permute.xlu0 %4667
      %4669 = vrot.lane.b32.xlu0 %v3841, 96
      %v4670 = vpop.permute.xlu0 %4669
      %4671 = vrot.lane.b32.xlu0 %v3842, 96
      %v4672 = vpop.permute.xlu0 %4671
      %4673 = vrot.lane.b32.xlu0 %v3843, 96
      %v4674 = vpop.permute.xlu0 %4673
      %4675 = vrot.lane.b32.xlu0 %v3844, 96
      %v4676 = vpop.permute.xlu0 %4675
      %4677 = vrot.lane.b32.xlu0 %v3845, 96
      %v4678 = vpop.permute.xlu0 %4677
      %4679 = vrot.lane.b32.xlu0 %v3846, 96
      %v4680 = vpop.permute.xlu0 %4679
      %4681 = vrot.lane.b32.xlu0 %v3847, 96
      %v4682 = vpop.permute.xlu0 %4681
      %4683 = vrot.lane.b32.xlu0 %v3848, 96
      %v4684 = vpop.permute.xlu0 %4683
      %4685 = vrot.lane.b32.xlu0 %v3849, 96
      %v4686 = vpop.permute.xlu0 %4685
      %4687 = vrot.lane.b32.xlu0 %v3850, 96
      %v4688 = vpop.permute.xlu0 %4687
      %4689 = vrot.lane.b32.xlu0 %v3851, 96
      %v4690 = vpop.permute.xlu0 %4689
      %4691 = vrot.lane.b32.xlu0 %v3852, 96
      %v4692 = vpop.permute.xlu0 %4691
      %4693 = vrot.lane.b32.xlu0 %v3853, 96
      %v4694 = vpop.permute.xlu0 %4693
      %4695 = vrot.lane.b32.xlu0 %v3854, 96
      %v4696 = vpop.permute.xlu0 %4695
      %4697 = vrot.lane.b32.xlu0 %v3855, 96
      %v4698 = vpop.permute.xlu0 %4697
      %4699 = vrot.lane.b32.xlu0 %v3856, 96
      %v4700 = vpop.permute.xlu0 %4699
      %4701 = vrot.lane.b32.xlu0 %v3857, 96
      %v4702 = vpop.permute.xlu0 %4701
      %4703 = vrot.lane.b32.xlu0 %v3858, 96
      %v4704 = vpop.permute.xlu0 %4703
      %4705 = vrot.lane.b32.xlu0 %v3859, 96
      %v4706 = vpop.permute.xlu0 %4705
      %4707 = vrot.lane.b32.xlu0 %v3860, 96
      %v4708 = vpop.permute.xlu0 %4707
      %4709 = vrot.lane.b32.xlu0 %v3861, 96
      %v4710 = vpop.permute.xlu0 %4709
      %4711 = vrot.lane.b32.xlu0 %v3862, 96
      %v4712 = vpop.permute.xlu0 %4711
      %4713 = vrot.lane.b32.xlu0 %v3863, 96
      %v4714 = vpop.permute.xlu0 %4713
      %4715 = vrot.lane.b32.xlu0 %v3864, 96
      %v4716 = vpop.permute.xlu0 %4715
      %4717 = vrot.lane.b32.xlu0 %v3865, 96
      %v4718 = vpop.permute.xlu0 %4717
      %4719 = vrot.lane.b32.xlu0 %v3866, 96
      %v4720 = vpop.permute.xlu0 %4719
      %4721 = vrot.lane.b32.xlu0 %v3867, 96
      %v4722 = vpop.permute.xlu0 %4721
      %4723 = vrot.lane.b32.xlu0 %v3868, 96
      %v4724 = vpop.permute.xlu0 %4723
      %4725 = vrot.lane.b32.xlu0 %v3869, 96
      %v4726 = vpop.permute.xlu0 %4725
      %4727 = vrot.lane.b32.xlu0 %v3870, 96
      %v4728 = vpop.permute.xlu0 %4727
      %4729 = vrot.lane.b32.xlu0 %v3871, 96
      %v4730 = vpop.permute.xlu0 %4729
      %4731 = vrot.lane.b32.xlu0 %v3872, 96
      %v4732 = vpop.permute.xlu0 %4731
      %4733 = vrot.lane.b32.xlu0 %v3873, 96
      %v4734 = vpop.permute.xlu0 %4733
      %4735 = vrot.lane.b32.xlu0 %v3874, 96
      %v4736 = vpop.permute.xlu0 %4735
      %4737 = vrot.lane.b32.xlu0 %v3875, 96
      %v4738 = vpop.permute.xlu0 %4737
      %4739 = vrot.lane.b32.xlu0 %v3876, 96
      %v4740 = vpop.permute.xlu0 %4739
      %4741 = vrot.lane.b32.xlu0 %v3877, 96
      %v4742 = vpop.permute.xlu0 %4741
      %4743 = vrot.lane.b32.xlu0 %v3878, 96
      %v4744 = vpop.permute.xlu0 %4743
      %4745 = vrot.lane.b32.xlu0 %v3879, 96
      %v4746 = vpop.permute.xlu0 %4745
      %4747 = vrot.lane.b32.xlu0 %v3880, 96
      %v4748 = vpop.permute.xlu0 %4747
      %4749 = vrot.lane.b32.xlu0 %v3881, 96
      %v4750 = vpop.permute.xlu0 %4749
      %4751 = vrot.lane.b32.xlu0 %v3882, 96
      %v4752 = vpop.permute.xlu0 %4751
      %4753 = vrot.lane.b32.xlu0 %v4015, 96
      %v4754 = vpop.permute.xlu0 %4753
      %4755 = vrot.lane.b32.xlu0 %v4016, 96
      %v4756 = vpop.permute.xlu0 %4755
      %4757 = vrot.lane.b32.xlu0 %v4017, 96
      %v4758 = vpop.permute.xlu0 %4757
      %4828 = vrot.lane.b32.xlu0 %v3952, 32
      %v4829 = vpop.permute.xlu0 %4828
      %4830 = vrot.lane.b32.xlu0 %v3953, 32
      %v4831 = vpop.permute.xlu0 %4830
      %4832 = vrot.lane.b32.xlu0 %v3954, 32
      %v4833 = vpop.permute.xlu0 %4832
      %4834 = vrot.lane.b32.xlu0 %v3955, 32
      %v4835 = vpop.permute.xlu0 %4834
      %4836 = vrot.lane.b32.xlu0 %v3956, 32
      %v4837 = vpop.permute.xlu0 %4836
      %4838 = vrot.lane.b32.xlu0 %v3957, 32
      %v4839 = vpop.permute.xlu0 %4838
      %4840 = vrot.lane.b32.xlu0 %v3958, 32
      %v4841 = vpop.permute.xlu0 %4840
      %4842 = vrot.lane.b32.xlu0 %v3959, 32
      %v4843 = vpop.permute.xlu0 %4842
      %4844 = vrot.lane.b32.xlu0 %v3960, 32
      %v4845 = vpop.permute.xlu0 %4844
      %4846 = vrot.lane.b32.xlu0 %v3961, 32
      %v4847 = vpop.permute.xlu0 %4846
      %4848 = vrot.lane.b32.xlu0 %v3962, 32
      %v4849 = vpop.permute.xlu0 %4848
      %4850 = vrot.lane.b32.xlu0 %v3963, 32
      %v4851 = vpop.permute.xlu0 %4850
      %4852 = vrot.lane.b32.xlu0 %v3964, 32
      %v4853 = vpop.permute.xlu0 %4852
      %4854 = vrot.lane.b32.xlu0 %v3965, 32
      %v4855 = vpop.permute.xlu0 %4854
      %4856 = vrot.lane.b32.xlu0 %v3966, 32
      %v4857 = vpop.permute.xlu0 %4856
      %4858 = vrot.lane.b32.xlu0 %v3967, 32
      %v4859 = vpop.permute.xlu0 %4858
      %4860 = vrot.lane.b32.xlu0 %v3968, 32
      %v4861 = vpop.permute.xlu0 %4860
      %4862 = vrot.lane.b32.xlu0 %v3969, 32
      %v4863 = vpop.permute.xlu0 %4862
      %4864 = vrot.lane.b32.xlu0 %v3970, 32
      %v4865 = vpop.permute.xlu0 %4864
      %4866 = vrot.lane.b32.xlu0 %v3971, 32
      %v4867 = vpop.permute.xlu0 %4866
      %4868 = vrot.lane.b32.xlu0 %v3972, 32
      %v4869 = vpop.permute.xlu0 %4868
      %4870 = vrot.lane.b32.xlu0 %v3973, 32
      %v4871 = vpop.permute.xlu0 %4870
      %4872 = vrot.lane.b32.xlu0 %v3974, 32
      %v4873 = vpop.permute.xlu0 %4872
      %4874 = vrot.lane.b32.xlu0 %v3975, 32
      %v4875 = vpop.permute.xlu0 %4874
      %4876 = vrot.lane.b32.xlu0 %v3976, 32
      %v4877 = vpop.permute.xlu0 %4876
      %4878 = vrot.lane.b32.xlu0 %v3977, 32
      %v4879 = vpop.permute.xlu0 %4878
      %4880 = vrot.lane.b32.xlu0 %v3978, 32
      %v4881 = vpop.permute.xlu0 %4880
      %4882 = vrot.lane.b32.xlu0 %v3979, 32
      %v4883 = vpop.permute.xlu0 %4882
      %4884 = vrot.lane.b32.xlu0 %v3980, 32
      %v4885 = vpop.permute.xlu0 %4884
      %4886 = vrot.lane.b32.xlu0 %v3981, 32
      %v4887 = vpop.permute.xlu0 %4886
      %4888 = vrot.lane.b32.xlu0 %v3982, 32
      %v4889 = vpop.permute.xlu0 %4888
      %4890 = vrot.lane.b32.xlu0 %v3983, 32
      %v4891 = vpop.permute.xlu0 %4890
      %4892 = vrot.lane.b32.xlu0 %v3984, 32
      %v4893 = vpop.permute.xlu0 %4892
      %4894 = vrot.lane.b32.xlu0 %v3985, 32
      %v4895 = vpop.permute.xlu0 %4894
      %4896 = vrot.lane.b32.xlu0 %v3986, 32
      %v4897 = vpop.permute.xlu0 %4896
      %4898 = vrot.lane.b32.xlu0 %v3987, 32
      %v4899 = vpop.permute.xlu0 %4898
      %4900 = vrot.lane.b32.xlu0 %v3988, 32
      %v4901 = vpop.permute.xlu0 %4900
      %4902 = vrot.lane.b32.xlu0 %v3989, 32
      %v4903 = vpop.permute.xlu0 %4902
      %4904 = vrot.lane.b32.xlu0 %v3990, 32
      %v4905 = vpop.permute.xlu0 %4904
      %4906 = vrot.lane.b32.xlu0 %v3991, 32
      %v4907 = vpop.permute.xlu0 %4906
      %4908 = vrot.lane.b32.xlu0 %v3992, 32
      %v4909 = vpop.permute.xlu0 %4908
      %4910 = vrot.lane.b32.xlu0 %v3993, 32
      %v4911 = vpop.permute.xlu0 %4910
      %4912 = vrot.lane.b32.xlu0 %v3994, 32
      %v4913 = vpop.permute.xlu0 %4912
      %4914 = vrot.lane.b32.xlu0 %v3995, 32
      %v4915 = vpop.permute.xlu0 %4914
      %4916 = vrot.lane.b32.xlu0 %v3996, 32
      %v4917 = vpop.permute.xlu0 %4916
      %4918 = vrot.lane.b32.xlu0 %v3997, 32
      %v4919 = vpop.permute.xlu0 %4918
      %4920 = vrot.lane.b32.xlu0 %v3998, 32
      %v4921 = vpop.permute.xlu0 %4920
      %4922 = vrot.lane.b32.xlu0 %v3999, 32
      %v4923 = vpop.permute.xlu0 %4922
      %4924 = vrot.lane.b32.xlu0 %v4000, 32
      %v4925 = vpop.permute.xlu0 %4924
      %4926 = vrot.lane.b32.xlu0 %v4001, 32
      %v4927 = vpop.permute.xlu0 %4926
      %4928 = vrot.lane.b32.xlu0 %v4002, 32
      %v4929 = vpop.permute.xlu0 %4928
      %4930 = vrot.lane.b32.xlu0 %v4003, 32
      %v4931 = vpop.permute.xlu0 %4930
      %4932 = vrot.lane.b32.xlu0 %v4004, 32
      %v4933 = vpop.permute.xlu0 %4932
      %4934 = vrot.lane.b32.xlu0 %v4005, 32
      %v4935 = vpop.permute.xlu0 %4934
      %4936 = vrot.lane.b32.xlu0 %v4006, 32
      %v4937 = vpop.permute.xlu0 %4936
      %4938 = vrot.lane.b32.xlu0 %v4007, 32
      %v4939 = vpop.permute.xlu0 %4938
      %4940 = vrot.lane.b32.xlu0 %v4008, 32
      %v4941 = vpop.permute.xlu0 %4940
      %4942 = vrot.lane.b32.xlu0 %v4009, 32
      %v4943 = vpop.permute.xlu0 %4942
      %4944 = vrot.lane.b32.xlu0 %v4010, 32
      %v4945 = vpop.permute.xlu0 %4944
      %4946 = vrot.lane.b32.xlu0 %v4011, 32
      %v4947 = vpop.permute.xlu0 %4946
      %4948 = vrot.lane.b32.xlu0 %v4012, 32
      %v4949 = vpop.permute.xlu0 %4948
      %4950 = vrot.lane.b32.xlu0 %v4013, 32
      %v4951 = vpop.permute.xlu0 %4950
      %4952 = vrot.lane.b32.xlu0 %v4014, 32
      %v4953 = vpop.permute.xlu0 %4952
      %4954 = vrot.lane.b32.xlu0 %v4021, 32
      %v4955 = vpop.permute.xlu0 %4954
      %4956 = vrot.lane.b32.xlu0 %v4022, 32
      %v4957 = vpop.permute.xlu0 %4956
      %4958 = vrot.lane.b32.xlu0 %v4023, 32
      %v4959 = vpop.permute.xlu0 %4958
      %5029 = vrot.lane.b32.xlu0 %v3823, 64
      %v5030 = vpop.permute.xlu0 %5029
      %5031 = vrot.lane.b32.xlu0 %v3824, 64
      %v5032 = vpop.permute.xlu0 %5031
      %5033 = vrot.lane.b32.xlu0 %v3825, 64
      %v5034 = vpop.permute.xlu0 %5033
      %5035 = vrot.lane.b32.xlu0 %v3826, 64
      %v5036 = vpop.permute.xlu0 %5035
      %5037 = vrot.lane.b32.xlu0 %v3827, 64
      %v5038 = vpop.permute.xlu0 %5037
      %5039 = vrot.lane.b32.xlu0 %v3828, 64
      %v5040 = vpop.permute.xlu0 %5039
      %5041 = vrot.lane.b32.xlu0 %v3829, 64
      %v5042 = vpop.permute.xlu0 %5041
      %5043 = vrot.lane.b32.xlu0 %v3830, 64
      %v5044 = vpop.permute.xlu0 %5043
      %5045 = vrot.lane.b32.xlu0 %v3831, 64
      %v5046 = vpop.permute.xlu0 %5045
      %5047 = vrot.lane.b32.xlu0 %v3832, 64
      %v5048 = vpop.permute.xlu0 %5047
      %5049 = vrot.lane.b32.xlu0 %v3833, 64
      %v5050 = vpop.permute.xlu0 %5049
      %5051 = vrot.lane.b32.xlu0 %v3834, 64
      %v5052 = vpop.permute.xlu0 %5051
      %5053 = vrot.lane.b32.xlu0 %v3835, 64
      %v5054 = vpop.permute.xlu0 %5053
      %5055 = vrot.lane.b32.xlu0 %v3836, 64
      %v5056 = vpop.permute.xlu0 %5055
      %5057 = vrot.lane.b32.xlu0 %v3837, 64
      %v5058 = vpop.permute.xlu0 %5057
      %5059 = vrot.lane.b32.xlu0 %v3838, 64
      %v5060 = vpop.permute.xlu0 %5059
      %5061 = vrot.lane.b32.xlu0 %v3839, 64
      %v5062 = vpop.permute.xlu0 %5061
      %5063 = vrot.lane.b32.xlu0 %v3840, 64
      %v5064 = vpop.permute.xlu0 %5063
      %5065 = vrot.lane.b32.xlu0 %v3841, 64
      %v5066 = vpop.permute.xlu0 %5065
      %5067 = vrot.lane.b32.xlu0 %v3842, 64
      %v5068 = vpop.permute.xlu0 %5067
      %5069 = vrot.lane.b32.xlu0 %v3843, 64
      %v5070 = vpop.permute.xlu0 %5069
      %5071 = vrot.lane.b32.xlu0 %v3844, 64
      %v5072 = vpop.permute.xlu0 %5071
      %5073 = vrot.lane.b32.xlu0 %v3845, 64
      %v5074 = vpop.permute.xlu0 %5073
      %5075 = vrot.lane.b32.xlu0 %v3846, 64
      %v5076 = vpop.permute.xlu0 %5075
      %5077 = vrot.lane.b32.xlu0 %v3847, 64
      %v5078 = vpop.permute.xlu0 %5077
      %5079 = vrot.lane.b32.xlu0 %v3848, 64
      %v5080 = vpop.permute.xlu0 %5079
      %5081 = vrot.lane.b32.xlu0 %v3849, 64
      %v5082 = vpop.permute.xlu0 %5081
      %5083 = vrot.lane.b32.xlu0 %v3850, 64
      %v5084 = vpop.permute.xlu0 %5083
      %5085 = vrot.lane.b32.xlu0 %v3851, 64
      %v5086 = vpop.permute.xlu0 %5085
      %5087 = vrot.lane.b32.xlu0 %v3852, 64
      %v5088 = vpop.permute.xlu0 %5087
      %5089 = vrot.lane.b32.xlu0 %v3853, 64
      %v5090 = vpop.permute.xlu0 %5089
      %5091 = vrot.lane.b32.xlu0 %v3854, 64
      %v5092 = vpop.permute.xlu0 %5091
      %5093 = vrot.lane.b32.xlu0 %v3855, 64
      %v5094 = vpop.permute.xlu0 %5093
      %5095 = vrot.lane.b32.xlu0 %v3856, 64
      %v5096 = vpop.permute.xlu0 %5095
      %5097 = vrot.lane.b32.xlu0 %v3857, 64
      %v5098 = vpop.permute.xlu0 %5097
      %5099 = vrot.lane.b32.xlu0 %v3858, 64
      %v5100 = vpop.permute.xlu0 %5099
      %5101 = vrot.lane.b32.xlu0 %v3859, 64
      %v5102 = vpop.permute.xlu0 %5101
      %5103 = vrot.lane.b32.xlu0 %v3860, 64
      %v5104 = vpop.permute.xlu0 %5103
      %5105 = vrot.lane.b32.xlu0 %v3861, 64
      %v5106 = vpop.permute.xlu0 %5105
      %5107 = vrot.lane.b32.xlu0 %v3862, 64
      %v5108 = vpop.permute.xlu0 %5107
      %5109 = vrot.lane.b32.xlu0 %v3863, 64
      %v5110 = vpop.permute.xlu0 %5109
      %5111 = vrot.lane.b32.xlu0 %v3864, 64
      %v5112 = vpop.permute.xlu0 %5111
      %5113 = vrot.lane.b32.xlu0 %v3865, 64
      %v5114 = vpop.permute.xlu0 %5113
      %5115 = vrot.lane.b32.xlu0 %v3866, 64
      %v5116 = vpop.permute.xlu0 %5115
      %5117 = vrot.lane.b32.xlu0 %v3867, 64
      %v5118 = vpop.permute.xlu0 %5117
      %5119 = vrot.lane.b32.xlu0 %v3868, 64
      %v5120 = vpop.permute.xlu0 %5119
      %5121 = vrot.lane.b32.xlu0 %v3869, 64
      %v5122 = vpop.permute.xlu0 %5121
      %5123 = vrot.lane.b32.xlu0 %v3870, 64
      %v5124 = vpop.permute.xlu0 %5123
      %5125 = vrot.lane.b32.xlu0 %v3871, 64
      %v5126 = vpop.permute.xlu0 %5125
      %5127 = vrot.lane.b32.xlu0 %v3872, 64
      %v5128 = vpop.permute.xlu0 %5127
      %5129 = vrot.lane.b32.xlu0 %v3873, 64
      %v5130 = vpop.permute.xlu0 %5129
      %5131 = vrot.lane.b32.xlu0 %v3874, 64
      %v5132 = vpop.permute.xlu0 %5131
      %5133 = vrot.lane.b32.xlu0 %v3875, 64
      %v5134 = vpop.permute.xlu0 %5133
      %5135 = vrot.lane.b32.xlu0 %v3876, 64
      %v5136 = vpop.permute.xlu0 %5135
      %5137 = vrot.lane.b32.xlu0 %v3877, 64
      %v5138 = vpop.permute.xlu0 %5137
      %5139 = vrot.lane.b32.xlu0 %v3878, 64
      %v5140 = vpop.permute.xlu0 %5139
      %5141 = vrot.lane.b32.xlu0 %v3879, 64
      %v5142 = vpop.permute.xlu0 %5141
      %5143 = vrot.lane.b32.xlu0 %v3880, 64
      %v5144 = vpop.permute.xlu0 %5143
      %5145 = vrot.lane.b32.xlu0 %v3881, 64
      %v5146 = vpop.permute.xlu0 %5145
      %5147 = vrot.lane.b32.xlu0 %v3882, 64
      %v5148 = vpop.permute.xlu0 %5147
      %5149 = vrot.lane.b32.xlu0 %v4015, 64
      %v5150 = vpop.permute.xlu0 %5149
      %5151 = vrot.lane.b32.xlu0 %v4016, 64
      %v5152 = vpop.permute.xlu0 %5151
      %5153 = vrot.lane.b32.xlu0 %v4017, 64
      %v5154 = vpop.permute.xlu0 %5153
      %5155 = vrot.lane.b32.xlu0 %v4024, 64
      %v5156 = vpop.permute.xlu0 %5155
      %5157 = vrot.lane.b32.xlu0 %v4025, 64
      %v5158 = vpop.permute.xlu0 %5157
      %5159 = vrot.lane.b32.xlu0 %v4026, 64
      %v5160 = vpop.permute.xlu0 %5159
      %5233 = vrot.lane.b32.xlu0 %v3889, 96
      %v5234 = vpop.permute.xlu0 %5233
      %5235 = vrot.lane.b32.xlu0 %v3890, 96
      %v5236 = vpop.permute.xlu0 %5235
      %5237 = vrot.lane.b32.xlu0 %v3891, 96
      %v5238 = vpop.permute.xlu0 %5237
      %5239 = vrot.lane.b32.xlu0 %v3892, 96
      %v5240 = vpop.permute.xlu0 %5239
      %5241 = vrot.lane.b32.xlu0 %v3893, 96
      %v5242 = vpop.permute.xlu0 %5241
      %5243 = vrot.lane.b32.xlu0 %v3894, 96
      %v5244 = vpop.permute.xlu0 %5243
      %5245 = vrot.lane.b32.xlu0 %v3895, 96
      %v5246 = vpop.permute.xlu0 %5245
      %5247 = vrot.lane.b32.xlu0 %v3896, 96
      %v5248 = vpop.permute.xlu0 %5247
      %5249 = vrot.lane.b32.xlu0 %v3897, 96
      %v5250 = vpop.permute.xlu0 %5249
      %5251 = vrot.lane.b32.xlu0 %v3898, 96
      %v5252 = vpop.permute.xlu0 %5251
      %5253 = vrot.lane.b32.xlu0 %v3899, 96
      %v5254 = vpop.permute.xlu0 %5253
      %5255 = vrot.lane.b32.xlu0 %v3900, 96
      %v5256 = vpop.permute.xlu0 %5255
      %5257 = vrot.lane.b32.xlu0 %v3901, 96
      %v5258 = vpop.permute.xlu0 %5257
      %5259 = vrot.lane.b32.xlu0 %v3902, 96
      %v5260 = vpop.permute.xlu0 %5259
      %5261 = vrot.lane.b32.xlu0 %v3903, 96
      %v5262 = vpop.permute.xlu0 %5261
      %5263 = vrot.lane.b32.xlu0 %v3904, 96
      %v5264 = vpop.permute.xlu0 %5263
      %5265 = vrot.lane.b32.xlu0 %v3905, 96
      %v5266 = vpop.permute.xlu0 %5265
      %5267 = vrot.lane.b32.xlu0 %v3906, 96
      %v5268 = vpop.permute.xlu0 %5267
      %5269 = vrot.lane.b32.xlu0 %v3907, 96
      %v5270 = vpop.permute.xlu0 %5269
      %5271 = vrot.lane.b32.xlu0 %v3908, 96
      %v5272 = vpop.permute.xlu0 %5271
      %5273 = vrot.lane.b32.xlu0 %v3909, 96
      %v5274 = vpop.permute.xlu0 %5273
      %5275 = vrot.lane.b32.xlu0 %v3910, 96
      %v5276 = vpop.permute.xlu0 %5275
      %5277 = vrot.lane.b32.xlu0 %v3911, 96
      %v5278 = vpop.permute.xlu0 %5277
      %5279 = vrot.lane.b32.xlu0 %v3912, 96
      %v5280 = vpop.permute.xlu0 %5279
      %5281 = vrot.lane.b32.xlu0 %v3913, 96
      %v5282 = vpop.permute.xlu0 %5281
      %5283 = vrot.lane.b32.xlu0 %v3914, 96
      %v5284 = vpop.permute.xlu0 %5283
      %5285 = vrot.lane.b32.xlu0 %v3915, 96
      %v5286 = vpop.permute.xlu0 %5285
      %5287 = vrot.lane.b32.xlu0 %v3916, 96
      %v5288 = vpop.permute.xlu0 %5287
      %5289 = vrot.lane.b32.xlu0 %v3917, 96
      %v5290 = vpop.permute.xlu0 %5289
      %5291 = vrot.lane.b32.xlu0 %v3918, 96
      %v5292 = vpop.permute.xlu0 %5291
      %5293 = vrot.lane.b32.xlu0 %v3919, 96
      %v5294 = vpop.permute.xlu0 %5293
      %5295 = vrot.lane.b32.xlu0 %v3920, 96
      %v5296 = vpop.permute.xlu0 %5295
      %5297 = vrot.lane.b32.xlu0 %v3921, 96
      %v5298 = vpop.permute.xlu0 %5297
      %5299 = vrot.lane.b32.xlu0 %v3922, 96
      %v5300 = vpop.permute.xlu0 %5299
      %5301 = vrot.lane.b32.xlu0 %v3923, 96
      %v5302 = vpop.permute.xlu0 %5301
      %5303 = vrot.lane.b32.xlu0 %v3924, 96
      %v5304 = vpop.permute.xlu0 %5303
      %5305 = vrot.lane.b32.xlu0 %v3925, 96
      %v5306 = vpop.permute.xlu0 %5305
      %5307 = vrot.lane.b32.xlu0 %v3926, 96
      %v5308 = vpop.permute.xlu0 %5307
      %5309 = vrot.lane.b32.xlu0 %v3927, 96
      %v5310 = vpop.permute.xlu0 %5309
      %5311 = vrot.lane.b32.xlu0 %v3928, 96
      %v5312 = vpop.permute.xlu0 %5311
      %5313 = vrot.lane.b32.xlu0 %v3929, 96
      %v5314 = vpop.permute.xlu0 %5313
      %5315 = vrot.lane.b32.xlu0 %v3930, 96
      %v5316 = vpop.permute.xlu0 %5315
      %5317 = vrot.lane.b32.xlu0 %v3931, 96
      %v5318 = vpop.permute.xlu0 %5317
      %5319 = vrot.lane.b32.xlu0 %v3932, 96
      %v5320 = vpop.permute.xlu0 %5319
      %5321 = vrot.lane.b32.xlu0 %v3933, 96
      %v5322 = vpop.permute.xlu0 %5321
      %5323 = vrot.lane.b32.xlu0 %v3934, 96
      %v5324 = vpop.permute.xlu0 %5323
      %5325 = vrot.lane.b32.xlu0 %v3935, 96
      %v5326 = vpop.permute.xlu0 %5325
      %5327 = vrot.lane.b32.xlu0 %v3936, 96
      %v5328 = vpop.permute.xlu0 %5327
      %5329 = vrot.lane.b32.xlu0 %v3937, 96
      %v5330 = vpop.permute.xlu0 %5329
      %5331 = vrot.lane.b32.xlu0 %v3938, 96
      %v5332 = vpop.permute.xlu0 %5331
      %5333 = vrot.lane.b32.xlu0 %v3939, 96
      %v5334 = vpop.permute.xlu0 %5333
      %5335 = vrot.lane.b32.xlu0 %v3940, 96
      %v5336 = vpop.permute.xlu0 %5335
      %5337 = vrot.lane.b32.xlu0 %v3941, 96
      %v5338 = vpop.permute.xlu0 %5337
      %5339 = vrot.lane.b32.xlu0 %v3942, 96
      %v5340 = vpop.permute.xlu0 %5339
      %5341 = vrot.lane.b32.xlu0 %v3943, 96
      %v5342 = vpop.permute.xlu0 %5341
      %5343 = vrot.lane.b32.xlu0 %v3944, 96
      %v5344 = vpop.permute.xlu0 %5343
      %5345 = vrot.lane.b32.xlu0 %v3945, 96
      %v5346 = vpop.permute.xlu0 %5345
      %5347 = vrot.lane.b32.xlu0 %v3946, 96
      %v5348 = vpop.permute.xlu0 %5347
      %5349 = vrot.lane.b32.xlu0 %v3947, 96
      %v5350 = vpop.permute.xlu0 %5349
      %5351 = vrot.lane.b32.xlu0 %v3948, 96
      %v5352 = vpop.permute.xlu0 %5351
      %5353 = vrot.lane.b32.xlu0 %v4018, 96
      %v5354 = vpop.permute.xlu0 %5353
      %5355 = vrot.lane.b32.xlu0 %v4019, 96
      %v5356 = vpop.permute.xlu0 %5355
      %5357 = vrot.lane.b32.xlu0 %v4020, 96
      %v5358 = vpop.permute.xlu0 %5357
      %5359 = vrot.lane.b32.xlu0 %v4027, 96
      %v5360 = vpop.permute.xlu0 %5359
      %5361 = vrot.lane.b32.xlu0 %v4028, 96
      %v5362 = vpop.permute.xlu0 %5361
      %5363 = vrot.lane.b32.xlu0 %v4029, 96
      %v5364 = vpop.permute.xlu0 %5363
      %v5431 = vsel %vm408, %v3817, %v4100
      %v5432 = vsel %vm408, %v3818, %v4102
      %v5433 = vsel %vm408, %v3819, %v4104
      %v5434 = vsel %vm408, %v3820, %v4106
      %v5435 = vsel %vm408, %v3821, %v4108
      %v5436 = vsel %vm408, %v3822, %v4110
      %v5437 = vsel %vm408, %v3823, %v4112
      %v5438 = vsel %vm408, %v3824, %v4114
      %v5439 = vsel %vm408, %v3825, %v4116
      %v5440 = vsel %vm408, %v3826, %v4118
      %v5441 = vsel %vm408, %v3827, %v4120
      %v5442 = vsel %vm408, %v3828, %v4122
      %v5443 = vsel %vm408, %v3829, %v4124
      %v5444 = vsel %vm408, %v3830, %v4126
      %v5445 = vsel %vm408, %v3831, %v4128
      %v5446 = vsel %vm408, %v3832, %v4130
      %v5447 = vsel %vm408, %v3833, %v4132
      %v5448 = vsel %vm408, %v3834, %v4134
      %v5449 = vsel %vm408, %v3835, %v4136
      %v5450 = vsel %vm408, %v3836, %v4138
      %v5451 = vsel %vm408, %v3837, %v4140
      %v5452 = vsel %vm408, %v3838, %v4142
      %v5453 = vsel %vm408, %v3839, %v4144
      %v5454 = vsel %vm408, %v3840, %v4146
      %v5455 = vsel %vm408, %v3841, %v4148
      %v5456 = vsel %vm408, %v3842, %v4150
      %v5457 = vsel %vm408, %v3843, %v4152
      %v5458 = vsel %vm408, %v3844, %v4154
      %v5459 = vsel %vm408, %v3845, %v4156
      %v5460 = vsel %vm408, %v3846, %v4158
      %v5461 = vsel %vm408, %v3847, %v4160
      %v5462 = vsel %vm408, %v3848, %v4162
      %v5463 = vsel %vm408, %v3849, %v4164
      %v5464 = vsel %vm408, %v3850, %v4166
      %v5465 = vsel %vm408, %v3851, %v4168
      %v5466 = vsel %vm408, %v3852, %v4170
      %v5467 = vsel %vm408, %v3853, %v4172
      %v5468 = vsel %vm408, %v3854, %v4174
      %v5469 = vsel %vm408, %v3855, %v4176
      %v5470 = vsel %vm408, %v3856, %v4178
      %v5471 = vsel %vm408, %v3857, %v4180
      %v5472 = vsel %vm408, %v3858, %v4182
      %v5473 = vsel %vm408, %v3859, %v4184
      %v5474 = vsel %vm408, %v3860, %v4186
      %v5475 = vsel %vm408, %v3861, %v4188
      %v5476 = vsel %vm408, %v3862, %v4190
      %v5477 = vsel %vm408, %v3863, %v4192
      %v5478 = vsel %vm408, %v3864, %v4194
      %v5479 = vsel %vm408, %v3865, %v4196
      %v5480 = vsel %vm408, %v3866, %v4198
      %v5481 = vsel %vm408, %v3867, %v4200
      %v5482 = vsel %vm408, %v3868, %v4202
      %v5483 = vsel %vm408, %v3869, %v4204
      %v5484 = vsel %vm408, %v3870, %v4206
      %v5485 = vsel %vm408, %v3871, %v4208
      %v5486 = vsel %vm408, %v3872, %v4210
      %v5487 = vsel %vm408, %v3873, %v4212
      %v5488 = vsel %vm408, %v3874, %v4214
      %v5489 = vsel %vm408, %v3875, %v4216
      %v5490 = vsel %vm408, %v3876, %v4218
      %v5491 = vsel %vm408, %v3877, %v4220
      %v5492 = vsel %vm408, %v3878, %v4222
      %v5493 = vsel %vm408, %v3879, %v4224
      %v5494 = vsel %vm408, %v3880, %v4226
      %v5495 = vsel %vm408, %v3881, %v4228
      %v5496 = vsel %vm408, %v3882, %v4230
      %v5497 = vsel %vm930, %v5431, %v4364
      %v5498 = vsel %vm930, %v5432, %v4366
      %v5499 = vsel %vm930, %v5433, %v4368
      %v5500 = vsel %vm930, %v5434, %v4370
      %v5501 = vsel %vm930, %v5435, %v4372
      %v5502 = vsel %vm930, %v5436, %v4374
      %v5503 = vsel %vm930, %v5437, %v4376
      %v5504 = vsel %vm930, %v5438, %v4378
      %v5505 = vsel %vm930, %v5439, %v4380
      %v5506 = vsel %vm930, %v5440, %v4382
      %v5507 = vsel %vm930, %v5441, %v4384
      %v5508 = vsel %vm930, %v5442, %v4386
      %v5509 = vsel %vm930, %v5443, %v4388
      %v5510 = vsel %vm930, %v5444, %v4390
      %v5511 = vsel %vm930, %v5445, %v4392
      %v5512 = vsel %vm930, %v5446, %v4394
      %v5513 = vsel %vm930, %v5447, %v4396
      %v5514 = vsel %vm930, %v5448, %v4398
      %v5515 = vsel %vm930, %v5449, %v4400
      %v5516 = vsel %vm930, %v5450, %v4402
      %v5517 = vsel %vm930, %v5451, %v4404
      %v5518 = vsel %vm930, %v5452, %v4406
      %v5519 = vsel %vm930, %v5453, %v4408
      %v5520 = vsel %vm930, %v5454, %v4410
      %v5521 = vsel %vm930, %v5455, %v4412
      %v5522 = vsel %vm930, %v5456, %v4414
      %v5523 = vsel %vm930, %v5457, %v4416
      %v5524 = vsel %vm930, %v5458, %v4418
      %v5525 = vsel %vm930, %v5459, %v4420
      %v5526 = vsel %vm930, %v5460, %v4422
      %v5527 = vsel %vm930, %v5461, %v4424
      %v5528 = vsel %vm930, %v5462, %v4426
      %v5529 = vsel %vm930, %v5463, %v4428
      %v5530 = vsel %vm930, %v5464, %v4430
      %v5531 = vsel %vm930, %v5465, %v4432
      %v5532 = vsel %vm930, %v5466, %v4434
      %v5533 = vsel %vm930, %v5467, %v4436
      %v5534 = vsel %vm930, %v5468, %v4438
      %v5535 = vsel %vm930, %v5469, %v4440
      %v5536 = vsel %vm930, %v5470, %v4442
      %v5537 = vsel %vm930, %v5471, %v4444
      %v5538 = vsel %vm930, %v5472, %v4446
      %v5539 = vsel %vm930, %v5473, %v4448
      %v5540 = vsel %vm930, %v5474, %v4450
      %v5541 = vsel %vm930, %v5475, %v4452
      %v5542 = vsel %vm930, %v5476, %v4454
      %v5543 = vsel %vm930, %v5477, %v4456
      %v5544 = vsel %vm930, %v5478, %v4458
      %v5545 = vsel %vm930, %v5479, %v4460
      %v5546 = vsel %vm930, %v5480, %v4462
      %v5547 = vsel %vm930, %v5481, %v4464
      %v5548 = vsel %vm930, %v5482, %v4466
      %v5549 = vsel %vm930, %v5483, %v4468
      %v5550 = vsel %vm930, %v5484, %v4470
      %v5551 = vsel %vm930, %v5485, %v4472
      %v5552 = vsel %vm930, %v5486, %v4474
      %v5553 = vsel %vm930, %v5487, %v4476
      %v5554 = vsel %vm930, %v5488, %v4478
      %v5555 = vsel %vm930, %v5489, %v4480
      %v5556 = vsel %vm930, %v5490, %v4482
      %v5557 = vsel %vm930, %v5491, %v4484
      %v5558 = vsel %vm930, %v5492, %v4486
      %v5559 = vsel %vm930, %v5493, %v4488
      %v5560 = vsel %vm930, %v5494, %v4490
      %v5561 = vsel %vm930, %v5495, %v4492
      %v5562 = vsel %vm930, %v5496, %v4494
      %v5563 = vsel %vm937, %v5497, %v4628
      %v5564 = vsel %vm937, %v5498, %v4630
      %v5565 = vsel %vm937, %v5499, %v4632
      %v5566 = vsel %vm937, %v5500, %v4634
      %v5567 = vsel %vm937, %v5501, %v4636
      %v5568 = vsel %vm937, %v5502, %v4638
      %v5569 = vsel %vm937, %v5503, %v4640
      %v5570 = vsel %vm937, %v5504, %v4642
      %v5571 = vsel %vm937, %v5505, %v4644
      %v5572 = vsel %vm937, %v5506, %v4646
      %v5573 = vsel %vm937, %v5507, %v4648
      %v5574 = vsel %vm937, %v5508, %v4650
      %v5575 = vsel %vm937, %v5509, %v4652
      %v5576 = vsel %vm937, %v5510, %v4654
      %v5577 = vsel %vm937, %v5511, %v4656
      %v5578 = vsel %vm937, %v5512, %v4658
      %v5579 = vsel %vm937, %v5513, %v4660
      %v5580 = vsel %vm937, %v5514, %v4662
      %v5581 = vsel %vm937, %v5515, %v4664
      %v5582 = vsel %vm937, %v5516, %v4666
      %v5583 = vsel %vm937, %v5517, %v4668
      %v5584 = vsel %vm937, %v5518, %v4670
      %v5585 = vsel %vm937, %v5519, %v4672
      %v5586 = vsel %vm937, %v5520, %v4674
      %v5587 = vsel %vm937, %v5521, %v4676
      %v5588 = vsel %vm937, %v5522, %v4678
      %v5589 = vsel %vm937, %v5523, %v4680
      %v5590 = vsel %vm937, %v5524, %v4682
      %v5591 = vsel %vm937, %v5525, %v4684
      %v5592 = vsel %vm937, %v5526, %v4686
      %v5593 = vsel %vm937, %v5527, %v4688
      %v5594 = vsel %vm937, %v5528, %v4690
      %v5595 = vsel %vm937, %v5529, %v4692
      %v5596 = vsel %vm937, %v5530, %v4694
      %v5597 = vsel %vm937, %v5531, %v4696
      %v5598 = vsel %vm937, %v5532, %v4698
      %v5599 = vsel %vm937, %v5533, %v4700
      %v5600 = vsel %vm937, %v5534, %v4702
      %v5601 = vsel %vm937, %v5535, %v4704
      %v5602 = vsel %vm937, %v5536, %v4706
      %v5603 = vsel %vm937, %v5537, %v4708
      %v5604 = vsel %vm937, %v5538, %v4710
      %v5605 = vsel %vm937, %v5539, %v4712
      %v5606 = vsel %vm937, %v5540, %v4714
      %v5607 = vsel %vm937, %v5541, %v4716
      %v5608 = vsel %vm937, %v5542, %v4718
      %v5609 = vsel %vm937, %v5543, %v4720
      %v5610 = vsel %vm937, %v5544, %v4722
      %v5611 = vsel %vm937, %v5545, %v4724
      %v5612 = vsel %vm937, %v5546, %v4726
      %v5613 = vsel %vm937, %v5547, %v4728
      %v5614 = vsel %vm937, %v5548, %v4730
      %v5615 = vsel %vm937, %v5549, %v4732
      %v5616 = vsel %vm937, %v5550, %v4734
      %v5617 = vsel %vm937, %v5551, %v4736
      %v5618 = vsel %vm937, %v5552, %v4738
      %v5619 = vsel %vm937, %v5553, %v4740
      %v5620 = vsel %vm937, %v5554, %v4742
      %v5621 = vsel %vm937, %v5555, %v4744
      %v5622 = vsel %vm937, %v5556, %v4746
      %v5623 = vsel %vm937, %v5557, %v4748
      %v5624 = vsel %vm937, %v5558, %v4750
      %v5625 = vsel %vm937, %v5559, %v4752
      %v5626 = vsel %vm937, %v5560, %v4754
      %v5627 = vsel %vm937, %v5561, %v4756
      %v5628 = vsel %vm937, %v5562, %v4758
      %v5629 = vsel %vm408, %v3886, %v4829
      %v5630 = vsel %vm408, %v3887, %v4831
      %v5631 = vsel %vm408, %v3888, %v4833
      %v5632 = vsel %vm408, %v3889, %v4835
      %v5633 = vsel %vm408, %v3890, %v4837
      %v5634 = vsel %vm408, %v3891, %v4839
      %v5635 = vsel %vm408, %v3892, %v4841
      %v5636 = vsel %vm408, %v3893, %v4843
      %v5637 = vsel %vm408, %v3894, %v4845
      %v5638 = vsel %vm408, %v3895, %v4847
      %v5639 = vsel %vm408, %v3896, %v4849
      %v5640 = vsel %vm408, %v3897, %v4851
      %v5641 = vsel %vm408, %v3898, %v4853
      %v5642 = vsel %vm408, %v3899, %v4855
      %v5643 = vsel %vm408, %v3900, %v4857
      %v5644 = vsel %vm408, %v3901, %v4859
      %v5645 = vsel %vm408, %v3902, %v4861
      %v5646 = vsel %vm408, %v3903, %v4863
      %v5647 = vsel %vm408, %v3904, %v4865
      %v5648 = vsel %vm408, %v3905, %v4867
      %v5649 = vsel %vm408, %v3906, %v4869
      %v5650 = vsel %vm408, %v3907, %v4871
      %v5651 = vsel %vm408, %v3908, %v4873
      %v5652 = vsel %vm408, %v3909, %v4875
      %v5653 = vsel %vm408, %v3910, %v4877
      %v5654 = vsel %vm408, %v3911, %v4879
      %v5655 = vsel %vm408, %v3912, %v4881
      %v5656 = vsel %vm408, %v3913, %v4883
      %v5657 = vsel %vm408, %v3914, %v4885
      %v5658 = vsel %vm408, %v3915, %v4887
      %v5659 = vsel %vm408, %v3916, %v4889
      %v5660 = vsel %vm408, %v3917, %v4891
      %v5661 = vsel %vm408, %v3918, %v4893
      %v5662 = vsel %vm408, %v3919, %v4895
      %v5663 = vsel %vm408, %v3920, %v4897
      %v5664 = vsel %vm408, %v3921, %v4899
      %v5665 = vsel %vm408, %v3922, %v4901
      %v5666 = vsel %vm408, %v3923, %v4903
      %v5667 = vsel %vm408, %v3924, %v4905
      %v5668 = vsel %vm408, %v3925, %v4907
      %v5669 = vsel %vm408, %v3926, %v4909
      %v5670 = vsel %vm408, %v3927, %v4911
      %v5671 = vsel %vm408, %v3928, %v4913
      %v5672 = vsel %vm408, %v3929, %v4915
      %v5673 = vsel %vm408, %v3930, %v4917
      %v5674 = vsel %vm408, %v3931, %v4919
      %v5675 = vsel %vm408, %v3932, %v4921
      %v5676 = vsel %vm408, %v3933, %v4923
      %v5677 = vsel %vm408, %v3934, %v4925
      %v5678 = vsel %vm408, %v3935, %v4927
      %v5679 = vsel %vm408, %v3936, %v4929
      %v5680 = vsel %vm408, %v3937, %v4931
      %v5681 = vsel %vm408, %v3938, %v4933
      %v5682 = vsel %vm408, %v3939, %v4935
      %v5683 = vsel %vm408, %v3940, %v4937
      %v5684 = vsel %vm408, %v3941, %v4939
      %v5685 = vsel %vm408, %v3942, %v4941
      %v5686 = vsel %vm408, %v3943, %v4943
      %v5687 = vsel %vm408, %v3944, %v4945
      %v5688 = vsel %vm408, %v3945, %v4947
      %v5689 = vsel %vm408, %v3946, %v4949
      %v5690 = vsel %vm408, %v3947, %v4951
      %v5691 = vsel %vm408, %v3948, %v4953
      %v5692 = vsel %vm408, %v4018, %v4955
      %v5693 = vsel %vm408, %v4019, %v4957
      %v5694 = vsel %vm408, %v4020, %v4959
      %v5695 = vsel %vm930, %v5629, %v5030
      %v5696 = vsel %vm930, %v5630, %v5032
      %v5697 = vsel %vm930, %v5631, %v5034
      %v5698 = vsel %vm930, %v5632, %v5036
      %v5699 = vsel %vm930, %v5633, %v5038
      %v5700 = vsel %vm930, %v5634, %v5040
      %v5701 = vsel %vm930, %v5635, %v5042
      %v5702 = vsel %vm930, %v5636, %v5044
      %v5703 = vsel %vm930, %v5637, %v5046
      %v5704 = vsel %vm930, %v5638, %v5048
      %v5705 = vsel %vm930, %v5639, %v5050
      %v5706 = vsel %vm930, %v5640, %v5052
      %v5707 = vsel %vm930, %v5641, %v5054
      %v5708 = vsel %vm930, %v5642, %v5056
      %v5709 = vsel %vm930, %v5643, %v5058
      %v5710 = vsel %vm930, %v5644, %v5060
      %v5711 = vsel %vm930, %v5645, %v5062
      %v5712 = vsel %vm930, %v5646, %v5064
      %v5713 = vsel %vm930, %v5647, %v5066
      %v5714 = vsel %vm930, %v5648, %v5068
      %v5715 = vsel %vm930, %v5649, %v5070
      %v5716 = vsel %vm930, %v5650, %v5072
      %v5717 = vsel %vm930, %v5651, %v5074
      %v5718 = vsel %vm930, %v5652, %v5076
      %v5719 = vsel %vm930, %v5653, %v5078
      %v5720 = vsel %vm930, %v5654, %v5080
      %v5721 = vsel %vm930, %v5655, %v5082
      %v5722 = vsel %vm930, %v5656, %v5084
      %v5723 = vsel %vm930, %v5657, %v5086
      %v5724 = vsel %vm930, %v5658, %v5088
      %v5725 = vsel %vm930, %v5659, %v5090
      %v5726 = vsel %vm930, %v5660, %v5092
      %v5727 = vsel %vm930, %v5661, %v5094
      %v5728 = vsel %vm930, %v5662, %v5096
      %v5729 = vsel %vm930, %v5663, %v5098
      %v5730 = vsel %vm930, %v5664, %v5100
      %v5731 = vsel %vm930, %v5665, %v5102
      %v5732 = vsel %vm930, %v5666, %v5104
      %v5733 = vsel %vm930, %v5667, %v5106
      %v5734 = vsel %vm930, %v5668, %v5108
      %v5735 = vsel %vm930, %v5669, %v5110
      %v5736 = vsel %vm930, %v5670, %v5112
      %v5737 = vsel %vm930, %v5671, %v5114
      %v5738 = vsel %vm930, %v5672, %v5116
      %v5739 = vsel %vm930, %v5673, %v5118
      %v5740 = vsel %vm930, %v5674, %v5120
      %v5741 = vsel %vm930, %v5675, %v5122
      %v5742 = vsel %vm930, %v5676, %v5124
      %v5743 = vsel %vm930, %v5677, %v5126
      %v5744 = vsel %vm930, %v5678, %v5128
      %v5745 = vsel %vm930, %v5679, %v5130
      %v5746 = vsel %vm930, %v5680, %v5132
      %v5747 = vsel %vm930, %v5681, %v5134
      %v5748 = vsel %vm930, %v5682, %v5136
      %v5749 = vsel %vm930, %v5683, %v5138
      %v5750 = vsel %vm930, %v5684, %v5140
      %v5751 = vsel %vm930, %v5685, %v5142
      %v5752 = vsel %vm930, %v5686, %v5144
      %v5753 = vsel %vm930, %v5687, %v5146
      %v5754 = vsel %vm930, %v5688, %v5148
      %v5755 = vsel %vm930, %v5689, %v5150
      %v5756 = vsel %vm930, %v5690, %v5152
      %v5757 = vsel %vm930, %v5691, %v5154
      %v5758 = vsel %vm930, %v5692, %v5156
      %v5759 = vsel %vm930, %v5693, %v5158
      %v5760 = vsel %vm930, %v5694, %v5160
      %v5761 = vsel %vm937, %v5695, %v5234
      %v5762 = vsel %vm937, %v5696, %v5236
      %v5763 = vsel %vm937, %v5697, %v5238
      %v5764 = vsel %vm937, %v5698, %v5240
      %v5765 = vsel %vm937, %v5699, %v5242
      %v5766 = vsel %vm937, %v5700, %v5244
      %v5767 = vsel %vm937, %v5701, %v5246
      %v5768 = vsel %vm937, %v5702, %v5248
      %v5769 = vsel %vm937, %v5703, %v5250
      %v5770 = vsel %vm937, %v5704, %v5252
      %v5771 = vsel %vm937, %v5705, %v5254
      %v5772 = vsel %vm937, %v5706, %v5256
      %v5773 = vsel %vm937, %v5707, %v5258
      %v5774 = vsel %vm937, %v5708, %v5260
      %v5775 = vsel %vm937, %v5709, %v5262
      %v5776 = vsel %vm937, %v5710, %v5264
      %v5777 = vsel %vm937, %v5711, %v5266
      %v5778 = vsel %vm937, %v5712, %v5268
      %v5779 = vsel %vm937, %v5713, %v5270
      %v5780 = vsel %vm937, %v5714, %v5272
      %v5781 = vsel %vm937, %v5715, %v5274
      %v5782 = vsel %vm937, %v5716, %v5276
      %v5783 = vsel %vm937, %v5717, %v5278
      %v5784 = vsel %vm937, %v5718, %v5280
      %v5785 = vsel %vm937, %v5719, %v5282
      %v5786 = vsel %vm937, %v5720, %v5284
      %v5787 = vsel %vm937, %v5721, %v5286
      %v5788 = vsel %vm937, %v5722, %v5288
      %v5789 = vsel %vm937, %v5723, %v5290
      %v5790 = vsel %vm937, %v5724, %v5292
      %v5791 = vsel %vm937, %v5725, %v5294
      %v5792 = vsel %vm937, %v5726, %v5296
      %v5793 = vsel %vm937, %v5727, %v5298
      %v5794 = vsel %vm937, %v5728, %v5300
      %v5795 = vsel %vm937, %v5729, %v5302
      %v5796 = vsel %vm937, %v5730, %v5304
      %v5797 = vsel %vm937, %v5731, %v5306
      %v5798 = vsel %vm937, %v5732, %v5308
      %v5799 = vsel %vm937, %v5733, %v5310
      %v5800 = vsel %vm937, %v5734, %v5312
      %v5801 = vsel %vm937, %v5735, %v5314
      %v5802 = vsel %vm937, %v5736, %v5316
      %v5803 = vsel %vm937, %v5737, %v5318
      %v5804 = vsel %vm937, %v5738, %v5320
      %v5805 = vsel %vm937, %v5739, %v5322
      %v5806 = vsel %vm937, %v5740, %v5324
      %v5807 = vsel %vm937, %v5741, %v5326
      %v5808 = vsel %vm937, %v5742, %v5328
      %v5809 = vsel %vm937, %v5743, %v5330
      %v5810 = vsel %vm937, %v5744, %v5332
      %v5811 = vsel %vm937, %v5745, %v5334
      %v5812 = vsel %vm937, %v5746, %v5336
      %v5813 = vsel %vm937, %v5747, %v5338
      %v5814 = vsel %vm937, %v5748, %v5340
      %v5815 = vsel %vm937, %v5749, %v5342
      %v5816 = vsel %vm937, %v5750, %v5344
      %v5817 = vsel %vm937, %v5751, %v5346
      %v5818 = vsel %vm937, %v5752, %v5348
      %v5819 = vsel %vm937, %v5753, %v5350
      %v5820 = vsel %vm937, %v5754, %v5352
      %v5821 = vsel %vm937, %v5755, %v5354
      %v5822 = vsel %vm937, %v5756, %v5356
      %v5823 = vsel %vm937, %v5757, %v5358
      %v5824 = vsel %vm937, %v5758, %v5360
      %v5825 = vsel %vm937, %v5759, %v5362
      %v5826 = vsel %vm937, %v5760, %v5364
      %v5827 = vld [vmem:[%s9] sm:$0x77]
      %v5828 = vld [vmem:[%s9 + $0x8] sm:$0x7]
      %v5829 = vld [vmem:[%s10] sm:$0x7]
      %5831 = vset.pattern.permute.xlu0 0
      %5832 = vperm.xlu0 %5831, %v5829
      %v5833 = vpop.permute.xlu0 %5832
      %v5837 = vcombine.high %v5827, %v5827
      %v5839 = vsel %vm408, %v5828, 0
      %v5841 = vsel %vm408, %v3955, 0
      %v5843 = vsel %vm408, %v3956, 0
      %v5845 = vsel %vm408, %v3957, 0
      %v5847 = vsel %vm408, %v3958, 0
      %v5849 = vsel %vm408, %v3959, 0
      %v5851 = vsel %vm408, %v3960, 0
      %v5853 = vsel %vm408, %v3961, 0
      %v5855 = vsel %vm408, %v3962, 0
      %v5857 = vsel %vm408, %v3963, 0
      %v5859 = vsel %vm408, %v3964, 0
      %v5861 = vsel %vm408, %v3965, 0
      %v5863 = vsel %vm408, %v3966, 0
      %v5865 = vsel %vm408, %v3967, 0
      %v5867 = vsel %vm408, %v3968, 0
      %v5869 = vsel %vm408, %v3969, 0
      %v5871 = vsel %vm408, %v3970, 0
      %v5873 = vsel %vm408, %v3971, 0
      %v5875 = vsel %vm408, %v3972, 0
      %v5877 = vsel %vm408, %v3973, 0
      %v5879 = vsel %vm408, %v3974, 0
      %v5881 = vsel %vm408, %v3975, 0
      %v5883 = vsel %vm408, %v3976, 0
      %v5885 = vsel %vm408, %v3977, 0
      %v5887 = vsel %vm408, %v3978, 0
      %v5889 = vsel %vm408, %v3979, 0
      %v5891 = vsel %vm408, %v3980, 0
      %v5893 = vsel %vm408, %v3981, 0
      %v5895 = vsel %vm408, %v3982, 0
      %v5897 = vsel %vm408, %v3983, 0
      %v5899 = vsel %vm408, %v3984, 0
      %v5901 = vsel %vm408, %v3985, 0
      %v5903 = vsel %vm408, %v3986, 0
      %v5905 = vsel %vm408, %v3987, 0
      %v5907 = vsel %vm408, %v3988, 0
      %v5909 = vsel %vm408, %v3989, 0
      %v5911 = vsel %vm408, %v3990, 0
      %v5913 = vsel %vm408, %v3991, 0
      %v5915 = vsel %vm408, %v3992, 0
      %v5917 = vsel %vm408, %v3993, 0
      %v5919 = vsel %vm408, %v3994, 0
      %v5921 = vsel %vm408, %v3995, 0
      %v5923 = vsel %vm408, %v3996, 0
      %v5925 = vsel %vm408, %v3997, 0
      %v5927 = vsel %vm408, %v3998, 0
      %v5929 = vsel %vm408, %v3999, 0
      %v5931 = vsel %vm408, %v4000, 0
      %v5933 = vsel %vm408, %v4001, 0
      %v5935 = vsel %vm408, %v4002, 0
      %v5937 = vsel %vm408, %v4003, 0
      %v5939 = vsel %vm408, %v4004, 0
      %v5941 = vsel %vm408, %v4005, 0
      %v5943 = vsel %vm408, %v4006, 0
      %v5945 = vsel %vm408, %v4007, 0
      %v5947 = vsel %vm408, %v4008, 0
      %v5949 = vsel %vm408, %v4009, 0
      %v5951 = vsel %vm408, %v4010, 0
      %v5953 = vsel %vm408, %v4011, 0
      %v5955 = vsel %vm408, %v4012, 0
      %v5957 = vsel %vm408, %v4013, 0
      %v5959 = vsel %vm408, %v4014, 0
      %v5961 = vsel %vm408, %v4021, 0
      %v5963 = vsel %vm408, %v4022, 0
      %v5965 = vsel %vm408, %v4023, 0
      %v5968 = vsel %vm408, %v4030, 0
      %v5971 = vsel %vm408, %v4031, 0
      %v5974 = vsel %vm408, %v4032, 0
      %5976 = vmatprep.subr.mxu0 %v5776
      %5977 = vmatpush1.xpose.msra.mxu0 %v5578
      %5978 = vmatprep.subr.mxu0 %v5775
      %5979 = vmatpush1.xpose.msra.mxu0 %v5577
      %5980 = vmatprep.subr.mxu0 %v5774
      %5981 = vmatpush1.xpose.msra.mxu0 %v5576
      %5982 = vmatprep.subr.mxu0 %v5773
      %5983 = vmatpush1.xpose.msra.mxu0 %v5575
      %5984 = vmatprep.subr.mxu0 %v5772
      %5985 = vmatpush1.xpose.msra.mxu0 %v5574
      %5986 = vmatprep.subr.mxu0 %v5771
      %5987 = vmatpush1.xpose.msra.mxu0 %v5573
      %5988 = vmatprep.subr.mxu0 %v5770
      %5989 = vmatpush1.xpose.msra.mxu0 %v5572
      %5990 = vmatprep.subr.mxu0 %v5769
      %5991 = vmatpush1.xpose.msra.mxu0 %v5571
      %5992 = vmatprep.subr.mxu0 %v5768
      %5993 = vmatpush1.xpose.msra.mxu0 %v5570
      %5994 = vmatprep.subr.mxu0 %v5767
      %5995 = vmatpush1.xpose.msra.mxu0 %v5569
      %5996 = vmatprep.subr.mxu0 %v5766
      %5997 = vmatpush1.xpose.msra.mxu0 %v5568
      %5998 = vmatprep.subr.mxu0 %v5765
      %5999 = vmatpush1.xpose.msra.mxu0 %v5567
      %6000 = vmatprep.subr.mxu0 %v5764
      %6001 = vmatpush1.xpose.msra.mxu0 %v5566
      %6002 = vmatprep.subr.mxu0 %v5763
      %6003 = vmatpush1.xpose.msra.mxu0 %v5565
      %6004 = vmatprep.subr.mxu0 %v5762
      %6005 = vmatpush1.xpose.msra.mxu0 %v5564
      %6006 = vmatprep.subr.mxu0 %v5761
      %6007 = vmatpush1.xpose.msra.mxu0 %v5563
      %6008 = vmatprep.subr.mxu0 %v5792
      %6009 = vmatpush2.xpose.msra.mxu0 %v5594
      %6010 = vmatprep.subr.mxu0 %v5791
      %6011 = vmatpush2.xpose.msra.mxu0 %v5593
      %6012 = vmatprep.subr.mxu0 %v5790
      %6013 = vmatpush2.xpose.msra.mxu0 %v5592
      %6014 = vmatprep.subr.mxu0 %v5789
      %6015 = vmatpush2.xpose.msra.mxu0 %v5591
      %6016 = vmatprep.subr.mxu0 %v5788
      %6017 = vmatpush2.xpose.msra.mxu0 %v5590
      %6018 = vmatprep.subr.mxu0 %v5787
      %6019 = vmatpush2.xpose.msra.mxu0 %v5589
      %6020 = vmatprep.subr.mxu0 %v5786
      %6021 = vmatpush2.xpose.msra.mxu0 %v5588
      %6022 = vmatprep.subr.mxu0 %v5785
      %6023 = vmatpush2.xpose.msra.mxu0 %v5587
      %6024 = vmatprep.subr.mxu0 %v5784
      %6025 = vmatpush2.xpose.msra.mxu0 %v5586
      %6026 = vmatprep.subr.mxu0 %v5783
      %6027 = vmatpush2.xpose.msra.mxu0 %v5585
      %6028 = vmatprep.subr.mxu0 %v5782
      %6029 = vmatpush2.xpose.msra.mxu0 %v5584
      %6030 = vmatprep.subr.mxu0 %v5781
      %6031 = vmatpush2.xpose.msra.mxu0 %v5583
      %6032 = vmatprep.subr.mxu0 %v5780
      %6033 = vmatpush2.xpose.msra.mxu0 %v5582
      %6034 = vmatprep.subr.mxu0 %v5779
      %6035 = vmatpush2.xpose.msra.mxu0 %v5581
      %6036 = vmatprep.subr.mxu0 %v5778
      %6037 = vmatpush2.xpose.msra.mxu0 %v5580
      %6038 = vmatprep.subr.mxu0 %v5777
      %6039 = vmatpush2.xpose.msra.mxu0 %v5579
      %6040 = vmatprep.mubr.f32.mxu0 %v5837
      %6041 = vmatmul.mubr.f32.gmra.mxu0 %v5827
      %v6042 = vpop.f32.mrf.mxu0
      %v6043 = vadd.f32 %v5833, %v6042
      %v6044 = vpop.f32.mrf.mxu0
      %v6045 = vadd.f32 %v5833, %v6044
      %6046 = vdwg.mxu0
      %6047 = vmatprep.subr.mxu0 0.0
      %6048 = vmatpush1.xpose.msra.mxu0 %v5871
      %6049 = vmatprep.subr.mxu0 0.0
      %6050 = vmatpush1.xpose.msra.mxu0 %v5869
      %6051 = vmatprep.subr.mxu0 0.0
      %6052 = vmatpush1.xpose.msra.mxu0 %v5867
      %6053 = vmatprep.subr.mxu0 0.0
      %6054 = vmatpush1.xpose.msra.mxu0 %v5865
      %6055 = vmatprep.subr.mxu0 0.0
      %6056 = vmatpush1.xpose.msra.mxu0 %v5863
      %6057 = vmatprep.subr.mxu0 0.0
      %6058 = vmatpush1.xpose.msra.mxu0 %v5861
      %6059 = vmatprep.subr.mxu0 0.0
      %6060 = vmatpush1.xpose.msra.mxu0 %v5859
      %6061 = vmatprep.subr.mxu0 0.0
      %6062 = vmatpush1.xpose.msra.mxu0 %v5857
      %6063 = vmatprep.subr.mxu0 0.0
      %6064 = vmatpush1.xpose.msra.mxu0 %v5855
      %6065 = vmatprep.subr.mxu0 0.0
      %6066 = vmatpush1.xpose.msra.mxu0 %v5853
      %6067 = vmatprep.subr.mxu0 0.0
      %6068 = vmatpush1.xpose.msra.mxu0 %v5851
      %6069 = vmatprep.subr.mxu0 0.0
      %6070 = vmatpush1.xpose.msra.mxu0 %v5849
      %6071 = vmatprep.subr.mxu0 0.0
      %6072 = vmatpush1.xpose.msra.mxu0 %v5847
      %6073 = vmatprep.subr.mxu0 0.0
      %6074 = vmatpush1.xpose.msra.mxu0 %v5845
      %6075 = vmatprep.subr.mxu0 0.0
      %6076 = vmatpush1.xpose.msra.mxu0 %v5843
      %6077 = vmatprep.subr.mxu0 0.0
      %6078 = vmatpush1.xpose.msra.mxu0 %v5841
      %6079 = vmatprep.subr.mxu0 0.0
      %6080 = vmatpush2.xpose.msra.mxu0 %v5903
      %6081 = vmatprep.subr.mxu0 0.0
      %6082 = vmatpush2.xpose.msra.mxu0 %v5901
      %6083 = vmatprep.subr.mxu0 0.0
      %6084 = vmatpush2.xpose.msra.mxu0 %v5899
      %6085 = vmatprep.subr.mxu0 0.0
      %6086 = vmatpush2.xpose.msra.mxu0 %v5897
      %6087 = vmatprep.subr.mxu0 0.0
      %6088 = vmatpush2.xpose.msra.mxu0 %v5895
      %6089 = vmatprep.subr.mxu0 0.0
      %6090 = vmatpush2.xpose.msra.mxu0 %v5893
      %6091 = vmatprep.subr.mxu0 0.0
      %6092 = vmatpush2.xpose.msra.mxu0 %v5891
      %6093 = vmatprep.subr.mxu0 0.0
      %6094 = vmatpush2.xpose.msra.mxu0 %v5889
      %6095 = vmatprep.subr.mxu0 0.0
      %6096 = vmatpush2.xpose.msra.mxu0 %v5887
      %6097 = vmatprep.subr.mxu0 0.0
      %6098 = vmatpush2.xpose.msra.mxu0 %v5885
      %6099 = vmatprep.subr.mxu0 0.0
      %6100 = vmatpush2.xpose.msra.mxu0 %v5883
      %6101 = vmatprep.subr.mxu0 0.0
      %6102 = vmatpush2.xpose.msra.mxu0 %v5881
      %6103 = vmatprep.subr.mxu0 0.0
      %6104 = vmatpush2.xpose.msra.mxu0 %v5879
      %6105 = vmatprep.subr.mxu0 0.0
      %6106 = vmatpush2.xpose.msra.mxu0 %v5877
      %6107 = vmatprep.subr.mxu0 0.0
      %6108 = vmatpush2.xpose.msra.mxu0 %v5875
      %6109 = vmatprep.subr.mxu0 0.0
      %6110 = vmatpush2.xpose.msra.mxu0 %v5873
      %6111 = vmatprep.mubr.f32.mxu0 0.0
      %6112 = vmatmul.mubr.f32.gmra.mxu0 %v5839
      %v6113 = vpop.f32.mrf.mxu0
      %v6114 = vadd.f32 %v6043, %v6113
      %v6115 = vpop.f32.mrf.mxu0
      %v6116 = vadd.f32 %v6045, %v6115
      %6117 = vdwg.mxu0
      %6118 = vmatprep.subr.mxu0 %v5808
      %6119 = vmatpush1.xpose.msra.mxu0 %v5610
      %6120 = vmatprep.subr.mxu0 %v5807
      %6121 = vmatpush1.xpose.msra.mxu0 %v5609
      %6122 = vmatprep.subr.mxu0 %v5806
      %6123 = vmatpush1.xpose.msra.mxu0 %v5608
      %6124 = vmatprep.subr.mxu0 %v5805
      %6125 = vmatpush1.xpose.msra.mxu0 %v5607
      %6126 = vmatprep.subr.mxu0 %v5804
      %6127 = vmatpush1.xpose.msra.mxu0 %v5606
      %6128 = vmatprep.subr.mxu0 %v5803
      %6129 = vmatpush1.xpose.msra.mxu0 %v5605
      %6130 = vmatprep.subr.mxu0 %v5802
      %6131 = vmatpush1.xpose.msra.mxu0 %v5604
      %6132 = vmatprep.subr.mxu0 %v5801
      %6133 = vmatpush1.xpose.msra.mxu0 %v5603
      %6134 = vmatprep.subr.mxu0 %v5800
      %6135 = vmatpush1.xpose.msra.mxu0 %v5602
      %6136 = vmatprep.subr.mxu0 %v5799
      %6137 = vmatpush1.xpose.msra.mxu0 %v5601
      %6138 = vmatprep.subr.mxu0 %v5798
      %6139 = vmatpush1.xpose.msra.mxu0 %v5600
      %6140 = vmatprep.subr.mxu0 %v5797
      %6141 = vmatpush1.xpose.msra.mxu0 %v5599
      %6142 = vmatprep.subr.mxu0 %v5796
      %6143 = vmatpush1.xpose.msra.mxu0 %v5598
      %6144 = vmatprep.subr.mxu0 %v5795
      %6145 = vmatpush1.xpose.msra.mxu0 %v5597
      %6146 = vmatprep.subr.mxu0 %v5794
      %6147 = vmatpush1.xpose.msra.mxu0 %v5596
      %6148 = vmatprep.subr.mxu0 %v5793
      %6149 = vmatpush1.xpose.msra.mxu0 %v5595
      %6150 = vmatprep.subr.mxu0 %v5824
      %6151 = vmatpush2.xpose.msra.mxu0 %v5626
      %6152 = vmatprep.subr.mxu0 %v5823
      %6153 = vmatpush2.xpose.msra.mxu0 %v5625
      %6154 = vmatprep.subr.mxu0 %v5822
      %6155 = vmatpush2.xpose.msra.mxu0 %v5624
      %6156 = vmatprep.subr.mxu0 %v5821
      %6157 = vmatpush2.xpose.msra.mxu0 %v5623
      %6158 = vmatprep.subr.mxu0 %v5820
      %6159 = vmatpush2.xpose.msra.mxu0 %v5622
      %6160 = vmatprep.subr.mxu0 %v5819
      %6161 = vmatpush2.xpose.msra.mxu0 %v5621
      %6162 = vmatprep.subr.mxu0 %v5818
      %6163 = vmatpush2.xpose.msra.mxu0 %v5620
      %6164 = vmatprep.subr.mxu0 %v5817
      %6165 = vmatpush2.xpose.msra.mxu0 %v5619
      %6166 = vmatprep.subr.mxu0 %v5816
      %6167 = vmatpush2.xpose.msra.mxu0 %v5618
      %6168 = vmatprep.subr.mxu0 %v5815
      %6169 = vmatpush2.xpose.msra.mxu0 %v5617
      %6170 = vmatprep.subr.mxu0 %v5814
      %6171 = vmatpush2.xpose.msra.mxu0 %v5616
      %6172 = vmatprep.subr.mxu0 %v5813
      %6173 = vmatpush2.xpose.msra.mxu0 %v5615
      %6174 = vmatprep.subr.mxu0 %v5812
      %6175 = vmatpush2.xpose.msra.mxu0 %v5614
      %6176 = vmatprep.subr.mxu0 %v5811
      %6177 = vmatpush2.xpose.msra.mxu0 %v5613
      %6178 = vmatprep.subr.mxu0 %v5810
      %6179 = vmatpush2.xpose.msra.mxu0 %v5612
      %6180 = vmatprep.subr.mxu0 %v5809
      %6181 = vmatpush2.xpose.msra.mxu0 %v5611
      %6182 = vmatprep.mubr.f32.mxu0 %v5837
      %6183 = vmatmul.mubr.f32.gmra.mxu0 %v5827
      %v6184 = vpop.f32.mrf.mxu0
      %v6185 = vadd.f32 %v5833, %v6184
      %v6186 = vpop.f32.mrf.mxu0
      %v6187 = vadd.f32 %v5833, %v6186
      %6188 = vdwg.mxu0
      %6189 = vmatprep.subr.mxu0 0.0
      %6190 = vmatpush1.xpose.msra.mxu0 %v5935
      %6191 = vmatprep.subr.mxu0 0.0
      %6192 = vmatpush1.xpose.msra.mxu0 %v5933
      %6193 = vmatprep.subr.mxu0 0.0
      %6194 = vmatpush1.xpose.msra.mxu0 %v5931
      %6195 = vmatprep.subr.mxu0 0.0
      %6196 = vmatpush1.xpose.msra.mxu0 %v5929
      %6197 = vmatprep.subr.mxu0 0.0
      %6198 = vmatpush1.xpose.msra.mxu0 %v5927
      %6199 = vmatprep.subr.mxu0 0.0
      %6200 = vmatpush1.xpose.msra.mxu0 %v5925
      %6201 = vmatprep.subr.mxu0 0.0
      %6202 = vmatpush1.xpose.msra.mxu0 %v5923
      %6203 = vmatprep.subr.mxu0 0.0
      %6204 = vmatpush1.xpose.msra.mxu0 %v5921
      %6205 = vmatprep.subr.mxu0 0.0
      %6206 = vmatpush1.xpose.msra.mxu0 %v5919
      %6207 = vmatprep.subr.mxu0 0.0
      %6208 = vmatpush1.xpose.msra.mxu0 %v5917
      %6209 = vmatprep.subr.mxu0 0.0
      %6210 = vmatpush1.xpose.msra.mxu0 %v5915
      %6211 = vmatprep.subr.mxu0 0.0
      %6212 = vmatpush1.xpose.msra.mxu0 %v5913
      %6213 = vmatprep.subr.mxu0 0.0
      %6214 = vmatpush1.xpose.msra.mxu0 %v5911
      %6215 = vmatprep.subr.mxu0 0.0
      %6216 = vmatpush1.xpose.msra.mxu0 %v5909
      %6217 = vmatprep.subr.mxu0 0.0
      %6218 = vmatpush1.xpose.msra.mxu0 %v5907
      %6219 = vmatprep.subr.mxu0 0.0
      %6220 = vmatpush1.xpose.msra.mxu0 %v5905
      %6221 = vmatprep.subr.mxu0 0.0
      %6222 = vmatpush2.xpose.msra.mxu0 %v5968
      %6223 = vmatprep.subr.mxu0 0.0
      %6224 = vmatpush2.xpose.msra.mxu0 %v5965
      %6225 = vmatprep.subr.mxu0 0.0
      %6226 = vmatpush2.xpose.msra.mxu0 %v5963
      %6227 = vmatprep.subr.mxu0 0.0
      %6228 = vmatpush2.xpose.msra.mxu0 %v5961
      %6229 = vmatprep.subr.mxu0 0.0
      %6230 = vmatpush2.xpose.msra.mxu0 %v5959
      %6231 = vmatprep.subr.mxu0 0.0
      %6232 = vmatpush2.xpose.msra.mxu0 %v5957
      %6233 = vmatprep.subr.mxu0 0.0
      %6234 = vmatpush2.xpose.msra.mxu0 %v5955
      %6235 = vmatprep.subr.mxu0 0.0
      %6236 = vmatpush2.xpose.msra.mxu0 %v5953
      %6237 = vmatprep.subr.mxu0 0.0
      %6238 = vmatpush2.xpose.msra.mxu0 %v5951
      %6239 = vmatprep.subr.mxu0 0.0
      %6240 = vmatpush2.xpose.msra.mxu0 %v5949
      %6241 = vmatprep.subr.mxu0 0.0
      %6242 = vmatpush2.xpose.msra.mxu0 %v5947
      %6243 = vmatprep.subr.mxu0 0.0
      %6244 = vmatpush2.xpose.msra.mxu0 %v5945
      %6245 = vmatprep.subr.mxu0 0.0
      %6246 = vmatpush2.xpose.msra.mxu0 %v5943
      %6247 = vmatprep.subr.mxu0 0.0
      %6248 = vmatpush2.xpose.msra.mxu0 %v5941
      %6249 = vmatprep.subr.mxu0 0.0
      %6250 = vmatpush2.xpose.msra.mxu0 %v5939
      %6251 = vmatprep.subr.mxu0 0.0
      %6252 = vmatpush2.xpose.msra.mxu0 %v5937
      %6253 = vmatprep.mubr.f32.mxu0 0.0
      %6254 = vmatmul.mubr.f32.gmra.mxu0 %v5839
      %v6255 = vpop.f32.mrf.mxu0
      %v6256 = vadd.f32 %v6185, %v6255
      %v6257 = vpop.f32.mrf.mxu0
      %v6258 = vadd.f32 %v6187, %v6257
      %6259 = vdwg.mxu0
      %6260 = vmatprep.subr.mxu0 0.0
      %6261 = vmatpush1.xpose.msra.mxu0 0.0
      %6262 = vmatprep.subr.mxu0 0.0
      %6263 = vmatpush1.xpose.msra.mxu0 0.0
      %6264 = vmatprep.subr.mxu0 0.0
      %6265 = vmatpush1.xpose.msra.mxu0 0.0
      %6266 = vmatprep.subr.mxu0 0.0
      %6267 = vmatpush1.xpose.msra.mxu0 0.0
      %6268 = vmatprep.subr.mxu0 0.0
      %6269 = vmatpush1.xpose.msra.mxu0 0.0
      %6270 = vmatprep.subr.mxu0 0.0
      %6271 = vmatpush1.xpose.msra.mxu0 0.0
      %6272 = vmatprep.subr.mxu0 0.0
      %6273 = vmatpush1.xpose.msra.mxu0 0.0
      %6274 = vmatprep.subr.mxu0 0.0
      %6275 = vmatpush1.xpose.msra.mxu0 0.0
      %6276 = vmatprep.subr.mxu0 0.0
      %6277 = vmatpush1.xpose.msra.mxu0 0.0
      %6278 = vmatprep.subr.mxu0 0.0
      %6279 = vmatpush1.xpose.msra.mxu0 0.0
      %6280 = vmatprep.subr.mxu0 0.0
      %6281 = vmatpush1.xpose.msra.mxu0 0.0
      %6282 = vmatprep.subr.mxu0 0.0
      %6283 = vmatpush1.xpose.msra.mxu0 0.0
      %6284 = vmatprep.subr.mxu0 0.0
      %6285 = vmatpush1.xpose.msra.mxu0 0.0
      %6286 = vmatprep.subr.mxu0 0.0
      %6287 = vmatpush1.xpose.msra.mxu0 0.0
      %6288 = vmatprep.subr.mxu0 %v5826
      %6289 = vmatpush1.xpose.msra.mxu0 %v5628
      %6290 = vmatprep.subr.mxu0 %v5825
      %6291 = vmatpush1.xpose.msra.mxu0 %v5627
      %6292 = vmatprep.subr.mxu0 0.0
      %6293 = vmatpush2.xpose.msra.mxu0 0.0
      %6294 = vmatprep.subr.mxu0 0.0
      %6295 = vmatpush2.xpose.msra.mxu0 0.0
      %6296 = vmatprep.subr.mxu0 0.0
      %6297 = vmatpush2.xpose.msra.mxu0 0.0
      %6298 = vmatprep.subr.mxu0 0.0
      %6299 = vmatpush2.xpose.msra.mxu0 0.0
      %6300 = vmatprep.subr.mxu0 0.0
      %6301 = vmatpush2.xpose.msra.mxu0 0.0
      %6302 = vmatprep.subr.mxu0 0.0
      %6303 = vmatpush2.xpose.msra.mxu0 0.0
      %6304 = vmatprep.subr.mxu0 0.0
      %6305 = vmatpush2.xpose.msra.mxu0 0.0
      %6306 = vmatprep.subr.mxu0 0.0
      %6307 = vmatpush2.xpose.msra.mxu0 0.0
      %6308 = vmatprep.subr.mxu0 0.0
      %6309 = vmatpush2.xpose.msra.mxu0 0.0
      %6310 = vmatprep.subr.mxu0 0.0
      %6311 = vmatpush2.xpose.msra.mxu0 0.0
      %6312 = vmatprep.subr.mxu0 0.0
      %6313 = vmatpush2.xpose.msra.mxu0 0.0
      %6314 = vmatprep.subr.mxu0 0.0
      %6315 = vmatpush2.xpose.msra.mxu0 0.0
      %6316 = vmatprep.subr.mxu0 0.0
      %6317 = vmatpush2.xpose.msra.mxu0 0.0
      %6318 = vmatprep.subr.mxu0 0.0
      %6319 = vmatpush2.xpose.msra.mxu0 0.0
      %6320 = vmatprep.subr.mxu0 0.0
      %6321 = vmatpush2.xpose.msra.mxu0 0.0
      %6322 = vmatprep.subr.mxu0 0.0
      %6323 = vmatpush2.xpose.msra.mxu0 0.0
      %6324 = vmatprep.mubr.f32.mxu0 %v5837
      %6325 = vmatmul.mubr.f32.gmra.mxu0 %v5827
      %v6326 = vpop.f32.mrf.mxu0
      %v6327 = vadd.f32 %v5833, %v6326
      %v6328 = vpop.f32.mrf.mxu0
      %6329 = vdwg.mxu0
      %6330 = vmatprep.subr.mxu0 0.0
      %6331 = vmatpush1.xpose.msra.mxu0 0.0
      %6332 = vmatprep.subr.mxu0 0.0
      %6333 = vmatpush1.xpose.msra.mxu0 0.0
      %6334 = vmatprep.subr.mxu0 0.0
      %6335 = vmatpush1.xpose.msra.mxu0 0.0
      %6336 = vmatprep.subr.mxu0 0.0
      %6337 = vmatpush1.xpose.msra.mxu0 0.0
      %6338 = vmatprep.subr.mxu0 0.0
      %6339 = vmatpush1.xpose.msra.mxu0 0.0
      %6340 = vmatprep.subr.mxu0 0.0
      %6341 = vmatpush1.xpose.msra.mxu0 0.0
      %6342 = vmatprep.subr.mxu0 0.0
      %6343 = vmatpush1.xpose.msra.mxu0 0.0
      %6344 = vmatprep.subr.mxu0 0.0
      %6345 = vmatpush1.xpose.msra.mxu0 0.0
      %6346 = vmatprep.subr.mxu0 0.0
      %6347 = vmatpush1.xpose.msra.mxu0 0.0
      %6348 = vmatprep.subr.mxu0 0.0
      %6349 = vmatpush1.xpose.msra.mxu0 0.0
      %6350 = vmatprep.subr.mxu0 0.0
      %6351 = vmatpush1.xpose.msra.mxu0 0.0
      %6352 = vmatprep.subr.mxu0 0.0
      %6353 = vmatpush1.xpose.msra.mxu0 0.0
      %6354 = vmatprep.subr.mxu0 0.0
      %6355 = vmatpush1.xpose.msra.mxu0 0.0
      %6356 = vmatprep.subr.mxu0 0.0
      %6357 = vmatpush1.xpose.msra.mxu0 0.0
      %6358 = vmatprep.subr.mxu0 0.0
      %6359 = vmatpush1.xpose.msra.mxu0 %v5974
      %6360 = vmatprep.subr.mxu0 0.0
      %6361 = vmatpush1.xpose.msra.mxu0 %v5971
      %6362 = vmatprep.subr.mxu0 0.0
      %6363 = vmatpush2.xpose.msra.mxu0 0.0
      %6364 = vmatprep.subr.mxu0 0.0
      %6365 = vmatpush2.xpose.msra.mxu0 0.0
      %6366 = vmatprep.subr.mxu0 0.0
      %6367 = vmatpush2.xpose.msra.mxu0 0.0
      %6368 = vmatprep.subr.mxu0 0.0
      %6369 = vmatpush2.xpose.msra.mxu0 0.0
      %6370 = vmatprep.subr.mxu0 0.0
      %6371 = vmatpush2.xpose.msra.mxu0 0.0
      %6372 = vmatprep.subr.mxu0 0.0
      %6373 = vmatpush2.xpose.msra.mxu0 0.0
      %6374 = vmatprep.subr.mxu0 0.0
      %6375 = vmatpush2.xpose.msra.mxu0 0.0
      %6376 = vmatprep.subr.mxu0 0.0
      %6377 = vmatpush2.xpose.msra.mxu0 0.0
      %6378 = vmatprep.subr.mxu0 0.0
      %6379 = vmatpush2.xpose.msra.mxu0 0.0
      %6380 = vmatprep.subr.mxu0 0.0
      %6381 = vmatpush2.xpose.msra.mxu0 0.0
      %6382 = vmatprep.subr.mxu0 0.0
      %6383 = vmatpush2.xpose.msra.mxu0 0.0
      %6384 = vmatprep.subr.mxu0 0.0
      %6385 = vmatpush2.xpose.msra.mxu0 0.0
      %6386 = vmatprep.subr.mxu0 0.0
      %6387 = vmatpush2.xpose.msra.mxu0 0.0
      %6388 = vmatprep.subr.mxu0 0.0
      %6389 = vmatpush2.xpose.msra.mxu0 0.0
      %6390 = vmatprep.subr.mxu0 0.0
      %6391 = vmatpush2.xpose.msra.mxu0 0.0
      %6392 = vmatprep.subr.mxu0 0.0
      %6393 = vmatpush2.xpose.msra.mxu0 0.0
      %6394 = vmatprep.mubr.f32.mxu0 0.0
      %6395 = vmatmul.mubr.f32.gmra.mxu0 %v5839
      %v6396 = vpop.f32.mrf.mxu0
      %v6397 = vadd.f32 %v6327, %v6396
      %v6398 = vpop.f32.mrf.mxu0
      %6399 = vdwg.mxu0
      %v6402 = vunpack.c.l.s4 1966171168
      %v6403 = vunpack.c.0.s8 %v6402
      %v6404 = vlaneseq
      %v6405 = vshrl.u32 %v6404, 7
      %v6406 = vsub.s32 %v6403, %v6405
      %v6407 = vrot.slane %v6114, %v6406
      %v6408 = vcombine.high %v6407, %v6407
      %v6410 = vunpack.c.l.s4 1966171168
      %v6411 = vunpack.c.0.s8 %v6410
      %v6412 = vlaneseq
      %v6413 = vshrl.u32 %v6412, 7
      %v6414 = vsub.s32 %v6411, %v6413
      %v6415 = vrot.slane %v6407, %v6414
      %v6417 = vunpack.c.l.s4 1966171168
      %v6418 = vunpack.c.0.s8 %v6417
      %v6419 = vlaneseq
      %v6420 = vshrl.u32 %v6419, 7
      %v6421 = vsub.s32 %v6418, %v6420
      %v6422 = vrot.slane %v6408, %v6421
      %v6423 = vcombine.high %v6415, %v6415
      %vm6427 = vcmask 172032
      %6428 = vst.msk [vmem:[%s407] sm:$0x1] %vm6427, %v6415
      %6429 = vst.msk [vmem:[%s407 + $0x18] sm:$0x1] %vm6427, %v6422
      %6430 = vst.msk [vmem:[%s407 + $0x30] sm:$0x1] %vm6427, %v6423
      %v6431 = vlaneseq
      %v6432 = vshrl.u32 %v6431, 7
      %v6433 = vsub.s32 0, %v6432
      %v6434 = vrot.slane %v6415, %v6433
      %v6435 = vlaneseq
      %v6436 = vshrl.u32 %v6435, 7
      %v6437 = vsub.s32 0, %v6436
      %v6438 = vrot.slane %v6422, %v6437
      %v6439 = vlaneseq
      %v6440 = vshrl.u32 %v6439, 7
      %v6441 = vsub.s32 0, %v6440
      %v6442 = vrot.slane %v6423, %v6441
      %6443 = vrot.lane.b32.xlu0 %v6434, 104
      %v6444 = vpop.permute.xlu0 %6443
      %6445 = vrot.lane.b32.xlu0 %v6438, 104
      %v6446 = vpop.permute.xlu0 %6445
      %6447 = vrot.lane.b32.xlu0 %v6442, 104
      %v6448 = vpop.permute.xlu0 %6447
      %6452 = vst.msk [vmem:[%s407 + $0x1] sm:$0x1] %vm6427, %v6444
      %6453 = vst.msk [vmem:[%s407 + $0x19] sm:$0x1] %vm6427, %v6446
      %6454 = vst.msk [vmem:[%s407 + $0x31] sm:$0x1] %vm6427, %v6448
      %6455 = vrot.lane.b32.xlu0 %v6434, 80
      %v6456 = vpop.permute.xlu0 %6455
      %6457 = vrot.lane.b32.xlu0 %v6438, 80
      %v6458 = vpop.permute.xlu0 %6457
      %6459 = vrot.lane.b32.xlu0 %v6442, 80
      %v6460 = vpop.permute.xlu0 %6459
      %6464 = vst.msk [vmem:[%s407 + $0x2] sm:$0x1] %vm6427, %v6456
      %6465 = vst.msk [vmem:[%s407 + $0x1a] sm:$0x1] %vm6427, %v6458
      %6466 = vst.msk [vmem:[%s407 + $0x32] sm:$0x1] %vm6427, %v6460
      %6467 = vrot.lane.b32.xlu0 %v6434, 56
      %v6468 = vpop.permute.xlu0 %6467
      %6469 = vrot.lane.b32.xlu0 %v6438, 56
      %v6470 = vpop.permute.xlu0 %6469
      %6471 = vrot.lane.b32.xlu0 %v6442, 56
      %v6472 = vpop.permute.xlu0 %6471
      %6476 = vst.msk [vmem:[%s407 + $0x3] sm:$0x1] %vm6427, %v6468
      %6477 = vst.msk [vmem:[%s407 + $0x1b] sm:$0x1] %vm6427, %v6470
      %6478 = vst.msk [vmem:[%s407 + $0x33] sm:$0x1] %vm6427, %v6472
      %6479 = vrot.lane.b32.xlu0 %v6434, 32
      %v6480 = vpop.permute.xlu0 %6479
      %6481 = vrot.lane.b32.xlu0 %v6438, 32
      %v6482 = vpop.permute.xlu0 %6481
      %6483 = vrot.lane.b32.xlu0 %v6442, 32
      %v6484 = vpop.permute.xlu0 %6483
      %6488 = vst.msk [vmem:[%s407 + $0x4] sm:$0x1] %vm6427, %v6480
      %6489 = vst.msk [vmem:[%s407 + $0x1c] sm:$0x1] %vm6427, %v6482
      %6490 = vst.msk [vmem:[%s407 + $0x34] sm:$0x1] %vm6427, %v6484
      %v6492 = vcombine.low %v6114, %v6116
      %v6494 = vunpack.c.l.s4 1966171168
      %v6495 = vunpack.c.0.s8 %v6494
      %v6496 = vlaneseq
      %v6497 = vshrl.u32 %v6496, 7
      %v6498 = vsub.s32 %v6495, %v6497
      %v6499 = vrot.slane %v6492, %v6498
      %v6500 = vcombine.high %v6499, %v6499
      %v6502 = vunpack.c.l.s4 1966171168
      %v6503 = vunpack.c.0.s8 %v6502
      %v6504 = vlaneseq
      %v6505 = vshrl.u32 %v6504, 7
      %v6506 = vsub.s32 %v6503, %v6505
      %v6507 = vrot.slane %v6499, %v6506
      %v6509 = vunpack.c.l.s4 1966171168
      %v6510 = vunpack.c.0.s8 %v6509
      %v6511 = vlaneseq
      %v6512 = vshrl.u32 %v6511, 7
      %v6513 = vsub.s32 %v6510, %v6512
      %v6514 = vrot.slane %v6500, %v6513
      %v6515 = vcombine.high %v6507, %v6507
      %v6516 = vlaneseq
      %v6517 = vshrl.u32 %v6516, 7
      %v6518 = vsub.s32 0, %v6517
      %v6519 = vrot.slane %v6507, %v6518
      %v6520 = vlaneseq
      %v6521 = vshrl.u32 %v6520, 7
      %v6522 = vsub.s32 1, %v6521
      %v6523 = vrot.slane %v6507, %v6522
      %v6524 = vlaneseq
      %v6525 = vshrl.u32 %v6524, 7
      %v6526 = vsub.s32 0, %v6525
      %v6527 = vrot.slane %v6514, %v6526
      %v6528 = vlaneseq
      %v6529 = vshrl.u32 %v6528, 7
      %v6530 = vsub.s32 1, %v6529
      %v6531 = vrot.slane %v6514, %v6530
      %v6532 = vlaneseq
      %v6533 = vshrl.u32 %v6532, 7
      %v6534 = vsub.s32 0, %v6533
      %v6535 = vrot.slane %v6515, %v6534
      %v6536 = vlaneseq
      %v6537 = vshrl.u32 %v6536, 7
      %v6538 = vsub.s32 1, %v6537
      %v6539 = vrot.slane %v6515, %v6538
      %6540 = vrot.lane.b32.xlu0 %v6519, 8
      %v6541 = vpop.permute.xlu0 %6540
      %6542 = vrot.lane.b32.xlu0 %v6523, 8
      %v6543 = vpop.permute.xlu0 %6542
      %6544 = vrot.lane.b32.xlu0 %v6527, 8
      %v6545 = vpop.permute.xlu0 %6544
      %6546 = vrot.lane.b32.xlu0 %v6531, 8
      %v6547 = vpop.permute.xlu0 %6546
      %6548 = vrot.lane.b32.xlu0 %v6535, 8
      %v6549 = vpop.permute.xlu0 %6548
      %6550 = vrot.lane.b32.xlu0 %v6539, 8
      %v6551 = vpop.permute.xlu0 %6550
      %vm6552 = vcmask 64512
      %v6553 = vsel %vm6552, %v6541, %v6543
      %v6554 = vsel %vm6552, %v6545, %v6547
      %v6555 = vsel %vm6552, %v6549, %v6551
      %6559 = vst.msk [vmem:[%s407 + $0x5] sm:$0x1] %vm6427, %v6553
      %6560 = vst.msk [vmem:[%s407 + $0x1d] sm:$0x1] %vm6427, %v6554
      %6561 = vst.msk [vmem:[%s407 + $0x35] sm:$0x1] %vm6427, %v6555
      %v6563 = vunpack.c.l.s4 1966171168
      %v6564 = vunpack.c.0.s8 %v6563
      %v6565 = vlaneseq
      %v6566 = vshrl.u32 %v6565, 7
      %v6567 = vsub.s32 %v6564, %v6566
      %v6568 = vrot.slane %v6116, %v6567
      %v6569 = vcombine.high %v6568, %v6568
      %v6571 = vunpack.c.l.s4 1966171168
      %v6572 = vunpack.c.0.s8 %v6571
      %v6573 = vlaneseq
      %v6574 = vshrl.u32 %v6573, 7
      %v6575 = vsub.s32 %v6572, %v6574
      %v6576 = vrot.slane %v6568, %v6575
      %v6578 = vunpack.c.l.s4 1966171168
      %v6579 = vunpack.c.0.s8 %v6578
      %v6580 = vlaneseq
      %v6581 = vshrl.u32 %v6580, 7
      %v6582 = vsub.s32 %v6579, %v6581
      %v6583 = vrot.slane %v6569, %v6582
      %v6584 = vcombine.high %v6576, %v6576
      %v6585 = vlaneseq
      %v6586 = vshrl.u32 %v6585, 7
      %v6587 = vsub.s32 0, %v6586
      %v6588 = vrot.slane %v6576, %v6587
      %v6589 = vlaneseq
      %v6590 = vshrl.u32 %v6589, 7
      %v6591 = vsub.s32 0, %v6590
      %v6592 = vrot.slane %v6583, %v6591
      %v6593 = vlaneseq
      %v6594 = vshrl.u32 %v6593, 7
      %v6595 = vsub.s32 0, %v6594
      %v6596 = vrot.slane %v6584, %v6595
      %6597 = vrot.lane.b32.xlu0 %v6588, 112
      %v6598 = vpop.permute.xlu0 %6597
      %6599 = vrot.lane.b32.xlu0 %v6592, 112
      %v6600 = vpop.permute.xlu0 %6599
      %6601 = vrot.lane.b32.xlu0 %v6596, 112
      %v6602 = vpop.permute.xlu0 %6601
      %6606 = vst.msk [vmem:[%s407 + $0x6] sm:$0x1] %vm6427, %v6598
      %6607 = vst.msk [vmem:[%s407 + $0x1e] sm:$0x1] %vm6427, %v6600
      %6608 = vst.msk [vmem:[%s407 + $0x36] sm:$0x1] %vm6427, %v6602
      %6609 = vrot.lane.b32.xlu0 %v6588, 88
      %v6610 = vpop.permute.xlu0 %6609
      %6611 = vrot.lane.b32.xlu0 %v6592, 88
      %v6612 = vpop.permute.xlu0 %6611
      %6613 = vrot.lane.b32.xlu0 %v6596, 88
      %v6614 = vpop.permute.xlu0 %6613
      %6618 = vst.msk [vmem:[%s407 + $0x7] sm:$0x1] %vm6427, %v6610
      %6619 = vst.msk [vmem:[%s407 + $0x1f] sm:$0x1] %vm6427, %v6612
      %6620 = vst.msk [vmem:[%s407 + $0x37] sm:$0x1] %vm6427, %v6614
      %6621 = vrot.lane.b32.xlu0 %v6588, 64
      %v6622 = vpop.permute.xlu0 %6621
      %6623 = vrot.lane.b32.xlu0 %v6592, 64
      %v6624 = vpop.permute.xlu0 %6623
      %6625 = vrot.lane.b32.xlu0 %v6596, 64
      %v6626 = vpop.permute.xlu0 %6625
      %6630 = vst.msk [vmem:[%s407 + $0x8] sm:$0x1] %vm6427, %v6622
      %6631 = vst.msk [vmem:[%s407 + $0x20] sm:$0x1] %vm6427, %v6624
      %6632 = vst.msk [vmem:[%s407 + $0x38] sm:$0x1] %vm6427, %v6626
      %6633 = vrot.lane.b32.xlu0 %v6588, 40
      %v6634 = vpop.permute.xlu0 %6633
      %6635 = vrot.lane.b32.xlu0 %v6592, 40
      %v6636 = vpop.permute.xlu0 %6635
      %6637 = vrot.lane.b32.xlu0 %v6596, 40
      %v6638 = vpop.permute.xlu0 %6637
      %6642 = vst.msk [vmem:[%s407 + $0x9] sm:$0x1] %vm6427, %v6634
      %6643 = vst.msk [vmem:[%s407 + $0x21] sm:$0x1] %vm6427, %v6636
      %6644 = vst.msk [vmem:[%s407 + $0x39] sm:$0x1] %vm6427, %v6638
      %v6646 = vcombine.low %v6116, %v6256
      %v6648 = vunpack.c.l.s4 1966171168
      %v6649 = vunpack.c.0.s8 %v6648
      %v6650 = vlaneseq
      %v6651 = vshrl.u32 %v6650, 7
      %v6652 = vsub.s32 %v6649, %v6651
      %v6653 = vrot.slane %v6646, %v6652
      %v6654 = vcombine.high %v6653, %v6653
      %v6656 = vunpack.c.l.s4 1966171168
      %v6657 = vunpack.c.0.s8 %v6656
      %v6658 = vlaneseq
      %v6659 = vshrl.u32 %v6658, 7
      %v6660 = vsub.s32 %v6657, %v6659
      %v6661 = vrot.slane %v6653, %v6660
      %v6663 = vunpack.c.l.s4 1966171168
      %v6664 = vunpack.c.0.s8 %v6663
      %v6665 = vlaneseq
      %v6666 = vshrl.u32 %v6665, 7
      %v6667 = vsub.s32 %v6664, %v6666
      %v6668 = vrot.slane %v6654, %v6667
      %v6669 = vcombine.high %v6661, %v6661
      %v6670 = vlaneseq
      %v6671 = vshrl.u32 %v6670, 7
      %v6672 = vsub.s32 0, %v6671
      %v6673 = vrot.slane %v6661, %v6672
      %v6674 = vlaneseq
      %v6675 = vshrl.u32 %v6674, 7
      %v6676 = vsub.s32 1, %v6675
      %v6677 = vrot.slane %v6661, %v6676
      %v6678 = vlaneseq
      %v6679 = vshrl.u32 %v6678, 7
      %v6680 = vsub.s32 0, %v6679
      %v6681 = vrot.slane %v6668, %v6680
      %v6682 = vlaneseq
      %v6683 = vshrl.u32 %v6682, 7
      %v6684 = vsub.s32 1, %v6683
      %v6685 = vrot.slane %v6668, %v6684
      %v6686 = vlaneseq
      %v6687 = vshrl.u32 %v6686, 7
      %v6688 = vsub.s32 0, %v6687
      %v6689 = vrot.slane %v6669, %v6688
      %v6690 = vlaneseq
      %v6691 = vshrl.u32 %v6690, 7
      %v6692 = vsub.s32 1, %v6691
      %v6693 = vrot.slane %v6669, %v6692
      %6694 = vrot.lane.b32.xlu0 %v6673, 16
      %v6695 = vpop.permute.xlu0 %6694
      %6696 = vrot.lane.b32.xlu0 %v6677, 16
      %v6697 = vpop.permute.xlu0 %6696
      %6698 = vrot.lane.b32.xlu0 %v6681, 16
      %v6699 = vpop.permute.xlu0 %6698
      %6700 = vrot.lane.b32.xlu0 %v6685, 16
      %v6701 = vpop.permute.xlu0 %6700
      %6702 = vrot.lane.b32.xlu0 %v6689, 16
      %v6703 = vpop.permute.xlu0 %6702
      %6704 = vrot.lane.b32.xlu0 %v6693, 16
      %v6705 = vpop.permute.xlu0 %6704
      %vm6706 = vcmask 130048
      %v6707 = vsel %vm6706, %v6695, %v6697
      %v6708 = vsel %vm6706, %v6699, %v6701
      %v6709 = vsel %vm6706, %v6703, %v6705
      %6713 = vst.msk [vmem:[%s407 + $0xa] sm:$0x1] %vm6427, %v6707
      %6714 = vst.msk [vmem:[%s407 + $0x22] sm:$0x1] %vm6427, %v6708
      %6715 = vst.msk [vmem:[%s407 + $0x3a] sm:$0x1] %vm6427, %v6709
      %v6717 = vunpack.c.l.s4 1966171168
      %v6718 = vunpack.c.0.s8 %v6717
      %v6719 = vlaneseq
      %v6720 = vshrl.u32 %v6719, 7
      %v6721 = vsub.s32 %v6718, %v6720
      %v6722 = vrot.slane %v6256, %v6721
      %v6723 = vcombine.high %v6722, %v6722
      %v6725 = vunpack.c.l.s4 1966171168
      %v6726 = vunpack.c.0.s8 %v6725
      %v6727 = vlaneseq
      %v6728 = vshrl.u32 %v6727, 7
      %v6729 = vsub.s32 %v6726, %v6728
      %v6730 = vrot.slane %v6722, %v6729
      %v6732 = vunpack.c.l.s4 1966171168
      %v6733 = vunpack.c.0.s8 %v6732
      %v6734 = vlaneseq
      %v6735 = vshrl.u32 %v6734, 7
      %v6736 = vsub.s32 %v6733, %v6735
      %v6737 = vrot.slane %v6723, %v6736
      %v6738 = vcombine.high %v6730, %v6730
      %v6739 = vlaneseq
      %v6740 = vshrl.u32 %v6739, 7
      %v6741 = vsub.s32 0, %v6740
      %v6742 = vrot.slane %v6730, %v6741
      %v6743 = vlaneseq
      %v6744 = vshrl.u32 %v6743, 7
      %v6745 = vsub.s32 0, %v6744
      %v6746 = vrot.slane %v6737, %v6745
      %v6747 = vlaneseq
      %v6748 = vshrl.u32 %v6747, 7
      %v6749 = vsub.s32 0, %v6748
      %v6750 = vrot.slane %v6738, %v6749
      %6751 = vrot.lane.b32.xlu0 %v6742, 120
      %v6752 = vpop.permute.xlu0 %6751
      %6753 = vrot.lane.b32.xlu0 %v6746, 120
      %v6754 = vpop.permute.xlu0 %6753
      %6755 = vrot.lane.b32.xlu0 %v6750, 120
      %v6756 = vpop.permute.xlu0 %6755
      %6760 = vst.msk [vmem:[%s407 + $0xb] sm:$0x1] %vm6427, %v6752
      %6761 = vst.msk [vmem:[%s407 + $0x23] sm:$0x1] %vm6427, %v6754
      %6762 = vst.msk [vmem:[%s407 + $0x3b] sm:$0x1] %vm6427, %v6756
      %6763 = vrot.lane.b32.xlu0 %v6742, 96
      %v6764 = vpop.permute.xlu0 %6763
      %6765 = vrot.lane.b32.xlu0 %v6746, 96
      %v6766 = vpop.permute.xlu0 %6765
      %6767 = vrot.lane.b32.xlu0 %v6750, 96
      %v6768 = vpop.permute.xlu0 %6767
      %6772 = vst.msk [vmem:[%s407 + $0xc] sm:$0x1] %vm6427, %v6764
      %6773 = vst.msk [vmem:[%s407 + $0x24] sm:$0x1] %vm6427, %v6766
      %6774 = vst.msk [vmem:[%s407 + $0x3c] sm:$0x1] %vm6427, %v6768
      %6775 = vrot.lane.b32.xlu0 %v6742, 72
      %v6776 = vpop.permute.xlu0 %6775
      %6777 = vrot.lane.b32.xlu0 %v6746, 72
      %v6778 = vpop.permute.xlu0 %6777
      %6779 = vrot.lane.b32.xlu0 %v6750, 72
      %v6780 = vpop.permute.xlu0 %6779
      %6784 = vst.msk [vmem:[%s407 + $0xd] sm:$0x1] %vm6427, %v6776
      %6785 = vst.msk [vmem:[%s407 + $0x25] sm:$0x1] %vm6427, %v6778
      %6786 = vst.msk [vmem:[%s407 + $0x3d] sm:$0x1] %vm6427, %v6780
      %6787 = vrot.lane.b32.xlu0 %v6742, 48
      %v6788 = vpop.permute.xlu0 %6787
      %6789 = vrot.lane.b32.xlu0 %v6746, 48
      %v6790 = vpop.permute.xlu0 %6789
      %6791 = vrot.lane.b32.xlu0 %v6750, 48
      %v6792 = vpop.permute.xlu0 %6791
      %6796 = vst.msk [vmem:[%s407 + $0xe] sm:$0x1] %vm6427, %v6788
      %6797 = vst.msk [vmem:[%s407 + $0x26] sm:$0x1] %vm6427, %v6790
      %6798 = vst.msk [vmem:[%s407 + $0x3e] sm:$0x1] %vm6427, %v6792
      %6799 = vrot.lane.b32.xlu0 %v6742, 24
      %v6800 = vpop.permute.xlu0 %6799
      %6801 = vrot.lane.b32.xlu0 %v6746, 24
      %v6802 = vpop.permute.xlu0 %6801
      %6803 = vrot.lane.b32.xlu0 %v6750, 24
      %v6804 = vpop.permute.xlu0 %6803
      %6808 = vst.msk [vmem:[%s407 + $0xf] sm:$0x1] %vm6427, %v6800
      %6809 = vst.msk [vmem:[%s407 + $0x27] sm:$0x1] %vm6427, %v6802
      %6810 = vst.msk [vmem:[%s407 + $0x3f] sm:$0x1] %vm6427, %v6804
      %v6813 = vunpack.c.l.s4 1966171168
      %v6814 = vunpack.c.0.s8 %v6813
      %v6815 = vlaneseq
      %v6816 = vshrl.u32 %v6815, 7
      %v6817 = vsub.s32 %v6814, %v6816
      %v6818 = vrot.slane %v6258, %v6817
      %v6819 = vcombine.high %v6818, %v6818
      %v6821 = vunpack.c.l.s4 1966171168
      %v6822 = vunpack.c.0.s8 %v6821
      %v6823 = vlaneseq
      %v6824 = vshrl.u32 %v6823, 7
      %v6825 = vsub.s32 %v6822, %v6824
      %v6826 = vrot.slane %v6818, %v6825
      %v6828 = vunpack.c.l.s4 1966171168
      %v6829 = vunpack.c.0.s8 %v6828
      %v6830 = vlaneseq
      %v6831 = vshrl.u32 %v6830, 7
      %v6832 = vsub.s32 %v6829, %v6831
      %v6833 = vrot.slane %v6819, %v6832
      %v6834 = vcombine.high %v6826, %v6826
      %6838 = vst.msk [vmem:[%s407 + $0x10] sm:$0x1] %vm6427, %v6826
      %6839 = vst.msk [vmem:[%s407 + $0x28] sm:$0x1] %vm6427, %v6833
      %6840 = vst.msk [vmem:[%s407 + $0x40] sm:$0x1] %vm6427, %v6834
      %v6841 = vlaneseq
      %v6842 = vshrl.u32 %v6841, 7
      %v6843 = vsub.s32 0, %v6842
      %v6844 = vrot.slane %v6826, %v6843
      %v6845 = vlaneseq
      %v6846 = vshrl.u32 %v6845, 7
      %v6847 = vsub.s32 0, %v6846
      %v6848 = vrot.slane %v6833, %v6847
      %v6849 = vlaneseq
      %v6850 = vshrl.u32 %v6849, 7
      %v6851 = vsub.s32 0, %v6850
      %v6852 = vrot.slane %v6834, %v6851
      %6853 = vrot.lane.b32.xlu0 %v6844, 104
      %v6854 = vpop.permute.xlu0 %6853
      %6855 = vrot.lane.b32.xlu0 %v6848, 104
      %v6856 = vpop.permute.xlu0 %6855
      %6857 = vrot.lane.b32.xlu0 %v6852, 104
      %v6858 = vpop.permute.xlu0 %6857
      %6862 = vst.msk [vmem:[%s407 + $0x11] sm:$0x1] %vm6427, %v6854
      %6863 = vst.msk [vmem:[%s407 + $0x29] sm:$0x1] %vm6427, %v6856
      %6864 = vst.msk [vmem:[%s407 + $0x41] sm:$0x1] %vm6427, %v6858
      %6865 = vrot.lane.b32.xlu0 %v6844, 80
      %v6866 = vpop.permute.xlu0 %6865
      %6867 = vrot.lane.b32.xlu0 %v6848, 80
      %v6868 = vpop.permute.xlu0 %6867
      %6869 = vrot.lane.b32.xlu0 %v6852, 80
      %v6870 = vpop.permute.xlu0 %6869
      %6874 = vst.msk [vmem:[%s407 + $0x12] sm:$0x1] %vm6427, %v6866
      %6875 = vst.msk [vmem:[%s407 + $0x2a] sm:$0x1] %vm6427, %v6868
      %6876 = vst.msk [vmem:[%s407 + $0x42] sm:$0x1] %vm6427, %v6870
      %6877 = vrot.lane.b32.xlu0 %v6844, 56
      %v6878 = vpop.permute.xlu0 %6877
      %6879 = vrot.lane.b32.xlu0 %v6848, 56
      %v6880 = vpop.permute.xlu0 %6879
      %6881 = vrot.lane.b32.xlu0 %v6852, 56
      %v6882 = vpop.permute.xlu0 %6881
      %6886 = vst.msk [vmem:[%s407 + $0x13] sm:$0x1] %vm6427, %v6878
      %6887 = vst.msk [vmem:[%s407 + $0x2b] sm:$0x1] %vm6427, %v6880
      %6888 = vst.msk [vmem:[%s407 + $0x43] sm:$0x1] %vm6427, %v6882
      %6889 = vrot.lane.b32.xlu0 %v6844, 32
      %v6890 = vpop.permute.xlu0 %6889
      %6891 = vrot.lane.b32.xlu0 %v6848, 32
      %v6892 = vpop.permute.xlu0 %6891
      %6893 = vrot.lane.b32.xlu0 %v6852, 32
      %v6894 = vpop.permute.xlu0 %6893
      %6898 = vst.msk [vmem:[%s407 + $0x14] sm:$0x1] %vm6427, %v6890
      %6899 = vst.msk [vmem:[%s407 + $0x2c] sm:$0x1] %vm6427, %v6892
      %6900 = vst.msk [vmem:[%s407 + $0x44] sm:$0x1] %vm6427, %v6894
      %v6902 = vcombine.low %v6258, %v6397
      %v6904 = vunpack.c.l.s4 1966171168
      %v6905 = vunpack.c.0.s8 %v6904
      %v6906 = vlaneseq
      %v6907 = vshrl.u32 %v6906, 7
      %v6908 = vsub.s32 %v6905, %v6907
      %v6909 = vrot.slane %v6902, %v6908
      %v6910 = vcombine.high %v6909, %v6909
      %v6912 = vunpack.c.l.s4 1966171168
      %v6913 = vunpack.c.0.s8 %v6912
      %v6914 = vlaneseq
      %v6915 = vshrl.u32 %v6914, 7
      %v6916 = vsub.s32 %v6913, %v6915
      %v6917 = vrot.slane %v6909, %v6916
      %v6919 = vunpack.c.l.s4 1966171168
      %v6920 = vunpack.c.0.s8 %v6919
      %v6921 = vlaneseq
      %v6922 = vshrl.u32 %v6921, 7
      %v6923 = vsub.s32 %v6920, %v6922
      %v6924 = vrot.slane %v6910, %v6923
      %v6925 = vcombine.high %v6917, %v6917
      %v6926 = vlaneseq
      %v6927 = vshrl.u32 %v6926, 7
      %v6928 = vsub.s32 0, %v6927
      %v6929 = vrot.slane %v6917, %v6928
      %v6930 = vlaneseq
      %v6931 = vshrl.u32 %v6930, 7
      %v6932 = vsub.s32 1, %v6931
      %v6933 = vrot.slane %v6917, %v6932
      %v6934 = vlaneseq
      %v6935 = vshrl.u32 %v6934, 7
      %v6936 = vsub.s32 0, %v6935
      %v6937 = vrot.slane %v6924, %v6936
      %v6938 = vlaneseq
      %v6939 = vshrl.u32 %v6938, 7
      %v6940 = vsub.s32 1, %v6939
      %v6941 = vrot.slane %v6924, %v6940
      %v6942 = vlaneseq
      %v6943 = vshrl.u32 %v6942, 7
      %v6944 = vsub.s32 0, %v6943
      %v6945 = vrot.slane %v6925, %v6944
      %v6946 = vlaneseq
      %v6947 = vshrl.u32 %v6946, 7
      %v6948 = vsub.s32 1, %v6947
      %v6949 = vrot.slane %v6925, %v6948
      %6950 = vrot.lane.b32.xlu0 %v6929, 8
      %v6951 = vpop.permute.xlu0 %6950
      %6952 = vrot.lane.b32.xlu0 %v6933, 8
      %v6953 = vpop.permute.xlu0 %6952
      %6954 = vrot.lane.b32.xlu0 %v6937, 8
      %v6955 = vpop.permute.xlu0 %6954
      %6956 = vrot.lane.b32.xlu0 %v6941, 8
      %v6957 = vpop.permute.xlu0 %6956
      %6958 = vrot.lane.b32.xlu0 %v6945, 8
      %v6959 = vpop.permute.xlu0 %6958
      %6960 = vrot.lane.b32.xlu0 %v6949, 8
      %v6961 = vpop.permute.xlu0 %6960
      %v6962 = vsel %vm6552, %v6951, %v6953
      %v6963 = vsel %vm6552, %v6955, %v6957
      %v6964 = vsel %vm6552, %v6959, %v6961
      %6968 = vst.msk [vmem:[%s407 + $0x15] sm:$0x1] %vm6427, %v6962
      %6969 = vst.msk [vmem:[%s407 + $0x2d] sm:$0x1] %vm6427, %v6963
      %6970 = vst.msk [vmem:[%s407 + $0x45] sm:$0x1] %vm6427, %v6964
      %p6971 = scmp.lt.s32.totalorder %s23, 1
      %s6972 = scalar_select %p6971, %s23, 1
      %s6973 = smul.addr %s6972, 9
      %s6974 = smul.addr %s6973, 8
      %s6975 = scalar_lea.vmem %s12, %s6974
      // Predicated region
      $region69: #{decoder_forward.1} parent=67 // pred_check
        %p6976 = pneg %p298
      $region70: #{decoder_forward.1} parent=67 // pred_check_branch
        %6978 = sbr.rel (%p6976) target = $region72
      $region71: #{decoder_forward.1} parent=67 // pred_region
        _
      $region72: #{decoder_forward.1} parent=67 // pred_fallthru
        _
    $region68: #{decoder_forward.1} parent=5 // pred_fallthru
      _
    %p6979 = scmp.le.s32.totalorder 2, %s18
    // Predicated region
    $region73: #{decoder_forward.1} parent=5 // pred_check
      %p6980 = pneg %p6979
    $region74: #{decoder_forward.1} parent=5 // pred_check_branch
      %6982 = sbr.rel (%p6980) target = $region76
    $region75: #{decoder_forward.1} parent=5 // pred_region
      %s6983 = ssub.s32 %s18, 2
      // Predicated region
      $region77: #{decoder_forward.1} parent=75 // pred_check
        %p6984 = pneg %p304
      $region78: #{decoder_forward.1} parent=75 // pred_check_branch
        %6986 = sbr.rel (%p6984) target = $region80
      $region79: #{decoder_forward.1} parent=75 // pred_region
        %p6987 = scmp.lt.s32.totalorder %s24, 1
        %s6988 = scalar_select %p6987, %s24, 1
        %s6989 = smul.addr %s6988, 9
        %s6990 = smul.addr %s6989, 8
        %s6991 = scalar_lea.vmem %s12, %s6990
      $region80: #{decoder_forward.1} parent=75 // pred_fallthru
        _
    $region76: #{decoder_forward.1} parent=5 // pred_fallthru
      _
  $region6: #{decoder_forward.1} parent=0 // loop_footer
    %s22 = sadd.s32 1, %s18
  $region7: #{decoder_forward.1} parent=0 // loop_footer_branch
    %17 = sbr.rel target = $region3
  $region8: #{decoder_forward.1} parent=0 // loop_exit
    _

</llo_original>
